<compile_context>
chip_gen: v5e
topology: v5e:2x2
jax: 0.10.0
libtpu: 0.0.40
codegen_flags: <defaults>
</compile_context>

<pallas_src>
import functools

import jax
import jax.numpy as jnp
from jax.experimental import pallas as pl
from jax.experimental.pallas import tpu as pltpu


# ----------------------------------------------------------------------------
# small helpers
# ----------------------------------------------------------------------------
def _min_parallel_steps():
    """2 on chips with two TensorCores (megacore), else 1."""
    try:
        kind = jax.devices()[0].device_kind.lower()
    except Exception:  # pragma: no cover - defensive
        kind = ""
    return 2 if any(tag in kind for tag in ("v7", "v5p", "v4")) else 1


def _choose_tm(M):
    """Largest row tile dividing M; >=2 grid steps only on 2-TensorCore chips."""
    min_steps = _min_parallel_steps()
    for tm in (1024, 512, 256, 128, 64, 32, 16, 8):
        if M % tm == 0 and M >= min_steps * tm:
            return tm
    return M


_SQRT1_2 = 0.7071067811865476


def _erf_poly(x):
    # Abramowitz & Stegun 7.1.26, |abs error| <= 1.5e-7 — exact-GELU quality at
    # f32, built only from exp/mul/add/where so it lowers cleanly in Mosaic.
    a1, a2, a3, a4, a5 = (0.254829592, -0.284496736, 1.421413741,
                          -1.453152027, 1.061405429)
    p = 0.3275911
    sgn = jnp.where(x >= 0.0, 1.0, -1.0)
    z = jnp.abs(x)
    t = 1.0 / (1.0 + p * z)
    poly = ((((a5 * t + a4) * t + a3) * t + a2) * t + a1) * t
    return sgn * (1.0 - poly * jnp.exp(-z * z))


def _gelu_exact(x):
    return 0.5 * x * (1.0 + _erf_poly(x * _SQRT1_2))


# ----------------------------------------------------------------------------
# fused matmul kernel: optional BN-affine+ReLU prologue, bf16 MXU matmul with
# f32 accumulation, bias, optional per-tile BatchNorm partial statistics.
# ----------------------------------------------------------------------------
def _make_fused_mm_kernel(has_affine, has_bias, with_stats):
    def kernel(*refs):
        it = iter(refs)
        x_ref = next(it)
        if has_affine:
            sc_ref = next(it)
            sh_ref = next(it)
        w_ref = next(it)
        b_ref = next(it) if has_bias else None
        o_ref = next(it)
        if with_stats:
            s_ref = next(it)
            q_ref = next(it)

        x = x_ref[...]
        if has_affine:
            # folded BatchNorm (scale/shift) + ReLU of the previous layer
            x = jnp.maximum(x * sc_ref[...] + sh_ref[...], 0.0)

        # bf16 operands on the MXU (w_ref already bf16), f32 accumulation.
        acc = jnp.dot(x.astype(jnp.bfloat16), w_ref[...],
                      preferred_element_type=jnp.float32)
        if has_bias:
            acc = acc + b_ref[...]
        if with_stats:
            # Per-tile partial sums of the (bias-added) output; broadcast to 8
            # sublanes so the stats blocks satisfy the (8, 128) tiling rule.
            s_ref[...] = jnp.broadcast_to(
                jnp.sum(acc, axis=0, keepdims=True), s_ref.shape)
            q_ref[...] = jnp.broadcast_to(
                jnp.sum(acc * acc, axis=0, keepdims=True), q_ref.shape)
        o_ref[...] = acc

    return kernel


def fused_matmul(x, w, bias=None, *, affine=None, with_stats=False):
    """out = (ReLU(x*scale+shift) if affine else x) @ w + bias, one Pallas call.

    with_stats: additionally emit per-tile partial sum / sum-of-squares of the
    output so BatchNorm batch statistics need no extra HBM pass.
    """
    x = x.astype(jnp.float32)
    w = w.astype(jnp.bfloat16)          # bf16 at the boundary: half DMA / VMEM
    M, K = x.shape
    Kw, N = w.shape
    assert K == Kw
    tm = _choose_tm(M)
    grid = M // tm

    inputs = [x]
    in_specs = [pl.BlockSpec((tm, K), lambda i: (i, 0))]
    if affine is not None:
        s, sh = affine
        inputs += [s.reshape(1, K).astype(jnp.float32),
                   sh.reshape(1, K).astype(jnp.float32)]
        in_specs += [pl.BlockSpec((1, K), lambda i: (0, 0))] * 2
    inputs.append(w)
    in_specs.append(pl.BlockSpec((K, N), lambda i: (0, 0)))
    if bias is not None:
        inputs.append(bias.reshape(1, N).astype(jnp.float32))
        in_specs.append(pl.BlockSpec((1, N), lambda i: (0, 0)))

    kernel = _make_fused_mm_kernel(affine is not None, bias is not None,
                                   with_stats)

    if with_stats:
        out_shape = (jax.ShapeDtypeStruct((M, N), jnp.float32),
                     jax.ShapeDtypeStruct((grid * 8, N), jnp.float32),
                     jax.ShapeDtypeStruct((grid * 8, N), jnp.float32))
        out_specs = [pl.BlockSpec((tm, N), lambda i: (i, 0)),
                     pl.BlockSpec((8, N), lambda i: (i, 0)),
                     pl.BlockSpec((8, N), lambda i: (i, 0))]
    else:
        out_shape = jax.ShapeDtypeStruct((M, N), jnp.float32)
        out_specs = pl.BlockSpec((tm, N), lambda i: (i, 0))

    return pl.pallas_call(
        kernel,
        out_shape=out_shape,
        grid_spec=pltpu.PrefetchScalarGridSpec(
            num_scalar_prefetch=0,
            grid=(grid,),
            in_specs=in_specs,
            out_specs=out_specs,
        ),
        compiler_params=pltpu.CompilerParams(dimension_semantics=("parallel",)),
    )(*inputs)


# ----------------------------------------------------------------------------
# standalone affine(BatchNorm-fold) + ReLU kernel — only used where the next
# op is maxpool (max does not commute with a possibly sign-flipping affine).
# ----------------------------------------------------------------------------
def _affine_relu_kernel(x_ref, s_ref, b_ref, o_ref):
    o_ref[...] = jnp.maximum(x_ref[...] * s_ref[...] + b_ref[...], 0.0)


def affine_relu(x, scale, shift):
    M, C = x.shape
    tm = _choose_tm(M)
    return pl.pallas_call(
        _affine_relu_kernel,
        out_shape=jax.ShapeDtypeStruct((M, C), jnp.float32),
        grid_spec=pltpu.PrefetchScalarGridSpec(
            num_scalar_prefetch=0,
            grid=(M // tm,),
            in_specs=[
                pl.BlockSpec((tm, C), lambda i: (i, 0)),
                pl.BlockSpec((1, C), lambda i: (0, 0)),
                pl.BlockSpec((1, C), lambda i: (0, 0)),
            ],
            out_specs=pl.BlockSpec((tm, C), lambda i: (i, 0)),
        ),
        compiler_params=pltpu.CompilerParams(dimension_semantics=("parallel",)),
    )(x.astype(jnp.float32), scale.reshape(1, C).astype(jnp.float32),
      shift.reshape(1, C).astype(jnp.float32))


# ----------------------------------------------------------------------------
# fully fused transformer block: one pallas_call per block, grid over batch.
# All intermediates stay in VMEM/vregs; nothing but x and the final output
# touches HBM.
# ----------------------------------------------------------------------------
def _transformer_block_kernel(x_ref, ln1g, ln1b, qkvw, projw, projb,
                              ln2g, ln2b, fc1w, fc1b, fc2w, fc2b,
                              o_ref, *, heads):
    x = x_ref[0]                                            # (N, C) f32

    # ---- attention branch: x + proj(attn(LN1(x))) ----
    mu = jnp.mean(x, axis=-1, keepdims=True)
    var = jnp.mean(jnp.square(x - mu), axis=-1, keepdims=True)
    xn = (x - mu) * jax.lax.rsqrt(var + 1e-5) * ln1g[...] + ln1b[...]

    # lane-dense QKV (1/sqrt(hd) already folded into the Q weight columns).
    qkv = jnp.dot(xn.astype(jnp.bfloat16), qkvw[...],
                  preferred_element_type=jnp.float32)       # (N, 3C)
    C3 = qkv.shape[-1]
    C = C3 // 3
    hd = C // heads

    outs = []
    for h in range(heads):                                  # static head loop
        q = qkv[:, h * hd:(h + 1) * hd]
        k = qkv[:, C + h * hd:C + (h + 1) * hd]
        v = qkv[:, 2 * C + h * hd:2 * C + (h + 1) * hd]
        s = jax.lax.dot_general(
            q.astype(jnp.bfloat16), k.astype(jnp.bfloat16),
            dimension_numbers=(((1,), (1,)), ((), ())),
            preferred_element_type=jnp.float32)             # (N, N)
        s = s - jnp.max(s, axis=-1, keepdims=True)
        p = jnp.exp(s)
        p = p * pl.reciprocal(jnp.sum(p, axis=-1, keepdims=True), approx=True)
        outs.append(jnp.dot(p.astype(jnp.bfloat16), v.astype(jnp.bfloat16),
                            preferred_element_type=jnp.float32))
    a = jnp.concatenate(outs, axis=-1)                      # (N, C) head merge

    x = x + jnp.dot(a.astype(jnp.bfloat16), projw[...],
                    preferred_element_type=jnp.float32) + projb[...]

    # ---- MLP branch: x + fc2(GELU(fc1(LN2(x)))) ----
    mu = jnp.mean(x, axis=-1, keepdims=True)
    var = jnp.mean(jnp.square(x - mu), axis=-1, keepdims=True)
    xn = (x - mu) * jax.lax.rsqrt(var + 1e-5) * ln2g[...] + ln2b[...]

    h1 = jnp.dot(xn.astype(jnp.bfloat16), fc1w[...],
                 preferred_element_type=jnp.float32) + fc1b[...]
    h1 = _gelu_exact(h1)
    x = x + jnp.dot(h1.astype(jnp.bfloat16), fc2w[...],
                    preferred_element_type=jnp.float32) + fc2b[...]

    o_ref[0] = x


def transformer_block(x, p):
    B, N, C = x.shape
    heads = p["num_heads"]
    hd = C // heads
    scale = float(hd) ** (-0.5)

    # Fold the attention scale into the Q columns of the QKV weight (f32 math,
    # then one bf16 cast for the boundary).
    qkv_w = p["qkv_w"].astype(jnp.float32)
    qkv_w = qkv_w.at[:, :C].multiply(scale).astype(jnp.bfloat16)

    vec = lambda a, n: a.reshape(1, n).astype(jnp.float32)
    kern = functools.partial(_transformer_block_kernel, heads=heads)

    # grid over batch: B=2 keeps both v7x TensorCores busy; per-step overhead
    # on single-core chips is negligible (~0.35us) at these shapes.
    return pl.pallas_call(
        kern,
        out_shape=jax.ShapeDtypeStruct((B, N, C), jnp.float32),
        grid_spec=pltpu.PrefetchScalarGridSpec(
            num_scalar_prefetch=0,
            grid=(B,),
            in_specs=[
                pl.BlockSpec((1, N, C), lambda b: (b, 0, 0)),     # x
                pl.BlockSpec((1, C), lambda b: (0, 0)),           # ln1_g
                pl.BlockSpec((1, C), lambda b: (0, 0)),           # ln1_b
                pl.BlockSpec((C, 3 * C), lambda b: (0, 0)),       # qkv_w (bf16)
                pl.BlockSpec((C, C), lambda b: (0, 0)),           # proj_w
                pl.BlockSpec((1, C), lambda b: (0, 0)),           # proj_b
                pl.BlockSpec((1, C), lambda b: (0, 0)),           # ln2_g
                pl.BlockSpec((1, C), lambda b: (0, 0)),           # ln2_b
                pl.BlockSpec((C, 4 * C), lambda b: (0, 0)),       # fc1_w
                pl.BlockSpec((1, 4 * C), lambda b: (0, 0)),       # fc1_b
                pl.BlockSpec((4 * C, C), lambda b: (0, 0)),       # fc2_w
                pl.BlockSpec((1, C), lambda b: (0, 0)),           # fc2_b
            ],
            out_specs=pl.BlockSpec((1, N, C), lambda b: (b, 0, 0)),
        ),
        compiler_params=pltpu.CompilerParams(dimension_semantics=("parallel",)),
    )(x.astype(jnp.float32),
      vec(p["ln1_g"], C), vec(p["ln1_b"], C),
      qkv_w,
      p["proj_w"].astype(jnp.bfloat16), vec(p["proj_b"], C),
      vec(p["ln2_g"], C), vec(p["ln2_b"], C),
      p["fc1_w"].astype(jnp.bfloat16), vec(p["fc1_b"], 4 * C),
      p["fc2_w"].astype(jnp.bfloat16), vec(p["fc2_b"], C))


# ----------------------------------------------------------------------------
# JAX glue (pure data movement / tiny per-channel math)
# ----------------------------------------------------------------------------
def im2col3x3(x):
    """NHWC (B,H,W,C), 3x3 conv pad=1 (zero pad) -> (B*H*W, 9*C) patch rows."""
    B, H, W, C = x.shape
    xp = jnp.pad(x, ((0, 0), (1, 1), (1, 1), (0, 0)))
    cols = [xp[:, dy:dy + H, dx:dx + W, :] for dy in range(3) for dx in range(3)]
    return jnp.concatenate(cols, axis=-1).reshape(B * H * W, 9 * C)


def im2col3x3_padval(x, pad_val):
    """Same as im2col3x3 but with a per-channel halo value.

    Used when the previous layer's BN+ReLU is folded into the NEXT conv's
    prologue: padding with -shift/scale makes relu(pad*scale+shift) == 0,
    reproducing PyTorch's zero padding of the post-ReLU activation exactly.
    """
    B, H, W, C = x.shape
    xp = jnp.broadcast_to(pad_val.reshape(1, 1, 1, C).astype(jnp.float32),
                          (B, H + 2, W + 2, C))
    xp = xp.at[:, 1:-1, 1:-1, :].set(x)
    cols = [xp[:, dy:dy + H, dx:dx + W, :] for dy in range(3) for dx in range(3)]
    return jnp.concatenate(cols, axis=-1).reshape(B * H * W, 9 * C)


def maxpool2x2(x):
    B, H, W, C = x.shape
    return jnp.max(x.reshape(B, H // 2, 2, W // 2, 2, C), axis=(2, 4))


def _bn_scale_shift(sum_rows, sq_rows, count, gamma, beta, eps=1e-5, fold=1):
    """Finalize training-mode BatchNorm (biased var) from per-tile partial sums.

    Each stats tile stores 8 identical sublanes, so sum everything and divide
    by 8 (no strided gather).
    """
    s = jnp.sum(sum_rows, axis=0) / 8.0
    q = jnp.sum(sq_rows, axis=0) / 8.0
    if fold > 1:                                  # merge (ky,kx) copies of a channel
        s = jnp.sum(s.reshape(fold, -1), axis=0)
        q = jnp.sum(q.reshape(fold, -1), axis=0)
    mean = s / count
    var = jnp.maximum(q / count - mean * mean, 0.0)
    scale = gamma / jnp.sqrt(var + eps)
    shift = beta - mean * scale
    return scale, shift


# ----------------------------------------------------------------------------
# Full model forward
# ----------------------------------------------------------------------------
def transunet_forward(x_nchw, params):
    x = jnp.transpose(x_nchw, (0, 2, 3, 1)).astype(jnp.float32)     # NCHW -> NHWC
    B, H, W, Cin = x.shape
    hidden = params["proj_w"].shape[-1]
    num_classes = params["dec_w2"].shape[-1]

    # ---------- encoder ----------
    # conv1: matmul + BN stats in one kernel; its BN+ReLU is folded into conv2.
    y1, s1, q1 = fused_matmul(im2col3x3(x),
                              params["enc_w1"].reshape(9 * Cin, 64),
                              params["enc_b1"], with_stats=True)
    sc1, sh1 = _bn_scale_shift(s1, q1, B * H * W,
                               params["enc_bn1_g"], params["enc_bn1_b"])

    # conv2: ReLU(BN(conv1)) applied as the prologue (9x-tiled scale/shift),
    # halo padded with -shift/scale so the folded prologue yields exact zeros.
    patches2 = im2col3x3_padval(y1.reshape(B, H, W, 64), -sh1 / sc1)
    y2, s2, q2 = fused_matmul(patches2,
                              params["enc_w2"].reshape(9 * 64, 64),
                              params["enc_b2"],
                              affine=(jnp.tile(sc1, 9), jnp.tile(sh1, 9)),
                              with_stats=True)
    sc2, sh2 = _bn_scale_shift(s2, q2, B * H * W,
                               params["enc_bn2_g"], params["enc_bn2_b"])

    # conv2's BN+ReLU runs before maxpool (cannot be folded past a max).
    h = affine_relu(y2, sc2, sh2).reshape(B, H, W, 64)
    h = maxpool2x2(h)                                               # (B, H/2, W/2, 64)
    Hp, Wp = H // 2, W // 2

    # ---------- 'b c h w -> b (h w) c' + proj ----------
    t = fused_matmul(h.reshape(B * Hp * Wp, 64), params["proj_w"],
                     params["proj_b"])
    t = t.reshape(B, Hp * Wp, hidden)

    # ---------- transformer (one fused kernel per block) ----------
    for blk in params["blocks"]:
        t = transformer_block(t, blk)

    # ---------- 'b (h w) c -> b c h w' + decoder ----------
    feat = t.reshape(B, Hp, Wp, hidden)

    # ConvTranspose2d(k=2, s=2) as ONE (Cin, 4*Cout) matmul (+ BN stats).
    w4 = jnp.transpose(params["dec_tw"], (2, 0, 1, 3)).reshape(hidden, 4 * 64)
    b4 = jnp.tile(params["dec_tb"], 4)
    y4, s4, q4 = fused_matmul(feat.reshape(B * Hp * Wp, hidden), w4, b4,
                              with_stats=True)
    scd1, shd1 = _bn_scale_shift(s4, q4, B * Hp * Wp * 4,
                                 params["dec_bn1_g"], params["dec_bn1_b"],
                                 fold=4)
    d = y4.reshape(B, Hp, Wp, 2, 2, 64)
    d = jnp.transpose(d, (0, 1, 3, 2, 4, 5)).reshape(B, H, W, 64)   # pre-BN deconv out

    # decoder conv3x3: deconv's BN+ReLU folded into the prologue, BN stats fused.
    patches_d = im2col3x3_padval(d, -shd1 / scd1)
    y5, s5, q5 = fused_matmul(patches_d,
                              params["dec_w1"].reshape(9 * 64, 64),
                              params["dec_b1"],
                              affine=(jnp.tile(scd1, 9), jnp.tile(shd1, 9)),
                              with_stats=True)
    scd2, shd2 = _bn_scale_shift(s5, q5, B * H * W,
                                 params["dec_bn2_g"], params["dec_bn2_b"])

    # 1x1 conv with the conv3x3 BN+ReLU folded as its prologue.
    logits = fused_matmul(y5, params["dec_w2"], params["dec_b2"],
                          affine=(scd2, shd2))                      # (B*H*W, nc)

    out = logits.reshape(B, H, W, num_classes)
    return jnp.transpose(out, (0, 3, 1, 2))                         # back to NCHW


# ----------------------------------------------------------------------------
# Deterministic synthetic parameters (shapes mirror the PyTorch module)
# ----------------------------------------------------------------------------
def init_params(key, in_channels=3, num_classes=1, hidden=32, heads=4, layers=2):
    keys = iter(jax.random.split(key, 64))

    def nrm(shape, s=0.05):
        return jax.random.normal(next(keys), shape, jnp.float32) * s

    p = {}
    p["enc_w1"], p["enc_b1"] = nrm((3, 3, in_channels, 64)), nrm((64,))
    p["enc_bn1_g"], p["enc_bn1_b"] = 1.0 + nrm((64,)), nrm((64,))
    p["enc_w2"], p["enc_b2"] = nrm((3, 3, 64, 64)), nrm((64,))
    p["enc_bn2_g"], p["enc_bn2_b"] = 1.0 + nrm((64,)), nrm((64,))
    p["proj_w"], p["proj_b"] = nrm((64, hidden)), nrm((hidden,))

    blocks = []
    for _ in range(layers):
        blocks.append(dict(
            num_heads=heads,
            ln1_g=1.0 + nrm((hidden,)), ln1_b=nrm((hidden,)),
            qkv_w=nrm((hidden, 3 * hidden)),                 # qkv_bias=False
            proj_w=nrm((hidden, hidden)), proj_b=nrm((hidden,)),
            ln2_g=1.0 + nrm((hidden,)), ln2_b=nrm((hidden,)),
            fc1_w=nrm((hidden, 4 * hidden)), fc1_b=nrm((4 * hidden,)),
            fc2_w=nrm((4 * hidden, hidden)), fc2_b=nrm((hidden,)),
        ))
    p["blocks"] = blocks

    p["dec_tw"], p["dec_tb"] = nrm((2, 2, hidden, 64)), nrm((64,))
    p["dec_bn1_g"], p["dec_bn1_b"] = 1.0 + nrm((64,)), nrm((64,))
    p["dec_w1"], p["dec_b1"] = nrm((3, 3, 64, 64)), nrm((64,))
    p["dec_bn2_g"], p["dec_bn2_b"] = 1.0 + nrm((64,)), nrm((64,))
    p["dec_w2"], p["dec_b2"] = nrm((64, num_classes)), nrm((num_classes,))
    return p


if __name__ == "__main__":
    key = jax.random.PRNGKey(0)
    pkey, xkey = jax.random.split(key)

    # Small TransUNet: in_channels=3, num_classes=1, hidden_size=32,
    # num_heads=4, num_layers=2; input (B=2, 3, 16, 16) in PyTorch NCHW layout.
    params = init_params(pkey, in_channels=3, num_classes=1, hidden=32,
                         heads=4, layers=2)
    x = jax.random.normal(xkey, (2, 3, 16, 16), jnp.float32)

    fwd = jax.jit(lambda inp: transunet_forward(inp, params))
    out = jax.block_until_ready(fwd(x))

    assert out.shape == (2, 1, 16, 16), out.shape
    assert bool(jnp.all(jnp.isfinite(out)))
    print("KERNEL_OK")
</pallas_src>

<mosaic_0001>
module attributes {stable_mosaic.version = 11 : i64} {
  func.func @kernel(%arg0: i32, %arg1: memref<512x27xf32, #tpu.memory_space<vmem>>, %arg2: memref<27x64xbf16, #tpu.memory_space<vmem>>, %arg3: memref<1x64xf32, #tpu.memory_space<vmem>>, %arg4: memref<512x64xf32, #tpu.memory_space<vmem>>, %arg5: memref<8x64xf32, #tpu.memory_space<vmem>>, %arg6: memref<8x64xf32, #tpu.memory_space<vmem>>) attributes {dimension_semantics = [#tpu.dimension_semantics<parallel>], iteration_bounds = array<i64: 1>, scalar_prefetch = 0 : i64, scratch_operands = 0 : i64, tpu.core_type = #tpu.core_type<tc>, window_params = [{transform_indices = @transform_0, window_bounds = array<i64: 512, 27>}, {pipeline_mode = #tpu.pipeline_mode<synchronous>, transform_indices = @transform_1, window_bounds = array<i64: 27, 64>}, {pipeline_mode = #tpu.pipeline_mode<synchronous>, transform_indices = @transform_2, window_bounds = array<i64: 1, 64>}, {transform_indices = @transform_3, window_bounds = array<i64: 512, 64>}, {transform_indices = @transform_4, window_bounds = array<i64: 8, 64>}, {transform_indices = @transform_5, window_bounds = array<i64: 8, 64>}]} {
    %c0 = arith.constant 0 : index
    %c0_0 = arith.constant 0 : index
    %0 = vector.load %arg1[%c0, %c0_0] : memref<512x27xf32, #tpu.memory_space<vmem>>, vector<512x27xf32>
    %1 = arith.truncf %0 : vector<512x27xf32> to vector<512x27xbf16>
    %c0_1 = arith.constant 0 : index
    %c0_2 = arith.constant 0 : index
    %2 = vector.load %arg2[%c0_1, %c0_2] : memref<27x64xbf16, #tpu.memory_space<vmem>>, vector<27x64xbf16>
    %cst = arith.constant dense<0.000000e+00> : vector<512x64xf32>
    %3 = tpu.matmul %1, %2, %cst {dimension_numbers = #tpu.dot_dimension_numbers<[1], [0], [0], [1], [0, 0, 1, 1], [], []>} : vector<512x27xbf16>, vector<27x64xbf16>, vector<512x64xf32> -> vector<512x64xf32>
    %c0_3 = arith.constant 0 : index
    %c0_4 = arith.constant 0 : index
    %4 = vector.load %arg3[%c0_3, %c0_4] : memref<1x64xf32, #tpu.memory_space<vmem>>, vector<1x64xf32>
    %5 = vector.broadcast %4 : vector<1x64xf32> to vector<512x64xf32>
    %6 = arith.addf %3, %5 : vector<512x64xf32>
    %cst_5 = arith.constant dense<0.000000e+00> : vector<64xf32>
    %7 = vector.multi_reduction <add>, %6, %cst_5 [0] : vector<512x64xf32> to vector<64xf32>
    %8 = vector.shape_cast %7 : vector<64xf32> to vector<1x64xf32>
    %9 = vector.shape_cast %8 : vector<1x64xf32> to vector<1x64xf32>
    %10 = vector.broadcast %9 : vector<1x64xf32> to vector<8x64xf32>
    %c0_6 = arith.constant 0 : index
    %c0_7 = arith.constant 0 : index
    %11 = vector.load %arg5[%c0_6, %c0_7] : memref<8x64xf32, #tpu.memory_space<vmem>>, vector<8x64xf32>
    tpu.vector_store %arg5[%c0_6, %c0_7], %10 {strides = array<i32>} : memref<8x64xf32, #tpu.memory_space<vmem>>, vector<8x64xf32>,
    %12 = arith.mulf %6, %6 : vector<512x64xf32>
    %cst_8 = arith.constant dense<0.000000e+00> : vector<64xf32>
    %13 = vector.multi_reduction <add>, %12, %cst_8 [0] : vector<512x64xf32> to vector<64xf32>
    %14 = vector.shape_cast %13 : vector<64xf32> to vector<1x64xf32>
    %15 = vector.shape_cast %14 : vector<1x64xf32> to vector<1x64xf32>
    %16 = vector.broadcast %15 : vector<1x64xf32> to vector<8x64xf32>
    %c0_9 = arith.constant 0 : index
    %c0_10 = arith.constant 0 : index
    %17 = vector.load %arg6[%c0_9, %c0_10] : memref<8x64xf32, #tpu.memory_space<vmem>>, vector<8x64xf32>
    tpu.vector_store %arg6[%c0_9, %c0_10], %16 {strides = array<i32>} : memref<8x64xf32, #tpu.memory_space<vmem>>, vector<8x64xf32>,
    %c0_11 = arith.constant 0 : index
    %c0_12 = arith.constant 0 : index
    %18 = vector.load %arg4[%c0_11, %c0_12] : memref<512x64xf32, #tpu.memory_space<vmem>>, vector<512x64xf32>
    tpu.vector_store %arg4[%c0_11, %c0_12], %6 {strides = array<i32>} : memref<512x64xf32, #tpu.memory_space<vmem>>, vector<512x64xf32>,
    return
  }
  func.func @transform_0(%arg0: i32) -> (i32, i32) {
    %c0_i32 = arith.constant 0 : i32
    %c0_i32_0 = arith.constant 0 : i32
    return %arg0, %c0_i32 : i32, i32
  }
  func.func @transform_1(%arg0: i32) -> (i32, i32) {
    %c0_i32 = arith.constant 0 : i32
    %c0_i32_0 = arith.constant 0 : i32
    %c0_i32_1 = arith.constant 0 : i32
    return %c0_i32, %c0_i32_0 : i32, i32
  }
  func.func @transform_2(%arg0: i32) -> (i32, i32) {
    %c0_i32 = arith.constant 0 : i32
    %c0_i32_0 = arith.constant 0 : i32
    %c0_i32_1 = arith.constant 0 : i32
    return %c0_i32, %c0_i32_0 : i32, i32
  }
  func.func @transform_3(%arg0: i32) -> (i32, i32) {
    %c0_i32 = arith.constant 0 : i32
    %c0_i32_0 = arith.constant 0 : i32
    return %arg0, %c0_i32 : i32, i32
  }
  func.func @transform_4(%arg0: i32) -> (i32, i32) {
    %c0_i32 = arith.constant 0 : i32
    %c0_i32_0 = arith.constant 0 : i32
    return %arg0, %c0_i32 : i32, i32
  }
  func.func @transform_5(%arg0: i32) -> (i32, i32) {
    %c0_i32 = arith.constant 0 : i32
    %c0_i32_0 = arith.constant 0 : i32
    return %arg0, %c0_i32 : i32, i32
  }
}

module attributes {stable_mosaic.version = 11 : i64} {
  func.func @kernel(%arg0: i32, %arg1: memref<512x576xf32, #tpu.memory_space<vmem>>, %arg2: memref<1x576xf32, #tpu.memory_space<vmem>>, %arg3: memref<1x576xf32, #tpu.memory_space<vmem>>, %arg4: memref<576x64xbf16, #tpu.memory_space<vmem>>, %arg5: memref<1x64xf32, #tpu.memory_space<vmem>>, %arg6: memref<512x64xf32, #tpu.memory_space<vmem>>, %arg7: memref<8x64xf32, #tpu.memory_space<vmem>>, %arg8: memref<8x64xf32, #tpu.memory_space<vmem>>) attributes {dimension_semantics = [#tpu.dimension_semantics<parallel>], iteration_bounds = array<i64: 1>, scalar_prefetch = 0 : i64, scratch_operands = 0 : i64, tpu.core_type = #tpu.core_type<tc>, window_params = [{transform_indices = @transform_0, window_bounds = array<i64: 512, 576>}, {pipeline_mode = #tpu.pipeline_mode<synchronous>, transform_indices = @transform_1, window_bounds = array<i64: 1, 576>}, {pipeline_mode = #tpu.pipeline_mode<synchronous>, transform_indices = @transform_2, window_bounds = array<i64: 1, 576>}, {pipeline_mode = #tpu.pipeline_mode<synchronous>, transform_indices = @transform_3, window_bounds = array<i64: 576, 64>}, {pipeline_mode = #tpu.pipeline_mode<synchronous>, transform_indices = @transform_4, window_bounds = array<i64: 1, 64>}, {transform_indices = @transform_5, window_bounds = array<i64: 512, 64>}, {transform_indices = @transform_6, window_bounds = array<i64: 8, 64>}, {transform_indices = @transform_7, window_bounds = array<i64: 8, 64>}]} {
    %c0 = arith.constant 0 : index
    %c0_0 = arith.constant 0 : index
    %0 = vector.load %arg1[%c0, %c0_0] : memref<512x576xf32, #tpu.memory_space<vmem>>, vector<512x576xf32>
    %c0_1 = arith.constant 0 : index
    %c0_2 = arith.constant 0 : index
    %1 = vector.load %arg2[%c0_1, %c0_2] : memref<1x576xf32, #tpu.memory_space<vmem>>, vector<1x576xf32>
    %2 = vector.broadcast %1 : vector<1x576xf32> to vector<512x576xf32>
    %3 = arith.mulf %0, %2 : vector<512x576xf32>
    %c0_3 = arith.constant 0 : index
    %c0_4 = arith.constant 0 : index
    %4 = vector.load %arg3[%c0_3, %c0_4] : memref<1x576xf32, #tpu.memory_space<vmem>>, vector<1x576xf32>
    %5 = vector.broadcast %4 : vector<1x576xf32> to vector<512x576xf32>
    %6 = arith.addf %3, %5 : vector<512x576xf32>
    %cst = arith.constant 0.000000e+00 : f32
    %7 = vector.broadcast %cst : f32 to vector<512x576xf32>
    %8 = arith.maximumf %6, %7 : vector<512x576xf32>
    %9 = arith.truncf %8 : vector<512x576xf32> to vector<512x576xbf16>
    %c0_5 = arith.constant 0 : index
    %c0_6 = arith.constant 0 : index
    %10 = vector.load %arg4[%c0_5, %c0_6] : memref<576x64xbf16, #tpu.memory_space<vmem>>, vector<576x64xbf16>
    %cst_7 = arith.constant dense<0.000000e+00> : vector<512x64xf32>
    %11 = tpu.matmul %9, %10, %cst_7 {dimension_numbers = #tpu.dot_dimension_numbers<[1], [0], [0], [1], [0, 0, 1, 1], [], []>} : vector<512x576xbf16>, vector<576x64xbf16>, vector<512x64xf32> -> vector<512x64xf32>
    %c0_8 = arith.constant 0 : index
    %c0_9 = arith.constant 0 : index
    %12 = vector.load %arg5[%c0_8, %c0_9] : memref<1x64xf32, #tpu.memory_space<vmem>>, vector<1x64xf32>
    %13 = vector.broadcast %12 : vector<1x64xf32> to vector<512x64xf32>
    %14 = arith.addf %11, %13 : vector<512x64xf32>
    %cst_10 = arith.constant dense<0.000000e+00> : vector<64xf32>
    %15 = vector.multi_reduction <add>, %14, %cst_10 [0] : vector<512x64xf32> to vector<64xf32>
    %16 = vector.shape_cast %15 : vector<64xf32> to vector<1x64xf32>
    %17 = vector.shape_cast %16 : vector<1x64xf32> to vector<1x64xf32>
    %18 = vector.broadcast %17 : vector<1x64xf32> to vector<8x64xf32>
    %c0_11 = arith.constant 0 : index
    %c0_12 = arith.constant 0 : index
    %19 = vector.load %arg7[%c0_11, %c0_12] : memref<8x64xf32, #tpu.memory_space<vmem>>, vector<8x64xf32>
    tpu.vector_store %arg7[%c0_11, %c0_12], %18 {strides = array<i32>} : memref<8x64xf32, #tpu.memory_space<vmem>>, vector<8x64xf32>,
    %20 = arith.mulf %14, %14 : vector<512x64xf32>
    %cst_13 = arith.constant dense<0.000000e+00> : vector<64xf32>
    %21 = vector.multi_reduction <add>, %20, %cst_13 [0] : vector<512x64xf32> to vector<64xf32>
    %22 = vector.shape_cast %21 : vector<64xf32> to vector<1x64xf32>
    %23 = vector.shape_cast %22 : vector<1x64xf32> to vector<1x64xf32>
    %24 = vector.broadcast %23 : vector<1x64xf32> to vector<8x64xf32>
    %c0_14 = arith.constant 0 : index
    %c0_15 = arith.constant 0 : index
    %25 = vector.load %arg8[%c0_14, %c0_15] : memref<8x64xf32, #tpu.memory_space<vmem>>, vector<8x64xf32>
    tpu.vector_store %arg8[%c0_14, %c0_15], %24 {strides = array<i32>} : memref<8x64xf32, #tpu.memory_space<vmem>>, vector<8x64xf32>,
    %c0_16 = arith.constant 0 : index
    %c0_17 = arith.constant 0 : index
    %26 = vector.load %arg6[%c0_16, %c0_17] : memref<512x64xf32, #tpu.memory_space<vmem>>, vector<512x64xf32>
    tpu.vector_store %arg6[%c0_16, %c0_17], %14 {strides = array<i32>} : memref<512x64xf32, #tpu.memory_space<vmem>>, vector<512x64xf32>,
    return
  }
  func.func @transform_0(%arg0: i32) -> (i32, i32) {
    %c0_i32 = arith.constant 0 : i32
    %c0_i32_0 = arith.constant 0 : i32
    return %arg0, %c0_i32 : i32, i32
  }
  func.func @transform_1(%arg0: i32) -> (i32, i32) {
    %c0_i32 = arith.constant 0 : i32
    %c0_i32_0 = arith.constant 0 : i32
    %c0_i32_1 = arith.constant 0 : i32
    return %c0_i32, %c0_i32_0 : i32, i32
  }
  func.func @transform_2(%arg0: i32) -> (i32, i32) {
    %c0_i32 = arith.constant 0 : i32
    %c0_i32_0 = arith.constant 0 : i32
    %c0_i32_1 = arith.constant 0 : i32
    return %c0_i32, %c0_i32_0 : i32, i32
  }
  func.func @transform_3(%arg0: i32) -> (i32, i32) {
    %c0_i32 = arith.constant 0 : i32
    %c0_i32_0 = arith.constant 0 : i32
    %c0_i32_1 = arith.constant 0 : i32
    return %c0_i32, %c0_i32_0 : i32, i32
  }
  func.func @transform_4(%arg0: i32) -> (i32, i32) {
    %c0_i32 = arith.constant 0 : i32
    %c0_i32_0 = arith.constant 0 : i32
    %c0_i32_1 = arith.constant 0 : i32
    return %c0_i32, %c0_i32_0 : i32, i32
  }
  func.func @transform_5(%arg0: i32) -> (i32, i32) {
    %c0_i32 = arith.constant 0 : i32
    %c0_i32_0 = arith.constant 0 : i32
    return %arg0, %c0_i32 : i32, i32
  }
  func.func @transform_6(%arg0: i32) -> (i32, i32) {
    %c0_i32 = arith.constant 0 : i32
    %c0_i32_0 = arith.constant 0 : i32
    return %arg0, %c0_i32 : i32, i32
  }
  func.func @transform_7(%arg0: i32) -> (i32, i32) {
    %c0_i32 = arith.constant 0 : i32
    %c0_i32_0 = arith.constant 0 : i32
    return %arg0, %c0_i32 : i32, i32
  }
}

module attributes {stable_mosaic.version = 11 : i64} {
  func.func @_affine_relu_kernel(%arg0: i32, %arg1: memref<512x64xf32, #tpu.memory_space<vmem>>, %arg2: memref<1x64xf32, #tpu.memory_space<vmem>>, %arg3: memref<1x64xf32, #tpu.memory_space<vmem>>, %arg4: memref<512x64xf32, #tpu.memory_space<vmem>>) attributes {dimension_semantics = [#tpu.dimension_semantics<parallel>], iteration_bounds = array<i64: 1>, scalar_prefetch = 0 : i64, scratch_operands = 0 : i64, tpu.core_type = #tpu.core_type<tc>, window_params = [{transform_indices = @transform_0, window_bounds = array<i64: 512, 64>}, {pipeline_mode = #tpu.pipeline_mode<synchronous>, transform_indices = @transform_1, window_bounds = array<i64: 1, 64>}, {pipeline_mode = #tpu.pipeline_mode<synchronous>, transform_indices = @transform_2, window_bounds = array<i64: 1, 64>}, {transform_indices = @transform_3, window_bounds = array<i64: 512, 64>}]} {
    %c0 = arith.constant 0 : index
    %c0_0 = arith.constant 0 : index
    %0 = vector.load %arg1[%c0, %c0_0] : memref<512x64xf32, #tpu.memory_space<vmem>>, vector<512x64xf32>
    %c0_1 = arith.constant 0 : index
    %c0_2 = arith.constant 0 : index
    %1 = vector.load %arg2[%c0_1, %c0_2] : memref<1x64xf32, #tpu.memory_space<vmem>>, vector<1x64xf32>
    %2 = vector.broadcast %1 : vector<1x64xf32> to vector<512x64xf32>
    %3 = arith.mulf %0, %2 : vector<512x64xf32>
    %c0_3 = arith.constant 0 : index
    %c0_4 = arith.constant 0 : index
    %4 = vector.load %arg3[%c0_3, %c0_4] : memref<1x64xf32, #tpu.memory_space<vmem>>, vector<1x64xf32>
    %5 = vector.broadcast %4 : vector<1x64xf32> to vector<512x64xf32>
    %6 = arith.addf %3, %5 : vector<512x64xf32>
    %cst = arith.constant 0.000000e+00 : f32
    %7 = vector.broadcast %cst : f32 to vector<512x64xf32>
    %8 = arith.maximumf %6, %7 : vector<512x64xf32>
    %c0_5 = arith.constant 0 : index
    %c0_6 = arith.constant 0 : index
    %9 = vector.load %arg4[%c0_5, %c0_6] : memref<512x64xf32, #tpu.memory_space<vmem>>, vector<512x64xf32>
    tpu.vector_store %arg4[%c0_5, %c0_6], %8 {strides = array<i32>} : memref<512x64xf32, #tpu.memory_space<vmem>>, vector<512x64xf32>,
    return
  }
  func.func @transform_0(%arg0: i32) -> (i32, i32) {
    %c0_i32 = arith.constant 0 : i32
    %c0_i32_0 = arith.constant 0 : i32
    return %arg0, %c0_i32 : i32, i32
  }
  func.func @transform_1(%arg0: i32) -> (i32, i32) {
    %c0_i32 = arith.constant 0 : i32
    %c0_i32_0 = arith.constant 0 : i32
    %c0_i32_1 = arith.constant 0 : i32
    return %c0_i32, %c0_i32_0 : i32, i32
  }
  func.func @transform_2(%arg0: i32) -> (i32, i32) {
    %c0_i32 = arith.constant 0 : i32
    %c0_i32_0 = arith.constant 0 : i32
    %c0_i32_1 = arith.constant 0 : i32
    return %c0_i32, %c0_i32_0 : i32, i32
  }
  func.func @transform_3(%arg0: i32) -> (i32, i32) {
    %c0_i32 = arith.constant 0 : i32
    %c0_i32_0 = arith.constant 0 : i32
    return %arg0, %c0_i32 : i32, i32
  }
}

module attributes {stable_mosaic.version = 11 : i64} {
  func.func @kernel(%arg0: i32, %arg1: memref<128x64xf32, #tpu.memory_space<vmem>>, %arg2: memref<64x32xbf16, #tpu.memory_space<vmem>>, %arg3: memref<1x32xf32, #tpu.memory_space<vmem>>, %arg4: memref<128x32xf32, #tpu.memory_space<vmem>>) attributes {dimension_semantics = [#tpu.dimension_semantics<parallel>], iteration_bounds = array<i64: 1>, scalar_prefetch = 0 : i64, scratch_operands = 0 : i64, tpu.core_type = #tpu.core_type<tc>, window_params = [{transform_indices = @transform_0, window_bounds = array<i64: 128, 64>}, {pipeline_mode = #tpu.pipeline_mode<synchronous>, transform_indices = @transform_1, window_bounds = array<i64: 64, 32>}, {pipeline_mode = #tpu.pipeline_mode<synchronous>, transform_indices = @transform_2, window_bounds = array<i64: 1, 32>}, {transform_indices = @transform_3, window_bounds = array<i64: 128, 32>}]} {
    %c0 = arith.constant 0 : index
    %c0_0 = arith.constant 0 : index
    %0 = vector.load %arg1[%c0, %c0_0] : memref<128x64xf32, #tpu.memory_space<vmem>>, vector<128x64xf32>
    %1 = arith.truncf %0 : vector<128x64xf32> to vector<128x64xbf16>
    %c0_1 = arith.constant 0 : index
    %c0_2 = arith.constant 0 : index
    %2 = vector.load %arg2[%c0_1, %c0_2] : memref<64x32xbf16, #tpu.memory_space<vmem>>, vector<64x32xbf16>
    %cst = arith.constant dense<0.000000e+00> : vector<128x32xf32>
    %3 = tpu.matmul %1, %2, %cst {dimension_numbers = #tpu.dot_dimension_numbers<[1], [0], [0], [1], [0, 0, 1, 1], [], []>} : vector<128x64xbf16>, vector<64x32xbf16>, vector<128x32xf32> -> vector<128x32xf32>
    %c0_3 = arith.constant 0 : index
    %c0_4 = arith.constant 0 : index
    %4 = vector.load %arg3[%c0_3, %c0_4] : memref<1x32xf32, #tpu.memory_space<vmem>>, vector<1x32xf32>
    %5 = vector.broadcast %4 : vector<1x32xf32> to vector<128x32xf32>
    %6 = arith.addf %3, %5 : vector<128x32xf32>
    %c0_5 = arith.constant 0 : index
    %c0_6 = arith.constant 0 : index
    %7 = vector.load %arg4[%c0_5, %c0_6] : memref<128x32xf32, #tpu.memory_space<vmem>>, vector<128x32xf32>
    tpu.vector_store %arg4[%c0_5, %c0_6], %6 {strides = array<i32>} : memref<128x32xf32, #tpu.memory_space<vmem>>, vector<128x32xf32>,
    return
  }
  func.func @transform_0(%arg0: i32) -> (i32, i32) {
    %c0_i32 = arith.constant 0 : i32
    %c0_i32_0 = arith.constant 0 : i32
    return %arg0, %c0_i32 : i32, i32
  }
  func.func @transform_1(%arg0: i32) -> (i32, i32) {
    %c0_i32 = arith.constant 0 : i32
    %c0_i32_0 = arith.constant 0 : i32
    %c0_i32_1 = arith.constant 0 : i32
    return %c0_i32, %c0_i32_0 : i32, i32
  }
  func.func @transform_2(%arg0: i32) -> (i32, i32) {
    %c0_i32 = arith.constant 0 : i32
    %c0_i32_0 = arith.constant 0 : i32
    %c0_i32_1 = arith.constant 0 : i32
    return %c0_i32, %c0_i32_0 : i32, i32
  }
  func.func @transform_3(%arg0: i32) -> (i32, i32) {
    %c0_i32 = arith.constant 0 : i32
    %c0_i32_0 = arith.constant 0 : i32
    return %arg0, %c0_i32 : i32, i32
  }
}

module attributes {stable_mosaic.version = 11 : i64} {
  func.func @kernel(%arg0: i32, %arg1: memref<128x32xf32, #tpu.memory_space<vmem>>, %arg2: memref<32x256xbf16, #tpu.memory_space<vmem>>, %arg3: memref<1x256xf32, #tpu.memory_space<vmem>>, %arg4: memref<128x256xf32, #tpu.memory_space<vmem>>, %arg5: memref<8x256xf32, #tpu.memory_space<vmem>>, %arg6: memref<8x256xf32, #tpu.memory_space<vmem>>) attributes {dimension_semantics = [#tpu.dimension_semantics<parallel>], iteration_bounds = array<i64: 1>, scalar_prefetch = 0 : i64, scratch_operands = 0 : i64, tpu.core_type = #tpu.core_type<tc>, window_params = [{transform_indices = @transform_0, window_bounds = array<i64: 128, 32>}, {pipeline_mode = #tpu.pipeline_mode<synchronous>, transform_indices = @transform_1, window_bounds = array<i64: 32, 256>}, {pipeline_mode = #tpu.pipeline_mode<synchronous>, transform_indices = @transform_2, window_bounds = array<i64: 1, 256>}, {transform_indices = @transform_3, window_bounds = array<i64: 128, 256>}, {transform_indices = @transform_4, window_bounds = array<i64: 8, 256>}, {transform_indices = @transform_5, window_bounds = array<i64: 8, 256>}]} {
    %c0 = arith.constant 0 : index
    %c0_0 = arith.constant 0 : index
    %0 = vector.load %arg1[%c0, %c0_0] : memref<128x32xf32, #tpu.memory_space<vmem>>, vector<128x32xf32>
    %1 = arith.truncf %0 : vector<128x32xf32> to vector<128x32xbf16>
    %c0_1 = arith.constant 0 : index
    %c0_2 = arith.constant 0 : index
    %2 = vector.load %arg2[%c0_1, %c0_2] : memref<32x256xbf16, #tpu.memory_space<vmem>>, vector<32x256xbf16>
    %cst = arith.constant dense<0.000000e+00> : vector<128x256xf32>
    %3 = tpu.matmul %1, %2, %cst {dimension_numbers = #tpu.dot_dimension_numbers<[1], [0], [0], [1], [0, 0, 1, 1], [], []>} : vector<128x32xbf16>, vector<32x256xbf16>, vector<128x256xf32> -> vector<128x256xf32>
    %c0_3 = arith.constant 0 : index
    %c0_4 = arith.constant 0 : index
    %4 = vector.load %arg3[%c0_3, %c0_4] : memref<1x256xf32, #tpu.memory_space<vmem>>, vector<1x256xf32>
    %5 = vector.broadcast %4 : vector<1x256xf32> to vector<128x256xf32>
    %6 = arith.addf %3, %5 : vector<128x256xf32>
    %cst_5 = arith.constant dense<0.000000e+00> : vector<256xf32>
    %7 = vector.multi_reduction <add>, %6, %cst_5 [0] : vector<128x256xf32> to vector<256xf32>
    %8 = vector.shape_cast %7 : vector<256xf32> to vector<1x256xf32>
    %9 = vector.shape_cast %8 : vector<1x256xf32> to vector<1x256xf32>
    %10 = vector.broadcast %9 : vector<1x256xf32> to vector<8x256xf32>
    %c0_6 = arith.constant 0 : index
    %c0_7 = arith.constant 0 : index
    %11 = vector.load %arg5[%c0_6, %c0_7] : memref<8x256xf32, #tpu.memory_space<vmem>>, vector<8x256xf32>
    tpu.vector_store %arg5[%c0_6, %c0_7], %10 {strides = array<i32>} : memref<8x256xf32, #tpu.memory_space<vmem>>, vector<8x256xf32>,
    %12 = arith.mulf %6, %6 : vector<128x256xf32>
    %cst_8 = arith.constant dense<0.000000e+00> : vector<256xf32>
    %13 = vector.multi_reduction <add>, %12, %cst_8 [0] : vector<128x256xf32> to vector<256xf32>
    %14 = vector.shape_cast %13 : vector<256xf32> to vector<1x256xf32>
    %15 = vector.shape_cast %14 : vector<1x256xf32> to vector<1x256xf32>
    %16 = vector.broadcast %15 : vector<1x256xf32> to vector<8x256xf32>
    %c0_9 = arith.constant 0 : index
    %c0_10 = arith.constant 0 : index
    %17 = vector.load %arg6[%c0_9, %c0_10] : memref<8x256xf32, #tpu.memory_space<vmem>>, vector<8x256xf32>
    tpu.vector_store %arg6[%c0_9, %c0_10], %16 {strides = array<i32>} : memref<8x256xf32, #tpu.memory_space<vmem>>, vector<8x256xf32>,
    %c0_11 = arith.constant 0 : index
    %c0_12 = arith.constant 0 : index
    %18 = vector.load %arg4[%c0_11, %c0_12] : memref<128x256xf32, #tpu.memory_space<vmem>>, vector<128x256xf32>
    tpu.vector_store %arg4[%c0_11, %c0_12], %6 {strides = array<i32>} : memref<128x256xf32, #tpu.memory_space<vmem>>, vector<128x256xf32>,
    return
  }
  func.func @transform_0(%arg0: i32) -> (i32, i32) {
    %c0_i32 = arith.constant 0 : i32
    %c0_i32_0 = arith.constant 0 : i32
    return %arg0, %c0_i32 : i32, i32
  }
  func.func @transform_1(%arg0: i32) -> (i32, i32) {
    %c0_i32 = arith.constant 0 : i32
    %c0_i32_0 = arith.constant 0 : i32
    %c0_i32_1 = arith.constant 0 : i32
    return %c0_i32, %c0_i32_0 : i32, i32
  }
  func.func @transform_2(%arg0: i32) -> (i32, i32) {
    %c0_i32 = arith.constant 0 : i32
    %c0_i32_0 = arith.constant 0 : i32
    %c0_i32_1 = arith.constant 0 : i32
    return %c0_i32, %c0_i32_0 : i32, i32
  }
  func.func @transform_3(%arg0: i32) -> (i32, i32) {
    %c0_i32 = arith.constant 0 : i32
    %c0_i32_0 = arith.constant 0 : i32
    return %arg0, %c0_i32 : i32, i32
  }
  func.func @transform_4(%arg0: i32) -> (i32, i32) {
    %c0_i32 = arith.constant 0 : i32
    %c0_i32_0 = arith.constant 0 : i32
    return %arg0, %c0_i32 : i32, i32
  }
  func.func @transform_5(%arg0: i32) -> (i32, i32) {
    %c0_i32 = arith.constant 0 : i32
    %c0_i32_0 = arith.constant 0 : i32
    return %arg0, %c0_i32 : i32, i32
  }
}

module attributes {stable_mosaic.version = 11 : i64} {
  func.func @_transformer_block_kernel(%arg0: i32, %arg1: memref<1x64x32xf32, #tpu.memory_space<vmem>>, %arg2: memref<1x32xf32, #tpu.memory_space<vmem>>, %arg3: memref<1x32xf32, #tpu.memory_space<vmem>>, %arg4: memref<32x96xbf16, #tpu.memory_space<vmem>>, %arg5: memref<32x32xbf16, #tpu.memory_space<vmem>>, %arg6: memref<1x32xf32, #tpu.memory_space<vmem>>, %arg7: memref<1x32xf32, #tpu.memory_space<vmem>>, %arg8: memref<1x32xf32, #tpu.memory_space<vmem>>, %arg9: memref<32x128xbf16, #tpu.memory_space<vmem>>, %arg10: memref<1x128xf32, #tpu.memory_space<vmem>>, %arg11: memref<128x32xbf16, #tpu.memory_space<vmem>>, %arg12: memref<1x32xf32, #tpu.memory_space<vmem>>, %arg13: memref<1x64x32xf32, #tpu.memory_space<vmem>>) attributes {dimension_semantics = [#tpu.dimension_semantics<parallel>], iteration_bounds = array<i64: 2>, scalar_prefetch = 0 : i64, scratch_operands = 0 : i64, tpu.core_type = #tpu.core_type<tc>, window_params = [{transform_indices = @transform_0, window_bounds = array<i64: 1, 64, 32>}, {pipeline_mode = #tpu.pipeline_mode<synchronous>, transform_indices = @transform_1, window_bounds = array<i64: 1, 32>}, {pipeline_mode = #tpu.pipeline_mode<synchronous>, transform_indices = @transform_2, window_bounds = array<i64: 1, 32>}, {pipeline_mode = #tpu.pipeline_mode<synchronous>, transform_indices = @transform_3, window_bounds = array<i64: 32, 96>}, {pipeline_mode = #tpu.pipeline_mode<synchronous>, transform_indices = @transform_4, window_bounds = array<i64: 32, 32>}, {pipeline_mode = #tpu.pipeline_mode<synchronous>, transform_indices = @transform_5, window_bounds = array<i64: 1, 32>}, {pipeline_mode = #tpu.pipeline_mode<synchronous>, transform_indices = @transform_6, window_bounds = array<i64: 1, 32>}, {pipeline_mode = #tpu.pipeline_mode<synchronous>, transform_indices = @transform_7, window_bounds = array<i64: 1, 32>}, {pipeline_mode = #tpu.pipeline_mode<synchronous>, transform_indices = @transform_8, window_bounds = array<i64: 32, 128>}, {pipeline_mode = #tpu.pipeline_mode<synchronous>, transform_indices = @transform_9, window_bounds = array<i64: 1, 128>}, {pipeline_mode = #tpu.pipeline_mode<synchronous>, transform_indices = @transform_10, window_bounds = array<i64: 128, 32>}, {pipeline_mode = #tpu.pipeline_mode<synchronous>, transform_indices = @transform_11, window_bounds = array<i64: 1, 32>}, {transform_indices = @transform_12, window_bounds = array<i64: 1, 64, 32>}]} {
    %c0 = arith.constant 0 : index
    %c0_0 = arith.constant 0 : index
    %c0_1 = arith.constant 0 : index
    %0 = vector.load %arg1[%c0, %c0_0, %c0_1] : memref<1x64x32xf32, #tpu.memory_space<vmem>>, vector<1x64x32xf32>
    %1 = vector.shape_cast %0 : vector<1x64x32xf32> to vector<64x32xf32>
    %cst = arith.constant dense<0.000000e+00> : vector<64xf32>
    %2 = vector.multi_reduction <add>, %1, %cst [1] : vector<64x32xf32> to vector<64xf32>
    %3 = vector.shape_cast %2 : vector<64xf32> to vector<64x1xf32>
    %cst_2 = arith.constant 3.200000e+01 : f32
    %4 = vector.broadcast %cst_2 : f32 to vector<64x1xf32>
    %5 = arith.divf %3, %4 : vector<64x1xf32>
    %6 = vector.broadcast %5 : vector<64x1xf32> to vector<64x32xf32>
    %7 = arith.subf %1, %6 : vector<64x32xf32>
    %8 = arith.mulf %7, %7 : vector<64x32xf32>
    %cst_3 = arith.constant dense<0.000000e+00> : vector<64xf32>
    %9 = vector.multi_reduction <add>, %8, %cst_3 [1] : vector<64x32xf32> to vector<64xf32>
    %10 = vector.shape_cast %9 : vector<64xf32> to vector<64x1xf32>
    %cst_4 = arith.constant 3.200000e+01 : f32
    %11 = vector.broadcast %cst_4 : f32 to vector<64x1xf32>
    %12 = arith.divf %10, %11 : vector<64x1xf32>
    %13 = vector.broadcast %5 : vector<64x1xf32> to vector<64x32xf32>
    %14 = arith.subf %1, %13 : vector<64x32xf32>
    %cst_5 = arith.constant 9.99999974E-6 : f32
    %15 = vector.broadcast %cst_5 : f32 to vector<64x1xf32>
    %16 = arith.addf %12, %15 : vector<64x1xf32>
    %17 = math.rsqrt %16 : vector<64x1xf32>
    %18 = vector.broadcast %17 : vector<64x1xf32> to vector<64x32xf32>
    %19 = arith.mulf %14, %18 : vector<64x32xf32>
    %c0_6 = arith.constant 0 : index
    %c0_7 = arith.constant 0 : index
    %20 = vector.load %arg2[%c0_6, %c0_7] : memref<1x32xf32, #tpu.memory_space<vmem>>, vector<1x32xf32>
    %21 = vector.broadcast %20 : vector<1x32xf32> to vector<64x32xf32>
    %22 = arith.mulf %19, %21 : vector<64x32xf32>
    %c0_8 = arith.constant 0 : index
    %c0_9 = arith.constant 0 : index
    %23 = vector.load %arg3[%c0_8, %c0_9] : memref<1x32xf32, #tpu.memory_space<vmem>>, vector<1x32xf32>
    %24 = vector.broadcast %23 : vector<1x32xf32> to vector<64x32xf32>
    %25 = arith.addf %22, %24 : vector<64x32xf32>
    %26 = arith.truncf %25 : vector<64x32xf32> to vector<64x32xbf16>
    %c0_10 = arith.constant 0 : index
    %c0_11 = arith.constant 0 : index
    %27 = vector.load %arg4[%c0_10, %c0_11] : memref<32x96xbf16, #tpu.memory_space<vmem>>, vector<32x96xbf16>
    %cst_12 = arith.constant dense<0.000000e+00> : vector<64x96xf32>
    %28 = tpu.matmul %26, %27, %cst_12 {dimension_numbers = #tpu.dot_dimension_numbers<[1], [0], [0], [1], [0, 0, 1, 1], [], []>} : vector<64x32xbf16>, vector<32x96xbf16>, vector<64x96xf32> -> vector<64x96xf32>
    %29 = vector.extract_strided_slice %28 {offsets = [0, 0], sizes = [64, 8], strides = [1, 1]} : vector<64x96xf32> to vector<64x8xf32>
    %30 = vector.extract_strided_slice %28 {offsets = [0, 32], sizes = [64, 8], strides = [1, 1]} : vector<64x96xf32> to vector<64x8xf32>
    %31 = vector.extract_strided_slice %28 {offsets = [0, 64], sizes = [64, 8], strides = [1, 1]} : vector<64x96xf32> to vector<64x8xf32>
    %32 = arith.truncf %29 : vector<64x8xf32> to vector<64x8xbf16>
    %33 = arith.truncf %30 : vector<64x8xf32> to vector<64x8xbf16>
    %cst_13 = arith.constant dense<0.000000e+00> : vector<64x64xf32>
    %34 = tpu.matmul %32, %33, %cst_13 {dimension_numbers = #tpu.dot_dimension_numbers<[1], [1], [0], [0], [0, 0, 1, 0], [], []>} : vector<64x8xbf16>, vector<64x8xbf16>, vector<64x64xf32> -> vector<64x64xf32>
    %cst_14 = arith.constant dense<0xFF800000> : vector<64xf32>
    %35 = vector.multi_reduction <maximumf>, %34, %cst_14 [1] : vector<64x64xf32> to vector<64xf32>
    %36 = vector.shape_cast %35 : vector<64xf32> to vector<64x1xf32>
    %37 = vector.broadcast %36 : vector<64x1xf32> to vector<64x64xf32>
    %38 = arith.subf %34, %37 : vector<64x64xf32>
    %39 = math.exp %38 : vector<64x64xf32>
    %cst_15 = arith.constant dense<0.000000e+00> : vector<64xf32>
    %40 = vector.multi_reduction <add>, %39, %cst_15 [1] : vector<64x64xf32> to vector<64xf32>
    %41 = vector.shape_cast %40 : vector<64xf32> to vector<64x1xf32>
    %42 = tpu.reciprocal %41 {approx = true} : vector<64x1xf32> -> vector<64x1xf32>
    %43 = vector.broadcast %42 : vector<64x1xf32> to vector<64x64xf32>
    %44 = arith.mulf %39, %43 : vector<64x64xf32>
    %45 = arith.truncf %44 : vector<64x64xf32> to vector<64x64xbf16>
    %46 = arith.truncf %31 : vector<64x8xf32> to vector<64x8xbf16>
    %cst_16 = arith.constant dense<0.000000e+00> : vector<64x8xf32>
    %47 = tpu.matmul %45, %46, %cst_16 {dimension_numbers = #tpu.dot_dimension_numbers<[1], [0], [0], [1], [0, 0, 1, 1], [], []>} : vector<64x64xbf16>, vector<64x8xbf16>, vector<64x8xf32> -> vector<64x8xf32>
    %48 = vector.extract_strided_slice %28 {offsets = [0, 8], sizes = [64, 8], strides = [1, 1]} : vector<64x96xf32> to vector<64x8xf32>
    %49 = vector.extract_strided_slice %28 {offsets = [0, 40], sizes = [64, 8], strides = [1, 1]} : vector<64x96xf32> to vector<64x8xf32>
    %50 = vector.extract_strided_slice %28 {offsets = [0, 72], sizes = [64, 8], strides = [1, 1]} : vector<64x96xf32> to vector<64x8xf32>
    %51 = arith.truncf %48 : vector<64x8xf32> to vector<64x8xbf16>
    %52 = arith.truncf %49 : vector<64x8xf32> to vector<64x8xbf16>
    %cst_17 = arith.constant dense<0.000000e+00> : vector<64x64xf32>
    %53 = tpu.matmul %51, %52, %cst_17 {dimension_numbers = #tpu.dot_dimension_numbers<[1], [1], [0], [0], [0, 0, 1, 0], [], []>} : vector<64x8xbf16>, vector<64x8xbf16>, vector<64x64xf32> -> vector<64x64xf32>
    %cst_18 = arith.constant dense<0xFF800000> : vector<64xf32>
    %54 = vector.multi_reduction <maximumf>, %53, %cst_18 [1] : vector<64x64xf32> to vector<64xf32>
    %55 = vector.shape_cast %54 : vector<64xf32> to vector<64x1xf32>
    %56 = vector.broadcast %55 : vector<64x1xf32> to vector<64x64xf32>
    %57 = arith.subf %53, %56 : vector<64x64xf32>
    %58 = math.exp %57 : vector<64x64xf32>
    %cst_19 = arith.constant dense<0.000000e+00> : vector<64xf32>
    %59 = vector.multi_reduction <add>, %58, %cst_19 [1] : vector<64x64xf32> to vector<64xf32>
    %60 = vector.shape_cast %59 : vector<64xf32> to vector<64x1xf32>
    %61 = tpu.reciprocal %60 {approx = true} : vector<64x1xf32> -> vector<64x1xf32>
    %62 = vector.broadcast %61 : vector<64x1xf32> to vector<64x64xf32>
    %63 = arith.mulf %58, %62 : vector<64x64xf32>
    %64 = arith.truncf %63 : vector<64x64xf32> to vector<64x64xbf16>
    %65 = arith.truncf %50 : vector<64x8xf32> to vector<64x8xbf16>
    %cst_20 = arith.constant dense<0.000000e+00> : vector<64x8xf32>
    %66 = tpu.matmul %64, %65, %cst_20 {dimension_numbers = #tpu.dot_dimension_numbers<[1], [0], [0], [1], [0, 0, 1, 1], [], []>} : vector<64x64xbf16>, vector<64x8xbf16>, vector<64x8xf32> -> vector<64x8xf32>
    %67 = vector.extract_strided_slice %28 {offsets = [0, 16], sizes = [64, 8], strides = [1, 1]} : vector<64x96xf32> to vector<64x8xf32>
    %68 = vector.extract_strided_slice %28 {offsets = [0, 48], sizes = [64, 8], strides = [1, 1]} : vector<64x96xf32> to vector<64x8xf32>
    %69 = vector.extract_strided_slice %28 {offsets = [0, 80], sizes = [64, 8], strides = [1, 1]} : vector<64x96xf32> to vector<64x8xf32>
    %70 = arith.truncf %67 : vector<64x8xf32> to vector<64x8xbf16>
    %71 = arith.truncf %68 : vector<64x8xf32> to vector<64x8xbf16>
    %cst_21 = arith.constant dense<0.000000e+00> : vector<64x64xf32>
    %72 = tpu.matmul %70, %71, %cst_21 {dimension_numbers = #tpu.dot_dimension_numbers<[1], [1], [0], [0], [0, 0, 1, 0], [], []>} : vector<64x8xbf16>, vector<64x8xbf16>, vector<64x64xf32> -> vector<64x64xf32>
    %cst_22 = arith.constant dense<0xFF800000> : vector<64xf32>
    %73 = vector.multi_reduction <maximumf>, %72, %cst_22 [1] : vector<64x64xf32> to vector<64xf32>
    %74 = vector.shape_cast %73 : vector<64xf32> to vector<64x1xf32>
    %75 = vector.broadcast %74 : vector<64x1xf32> to vector<64x64xf32>
    %76 = arith.subf %72, %75 : vector<64x64xf32>
    %77 = math.exp %76 : vector<64x64xf32>
    %cst_23 = arith.constant dense<0.000000e+00> : vector<64xf32>
    %78 = vector.multi_reduction <add>, %77, %cst_23 [1] : vector<64x64xf32> to vector<64xf32>
    %79 = vector.shape_cast %78 : vector<64xf32> to vector<64x1xf32>
    %80 = tpu.reciprocal %79 {approx = true} : vector<64x1xf32> -> vector<64x1xf32>
    %81 = vector.broadcast %80 : vector<64x1xf32> to vector<64x64xf32>
    %82 = arith.mulf %77, %81 : vector<64x64xf32>
    %83 = arith.truncf %82 : vector<64x64xf32> to vector<64x64xbf16>
    %84 = arith.truncf %69 : vector<64x8xf32> to vector<64x8xbf16>
    %cst_24 = arith.constant dense<0.000000e+00> : vector<64x8xf32>
    %85 = tpu.matmul %83, %84, %cst_24 {dimension_numbers = #tpu.dot_dimension_numbers<[1], [0], [0], [1], [0, 0, 1, 1], [], []>} : vector<64x64xbf16>, vector<64x8xbf16>, vector<64x8xf32> -> vector<64x8xf32>
    %86 = vector.extract_strided_slice %28 {offsets = [0, 24], sizes = [64, 8], strides = [1, 1]} : vector<64x96xf32> to vector<64x8xf32>
    %87 = vector.extract_strided_slice %28 {offsets = [0, 56], sizes = [64, 8], strides = [1, 1]} : vector<64x96xf32> to vector<64x8xf32>
    %88 = vector.extract_strided_slice %28 {offsets = [0, 88], sizes = [64, 8], strides = [1, 1]} : vector<64x96xf32> to vector<64x8xf32>
    %89 = arith.truncf %86 : vector<64x8xf32> to vector<64x8xbf16>
    %90 = arith.truncf %87 : vector<64x8xf32> to vector<64x8xbf16>
    %cst_25 = arith.constant dense<0.000000e+00> : vector<64x64xf32>
    %91 = tpu.matmul %89, %90, %cst_25 {dimension_numbers = #tpu.dot_dimension_numbers<[1], [1], [0], [0], [0, 0, 1, 0], [], []>} : vector<64x8xbf16>, vector<64x8xbf16>, vector<64x64xf32> -> vector<64x64xf32>
    %cst_26 = arith.constant dense<0xFF800000> : vector<64xf32>
    %92 = vector.multi_reduction <maximumf>, %91, %cst_26 [1] : vector<64x64xf32> to vector<64xf32>
    %93 = vector.shape_cast %92 : vector<64xf32> to vector<64x1xf32>
    %94 = vector.broadcast %93 : vector<64x1xf32> to vector<64x64xf32>
    %95 = arith.subf %91, %94 : vector<64x64xf32>
    %96 = math.exp %95 : vector<64x64xf32>
    %cst_27 = arith.constant dense<0.000000e+00> : vector<64xf32>
    %97 = vector.multi_reduction <add>, %96, %cst_27 [1] : vector<64x64xf32> to vector<64xf32>
    %98 = vector.shape_cast %97 : vector<64xf32> to vector<64x1xf32>
    %99 = tpu.reciprocal %98 {approx = true} : vector<64x1xf32> -> vector<64x1xf32>
    %100 = vector.broadcast %99 : vector<64x1xf32> to vector<64x64xf32>
    %101 = arith.mulf %96, %100 : vector<64x64xf32>
    %102 = arith.truncf %101 : vector<64x64xf32> to vector<64x64xbf16>
    %103 = arith.truncf %88 : vector<64x8xf32> to vector<64x8xbf16>
    %cst_28 = arith.constant dense<0.000000e+00> : vector<64x8xf32>
    %104 = tpu.matmul %102, %103, %cst_28 {dimension_numbers = #tpu.dot_dimension_numbers<[1], [0], [0], [1], [0, 0, 1, 1], [], []>} : vector<64x64xbf16>, vector<64x8xbf16>, vector<64x8xf32> -> vector<64x8xf32>
    %105 = tpu.concatenate %47, %66, %85, %104 in 1 : vector<64x8xf32>, vector<64x8xf32>, vector<64x8xf32>, vector<64x8xf32> -> vector<64x32xf32>
    %106 = arith.truncf %105 : vector<64x32xf32> to vector<64x32xbf16>
    %c0_29 = arith.constant 0 : index
    %c0_30 = arith.constant 0 : index
    %107 = vector.load %arg5[%c0_29, %c0_30] : memref<32x32xbf16, #tpu.memory_space<vmem>>, vector<32x32xbf16>
    %cst_31 = arith.constant dense<0.000000e+00> : vector<64x32xf32>
    %108 = tpu.matmul %106, %107, %cst_31 {dimension_numbers = #tpu.dot_dimension_numbers<[1], [0], [0], [1], [0, 0, 1, 1], [], []>} : vector<64x32xbf16>, vector<32x32xbf16>, vector<64x32xf32> -> vector<64x32xf32>
    %109 = arith.addf %1, %108 : vector<64x32xf32>
    %c0_32 = arith.constant 0 : index
    %c0_33 = arith.constant 0 : index
    %110 = vector.load %arg6[%c0_32, %c0_33] : memref<1x32xf32, #tpu.memory_space<vmem>>, vector<1x32xf32>
    %111 = vector.broadcast %110 : vector<1x32xf32> to vector<64x32xf32>
    %112 = arith.addf %109, %111 : vector<64x32xf32>
    %cst_34 = arith.constant dense<0.000000e+00> : vector<64xf32>
    %113 = vector.multi_reduction <add>, %112, %cst_34 [1] : vector<64x32xf32> to vector<64xf32>
    %114 = vector.shape_cast %113 : vector<64xf32> to vector<64x1xf32>
    %cst_35 = arith.constant 3.200000e+01 : f32
    %115 = vector.broadcast %cst_35 : f32 to vector<64x1xf32>
    %116 = arith.divf %114, %115 : vector<64x1xf32>
    %117 = vector.broadcast %116 : vector<64x1xf32> to vector<64x32xf32>
    %118 = arith.subf %112, %117 : vector<64x32xf32>
    %119 = arith.mulf %118, %118 : vector<64x32xf32>
    %cst_36 = arith.constant dense<0.000000e+00> : vector<64xf32>
    %120 = vector.multi_reduction <add>, %119, %cst_36 [1] : vector<64x32xf32> to vector<64xf32>
    %121 = vector.shape_cast %120 : vector<64xf32> to vector<64x1xf32>
    %cst_37 = arith.constant 3.200000e+01 : f32
    %122 = vector.broadcast %cst_37 : f32 to vector<64x1xf32>
    %123 = arith.divf %121, %122 : vector<64x1xf32>
    %124 = vector.broadcast %116 : vector<64x1xf32> to vector<64x32xf32>
    %125 = arith.subf %112, %124 : vector<64x32xf32>
    %cst_38 = arith.constant 9.99999974E-6 : f32
    %126 = vector.broadcast %cst_38 : f32 to vector<64x1xf32>
    %127 = arith.addf %123, %126 : vector<64x1xf32>
    %128 = math.rsqrt %127 : vector<64x1xf32>
    %129 = vector.broadcast %128 : vector<64x1xf32> to vector<64x32xf32>
    %130 = arith.mulf %125, %129 : vector<64x32xf32>
    %c0_39 = arith.constant 0 : index
    %c0_40 = arith.constant 0 : index
    %131 = vector.load %arg7[%c0_39, %c0_40] : memref<1x32xf32, #tpu.memory_space<vmem>>, vector<1x32xf32>
    %132 = vector.broadcast %131 : vector<1x32xf32> to vector<64x32xf32>
    %133 = arith.mulf %130, %132 : vector<64x32xf32>
    %c0_41 = arith.constant 0 : index
    %c0_42 = arith.constant 0 : index
    %134 = vector.load %arg8[%c0_41, %c0_42] : memref<1x32xf32, #tpu.memory_space<vmem>>, vector<1x32xf32>
    %135 = vector.broadcast %134 : vector<1x32xf32> to vector<64x32xf32>
    %136 = arith.addf %133, %135 : vector<64x32xf32>
    %137 = arith.truncf %136 : vector<64x32xf32> to vector<64x32xbf16>
    %c0_43 = arith.constant 0 : index
    %c0_44 = arith.constant 0 : index
    %138 = vector.load %arg9[%c0_43, %c0_44] : memref<32x128xbf16, #tpu.memory_space<vmem>>, vector<32x128xbf16>
    %cst_45 = arith.constant dense<0.000000e+00> : vector<64x128xf32>
    %139 = tpu.matmul %137, %138, %cst_45 {dimension_numbers = #tpu.dot_dimension_numbers<[1], [0], [0], [1], [0, 0, 1, 1], [], []>} : vector<64x32xbf16>, vector<32x128xbf16>, vector<64x128xf32> -> vector<64x128xf32>
    %c0_46 = arith.constant 0 : index
    %c0_47 = arith.constant 0 : index
    %140 = vector.load %arg10[%c0_46, %c0_47] : memref<1x128xf32, #tpu.memory_space<vmem>>, vector<1x128xf32>
    %141 = vector.broadcast %140 : vector<1x128xf32> to vector<64x128xf32>
    %142 = arith.addf %139, %141 : vector<64x128xf32>
    %cst_48 = arith.constant 5.000000e-01 : f32
    %143 = vector.broadcast %cst_48 : f32 to vector<64x128xf32>
    %144 = arith.mulf %143, %142 : vector<64x128xf32>
    %cst_49 = arith.constant 0.707106769 : f32
    %145 = vector.broadcast %cst_49 : f32 to vector<64x128xf32>
    %146 = arith.mulf %142, %145 : vector<64x128xf32>
    %cst_50 = arith.constant 0.000000e+00 : f32
    %147 = vector.broadcast %cst_50 : f32 to vector<64x128xf32>
    %148 = arith.cmpf oge, %146, %147 : vector<64x128xf32>
    %cst_51 = arith.constant 1.000000e+00 : f32
    %cst_52 = arith.constant -1.000000e+00 : f32
    %149 = vector.broadcast %cst_51 : f32 to vector<64x128xf32>
    %150 = vector.broadcast %cst_52 : f32 to vector<64x128xf32>
    %151 = arith.select %148, %149, %150 : vector<64x128xi1>, vector<64x128xf32>
    %152 = math.absf %146 : vector<64x128xf32>
    %cst_53 = arith.constant 0.327591091 : f32
    %153 = vector.broadcast %cst_53 : f32 to vector<64x128xf32>
    %154 = arith.mulf %153, %152 : vector<64x128xf32>
    %cst_54 = arith.constant 1.000000e+00 : f32
    %155 = vector.broadcast %cst_54 : f32 to vector<64x128xf32>
    %156 = arith.addf %155, %154 : vector<64x128xf32>
    %cst_55 = arith.constant 1.000000e+00 : f32
    %157 = vector.broadcast %cst_55 : f32 to vector<64x128xf32>
    %158 = arith.divf %157, %156 : vector<64x128xf32>
    %cst_56 = arith.constant 1.06140542 : f32
    %159 = vector.broadcast %cst_56 : f32 to vector<64x128xf32>
    %160 = arith.mulf %159, %158 : vector<64x128xf32>
    %cst_57 = arith.constant -1.45315206 : f32
    %161 = vector.broadcast %cst_57 : f32 to vector<64x128xf32>
    %162 = arith.addf %160, %161 : vector<64x128xf32>
    %163 = arith.mulf %162, %158 : vector<64x128xf32>
    %cst_58 = arith.constant 1.42141378 : f32
    %164 = vector.broadcast %cst_58 : f32 to vector<64x128xf32>
    %165 = arith.addf %163, %164 : vector<64x128xf32>
    %166 = arith.mulf %165, %158 : vector<64x128xf32>
    %cst_59 = arith.constant -0.284496725 : f32
    %167 = vector.broadcast %cst_59 : f32 to vector<64x128xf32>
    %168 = arith.addf %166, %167 : vector<64x128xf32>
    %169 = arith.mulf %168, %158 : vector<64x128xf32>
    %cst_60 = arith.constant 0.254829586 : f32
    %170 = vector.broadcast %cst_60 : f32 to vector<64x128xf32>
    %171 = arith.addf %169, %170 : vector<64x128xf32>
    %172 = arith.mulf %171, %158 : vector<64x128xf32>
    %cst_61 = arith.constant 0.000000e+00 : f32
    %173 = vector.broadcast %cst_61 : f32 to vector<64x128xf32>
    %174 = arith.subf %173, %152 : vector<64x128xf32>
    %175 = arith.mulf %174, %152 : vector<64x128xf32>
    %176 = math.exp %175 : vector<64x128xf32>
    %177 = arith.mulf %172, %176 : vector<64x128xf32>
    %cst_62 = arith.constant 1.000000e+00 : f32
    %178 = vector.broadcast %cst_62 : f32 to vector<64x128xf32>
    %179 = arith.subf %178, %177 : vector<64x128xf32>
    %180 = arith.mulf %151, %179 : vector<64x128xf32>
    %cst_63 = arith.constant 1.000000e+00 : f32
    %181 = vector.broadcast %cst_63 : f32 to vector<64x128xf32>
    %182 = arith.addf %181, %180 : vector<64x128xf32>
    %183 = arith.mulf %144, %182 : vector<64x128xf32>
    %184 = arith.truncf %183 : vector<64x128xf32> to vector<64x128xbf16>
    %c0_64 = arith.constant 0 : index
    %c0_65 = arith.constant 0 : index
    %185 = vector.load %arg11[%c0_64, %c0_65] : memref<128x32xbf16, #tpu.memory_space<vmem>>, vector<128x32xbf16>
    %cst_66 = arith.constant dense<0.000000e+00> : vector<64x32xf32>
    %186 = tpu.matmul %184, %185, %cst_66 {dimension_numbers = #tpu.dot_dimension_numbers<[1], [0], [0], [1], [0, 0, 1, 1], [], []>} : vector<64x128xbf16>, vector<128x32xbf16>, vector<64x32xf32> -> vector<64x32xf32>
    %187 = arith.addf %112, %186 : vector<64x32xf32>
    %c0_67 = arith.constant 0 : index
    %c0_68 = arith.constant 0 : index
    %188 = vector.load %arg12[%c0_67, %c0_68] : memref<1x32xf32, #tpu.memory_space<vmem>>, vector<1x32xf32>
    %189 = vector.broadcast %188 : vector<1x32xf32> to vector<64x32xf32>
    %190 = arith.addf %187, %189 : vector<64x32xf32>
    %c0_69 = arith.constant 0 : index
    %c0_70 = arith.constant 0 : index
    %c0_71 = arith.constant 0 : index
    %191 = vector.load %arg13[%c0_69, %c0_70, %c0_71] : memref<1x64x32xf32, #tpu.memory_space<vmem>>, vector<1x64x32xf32>
    %192 = vector.shape_cast %191 : vector<1x64x32xf32> to vector<64x32xf32>
    %193 = vector.shape_cast %190 : vector<64x32xf32> to vector<1x64x32xf32>
    tpu.vector_store %arg13[%c0_69, %c0_70, %c0_71], %193 {strides = array<i32>} : memref<1x64x32xf32, #tpu.memory_space<vmem>>, vector<1x64x32xf32>,
    return
  }
  func.func @transform_0(%arg0: i32) -> (i32, i32, i32) {
    %c0_i32 = arith.constant 0 : i32
    %c0_i32_0 = arith.constant 0 : i32
    %c0_i32_1 = arith.constant 0 : i32
    return %arg0, %c0_i32, %c0_i32_0 : i32, i32, i32
  }
  func.func @transform_1(%arg0: i32) -> (i32, i32) {
    %c0_i32 = arith.constant 0 : i32
    %c0_i32_0 = arith.constant 0 : i32
    %c0_i32_1 = arith.constant 0 : i32
    return %c0_i32, %c0_i32_0 : i32, i32
  }
  func.func @transform_2(%arg0: i32) -> (i32, i32) {
    %c0_i32 = arith.constant 0 : i32
    %c0_i32_0 = arith.constant 0 : i32
    %c0_i32_1 = arith.constant 0 : i32
    return %c0_i32, %c0_i32_0 : i32, i32
  }
  func.func @transform_3(%arg0: i32) -> (i32, i32) {
    %c0_i32 = arith.constant 0 : i32
    %c0_i32_0 = arith.constant 0 : i32
    %c0_i32_1 = arith.constant 0 : i32
    return %c0_i32, %c0_i32_0 : i32, i32
  }
  func.func @transform_4(%arg0: i32) -> (i32, i32) {
    %c0_i32 = arith.constant 0 : i32
    %c0_i32_0 = arith.constant 0 : i32
    %c0_i32_1 = arith.constant 0 : i32
    return %c0_i32, %c0_i32_0 : i32, i32
  }
  func.func @transform_5(%arg0: i32) -> (i32, i32) {
    %c0_i32 = arith.constant 0 : i32
    %c0_i32_0 = arith.constant 0 : i32
    %c0_i32_1 = arith.constant 0 : i32
    return %c0_i32, %c0_i32_0 : i32, i32
  }
  func.func @transform_6(%arg0: i32) -> (i32, i32) {
    %c0_i32 = arith.constant 0 : i32
    %c0_i32_0 = arith.constant 0 : i32
    %c0_i32_1 = arith.constant 0 : i32
    return %c0_i32, %c0_i32_0 : i32, i32
  }
  func.func @transform_7(%arg0: i32) -> (i32, i32) {
    %c0_i32 = arith.constant 0 : i32
    %c0_i32_0 = arith.constant 0 : i32
    %c0_i32_1 = arith.constant 0 : i32
    return %c0_i32, %c0_i32_0 : i32, i32
  }
  func.func @transform_8(%arg0: i32) -> (i32, i32) {
    %c0_i32 = arith.constant 0 : i32
    %c0_i32_0 = arith.constant 0 : i32
    %c0_i32_1 = arith.constant 0 : i32
    return %c0_i32, %c0_i32_0 : i32, i32
  }
  func.func @transform_9(%arg0: i32) -> (i32, i32) {
    %c0_i32 = arith.constant 0 : i32
    %c0_i32_0 = arith.constant 0 : i32
    %c0_i32_1 = arith.constant 0 : i32
    return %c0_i32, %c0_i32_0 : i32, i32
  }
  func.func @transform_10(%arg0: i32) -> (i32, i32) {
    %c0_i32 = arith.constant 0 : i32
    %c0_i32_0 = arith.constant 0 : i32
    %c0_i32_1 = arith.constant 0 : i32
    return %c0_i32, %c0_i32_0 : i32, i32
  }
  func.func @transform_11(%arg0: i32) -> (i32, i32) {
    %c0_i32 = arith.constant 0 : i32
    %c0_i32_0 = arith.constant 0 : i32
    %c0_i32_1 = arith.constant 0 : i32
    return %c0_i32, %c0_i32_0 : i32, i32
  }
  func.func @transform_12(%arg0: i32) -> (i32, i32, i32) {
    %c0_i32 = arith.constant 0 : i32
    %c0_i32_0 = arith.constant 0 : i32
    %c0_i32_1 = arith.constant 0 : i32
    return %arg0, %c0_i32, %c0_i32_0 : i32, i32, i32
  }
}

module attributes {stable_mosaic.version = 11 : i64} {
  func.func @kernel(%arg0: i32, %arg1: memref<512x64xf32, #tpu.memory_space<vmem>>, %arg2: memref<1x64xf32, #tpu.memory_space<vmem>>, %arg3: memref<1x64xf32, #tpu.memory_space<vmem>>, %arg4: memref<64x1xbf16, #tpu.memory_space<vmem>>, %arg5: memref<1x1xf32, #tpu.memory_space<vmem>>, %arg6: memref<512x1xf32, #tpu.memory_space<vmem>>) attributes {dimension_semantics = [#tpu.dimension_semantics<parallel>], iteration_bounds = array<i64: 1>, scalar_prefetch = 0 : i64, scratch_operands = 0 : i64, tpu.core_type = #tpu.core_type<tc>, window_params = [{transform_indices = @transform_0, window_bounds = array<i64: 512, 64>}, {pipeline_mode = #tpu.pipeline_mode<synchronous>, transform_indices = @transform_1, window_bounds = array<i64: 1, 64>}, {pipeline_mode = #tpu.pipeline_mode<synchronous>, transform_indices = @transform_2, window_bounds = array<i64: 1, 64>}, {pipeline_mode = #tpu.pipeline_mode<synchronous>, transform_indices = @transform_3, window_bounds = array<i64: 64, 1>}, {pipeline_mode = #tpu.pipeline_mode<synchronous>, transform_indices = @transform_4, window_bounds = array<i64: 1, 1>}, {transform_indices = @transform_5, window_bounds = array<i64: 512, 1>}]} {
    %c0 = arith.constant 0 : index
    %c0_0 = arith.constant 0 : index
    %0 = vector.load %arg1[%c0, %c0_0] : memref<512x64xf32, #tpu.memory_space<vmem>>, vector<512x64xf32>
    %c0_1 = arith.constant 0 : index
    %c0_2 = arith.constant 0 : index
    %1 = vector.load %arg2[%c0_1, %c0_2] : memref<1x64xf32, #tpu.memory_space<vmem>>, vector<1x64xf32>
    %2 = vector.broadcast %1 : vector<1x64xf32> to vector<512x64xf32>
    %3 = arith.mulf %0, %2 : vector<512x64xf32>
    %c0_3 = arith.constant 0 : index
    %c0_4 = arith.constant 0 : index
    %4 = vector.load %arg3[%c0_3, %c0_4] : memref<1x64xf32, #tpu.memory_space<vmem>>, vector<1x64xf32>
    %5 = vector.broadcast %4 : vector<1x64xf32> to vector<512x64xf32>
    %6 = arith.addf %3, %5 : vector<512x64xf32>
    %cst = arith.constant 0.000000e+00 : f32
    %7 = vector.broadcast %cst : f32 to vector<512x64xf32>
    %8 = arith.maximumf %6, %7 : vector<512x64xf32>
    %9 = arith.truncf %8 : vector<512x64xf32> to vector<512x64xbf16>
    %c0_5 = arith.constant 0 : index
    %c0_6 = arith.constant 0 : index
    %10 = vector.load %arg4[%c0_5, %c0_6] : memref<64x1xbf16, #tpu.memory_space<vmem>>, vector<64x1xbf16>
    %cst_7 = arith.constant dense<0.000000e+00> : vector<512x1xf32>
    %11 = tpu.matmul %9, %10, %cst_7 {dimension_numbers = #tpu.dot_dimension_numbers<[1], [0], [0], [1], [0, 0, 1, 1], [], []>} : vector<512x64xbf16>, vector<64x1xbf16>, vector<512x1xf32> -> vector<512x1xf32>
    %c0_8 = arith.constant 0 : index
    %c0_9 = arith.constant 0 : index
    %12 = vector.load %arg5[%c0_8, %c0_9] : memref<1x1xf32, #tpu.memory_space<vmem>>, vector<1x1xf32>
    %13 = vector.broadcast %12 : vector<1x1xf32> to vector<512x1xf32>
    %14 = arith.addf %11, %13 : vector<512x1xf32>
    %c0_10 = arith.constant 0 : index
    %c0_11 = arith.constant 0 : index
    %15 = vector.load %arg6[%c0_10, %c0_11] : memref<512x1xf32, #tpu.memory_space<vmem>>, vector<512x1xf32>
    tpu.vector_store %arg6[%c0_10, %c0_11], %14 {strides = array<i32>} : memref<512x1xf32, #tpu.memory_space<vmem>>, vector<512x1xf32>,
    return
  }
  func.func @transform_0(%arg0: i32) -> (i32, i32) {
    %c0_i32 = arith.constant 0 : i32
    %c0_i32_0 = arith.constant 0 : i32
    return %arg0, %c0_i32 : i32, i32
  }
  func.func @transform_1(%arg0: i32) -> (i32, i32) {
    %c0_i32 = arith.constant 0 : i32
    %c0_i32_0 = arith.constant 0 : i32
    %c0_i32_1 = arith.constant 0 : i32
    return %c0_i32, %c0_i32_0 : i32, i32
  }
  func.func @transform_2(%arg0: i32) -> (i32, i32) {
    %c0_i32 = arith.constant 0 : i32
    %c0_i32_0 = arith.constant 0 : i32
    %c0_i32_1 = arith.constant 0 : i32
    return %c0_i32, %c0_i32_0 : i32, i32
  }
  func.func @transform_3(%arg0: i32) -> (i32, i32) {
    %c0_i32 = arith.constant 0 : i32
    %c0_i32_0 = arith.constant 0 : i32
    %c0_i32_1 = arith.constant 0 : i32
    return %c0_i32, %c0_i32_0 : i32, i32
  }
  func.func @transform_4(%arg0: i32) -> (i32, i32) {
    %c0_i32 = arith.constant 0 : i32
    %c0_i32_0 = arith.constant 0 : i32
    %c0_i32_1 = arith.constant 0 : i32
    return %c0_i32, %c0_i32_0 : i32, i32
  }
  func.func @transform_5(%arg0: i32) -> (i32, i32) {
    %c0_i32 = arith.constant 0 : i32
    %c0_i32_0 = arith.constant 0 : i32
    return %arg0, %c0_i32 : i32, i32
  }
}

</mosaic_0001>

<llo_original>
// kernel: tile.27
$region0: #{tile.27}
  #allocation0 [shape = 's32[1]{0}', space=sflag, size = 0x4, scoped, tag = 'scoped memory for tile.27']
  %s0 = inlined_call_operand.vmem [shape: f32[64], index: 0, kind: input, shape index: {}]
  %s1 = inlined_call_operand.vmem [shape: f32[9,64], index: 1, kind: output, shape index: {}]
  // Predicated region
  $region2: #{tile.27} parent=0 // pred_check
    _
  $region3: #{tile.27} parent=0 // pred_check_branch
    %3 = sbr.rel (0) target = $region5
  $region4: #{tile.27} parent=0 // pred_region
    _
  $region5: #{tile.27} parent=0 // pred_fallthru
    _
  %v4 = vld [vmem:[%s0] ss:$0 sm:$0xff]
  %5 = vst [vmem:[%s1] sm:$0xff] %v4
  %s6 = scalar_lea.vmem %s1, 8
  %7 = vst [vmem:[%s6] sm:$0xff] %v4

// kernel: tile.32
$region0: #{tile.32}
  %s0 = inlined_call_operand.vmem [shape: f32[9,64], index: 0, kind: input, shape index: {}]
  %s1 = inlined_call_operand.vmem [shape: f32[1,576], index: 1, kind: output, shape index: {}]
  $region1: #{tile.32} parent=0
    #allocation0 [shape = 'u8[20480]{0}', space=vmem, size = 0x5000, scoped, tag = 'scoped mem for output reshape']
    %v2 = vld [vmem:[%s0] ss:$2 sm:$0x1f]
    %vm3 = vcmask 523264
    %4 = vst.msk [vmem:[#allocation0] ss:$8 sm:$0xf] %vm3, %v2
    %s5 = scalar_lea.vmem [#allocation0], 28
    %6 = vst.msk [vmem:[%s5] sm:$0x10] %vm3, %v2
    %s7 = scalar_lea.vmem %s0, 1
    %v8 = vld [vmem:[%s7] ss:$2 sm:$0xf]
    %9 = vrot.lane.b32.xlu0 %v8, 64
    %v10 = vpop.permute.xlu0 %9
    %vm11 = vcmask 1048064
    %12 = vst.msk [vmem:[#allocation0] ss:$8 sm:$0xf] %vm11, %v10
    %s14 = ssub.s32 2, 1
    %v15 = vld [vmem:[#allocation0] sm:%s14]
    %s17 = ssub.s32 2, 1
    %18 = vst [vmem:[%s1] sm:%s17] %v15
    %s19 = scalar_lea.vmem [#allocation0], 8
    %v20 = vld [vmem:[%s19] sm:%s14]
    %s22 = ssub.s32 2, 1
    %s23 = scalar_lea.vmem %s1, 1
    %24 = vst [vmem:[%s23] sm:%s22] %v20
    %s25 = scalar_lea.vmem [#allocation0], 16
    %v26 = vld [vmem:[%s25] sm:%s14]
    %s28 = ssub.s32 2, 1
    %s29 = scalar_lea.vmem %s1, 2
    %30 = vst [vmem:[%s29] sm:%s28] %v26
    %s31 = scalar_lea.vmem [#allocation0], 24
    %v32 = vld [vmem:[%s31] sm:%s14]
    %s34 = ssub.s32 2, 1
    %s35 = scalar_lea.vmem %s1, 3
    %36 = vst [vmem:[%s35] sm:%s34] %v32
    %s37 = scalar_lea.vmem [#allocation0], 32
    %v38 = vld [vmem:[%s37] sm:%s14]
    %s40 = ssub.s32 2, 1
    %s41 = scalar_lea.vmem %s1, 4
    %42 = vst [vmem:[%s41] sm:%s40] %v38

// kernel: _lambda_.9
$region0: #{_lambda_.9}
  #allocation0 [shape = 'u32[]', space=smem, size = 0x4, offset = 0x4, fixed_abs, tag = 'smem constant byte address 0x4 - core index']
  #allocation1 [shape = 'u32[72,128]{1,0:T(1,128)}', space=vmem, size = 0x9000, scoped, tag = 'internal scratch']
  %s0 = inlined_call_operand.vmem [shape: f32[512,27], index: 0, kind: input, shape index: {}]
  %s1 = inlined_call_operand.vmem [shape: bf16[27,64], index: 1, kind: input, shape index: {}]
  %s2 = inlined_call_operand.vmem [shape: f32[1,64], index: 2, kind: input, shape index: {}]
  %s3 = inlined_call_operand.vmem [shape: f32[512,64], index: 3, kind: output, shape index: {0}]
  %s4 = inlined_call_operand.vmem [shape: f32[8,64], index: 4, kind: output, shape index: {1}]
  %s5 = inlined_call_operand.vmem [shape: f32[8,64], index: 5, kind: output, shape index: {2}]
  %6 = xla_tuple %s3, %s4, %s5
  %s7 = sld [smem:[#allocation0]]
  $region38: #{_lambda_.9} parent=0
    _
  %s9 = ssub.s32 1, %s7
  %s10 = scalar_select 0, %s9, %s7
  // Predicated region
  $region2: #{_lambda_.9} parent=0 // pred_check
    _
  $region3: #{_lambda_.9} parent=0 // pred_check_branch
    %12 = sbr.rel (0) target = $region5
  $region4: #{_lambda_.9} parent=0 // pred_region
    _
  $region5: #{_lambda_.9} parent=0 // pred_fallthru
    _
  // Predicated region
  $region6: #{_lambda_.9} parent=0 // pred_check
    _
  $region7: #{_lambda_.9} parent=0 // pred_check_branch
    %14 = sbr.rel (0) target = $region9
  $region8: #{_lambda_.9} parent=0 // pred_region
    _
  $region9: #{_lambda_.9} parent=0 // pred_fallthru
    _
  // Predicated region
  $region10: #{_lambda_.9} parent=0 // pred_check
    _
  $region11: #{_lambda_.9} parent=0 // pred_check_branch
    %16 = sbr.rel (0) target = $region13
  $region12: #{_lambda_.9} parent=0 // pred_region
    _
  $region13: #{_lambda_.9} parent=0 // pred_fallthru
    _
  %v18 = vld [vmem:[%s0] sm:$0xff]
  %v19 = vld [vmem:[%s0 + $0x8] sm:$0xff]
  %v20 = vld [vmem:[%s0 + $0x10] sm:$0xff]
  %v21 = vld [vmem:[%s0 + $0x18] sm:$0xff]
  %v22 = vld [vmem:[%s0 + $0x20] sm:$0xff]
  %v23 = vld [vmem:[%s0 + $0x28] sm:$0xff]
  %v24 = vld [vmem:[%s0 + $0x30] sm:$0xff]
  %v25 = vld [vmem:[%s0 + $0x38] sm:$0xff]
  %v26 = vld [vmem:[%s0 + $0x40] sm:$0xff]
  %v27 = vld [vmem:[%s0 + $0x48] sm:$0xff]
  %v28 = vld [vmem:[%s0 + $0x50] sm:$0xff]
  %v29 = vld [vmem:[%s0 + $0x58] sm:$0xff]
  %v30 = vld [vmem:[%s0 + $0x60] sm:$0xff]
  %v31 = vld [vmem:[%s0 + $0x68] sm:$0xff]
  %v32 = vld [vmem:[%s0 + $0x70] sm:$0xff]
  %v33 = vld [vmem:[%s0 + $0x78] sm:$0xff]
  %v34 = vld [vmem:[%s0 + $0x80] sm:$0xff]
  %v35 = vld [vmem:[%s0 + $0x88] sm:$0xff]
  %v36 = vld [vmem:[%s0 + $0x90] sm:$0xff]
  %v37 = vld [vmem:[%s0 + $0x98] sm:$0xff]
  %v38 = vld [vmem:[%s0 + $0xa0] sm:$0xff]
  %v39 = vld [vmem:[%s0 + $0xa8] sm:$0xff]
  %v40 = vld [vmem:[%s0 + $0xb0] sm:$0xff]
  %v41 = vld [vmem:[%s0 + $0xb8] sm:$0xff]
  %v42 = vld [vmem:[%s0 + $0xc0] sm:$0xff]
  %v43 = vld [vmem:[%s0 + $0xc8] sm:$0xff]
  %v44 = vld [vmem:[%s0 + $0xd0] sm:$0xff]
  %v45 = vld [vmem:[%s0 + $0xd8] sm:$0xff]
  %v46 = vld [vmem:[%s0 + $0xe0] sm:$0xff]
  %v47 = vld [vmem:[%s0 + $0xe8] sm:$0xff]
  %v48 = vld [vmem:[%s0 + $0xf0] sm:$0xff]
  %v49 = vld [vmem:[%s0 + $0xf8] sm:$0xff]
  %v50 = vld [vmem:[%s0 + $0x100] sm:$0xff]
  %v51 = vld [vmem:[%s0 + $0x108] sm:$0xff]
  %v52 = vld [vmem:[%s0 + $0x110] sm:$0xff]
  %v53 = vld [vmem:[%s0 + $0x118] sm:$0xff]
  %v54 = vld [vmem:[%s0 + $0x120] sm:$0xff]
  %v55 = vld [vmem:[%s0 + $0x128] sm:$0xff]
  %v56 = vld [vmem:[%s0 + $0x130] sm:$0xff]
  %v57 = vld [vmem:[%s0 + $0x138] sm:$0xff]
  %v58 = vld [vmem:[%s0 + $0x140] sm:$0xff]
  %v59 = vld [vmem:[%s0 + $0x148] sm:$0xff]
  %v60 = vld [vmem:[%s0 + $0x150] sm:$0xff]
  %v61 = vld [vmem:[%s0 + $0x158] sm:$0xff]
  %v62 = vld [vmem:[%s0 + $0x160] sm:$0xff]
  %v63 = vld [vmem:[%s0 + $0x168] sm:$0xff]
  %v64 = vld [vmem:[%s0 + $0x170] sm:$0xff]
  %v65 = vld [vmem:[%s0 + $0x178] sm:$0xff]
  %v66 = vld [vmem:[%s0 + $0x180] sm:$0xff]
  %v67 = vld [vmem:[%s0 + $0x188] sm:$0xff]
  %v68 = vld [vmem:[%s0 + $0x190] sm:$0xff]
  %v69 = vld [vmem:[%s0 + $0x198] sm:$0xff]
  %v70 = vld [vmem:[%s0 + $0x1a0] sm:$0xff]
  %v71 = vld [vmem:[%s0 + $0x1a8] sm:$0xff]
  %v72 = vld [vmem:[%s0 + $0x1b0] sm:$0xff]
  %v73 = vld [vmem:[%s0 + $0x1b8] sm:$0xff]
  %v74 = vld [vmem:[%s0 + $0x1c0] sm:$0xff]
  %v75 = vld [vmem:[%s0 + $0x1c8] sm:$0xff]
  %v76 = vld [vmem:[%s0 + $0x1d0] sm:$0xff]
  %v77 = vld [vmem:[%s0 + $0x1d8] sm:$0xff]
  %v78 = vld [vmem:[%s0 + $0x1e0] sm:$0xff]
  %v79 = vld [vmem:[%s0 + $0x1e8] sm:$0xff]
  %v80 = vld [vmem:[%s0 + $0x1f0] sm:$0xff]
  %v81 = vld [vmem:[%s0 + $0x1f8] sm:$0xff]
  %v82 = vpack.c.bf16 %v19, %v18
  %v83 = vpack.c.bf16 %v21, %v20
  %v84 = vpack.c.bf16 %v23, %v22
  %v85 = vpack.c.bf16 %v25, %v24
  %v86 = vpack.c.bf16 %v27, %v26
  %v87 = vpack.c.bf16 %v29, %v28
  %v88 = vpack.c.bf16 %v31, %v30
  %v89 = vpack.c.bf16 %v33, %v32
  %v90 = vpack.c.bf16 %v35, %v34
  %v91 = vpack.c.bf16 %v37, %v36
  %v92 = vpack.c.bf16 %v39, %v38
  %v93 = vpack.c.bf16 %v41, %v40
  %v94 = vpack.c.bf16 %v43, %v42
  %v95 = vpack.c.bf16 %v45, %v44
  %v96 = vpack.c.bf16 %v47, %v46
  %v97 = vpack.c.bf16 %v49, %v48
  %v98 = vpack.c.bf16 %v51, %v50
  %v99 = vpack.c.bf16 %v53, %v52
  %v100 = vpack.c.bf16 %v55, %v54
  %v101 = vpack.c.bf16 %v57, %v56
  %v102 = vpack.c.bf16 %v59, %v58
  %v103 = vpack.c.bf16 %v61, %v60
  %v104 = vpack.c.bf16 %v63, %v62
  %v105 = vpack.c.bf16 %v65, %v64
  %v106 = vpack.c.bf16 %v67, %v66
  %v107 = vpack.c.bf16 %v69, %v68
  %v108 = vpack.c.bf16 %v71, %v70
  %v109 = vpack.c.bf16 %v73, %v72
  %v110 = vpack.c.bf16 %v75, %v74
  %v111 = vpack.c.bf16 %v77, %v76
  %v112 = vpack.c.bf16 %v79, %v78
  %v113 = vpack.c.bf16 %v81, %v80
  %v114 = vld [vmem:[%s1] sm:$0xf]
  %v115 = vld [vmem:[%s1 + $0x4] sm:$0xf]
  %v116 = vld [vmem:[%s1 + $0x8] sm:$0xf]
  %v117 = vld [vmem:[%s1 + $0xc] sm:$0x3]
  %v118 = vld [vmem:[%s2] sm:$0x1]
  %v120 = vperm.slane %v118, 0
  %v126 = vunpack.c.l.b16 %v114
  %v127 = vunpack.c.l.b16 %v115
  %v128 = vunpack.c.l.b16 %v116
  %v129 = vunpack.c.l.b16 %v117
  %v130 = vpack.c.b16 %v127, %v126
  %v131 = vpack.c.b16 %v129, %v128
  %vm133 = vcmask 220160
  %v135 = vsel %vm133, %v82, 0
  %v138 = vsel %vm133, %v83, 0
  %v141 = vsel %vm133, %v84, 0
  %v144 = vsel %vm133, %v85, 0
  %v147 = vsel %vm133, %v86, 0
  %v150 = vsel %vm133, %v87, 0
  %v153 = vsel %vm133, %v88, 0
  %v156 = vsel %vm133, %v89, 0
  %v159 = vsel %vm133, %v90, 0
  %v162 = vsel %vm133, %v91, 0
  %v165 = vsel %vm133, %v92, 0
  %v168 = vsel %vm133, %v93, 0
  %v171 = vsel %vm133, %v94, 0
  %v174 = vsel %vm133, %v95, 0
  %v177 = vsel %vm133, %v96, 0
  %v180 = vsel %vm133, %v97, 0
  %v183 = vsel %vm133, %v98, 0
  %v186 = vsel %vm133, %v99, 0
  %v189 = vsel %vm133, %v100, 0
  %v192 = vsel %vm133, %v101, 0
  %v195 = vsel %vm133, %v102, 0
  %v198 = vsel %vm133, %v103, 0
  %v201 = vsel %vm133, %v104, 0
  %v204 = vsel %vm133, %v105, 0
  %v207 = vsel %vm133, %v106, 0
  %v210 = vsel %vm133, %v107, 0
  %v213 = vsel %vm133, %v108, 0
  %v216 = vsel %vm133, %v109, 0
  %v219 = vsel %vm133, %v110, 0
  %v222 = vsel %vm133, %v111, 0
  %v225 = vsel %vm133, %v112, 0
  %v228 = vsel %vm133, %v113, 0
  %vm230 = vcmask 1044480
  %vm231 = vcmask 1045504
  %v232 = vsel %vm230, 4294967295, 65535
  %v233 = vsel %vm231, %v232, 0
  %v235 = vand.u32 %v131, %v233
  %237 = vmatpush.bf16.msra.mxu0 0
  %238 = vmatpush.bf16.msra.mxu0 0
  %239 = vmatpush.bf16.msra.mxu0 0
  %240 = vmatpush.bf16.msra.mxu0 0
  %241 = vmatpush.bf16.msra.mxu0 0
  %242 = vmatpush.bf16.msra.mxu0 0
  %243 = vmatpush.bf16.msra.mxu0 %v235
  %244 = vmatpush.bf16.msra.mxu0 %v130
  %245 = vmatmul.bf16.gmra.mxu0 %v135
  %v246 = vpop.f32.mrf.mxu0
  %v247 = vadd.f32 %v120, %v246
  %v248 = vpop.f32.mrf.mxu0
  %v249 = vadd.f32 %v120, %v248
  %250 = vmatmul.bf16.gmra.mxu0 %v138
  %v251 = vpop.f32.mrf.mxu0
  %v252 = vadd.f32 %v120, %v251
  %v253 = vpop.f32.mrf.mxu0
  %v254 = vadd.f32 %v120, %v253
  %255 = vmatmul.bf16.gmra.mxu0 %v141
  %v256 = vpop.f32.mrf.mxu0
  %v257 = vadd.f32 %v120, %v256
  %v258 = vpop.f32.mrf.mxu0
  %v259 = vadd.f32 %v120, %v258
  %260 = vmatmul.bf16.gmra.mxu0 %v144
  %v261 = vpop.f32.mrf.mxu0
  %v262 = vadd.f32 %v120, %v261
  %v263 = vpop.f32.mrf.mxu0
  %v264 = vadd.f32 %v120, %v263
  %265 = vmatmul.bf16.gmra.mxu0 %v147
  %v266 = vpop.f32.mrf.mxu0
  %v267 = vadd.f32 %v120, %v266
  %v268 = vpop.f32.mrf.mxu0
  %v269 = vadd.f32 %v120, %v268
  %270 = vmatmul.bf16.gmra.mxu0 %v150
  %v271 = vpop.f32.mrf.mxu0
  %v272 = vadd.f32 %v120, %v271
  %v273 = vpop.f32.mrf.mxu0
  %v274 = vadd.f32 %v120, %v273
  %275 = vmatmul.bf16.gmra.mxu0 %v153
  %v276 = vpop.f32.mrf.mxu0
  %v277 = vadd.f32 %v120, %v276
  %v278 = vpop.f32.mrf.mxu0
  %v279 = vadd.f32 %v120, %v278
  %280 = vmatmul.bf16.gmra.mxu0 %v156
  %v281 = vpop.f32.mrf.mxu0
  %v282 = vadd.f32 %v120, %v281
  %v283 = vpop.f32.mrf.mxu0
  %v284 = vadd.f32 %v120, %v283
  %285 = vmatmul.bf16.gmra.mxu0 %v159
  %v286 = vpop.f32.mrf.mxu0
  %v287 = vadd.f32 %v120, %v286
  %v288 = vpop.f32.mrf.mxu0
  %v289 = vadd.f32 %v120, %v288
  %290 = vmatmul.bf16.gmra.mxu0 %v162
  %v291 = vpop.f32.mrf.mxu0
  %v292 = vadd.f32 %v120, %v291
  %v293 = vpop.f32.mrf.mxu0
  %v294 = vadd.f32 %v120, %v293
  %295 = vmatmul.bf16.gmra.mxu0 %v165
  %v296 = vpop.f32.mrf.mxu0
  %v297 = vadd.f32 %v120, %v296
  %v298 = vpop.f32.mrf.mxu0
  %v299 = vadd.f32 %v120, %v298
  %300 = vmatmul.bf16.gmra.mxu0 %v168
  %v301 = vpop.f32.mrf.mxu0
  %v302 = vadd.f32 %v120, %v301
  %v303 = vpop.f32.mrf.mxu0
  %v304 = vadd.f32 %v120, %v303
  %305 = vmatmul.bf16.gmra.mxu0 %v171
  %v306 = vpop.f32.mrf.mxu0
  %v307 = vadd.f32 %v120, %v306
  %v308 = vpop.f32.mrf.mxu0
  %v309 = vadd.f32 %v120, %v308
  %310 = vmatmul.bf16.gmra.mxu0 %v174
  %v311 = vpop.f32.mrf.mxu0
  %v312 = vadd.f32 %v120, %v311
  %v313 = vpop.f32.mrf.mxu0
  %v314 = vadd.f32 %v120, %v313
  %315 = vmatmul.bf16.gmra.mxu0 %v177
  %v316 = vpop.f32.mrf.mxu0
  %v317 = vadd.f32 %v120, %v316
  %v318 = vpop.f32.mrf.mxu0
  %v319 = vadd.f32 %v120, %v318
  %320 = vmatmul.bf16.gmra.mxu0 %v180
  %v321 = vpop.f32.mrf.mxu0
  %v322 = vadd.f32 %v120, %v321
  %v323 = vpop.f32.mrf.mxu0
  %v324 = vadd.f32 %v120, %v323
  %325 = vmatmul.bf16.gmra.mxu0 %v183
  %v326 = vpop.f32.mrf.mxu0
  %v327 = vadd.f32 %v120, %v326
  %v328 = vpop.f32.mrf.mxu0
  %v329 = vadd.f32 %v120, %v328
  %330 = vmatmul.bf16.gmra.mxu0 %v186
  %v331 = vpop.f32.mrf.mxu0
  %v332 = vadd.f32 %v120, %v331
  %v333 = vpop.f32.mrf.mxu0
  %v334 = vadd.f32 %v120, %v333
  %335 = vmatmul.bf16.gmra.mxu0 %v189
  %v336 = vpop.f32.mrf.mxu0
  %v337 = vadd.f32 %v120, %v336
  %v338 = vpop.f32.mrf.mxu0
  %v339 = vadd.f32 %v120, %v338
  %340 = vmatmul.bf16.gmra.mxu0 %v192
  %v341 = vpop.f32.mrf.mxu0
  %v342 = vadd.f32 %v120, %v341
  %v343 = vpop.f32.mrf.mxu0
  %v344 = vadd.f32 %v120, %v343
  %345 = vmatmul.bf16.gmra.mxu0 %v195
  %v346 = vpop.f32.mrf.mxu0
  %v347 = vadd.f32 %v120, %v346
  %v348 = vpop.f32.mrf.mxu0
  %v349 = vadd.f32 %v120, %v348
  %350 = vmatmul.bf16.gmra.mxu0 %v198
  %v351 = vpop.f32.mrf.mxu0
  %v352 = vadd.f32 %v120, %v351
  %v353 = vpop.f32.mrf.mxu0
  %v354 = vadd.f32 %v120, %v353
  %355 = vmatmul.bf16.gmra.mxu0 %v201
  %v356 = vpop.f32.mrf.mxu0
  %v357 = vadd.f32 %v120, %v356
  %v358 = vpop.f32.mrf.mxu0
  %v359 = vadd.f32 %v120, %v358
  %360 = vmatmul.bf16.gmra.mxu0 %v204
  %v361 = vpop.f32.mrf.mxu0
  %v362 = vadd.f32 %v120, %v361
  %v363 = vpop.f32.mrf.mxu0
  %v364 = vadd.f32 %v120, %v363
  %365 = vmatmul.bf16.gmra.mxu0 %v207
  %v366 = vpop.f32.mrf.mxu0
  %v367 = vadd.f32 %v120, %v366
  %v368 = vpop.f32.mrf.mxu0
  %v369 = vadd.f32 %v120, %v368
  %370 = vmatmul.bf16.gmra.mxu0 %v210
  %v371 = vpop.f32.mrf.mxu0
  %v372 = vadd.f32 %v120, %v371
  %v373 = vpop.f32.mrf.mxu0
  %v374 = vadd.f32 %v120, %v373
  %375 = vmatmul.bf16.gmra.mxu0 %v213
  %v376 = vpop.f32.mrf.mxu0
  %v377 = vadd.f32 %v120, %v376
  %v378 = vpop.f32.mrf.mxu0
  %v379 = vadd.f32 %v120, %v378
  %380 = vmatmul.bf16.gmra.mxu0 %v216
  %v381 = vpop.f32.mrf.mxu0
  %v382 = vadd.f32 %v120, %v381
  %v383 = vpop.f32.mrf.mxu0
  %v384 = vadd.f32 %v120, %v383
  %385 = vmatmul.bf16.gmra.mxu0 %v219
  %v386 = vpop.f32.mrf.mxu0
  %v387 = vadd.f32 %v120, %v386
  %v388 = vpop.f32.mrf.mxu0
  %v389 = vadd.f32 %v120, %v388
  %390 = vmatmul.bf16.gmra.mxu0 %v222
  %v391 = vpop.f32.mrf.mxu0
  %v392 = vadd.f32 %v120, %v391
  %v393 = vpop.f32.mrf.mxu0
  %v394 = vadd.f32 %v120, %v393
  %395 = vmatmul.bf16.gmra.mxu0 %v225
  %v396 = vpop.f32.mrf.mxu0
  %v397 = vadd.f32 %v120, %v396
  %v398 = vpop.f32.mrf.mxu0
  %v399 = vadd.f32 %v120, %v398
  %400 = vmatmul.bf16.gmra.mxu0 %v228
  %v401 = vpop.f32.mrf.mxu0
  %v402 = vadd.f32 %v120, %v401
  %v403 = vpop.f32.mrf.mxu0
  %v404 = vadd.f32 %v120, %v403
  %405 = vdwg.mxu0
  %vm406 = vcmask 523264
  %v407 = vsel %vm406, %v247, 0.0
  %v408 = vsel %vm406, %v249, 0.0
  %v409 = vadd.f32 %v407, %v408
  %v410 = vsel %vm406, %v252, 0.0
  %v411 = vadd.f32 %v409, %v410
  %v412 = vsel %vm406, %v254, 0.0
  %v413 = vadd.f32 %v411, %v412
  %v414 = vsel %vm406, %v257, 0.0
  %v415 = vadd.f32 %v413, %v414
  %v416 = vsel %vm406, %v259, 0.0
  %v417 = vadd.f32 %v415, %v416
  %v418 = vsel %vm406, %v262, 0.0
  %v419 = vadd.f32 %v417, %v418
  %v420 = vsel %vm406, %v264, 0.0
  %v421 = vadd.f32 %v419, %v420
  %v422 = vsel %vm406, %v267, 0.0
  %v423 = vadd.f32 %v421, %v422
  %v424 = vsel %vm406, %v269, 0.0
  %v425 = vadd.f32 %v423, %v424
  %v426 = vsel %vm406, %v272, 0.0
  %v427 = vadd.f32 %v425, %v426
  %v428 = vsel %vm406, %v274, 0.0
  %v429 = vadd.f32 %v427, %v428
  %v430 = vsel %vm406, %v277, 0.0
  %v431 = vadd.f32 %v429, %v430
  %v432 = vsel %vm406, %v279, 0.0
  %v433 = vadd.f32 %v431, %v432
  %v434 = vsel %vm406, %v282, 0.0
  %v435 = vadd.f32 %v433, %v434
  %v436 = vsel %vm406, %v284, 0.0
  %v437 = vadd.f32 %v435, %v436
  %v438 = vsel %vm406, %v287, 0.0
  %v439 = vadd.f32 %v437, %v438
  %v440 = vsel %vm406, %v289, 0.0
  %v441 = vadd.f32 %v439, %v440
  %v442 = vsel %vm406, %v292, 0.0
  %v443 = vadd.f32 %v441, %v442
  %v444 = vsel %vm406, %v294, 0.0
  %v445 = vadd.f32 %v443, %v444
  %v446 = vsel %vm406, %v297, 0.0
  %v447 = vadd.f32 %v445, %v446
  %v448 = vsel %vm406, %v299, 0.0
  %v449 = vadd.f32 %v447, %v448
  %v450 = vsel %vm406, %v302, 0.0
  %v451 = vadd.f32 %v449, %v450
  %v452 = vsel %vm406, %v304, 0.0
  %v453 = vadd.f32 %v451, %v452
  %v454 = vsel %vm406, %v307, 0.0
  %v455 = vadd.f32 %v453, %v454
  %v456 = vsel %vm406, %v309, 0.0
  %v457 = vadd.f32 %v455, %v456
  %v458 = vsel %vm406, %v312, 0.0
  %v459 = vadd.f32 %v457, %v458
  %v460 = vsel %vm406, %v314, 0.0
  %v461 = vadd.f32 %v459, %v460
  %v462 = vsel %vm406, %v317, 0.0
  %v463 = vadd.f32 %v461, %v462
  %v464 = vsel %vm406, %v319, 0.0
  %v465 = vadd.f32 %v463, %v464
  %v466 = vsel %vm406, %v322, 0.0
  %v467 = vadd.f32 %v465, %v466
  %v468 = vsel %vm406, %v324, 0.0
  %v469 = vadd.f32 %v467, %v468
  %v470 = vsel %vm406, %v327, 0.0
  %v471 = vadd.f32 %v469, %v470
  %v472 = vsel %vm406, %v329, 0.0
  %v473 = vadd.f32 %v471, %v472
  %v474 = vsel %vm406, %v332, 0.0
  %v475 = vadd.f32 %v473, %v474
  %v476 = vsel %vm406, %v334, 0.0
  %v477 = vadd.f32 %v475, %v476
  %v478 = vsel %vm406, %v337, 0.0
  %v479 = vadd.f32 %v477, %v478
  %v480 = vsel %vm406, %v339, 0.0
  %v481 = vadd.f32 %v479, %v480
  %v482 = vsel %vm406, %v342, 0.0
  %v483 = vadd.f32 %v481, %v482
  %v484 = vsel %vm406, %v344, 0.0
  %v485 = vadd.f32 %v483, %v484
  %v486 = vsel %vm406, %v347, 0.0
  %v487 = vadd.f32 %v485, %v486
  %v488 = vsel %vm406, %v349, 0.0
  %v489 = vadd.f32 %v487, %v488
  %v490 = vsel %vm406, %v352, 0.0
  %v491 = vadd.f32 %v489, %v490
  %v492 = vsel %vm406, %v354, 0.0
  %v493 = vadd.f32 %v491, %v492
  %v494 = vsel %vm406, %v357, 0.0
  %v495 = vadd.f32 %v493, %v494
  %v496 = vsel %vm406, %v359, 0.0
  %v497 = vadd.f32 %v495, %v496
  %v498 = vsel %vm406, %v362, 0.0
  %v499 = vadd.f32 %v497, %v498
  %v500 = vsel %vm406, %v364, 0.0
  %v501 = vadd.f32 %v499, %v500
  %v502 = vsel %vm406, %v367, 0.0
  %v503 = vadd.f32 %v501, %v502
  %v504 = vsel %vm406, %v369, 0.0
  %v505 = vadd.f32 %v503, %v504
  %v506 = vsel %vm406, %v372, 0.0
  %v507 = vadd.f32 %v505, %v506
  %v508 = vsel %vm406, %v374, 0.0
  %v509 = vadd.f32 %v507, %v508
  %v510 = vsel %vm406, %v377, 0.0
  %v511 = vadd.f32 %v509, %v510
  %v512 = vsel %vm406, %v379, 0.0
  %v513 = vadd.f32 %v511, %v512
  %v514 = vsel %vm406, %v382, 0.0
  %v515 = vadd.f32 %v513, %v514
  %v516 = vsel %vm406, %v384, 0.0
  %v517 = vadd.f32 %v515, %v516
  %v518 = vsel %vm406, %v387, 0.0
  %v519 = vadd.f32 %v517, %v518
  %v520 = vsel %vm406, %v389, 0.0
  %v521 = vadd.f32 %v519, %v520
  %v522 = vsel %vm406, %v392, 0.0
  %v523 = vadd.f32 %v521, %v522
  %v524 = vsel %vm406, %v394, 0.0
  %v525 = vadd.f32 %v523, %v524
  %v526 = vsel %vm406, %v397, 0.0
  %v527 = vadd.f32 %v525, %v526
  %v528 = vsel %vm406, %v399, 0.0
  %v529 = vadd.f32 %v527, %v528
  %v530 = vsel %vm406, %v402, 0.0
  %v531 = vadd.f32 %v529, %v530
  %v532 = vsel %vm406, %v404, 0.0
  %v533 = vadd.f32 %v531, %v532
  %v534 = vrot.slane %v533, 4
  %v535 = vadd.f32 %v533, %v534
  %v536 = vrot.slane %v535, 2
  %v537 = vadd.f32 %v535, %v536
  %v538 = vrot.slane %v537, 1
  %v539 = vadd.f32 %v537, %v538
  %540 = vst.msk [vmem:[%s4] sm:$0xff] %vm406, %v539
  %v541 = vmul.f32 %v247, %v247
  %v542 = vmul.f32 %v249, %v249
  %v543 = vmul.f32 %v252, %v252
  %v544 = vmul.f32 %v254, %v254
  %v545 = vmul.f32 %v257, %v257
  %v546 = vmul.f32 %v259, %v259
  %v547 = vmul.f32 %v262, %v262
  %v548 = vmul.f32 %v264, %v264
  %v549 = vmul.f32 %v267, %v267
  %v550 = vmul.f32 %v269, %v269
  %v551 = vmul.f32 %v272, %v272
  %v552 = vmul.f32 %v274, %v274
  %v553 = vmul.f32 %v277, %v277
  %v554 = vmul.f32 %v279, %v279
  %v555 = vmul.f32 %v282, %v282
  %v556 = vmul.f32 %v284, %v284
  %v557 = vmul.f32 %v287, %v287
  %v558 = vmul.f32 %v289, %v289
  %v559 = vmul.f32 %v292, %v292
  %v560 = vmul.f32 %v294, %v294
  %v561 = vmul.f32 %v297, %v297
  %v562 = vmul.f32 %v299, %v299
  %v563 = vmul.f32 %v302, %v302
  %v564 = vmul.f32 %v304, %v304
  %v565 = vmul.f32 %v307, %v307
  %v566 = vmul.f32 %v309, %v309
  %v567 = vmul.f32 %v312, %v312
  %v568 = vmul.f32 %v314, %v314
  %v569 = vmul.f32 %v317, %v317
  %v570 = vmul.f32 %v319, %v319
  %v571 = vmul.f32 %v322, %v322
  %v572 = vmul.f32 %v324, %v324
  %v573 = vmul.f32 %v327, %v327
  %v574 = vmul.f32 %v329, %v329
  %v575 = vmul.f32 %v332, %v332
  %v576 = vmul.f32 %v334, %v334
  %v577 = vmul.f32 %v337, %v337
  %v578 = vmul.f32 %v339, %v339
  %v579 = vmul.f32 %v342, %v342
  %v580 = vmul.f32 %v344, %v344
  %v581 = vmul.f32 %v347, %v347
  %v582 = vmul.f32 %v349, %v349
  %v583 = vmul.f32 %v352, %v352
  %v584 = vmul.f32 %v354, %v354
  %v585 = vmul.f32 %v357, %v357
  %v586 = vmul.f32 %v359, %v359
  %v587 = vmul.f32 %v362, %v362
  %v588 = vmul.f32 %v364, %v364
  %v589 = vmul.f32 %v367, %v367
  %v590 = vmul.f32 %v369, %v369
  %v591 = vmul.f32 %v372, %v372
  %v592 = vmul.f32 %v374, %v374
  %v593 = vmul.f32 %v377, %v377
  %v594 = vmul.f32 %v379, %v379
  %v595 = vmul.f32 %v382, %v382
  %v596 = vmul.f32 %v384, %v384
  %v597 = vmul.f32 %v387, %v387
  %v598 = vmul.f32 %v389, %v389
  %v599 = vmul.f32 %v392, %v392
  %v600 = vmul.f32 %v394, %v394
  %v601 = vmul.f32 %v397, %v397
  %v602 = vmul.f32 %v399, %v399
  %v603 = vmul.f32 %v402, %v402
  %v604 = vmul.f32 %v404, %v404
  %v605 = vsel %vm406, %v541, 0.0
  %v606 = vsel %vm406, %v542, 0.0
  %v607 = vadd.f32 %v605, %v606
  %v608 = vsel %vm406, %v543, 0.0
  %v609 = vadd.f32 %v607, %v608
  %v610 = vsel %vm406, %v544, 0.0
  %v611 = vadd.f32 %v609, %v610
  %v612 = vsel %vm406, %v545, 0.0
  %v613 = vadd.f32 %v611, %v612
  %v614 = vsel %vm406, %v546, 0.0
  %v615 = vadd.f32 %v613, %v614
  %v616 = vsel %vm406, %v547, 0.0
  %v617 = vadd.f32 %v615, %v616
  %v618 = vsel %vm406, %v548, 0.0
  %v619 = vadd.f32 %v617, %v618
  %v620 = vsel %vm406, %v549, 0.0
  %v621 = vadd.f32 %v619, %v620
  %v622 = vsel %vm406, %v550, 0.0
  %v623 = vadd.f32 %v621, %v622
  %v624 = vsel %vm406, %v551, 0.0
  %v625 = vadd.f32 %v623, %v624
  %v626 = vsel %vm406, %v552, 0.0
  %v627 = vadd.f32 %v625, %v626
  %v628 = vsel %vm406, %v553, 0.0
  %v629 = vadd.f32 %v627, %v628
  %v630 = vsel %vm406, %v554, 0.0
  %v631 = vadd.f32 %v629, %v630
  %v632 = vsel %vm406, %v555, 0.0
  %v633 = vadd.f32 %v631, %v632
  %v634 = vsel %vm406, %v556, 0.0
  %v635 = vadd.f32 %v633, %v634
  %v636 = vsel %vm406, %v557, 0.0
  %v637 = vadd.f32 %v635, %v636
  %v638 = vsel %vm406, %v558, 0.0
  %v639 = vadd.f32 %v637, %v638
  %v640 = vsel %vm406, %v559, 0.0
  %v641 = vadd.f32 %v639, %v640
  %v642 = vsel %vm406, %v560, 0.0
  %v643 = vadd.f32 %v641, %v642
  %v644 = vsel %vm406, %v561, 0.0
  %v645 = vadd.f32 %v643, %v644
  %v646 = vsel %vm406, %v562, 0.0
  %v647 = vadd.f32 %v645, %v646
  %v648 = vsel %vm406, %v563, 0.0
  %v649 = vadd.f32 %v647, %v648
  %v650 = vsel %vm406, %v564, 0.0
  %v651 = vadd.f32 %v649, %v650
  %v652 = vsel %vm406, %v565, 0.0
  %v653 = vadd.f32 %v651, %v652
  %v654 = vsel %vm406, %v566, 0.0
  %v655 = vadd.f32 %v653, %v654
  %v656 = vsel %vm406, %v567, 0.0
  %v657 = vadd.f32 %v655, %v656
  %v658 = vsel %vm406, %v568, 0.0
  %v659 = vadd.f32 %v657, %v658
  %v660 = vsel %vm406, %v569, 0.0
  %v661 = vadd.f32 %v659, %v660
  %v662 = vsel %vm406, %v570, 0.0
  %v663 = vadd.f32 %v661, %v662
  %v664 = vsel %vm406, %v571, 0.0
  %v665 = vadd.f32 %v663, %v664
  %v666 = vsel %vm406, %v572, 0.0
  %v667 = vadd.f32 %v665, %v666
  %v668 = vsel %vm406, %v573, 0.0
  %v669 = vadd.f32 %v667, %v668
  %v670 = vsel %vm406, %v574, 0.0
  %v671 = vadd.f32 %v669, %v670
  %v672 = vsel %vm406, %v575, 0.0
  %v673 = vadd.f32 %v671, %v672
  %v674 = vsel %vm406, %v576, 0.0
  %v675 = vadd.f32 %v673, %v674
  %v676 = vsel %vm406, %v577, 0.0
  %v677 = vadd.f32 %v675, %v676
  %v678 = vsel %vm406, %v578, 0.0
  %v679 = vadd.f32 %v677, %v678
  %v680 = vsel %vm406, %v579, 0.0
  %v681 = vadd.f32 %v679, %v680
  %v682 = vsel %vm406, %v580, 0.0
  %v683 = vadd.f32 %v681, %v682
  %v684 = vsel %vm406, %v581, 0.0
  %v685 = vadd.f32 %v683, %v684
  %v686 = vsel %vm406, %v582, 0.0
  %v687 = vadd.f32 %v685, %v686
  %v688 = vsel %vm406, %v583, 0.0
  %v689 = vadd.f32 %v687, %v688
  %v690 = vsel %vm406, %v584, 0.0
  %v691 = vadd.f32 %v689, %v690
  %v692 = vsel %vm406, %v585, 0.0
  %v693 = vadd.f32 %v691, %v692
  %v694 = vsel %vm406, %v586, 0.0
  %v695 = vadd.f32 %v693, %v694
  %v696 = vsel %vm406, %v587, 0.0
  %v697 = vadd.f32 %v695, %v696
  %v698 = vsel %vm406, %v588, 0.0
  %v699 = vadd.f32 %v697, %v698
  %v700 = vsel %vm406, %v589, 0.0
  %v701 = vadd.f32 %v699, %v700
  %v702 = vsel %vm406, %v590, 0.0
  %v703 = vadd.f32 %v701, %v702
  %v704 = vsel %vm406, %v591, 0.0
  %v705 = vadd.f32 %v703, %v704
  %v706 = vsel %vm406, %v592, 0.0
  %v707 = vadd.f32 %v705, %v706
  %v708 = vsel %vm406, %v593, 0.0
  %v709 = vadd.f32 %v707, %v708
  %v710 = vsel %vm406, %v594, 0.0
  %v711 = vadd.f32 %v709, %v710
  %v712 = vsel %vm406, %v595, 0.0
  %v713 = vadd.f32 %v711, %v712
  %v714 = vsel %vm406, %v596, 0.0
  %v715 = vadd.f32 %v713, %v714
  %v716 = vsel %vm406, %v597, 0.0
  %v717 = vadd.f32 %v715, %v716
  %v718 = vsel %vm406, %v598, 0.0
  %v719 = vadd.f32 %v717, %v718
  %v720 = vsel %vm406, %v599, 0.0
  %v721 = vadd.f32 %v719, %v720
  %v722 = vsel %vm406, %v600, 0.0
  %v723 = vadd.f32 %v721, %v722
  %v724 = vsel %vm406, %v601, 0.0
  %v725 = vadd.f32 %v723, %v724
  %v726 = vsel %vm406, %v602, 0.0
  %v727 = vadd.f32 %v725, %v726
  %v728 = vsel %vm406, %v603, 0.0
  %v729 = vadd.f32 %v727, %v728
  %v730 = vsel %vm406, %v604, 0.0
  %v731 = vadd.f32 %v729, %v730
  %v732 = vrot.slane %v731, 4
  %v733 = vadd.f32 %v731, %v732
  %v734 = vrot.slane %v733, 2
  %v735 = vadd.f32 %v733, %v734
  %v736 = vrot.slane %v735, 1
  %v737 = vadd.f32 %v735, %v736
  %738 = vst.msk [vmem:[%s5] sm:$0xff] %vm406, %v737
  %739 = vst.msk [vmem:[%s3] sm:$0xff] %vm406, %v247
  %740 = vst.msk [vmem:[%s3 + $0x8] sm:$0xff] %vm406, %v249
  %741 = vst.msk [vmem:[%s3 + $0x10] sm:$0xff] %vm406, %v252
  %742 = vst.msk [vmem:[%s3 + $0x18] sm:$0xff] %vm406, %v254
  %743 = vst.msk [vmem:[%s3 + $0x20] sm:$0xff] %vm406, %v257
  %744 = vst.msk [vmem:[%s3 + $0x28] sm:$0xff] %vm406, %v259
  %745 = vst.msk [vmem:[%s3 + $0x30] sm:$0xff] %vm406, %v262
  %746 = vst.msk [vmem:[%s3 + $0x38] sm:$0xff] %vm406, %v264
  %747 = vst.msk [vmem:[%s3 + $0x40] sm:$0xff] %vm406, %v267
  %748 = vst.msk [vmem:[%s3 + $0x48] sm:$0xff] %vm406, %v269
  %749 = vst.msk [vmem:[%s3 + $0x50] sm:$0xff] %vm406, %v272
  %750 = vst.msk [vmem:[%s3 + $0x58] sm:$0xff] %vm406, %v274
  %751 = vst.msk [vmem:[%s3 + $0x60] sm:$0xff] %vm406, %v277
  %752 = vst.msk [vmem:[%s3 + $0x68] sm:$0xff] %vm406, %v279
  %753 = vst.msk [vmem:[%s3 + $0x70] sm:$0xff] %vm406, %v282
  %754 = vst.msk [vmem:[%s3 + $0x78] sm:$0xff] %vm406, %v284
  %755 = vst.msk [vmem:[%s3 + $0x80] sm:$0xff] %vm406, %v287
  %756 = vst.msk [vmem:[%s3 + $0x88] sm:$0xff] %vm406, %v289
  %757 = vst.msk [vmem:[%s3 + $0x90] sm:$0xff] %vm406, %v292
  %758 = vst.msk [vmem:[%s3 + $0x98] sm:$0xff] %vm406, %v294
  %759 = vst.msk [vmem:[%s3 + $0xa0] sm:$0xff] %vm406, %v297
  %760 = vst.msk [vmem:[%s3 + $0xa8] sm:$0xff] %vm406, %v299
  %761 = vst.msk [vmem:[%s3 + $0xb0] sm:$0xff] %vm406, %v302
  %762 = vst.msk [vmem:[%s3 + $0xb8] sm:$0xff] %vm406, %v304
  %763 = vst.msk [vmem:[%s3 + $0xc0] sm:$0xff] %vm406, %v307
  %764 = vst.msk [vmem:[%s3 + $0xc8] sm:$0xff] %vm406, %v309
  %765 = vst.msk [vmem:[%s3 + $0xd0] sm:$0xff] %vm406, %v312
  %766 = vst.msk [vmem:[%s3 + $0xd8] sm:$0xff] %vm406, %v314
  %767 = vst.msk [vmem:[%s3 + $0xe0] sm:$0xff] %vm406, %v317
  %768 = vst.msk [vmem:[%s3 + $0xe8] sm:$0xff] %vm406, %v319
  %769 = vst.msk [vmem:[%s3 + $0xf0] sm:$0xff] %vm406, %v322
  %770 = vst.msk [vmem:[%s3 + $0xf8] sm:$0xff] %vm406, %v324
  %771 = vst.msk [vmem:[%s3 + $0x100] sm:$0xff] %vm406, %v327
  %772 = vst.msk [vmem:[%s3 + $0x108] sm:$0xff] %vm406, %v329
  %773 = vst.msk [vmem:[%s3 + $0x110] sm:$0xff] %vm406, %v332
  %774 = vst.msk [vmem:[%s3 + $0x118] sm:$0xff] %vm406, %v334
  %775 = vst.msk [vmem:[%s3 + $0x120] sm:$0xff] %vm406, %v337
  %776 = vst.msk [vmem:[%s3 + $0x128] sm:$0xff] %vm406, %v339
  %777 = vst.msk [vmem:[%s3 + $0x130] sm:$0xff] %vm406, %v342
  %778 = vst.msk [vmem:[%s3 + $0x138] sm:$0xff] %vm406, %v344
  %779 = vst.msk [vmem:[%s3 + $0x140] sm:$0xff] %vm406, %v347
  %780 = vst.msk [vmem:[%s3 + $0x148] sm:$0xff] %vm406, %v349
  %781 = vst.msk [vmem:[%s3 + $0x150] sm:$0xff] %vm406, %v352
  %782 = vst.msk [vmem:[%s3 + $0x158] sm:$0xff] %vm406, %v354
  %783 = vst.msk [vmem:[%s3 + $0x160] sm:$0xff] %vm406, %v357
  %784 = vst.msk [vmem:[%s3 + $0x168] sm:$0xff] %vm406, %v359
  %785 = vst.msk [vmem:[%s3 + $0x170] sm:$0xff] %vm406, %v362
  %786 = vst.msk [vmem:[%s3 + $0x178] sm:$0xff] %vm406, %v364
  %787 = vst.msk [vmem:[%s3 + $0x180] sm:$0xff] %vm406, %v367
  %788 = vst.msk [vmem:[%s3 + $0x188] sm:$0xff] %vm406, %v369
  %789 = vst.msk [vmem:[%s3 + $0x190] sm:$0xff] %vm406, %v372
  %790 = vst.msk [vmem:[%s3 + $0x198] sm:$0xff] %vm406, %v374
  %791 = vst.msk [vmem:[%s3 + $0x1a0] sm:$0xff] %vm406, %v377
  %792 = vst.msk [vmem:[%s3 + $0x1a8] sm:$0xff] %vm406, %v379
  %793 = vst.msk [vmem:[%s3 + $0x1b0] sm:$0xff] %vm406, %v382
  %794 = vst.msk [vmem:[%s3 + $0x1b8] sm:$0xff] %vm406, %v384
  %795 = vst.msk [vmem:[%s3 + $0x1c0] sm:$0xff] %vm406, %v387
  %796 = vst.msk [vmem:[%s3 + $0x1c8] sm:$0xff] %vm406, %v389
  %797 = vst.msk [vmem:[%s3 + $0x1d0] sm:$0xff] %vm406, %v392
  %798 = vst.msk [vmem:[%s3 + $0x1d8] sm:$0xff] %vm406, %v394
  %799 = vst.msk [vmem:[%s3 + $0x1e0] sm:$0xff] %vm406, %v397
  %800 = vst.msk [vmem:[%s3 + $0x1e8] sm:$0xff] %vm406, %v399
  %801 = vst.msk [vmem:[%s3 + $0x1f0] sm:$0xff] %vm406, %v402
  %802 = vst.msk [vmem:[%s3 + $0x1f8] sm:$0xff] %vm406, %v404
  // Predicated region
  $region14: #{_lambda_.9} parent=0 // pred_check
    _
  $region15: #{_lambda_.9} parent=0 // pred_check_branch
    %804 = sbr.rel (0) target = $region17
  $region16: #{_lambda_.9} parent=0 // pred_region
    _
  $region17: #{_lambda_.9} parent=0 // pred_fallthru
    _
  // Predicated region
  $region18: #{_lambda_.9} parent=0 // pred_check
    _
  $region19: #{_lambda_.9} parent=0 // pred_check_branch
    %806 = sbr.rel (0) target = $region21
  $region20: #{_lambda_.9} parent=0 // pred_region
    _
  $region21: #{_lambda_.9} parent=0 // pred_fallthru
    _
  // Predicated region
  $region22: #{_lambda_.9} parent=0 // pred_check
    _
  $region23: #{_lambda_.9} parent=0 // pred_check_branch
    %808 = sbr.rel (0) target = $region25
  $region24: #{_lambda_.9} parent=0 // pred_region
    _
  $region25: #{_lambda_.9} parent=0 // pred_fallthru
    _
  // Predicated region
  $region26: #{_lambda_.9} parent=0 // pred_check
    _
  $region27: #{_lambda_.9} parent=0 // pred_check_branch
    %810 = sbr.rel (0) target = $region29
  $region28: #{_lambda_.9} parent=0 // pred_region
    _
  $region29: #{_lambda_.9} parent=0 // pred_fallthru
    _
  // Predicated region
  $region30: #{_lambda_.9} parent=0 // pred_check
    _
  $region31: #{_lambda_.9} parent=0 // pred_check_branch
    %812 = sbr.rel (0) target = $region33
  $region32: #{_lambda_.9} parent=0 // pred_region
    _
  $region33: #{_lambda_.9} parent=0 // pred_fallthru
    _
  // Predicated region
  $region34: #{_lambda_.9} parent=0 // pred_check
    _
  $region35: #{_lambda_.9} parent=0 // pred_check_branch
    %814 = sbr.rel (0) target = $region37
  $region36: #{_lambda_.9} parent=0 // pred_region
    _
  $region37: #{_lambda_.9} parent=0 // pred_fallthru
    _

// kernel: _lambda_.11
$region0: #{_lambda_.11}
  #allocation0 [shape = 'u32[]', space=smem, size = 0x4, offset = 0x4, fixed_abs, tag = 'smem constant byte address 0x4 - core index']
  #allocation1 [shape = 'u32[72,128]{1,0:T(1,128)}', space=vmem, size = 0x9000, scoped, tag = 'internal scratch']
  %s0 = inlined_call_operand.vmem [shape: f32[512,64], index: 0, kind: input, shape index: {}]
  %s1 = inlined_call_operand.vmem [shape: f32[1,64], index: 1, kind: input, shape index: {}]
  %s2 = inlined_call_operand.vmem [shape: f32[1,64], index: 2, kind: input, shape index: {}]
  %s3 = inlined_call_operand.vmem [shape: f32[512,64], index: 3, kind: output, shape index: {}]
  %s4 = sld [smem:[#allocation0]]
  $region22: #{_lambda_.11} parent=0
    _
  %s6 = ssub.s32 1, %s4
  %s7 = scalar_select 0, %s6, %s4
  // Predicated region
  $region2: #{_lambda_.11} parent=0 // pred_check
    _
  $region3: #{_lambda_.11} parent=0 // pred_check_branch
    %9 = sbr.rel (0) target = $region5
  $region4: #{_lambda_.11} parent=0 // pred_region
    _
  $region5: #{_lambda_.11} parent=0 // pred_fallthru
    _
  // Predicated region
  $region6: #{_lambda_.11} parent=0 // pred_check
    _
  $region7: #{_lambda_.11} parent=0 // pred_check_branch
    %11 = sbr.rel (0) target = $region9
  $region8: #{_lambda_.11} parent=0 // pred_region
    _
  $region9: #{_lambda_.11} parent=0 // pred_fallthru
    _
  // Predicated region
  $region10: #{_lambda_.11} parent=0 // pred_check
    _
  $region11: #{_lambda_.11} parent=0 // pred_check_branch
    %13 = sbr.rel (0) target = $region13
  $region12: #{_lambda_.11} parent=0 // pred_region
    _
  $region13: #{_lambda_.11} parent=0 // pred_fallthru
    _
  %v14 = vld [vmem:[%s0] sm:$0xff]
  %v15 = vld [vmem:[%s0 + $0x8] sm:$0xff]
  %v16 = vld [vmem:[%s0 + $0x10] sm:$0xff]
  %v17 = vld [vmem:[%s0 + $0x18] sm:$0xff]
  %v18 = vld [vmem:[%s0 + $0x20] sm:$0xff]
  %v19 = vld [vmem:[%s0 + $0x28] sm:$0xff]
  %v20 = vld [vmem:[%s0 + $0x30] sm:$0xff]
  %v21 = vld [vmem:[%s0 + $0x38] sm:$0xff]
  %v22 = vld [vmem:[%s0 + $0x40] sm:$0xff]
  %v23 = vld [vmem:[%s0 + $0x48] sm:$0xff]
  %v24 = vld [vmem:[%s0 + $0x50] sm:$0xff]
  %v25 = vld [vmem:[%s0 + $0x58] sm:$0xff]
  %v26 = vld [vmem:[%s0 + $0x60] sm:$0xff]
  %v27 = vld [vmem:[%s0 + $0x68] sm:$0xff]
  %v28 = vld [vmem:[%s0 + $0x70] sm:$0xff]
  %v29 = vld [vmem:[%s0 + $0x78] sm:$0xff]
  %v30 = vld [vmem:[%s0 + $0x80] sm:$0xff]
  %v31 = vld [vmem:[%s0 + $0x88] sm:$0xff]
  %v32 = vld [vmem:[%s0 + $0x90] sm:$0xff]
  %v33 = vld [vmem:[%s0 + $0x98] sm:$0xff]
  %v34 = vld [vmem:[%s0 + $0xa0] sm:$0xff]
  %v35 = vld [vmem:[%s0 + $0xa8] sm:$0xff]
  %v36 = vld [vmem:[%s0 + $0xb0] sm:$0xff]
  %v37 = vld [vmem:[%s0 + $0xb8] sm:$0xff]
  %v38 = vld [vmem:[%s0 + $0xc0] sm:$0xff]
  %v39 = vld [vmem:[%s0 + $0xc8] sm:$0xff]
  %v40 = vld [vmem:[%s0 + $0xd0] sm:$0xff]
  %v41 = vld [vmem:[%s0 + $0xd8] sm:$0xff]
  %v42 = vld [vmem:[%s0 + $0xe0] sm:$0xff]
  %v43 = vld [vmem:[%s0 + $0xe8] sm:$0xff]
  %v44 = vld [vmem:[%s0 + $0xf0] sm:$0xff]
  %v45 = vld [vmem:[%s0 + $0xf8] sm:$0xff]
  %v46 = vld [vmem:[%s0 + $0x100] sm:$0xff]
  %v47 = vld [vmem:[%s0 + $0x108] sm:$0xff]
  %v48 = vld [vmem:[%s0 + $0x110] sm:$0xff]
  %v49 = vld [vmem:[%s0 + $0x118] sm:$0xff]
  %v50 = vld [vmem:[%s0 + $0x120] sm:$0xff]
  %v51 = vld [vmem:[%s0 + $0x128] sm:$0xff]
  %v52 = vld [vmem:[%s0 + $0x130] sm:$0xff]
  %v53 = vld [vmem:[%s0 + $0x138] sm:$0xff]
  %v54 = vld [vmem:[%s0 + $0x140] sm:$0xff]
  %v55 = vld [vmem:[%s0 + $0x148] sm:$0xff]
  %v56 = vld [vmem:[%s0 + $0x150] sm:$0xff]
  %v57 = vld [vmem:[%s0 + $0x158] sm:$0xff]
  %v58 = vld [vmem:[%s0 + $0x160] sm:$0xff]
  %v59 = vld [vmem:[%s0 + $0x168] sm:$0xff]
  %v60 = vld [vmem:[%s0 + $0x170] sm:$0xff]
  %v61 = vld [vmem:[%s0 + $0x178] sm:$0xff]
  %v62 = vld [vmem:[%s0 + $0x180] sm:$0xff]
  %v63 = vld [vmem:[%s0 + $0x188] sm:$0xff]
  %v64 = vld [vmem:[%s0 + $0x190] sm:$0xff]
  %v65 = vld [vmem:[%s0 + $0x198] sm:$0xff]
  %v66 = vld [vmem:[%s0 + $0x1a0] sm:$0xff]
  %v67 = vld [vmem:[%s0 + $0x1a8] sm:$0xff]
  %v68 = vld [vmem:[%s0 + $0x1b0] sm:$0xff]
  %v69 = vld [vmem:[%s0 + $0x1b8] sm:$0xff]
  %v70 = vld [vmem:[%s0 + $0x1c0] sm:$0xff]
  %v71 = vld [vmem:[%s0 + $0x1c8] sm:$0xff]
  %v72 = vld [vmem:[%s0 + $0x1d0] sm:$0xff]
  %v73 = vld [vmem:[%s0 + $0x1d8] sm:$0xff]
  %v74 = vld [vmem:[%s0 + $0x1e0] sm:$0xff]
  %v75 = vld [vmem:[%s0 + $0x1e8] sm:$0xff]
  %v76 = vld [vmem:[%s0 + $0x1f0] sm:$0xff]
  %v77 = vld [vmem:[%s0 + $0x1f8] sm:$0xff]
  %v78 = vld [vmem:[%s1] sm:$0x1]
  %v80 = vperm.slane %v78, 0
  %v82 = vmul.f32 %v14, %v80
  %v83 = vmul.f32 %v15, %v80
  %v84 = vmul.f32 %v16, %v80
  %v85 = vmul.f32 %v17, %v80
  %v86 = vmul.f32 %v18, %v80
  %v87 = vmul.f32 %v19, %v80
  %v88 = vmul.f32 %v20, %v80
  %v89 = vmul.f32 %v21, %v80
  %v90 = vmul.f32 %v22, %v80
  %v91 = vmul.f32 %v23, %v80
  %v92 = vmul.f32 %v24, %v80
  %v93 = vmul.f32 %v25, %v80
  %v94 = vmul.f32 %v26, %v80
  %v95 = vmul.f32 %v27, %v80
  %v96 = vmul.f32 %v28, %v80
  %v97 = vmul.f32 %v29, %v80
  %v98 = vmul.f32 %v30, %v80
  %v99 = vmul.f32 %v31, %v80
  %v100 = vmul.f32 %v32, %v80
  %v101 = vmul.f32 %v33, %v80
  %v102 = vmul.f32 %v34, %v80
  %v103 = vmul.f32 %v35, %v80
  %v104 = vmul.f32 %v36, %v80
  %v105 = vmul.f32 %v37, %v80
  %v106 = vmul.f32 %v38, %v80
  %v107 = vmul.f32 %v39, %v80
  %v108 = vmul.f32 %v40, %v80
  %v109 = vmul.f32 %v41, %v80
  %v110 = vmul.f32 %v42, %v80
  %v111 = vmul.f32 %v43, %v80
  %v112 = vmul.f32 %v44, %v80
  %v113 = vmul.f32 %v45, %v80
  %v114 = vmul.f32 %v46, %v80
  %v115 = vmul.f32 %v47, %v80
  %v116 = vmul.f32 %v48, %v80
  %v117 = vmul.f32 %v49, %v80
  %v118 = vmul.f32 %v50, %v80
  %v119 = vmul.f32 %v51, %v80
  %v120 = vmul.f32 %v52, %v80
  %v121 = vmul.f32 %v53, %v80
  %v122 = vmul.f32 %v54, %v80
  %v123 = vmul.f32 %v55, %v80
  %v124 = vmul.f32 %v56, %v80
  %v125 = vmul.f32 %v57, %v80
  %v126 = vmul.f32 %v58, %v80
  %v127 = vmul.f32 %v59, %v80
  %v128 = vmul.f32 %v60, %v80
  %v129 = vmul.f32 %v61, %v80
  %v130 = vmul.f32 %v62, %v80
  %v131 = vmul.f32 %v63, %v80
  %v132 = vmul.f32 %v64, %v80
  %v133 = vmul.f32 %v65, %v80
  %v134 = vmul.f32 %v66, %v80
  %v135 = vmul.f32 %v67, %v80
  %v136 = vmul.f32 %v68, %v80
  %v137 = vmul.f32 %v69, %v80
  %v138 = vmul.f32 %v70, %v80
  %v139 = vmul.f32 %v71, %v80
  %v140 = vmul.f32 %v72, %v80
  %v141 = vmul.f32 %v73, %v80
  %v142 = vmul.f32 %v74, %v80
  %v143 = vmul.f32 %v75, %v80
  %v144 = vmul.f32 %v76, %v80
  %v145 = vmul.f32 %v77, %v80
  %v146 = vld [vmem:[%s2] sm:$0x1]
  %v148 = vperm.slane %v146, 0
  %v150 = vadd.f32 %v82, %v148
  %v151 = vadd.f32 %v83, %v148
  %v152 = vadd.f32 %v84, %v148
  %v153 = vadd.f32 %v85, %v148
  %v154 = vadd.f32 %v86, %v148
  %v155 = vadd.f32 %v87, %v148
  %v156 = vadd.f32 %v88, %v148
  %v157 = vadd.f32 %v89, %v148
  %v158 = vadd.f32 %v90, %v148
  %v159 = vadd.f32 %v91, %v148
  %v160 = vadd.f32 %v92, %v148
  %v161 = vadd.f32 %v93, %v148
  %v162 = vadd.f32 %v94, %v148
  %v163 = vadd.f32 %v95, %v148
  %v164 = vadd.f32 %v96, %v148
  %v165 = vadd.f32 %v97, %v148
  %v166 = vadd.f32 %v98, %v148
  %v167 = vadd.f32 %v99, %v148
  %v168 = vadd.f32 %v100, %v148
  %v169 = vadd.f32 %v101, %v148
  %v170 = vadd.f32 %v102, %v148
  %v171 = vadd.f32 %v103, %v148
  %v172 = vadd.f32 %v104, %v148
  %v173 = vadd.f32 %v105, %v148
  %v174 = vadd.f32 %v106, %v148
  %v175 = vadd.f32 %v107, %v148
  %v176 = vadd.f32 %v108, %v148
  %v177 = vadd.f32 %v109, %v148
  %v178 = vadd.f32 %v110, %v148
  %v179 = vadd.f32 %v111, %v148
  %v180 = vadd.f32 %v112, %v148
  %v181 = vadd.f32 %v113, %v148
  %v182 = vadd.f32 %v114, %v148
  %v183 = vadd.f32 %v115, %v148
  %v184 = vadd.f32 %v116, %v148
  %v185 = vadd.f32 %v117, %v148
  %v186 = vadd.f32 %v118, %v148
  %v187 = vadd.f32 %v119, %v148
  %v188 = vadd.f32 %v120, %v148
  %v189 = vadd.f32 %v121, %v148
  %v190 = vadd.f32 %v122, %v148
  %v191 = vadd.f32 %v123, %v148
  %v192 = vadd.f32 %v124, %v148
  %v193 = vadd.f32 %v125, %v148
  %v194 = vadd.f32 %v126, %v148
  %v195 = vadd.f32 %v127, %v148
  %v196 = vadd.f32 %v128, %v148
  %v197 = vadd.f32 %v129, %v148
  %v198 = vadd.f32 %v130, %v148
  %v199 = vadd.f32 %v131, %v148
  %v200 = vadd.f32 %v132, %v148
  %v201 = vadd.f32 %v133, %v148
  %v202 = vadd.f32 %v134, %v148
  %v203 = vadd.f32 %v135, %v148
  %v204 = vadd.f32 %v136, %v148
  %v205 = vadd.f32 %v137, %v148
  %v206 = vadd.f32 %v138, %v148
  %v207 = vadd.f32 %v139, %v148
  %v208 = vadd.f32 %v140, %v148
  %v209 = vadd.f32 %v141, %v148
  %v210 = vadd.f32 %v142, %v148
  %v211 = vadd.f32 %v143, %v148
  %v212 = vadd.f32 %v144, %v148
  %v213 = vadd.f32 %v145, %v148
  %v214 = vmax.f32 %v150, 0.0
  %v215 = vmax.f32 %v151, 0.0
  %v216 = vmax.f32 %v152, 0.0
  %v217 = vmax.f32 %v153, 0.0
  %v218 = vmax.f32 %v154, 0.0
  %v219 = vmax.f32 %v155, 0.0
  %v220 = vmax.f32 %v156, 0.0
  %v221 = vmax.f32 %v157, 0.0
  %v222 = vmax.f32 %v158, 0.0
  %v223 = vmax.f32 %v159, 0.0
  %v224 = vmax.f32 %v160, 0.0
  %v225 = vmax.f32 %v161, 0.0
  %v226 = vmax.f32 %v162, 0.0
  %v227 = vmax.f32 %v163, 0.0
  %v228 = vmax.f32 %v164, 0.0
  %v229 = vmax.f32 %v165, 0.0
  %v230 = vmax.f32 %v166, 0.0
  %v231 = vmax.f32 %v167, 0.0
  %v232 = vmax.f32 %v168, 0.0
  %v233 = vmax.f32 %v169, 0.0
  %v234 = vmax.f32 %v170, 0.0
  %v235 = vmax.f32 %v171, 0.0
  %v236 = vmax.f32 %v172, 0.0
  %v237 = vmax.f32 %v173, 0.0
  %v238 = vmax.f32 %v174, 0.0
  %v239 = vmax.f32 %v175, 0.0
  %v240 = vmax.f32 %v176, 0.0
  %v241 = vmax.f32 %v177, 0.0
  %v242 = vmax.f32 %v178, 0.0
  %v243 = vmax.f32 %v179, 0.0
  %v244 = vmax.f32 %v180, 0.0
  %v245 = vmax.f32 %v181, 0.0
  %v246 = vmax.f32 %v182, 0.0
  %v247 = vmax.f32 %v183, 0.0
  %v248 = vmax.f32 %v184, 0.0
  %v249 = vmax.f32 %v185, 0.0
  %v250 = vmax.f32 %v186, 0.0
  %v251 = vmax.f32 %v187, 0.0
  %v252 = vmax.f32 %v188, 0.0
  %v253 = vmax.f32 %v189, 0.0
  %v254 = vmax.f32 %v190, 0.0
  %v255 = vmax.f32 %v191, 0.0
  %v256 = vmax.f32 %v192, 0.0
  %v257 = vmax.f32 %v193, 0.0
  %v258 = vmax.f32 %v194, 0.0
  %v259 = vmax.f32 %v195, 0.0
  %v260 = vmax.f32 %v196, 0.0
  %v261 = vmax.f32 %v197, 0.0
  %v262 = vmax.f32 %v198, 0.0
  %v263 = vmax.f32 %v199, 0.0
  %v264 = vmax.f32 %v200, 0.0
  %v265 = vmax.f32 %v201, 0.0
  %v266 = vmax.f32 %v202, 0.0
  %v267 = vmax.f32 %v203, 0.0
  %v268 = vmax.f32 %v204, 0.0
  %v269 = vmax.f32 %v205, 0.0
  %v270 = vmax.f32 %v206, 0.0
  %v271 = vmax.f32 %v207, 0.0
  %v272 = vmax.f32 %v208, 0.0
  %v273 = vmax.f32 %v209, 0.0
  %v274 = vmax.f32 %v210, 0.0
  %v275 = vmax.f32 %v211, 0.0
  %v276 = vmax.f32 %v212, 0.0
  %v277 = vmax.f32 %v213, 0.0
  %vm278 = vcmask 523264
  %279 = vst.msk [vmem:[%s3] sm:$0xff] %vm278, %v214
  %280 = vst.msk [vmem:[%s3 + $0x8] sm:$0xff] %vm278, %v215
  %281 = vst.msk [vmem:[%s3 + $0x10] sm:$0xff] %vm278, %v216
  %282 = vst.msk [vmem:[%s3 + $0x18] sm:$0xff] %vm278, %v217
  %283 = vst.msk [vmem:[%s3 + $0x20] sm:$0xff] %vm278, %v218
  %284 = vst.msk [vmem:[%s3 + $0x28] sm:$0xff] %vm278, %v219
  %285 = vst.msk [vmem:[%s3 + $0x30] sm:$0xff] %vm278, %v220
  %286 = vst.msk [vmem:[%s3 + $0x38] sm:$0xff] %vm278, %v221
  %287 = vst.msk [vmem:[%s3 + $0x40] sm:$0xff] %vm278, %v222
  %288 = vst.msk [vmem:[%s3 + $0x48] sm:$0xff] %vm278, %v223
  %289 = vst.msk [vmem:[%s3 + $0x50] sm:$0xff] %vm278, %v224
  %290 = vst.msk [vmem:[%s3 + $0x58] sm:$0xff] %vm278, %v225
  %291 = vst.msk [vmem:[%s3 + $0x60] sm:$0xff] %vm278, %v226
  %292 = vst.msk [vmem:[%s3 + $0x68] sm:$0xff] %vm278, %v227
  %293 = vst.msk [vmem:[%s3 + $0x70] sm:$0xff] %vm278, %v228
  %294 = vst.msk [vmem:[%s3 + $0x78] sm:$0xff] %vm278, %v229
  %295 = vst.msk [vmem:[%s3 + $0x80] sm:$0xff] %vm278, %v230
  %296 = vst.msk [vmem:[%s3 + $0x88] sm:$0xff] %vm278, %v231
  %297 = vst.msk [vmem:[%s3 + $0x90] sm:$0xff] %vm278, %v232
  %298 = vst.msk [vmem:[%s3 + $0x98] sm:$0xff] %vm278, %v233
  %299 = vst.msk [vmem:[%s3 + $0xa0] sm:$0xff] %vm278, %v234
  %300 = vst.msk [vmem:[%s3 + $0xa8] sm:$0xff] %vm278, %v235
  %301 = vst.msk [vmem:[%s3 + $0xb0] sm:$0xff] %vm278, %v236
  %302 = vst.msk [vmem:[%s3 + $0xb8] sm:$0xff] %vm278, %v237
  %303 = vst.msk [vmem:[%s3 + $0xc0] sm:$0xff] %vm278, %v238
  %304 = vst.msk [vmem:[%s3 + $0xc8] sm:$0xff] %vm278, %v239
  %305 = vst.msk [vmem:[%s3 + $0xd0] sm:$0xff] %vm278, %v240
  %306 = vst.msk [vmem:[%s3 + $0xd8] sm:$0xff] %vm278, %v241
  %307 = vst.msk [vmem:[%s3 + $0xe0] sm:$0xff] %vm278, %v242
  %308 = vst.msk [vmem:[%s3 + $0xe8] sm:$0xff] %vm278, %v243
  %309 = vst.msk [vmem:[%s3 + $0xf0] sm:$0xff] %vm278, %v244
  %310 = vst.msk [vmem:[%s3 + $0xf8] sm:$0xff] %vm278, %v245
  %311 = vst.msk [vmem:[%s3 + $0x100] sm:$0xff] %vm278, %v246
  %312 = vst.msk [vmem:[%s3 + $0x108] sm:$0xff] %vm278, %v247
  %313 = vst.msk [vmem:[%s3 + $0x110] sm:$0xff] %vm278, %v248
  %314 = vst.msk [vmem:[%s3 + $0x118] sm:$0xff] %vm278, %v249
  %315 = vst.msk [vmem:[%s3 + $0x120] sm:$0xff] %vm278, %v250
  %316 = vst.msk [vmem:[%s3 + $0x128] sm:$0xff] %vm278, %v251
  %317 = vst.msk [vmem:[%s3 + $0x130] sm:$0xff] %vm278, %v252
  %318 = vst.msk [vmem:[%s3 + $0x138] sm:$0xff] %vm278, %v253
  %319 = vst.msk [vmem:[%s3 + $0x140] sm:$0xff] %vm278, %v254
  %320 = vst.msk [vmem:[%s3 + $0x148] sm:$0xff] %vm278, %v255
  %321 = vst.msk [vmem:[%s3 + $0x150] sm:$0xff] %vm278, %v256
  %322 = vst.msk [vmem:[%s3 + $0x158] sm:$0xff] %vm278, %v257
  %323 = vst.msk [vmem:[%s3 + $0x160] sm:$0xff] %vm278, %v258
  %324 = vst.msk [vmem:[%s3 + $0x168] sm:$0xff] %vm278, %v259
  %325 = vst.msk [vmem:[%s3 + $0x170] sm:$0xff] %vm278, %v260
  %326 = vst.msk [vmem:[%s3 + $0x178] sm:$0xff] %vm278, %v261
  %327 = vst.msk [vmem:[%s3 + $0x180] sm:$0xff] %vm278, %v262
  %328 = vst.msk [vmem:[%s3 + $0x188] sm:$0xff] %vm278, %v263
  %329 = vst.msk [vmem:[%s3 + $0x190] sm:$0xff] %vm278, %v264
  %330 = vst.msk [vmem:[%s3 + $0x198] sm:$0xff] %vm278, %v265
  %331 = vst.msk [vmem:[%s3 + $0x1a0] sm:$0xff] %vm278, %v266
  %332 = vst.msk [vmem:[%s3 + $0x1a8] sm:$0xff] %vm278, %v267
  %333 = vst.msk [vmem:[%s3 + $0x1b0] sm:$0xff] %vm278, %v268
  %334 = vst.msk [vmem:[%s3 + $0x1b8] sm:$0xff] %vm278, %v269
  %335 = vst.msk [vmem:[%s3 + $0x1c0] sm:$0xff] %vm278, %v270
  %336 = vst.msk [vmem:[%s3 + $0x1c8] sm:$0xff] %vm278, %v271
  %337 = vst.msk [vmem:[%s3 + $0x1d0] sm:$0xff] %vm278, %v272
  %338 = vst.msk [vmem:[%s3 + $0x1d8] sm:$0xff] %vm278, %v273
  %339 = vst.msk [vmem:[%s3 + $0x1e0] sm:$0xff] %vm278, %v274
  %340 = vst.msk [vmem:[%s3 + $0x1e8] sm:$0xff] %vm278, %v275
  %341 = vst.msk [vmem:[%s3 + $0x1f0] sm:$0xff] %vm278, %v276
  %342 = vst.msk [vmem:[%s3 + $0x1f8] sm:$0xff] %vm278, %v277
  // Predicated region
  $region14: #{_lambda_.11} parent=0 // pred_check
    _
  $region15: #{_lambda_.11} parent=0 // pred_check_branch
    %344 = sbr.rel (0) target = $region17
  $region16: #{_lambda_.11} parent=0 // pred_region
    _
  $region17: #{_lambda_.11} parent=0 // pred_fallthru
    _
  // Predicated region
  $region18: #{_lambda_.11} parent=0 // pred_check
    _
  $region19: #{_lambda_.11} parent=0 // pred_check_branch
    %346 = sbr.rel (0) target = $region21
  $region20: #{_lambda_.11} parent=0 // pred_region
    _
  $region21: #{_lambda_.11} parent=0 // pred_fallthru
    _

// kernel: _lambda_.12
$region0: #{_lambda_.12}
  #allocation0 [shape = 'u32[]', space=smem, size = 0x4, offset = 0x4, fixed_abs, tag = 'smem constant byte address 0x4 - core index']
  #allocation1 [shape = 'u32[72,128]{1,0:T(1,128)}', space=vmem, size = 0x9000, scoped, tag = 'internal scratch']
  %s0 = inlined_call_operand.vmem [shape: f32[128,64], index: 0, kind: input, shape index: {}]
  %s1 = inlined_call_operand.vmem [shape: bf16[64,32], index: 1, kind: input, shape index: {}]
  %s2 = inlined_call_operand.vmem [shape: f32[1,32], index: 2, kind: input, shape index: {}]
  %s3 = inlined_call_operand.vmem [shape: f32[128,32], index: 3, kind: output, shape index: {}]
  %s4 = sld [smem:[#allocation0]]
  $region22: #{_lambda_.12} parent=0
    _
  %s6 = ssub.s32 1, %s4
  %s7 = scalar_select 0, %s6, %s4
  // Predicated region
  $region2: #{_lambda_.12} parent=0 // pred_check
    _
  $region3: #{_lambda_.12} parent=0 // pred_check_branch
    %9 = sbr.rel (0) target = $region5
  $region4: #{_lambda_.12} parent=0 // pred_region
    _
  $region5: #{_lambda_.12} parent=0 // pred_fallthru
    _
  // Predicated region
  $region6: #{_lambda_.12} parent=0 // pred_check
    _
  $region7: #{_lambda_.12} parent=0 // pred_check_branch
    %11 = sbr.rel (0) target = $region9
  $region8: #{_lambda_.12} parent=0 // pred_region
    _
  $region9: #{_lambda_.12} parent=0 // pred_fallthru
    _
  // Predicated region
  $region10: #{_lambda_.12} parent=0 // pred_check
    _
  $region11: #{_lambda_.12} parent=0 // pred_check_branch
    %13 = sbr.rel (0) target = $region13
  $region12: #{_lambda_.12} parent=0 // pred_region
    _
  $region13: #{_lambda_.12} parent=0 // pred_fallthru
    _
  %v15 = vld [vmem:[%s0] sm:$0xff]
  %v16 = vld [vmem:[%s0 + $0x8] sm:$0xff]
  %v17 = vld [vmem:[%s0 + $0x10] sm:$0xff]
  %v18 = vld [vmem:[%s0 + $0x18] sm:$0xff]
  %v19 = vld [vmem:[%s0 + $0x20] sm:$0xff]
  %v20 = vld [vmem:[%s0 + $0x28] sm:$0xff]
  %v21 = vld [vmem:[%s0 + $0x30] sm:$0xff]
  %v22 = vld [vmem:[%s0 + $0x38] sm:$0xff]
  %v23 = vld [vmem:[%s0 + $0x40] sm:$0xff]
  %v24 = vld [vmem:[%s0 + $0x48] sm:$0xff]
  %v25 = vld [vmem:[%s0 + $0x50] sm:$0xff]
  %v26 = vld [vmem:[%s0 + $0x58] sm:$0xff]
  %v27 = vld [vmem:[%s0 + $0x60] sm:$0xff]
  %v28 = vld [vmem:[%s0 + $0x68] sm:$0xff]
  %v29 = vld [vmem:[%s0 + $0x70] sm:$0xff]
  %v30 = vld [vmem:[%s0 + $0x78] sm:$0xff]
  %v31 = vpack.c.bf16 %v16, %v15
  %v32 = vpack.c.bf16 %v18, %v17
  %v33 = vpack.c.bf16 %v20, %v19
  %v34 = vpack.c.bf16 %v22, %v21
  %v35 = vpack.c.bf16 %v24, %v23
  %v36 = vpack.c.bf16 %v26, %v25
  %v37 = vpack.c.bf16 %v28, %v27
  %v38 = vpack.c.bf16 %v30, %v29
  %v39 = vld [vmem:[%s1] sm:$0xf]
  %v40 = vld [vmem:[%s1 + $0x4] sm:$0xf]
  %v41 = vld [vmem:[%s1 + $0x8] sm:$0xf]
  %v42 = vld [vmem:[%s1 + $0xc] sm:$0xf]
  %v43 = vld [vmem:[%s1 + $0x10] sm:$0xf]
  %v44 = vld [vmem:[%s1 + $0x14] sm:$0xf]
  %v45 = vld [vmem:[%s1 + $0x18] sm:$0xf]
  %v46 = vld [vmem:[%s1 + $0x1c] sm:$0xf]
  %v47 = vld [vmem:[%s2] sm:$0x1]
  %v49 = vperm.slane %v47, 0
  %v59 = vunpack.c.l.b16 %v39
  %v60 = vunpack.c.l.b16 %v40
  %v61 = vunpack.c.l.b16 %v41
  %v62 = vunpack.c.l.b16 %v42
  %v63 = vunpack.c.l.b16 %v43
  %v64 = vunpack.c.l.b16 %v44
  %v65 = vunpack.c.l.b16 %v45
  %v66 = vunpack.c.l.b16 %v46
  %v67 = vpack.c.b16 %v60, %v59
  %v68 = vpack.c.b16 %v62, %v61
  %v69 = vpack.c.b16 %v64, %v63
  %v70 = vpack.c.b16 %v66, %v65
  %vm75 = vcmask 523264
  %v77 = vsel %vm75, %v31, 0
  %v80 = vsel %vm75, %v32, 0
  %v83 = vsel %vm75, %v33, 0
  %v86 = vsel %vm75, %v34, 0
  %v89 = vsel %vm75, %v35, 0
  %v92 = vsel %vm75, %v36, 0
  %v95 = vsel %vm75, %v37, 0
  %v98 = vsel %vm75, %v38, 0
  %100 = vmatpush.bf16.msra.mxu0 0
  %101 = vmatpush.bf16.msra.mxu0 0
  %102 = vmatpush.bf16.msra.mxu0 0
  %103 = vmatpush.bf16.msra.mxu0 0
  %104 = vmatpush.bf16.msra.mxu0 %v70
  %105 = vmatpush.bf16.msra.mxu0 %v69
  %106 = vmatpush.bf16.msra.mxu0 %v68
  %107 = vmatpush.bf16.msra.mxu0 %v67
  %108 = vmatmul.bf16.gmra.mxu0 %v77
  %v109 = vpop.f32.mrf.mxu0
  %v110 = vadd.f32 %v49, %v109
  %v111 = vpop.f32.mrf.mxu0
  %v112 = vadd.f32 %v49, %v111
  %113 = vmatmul.bf16.gmra.mxu0 %v80
  %v114 = vpop.f32.mrf.mxu0
  %v115 = vadd.f32 %v49, %v114
  %v116 = vpop.f32.mrf.mxu0
  %v117 = vadd.f32 %v49, %v116
  %118 = vmatmul.bf16.gmra.mxu0 %v83
  %v119 = vpop.f32.mrf.mxu0
  %v120 = vadd.f32 %v49, %v119
  %v121 = vpop.f32.mrf.mxu0
  %v122 = vadd.f32 %v49, %v121
  %123 = vmatmul.bf16.gmra.mxu0 %v86
  %v124 = vpop.f32.mrf.mxu0
  %v125 = vadd.f32 %v49, %v124
  %v126 = vpop.f32.mrf.mxu0
  %v127 = vadd.f32 %v49, %v126
  %128 = vmatmul.bf16.gmra.mxu0 %v89
  %v129 = vpop.f32.mrf.mxu0
  %v130 = vadd.f32 %v49, %v129
  %v131 = vpop.f32.mrf.mxu0
  %v132 = vadd.f32 %v49, %v131
  %133 = vmatmul.bf16.gmra.mxu0 %v92
  %v134 = vpop.f32.mrf.mxu0
  %v135 = vadd.f32 %v49, %v134
  %v136 = vpop.f32.mrf.mxu0
  %v137 = vadd.f32 %v49, %v136
  %138 = vmatmul.bf16.gmra.mxu0 %v95
  %v139 = vpop.f32.mrf.mxu0
  %v140 = vadd.f32 %v49, %v139
  %v141 = vpop.f32.mrf.mxu0
  %v142 = vadd.f32 %v49, %v141
  %143 = vmatmul.bf16.gmra.mxu0 %v98
  %v144 = vpop.f32.mrf.mxu0
  %v145 = vadd.f32 %v49, %v144
  %v146 = vpop.f32.mrf.mxu0
  %v147 = vadd.f32 %v49, %v146
  %148 = vdwg.mxu0
  %vm149 = vcmask 261120
  %150 = vst.msk [vmem:[%s3] sm:$0xff] %vm149, %v110
  %151 = vst.msk [vmem:[%s3 + $0x8] sm:$0xff] %vm149, %v112
  %152 = vst.msk [vmem:[%s3 + $0x10] sm:$0xff] %vm149, %v115
  %153 = vst.msk [vmem:[%s3 + $0x18] sm:$0xff] %vm149, %v117
  %154 = vst.msk [vmem:[%s3 + $0x20] sm:$0xff] %vm149, %v120
  %155 = vst.msk [vmem:[%s3 + $0x28] sm:$0xff] %vm149, %v122
  %156 = vst.msk [vmem:[%s3 + $0x30] sm:$0xff] %vm149, %v125
  %157 = vst.msk [vmem:[%s3 + $0x38] sm:$0xff] %vm149, %v127
  %158 = vst.msk [vmem:[%s3 + $0x40] sm:$0xff] %vm149, %v130
  %159 = vst.msk [vmem:[%s3 + $0x48] sm:$0xff] %vm149, %v132
  %160 = vst.msk [vmem:[%s3 + $0x50] sm:$0xff] %vm149, %v135
  %161 = vst.msk [vmem:[%s3 + $0x58] sm:$0xff] %vm149, %v137
  %162 = vst.msk [vmem:[%s3 + $0x60] sm:$0xff] %vm149, %v140
  %163 = vst.msk [vmem:[%s3 + $0x68] sm:$0xff] %vm149, %v142
  %164 = vst.msk [vmem:[%s3 + $0x70] sm:$0xff] %vm149, %v145
  %165 = vst.msk [vmem:[%s3 + $0x78] sm:$0xff] %vm149, %v147
  // Predicated region
  $region14: #{_lambda_.12} parent=0 // pred_check
    _
  $region15: #{_lambda_.12} parent=0 // pred_check_branch
    %167 = sbr.rel (0) target = $region17
  $region16: #{_lambda_.12} parent=0 // pred_region
    _
  $region17: #{_lambda_.12} parent=0 // pred_fallthru
    _
  // Predicated region
  $region18: #{_lambda_.12} parent=0 // pred_check
    _
  $region19: #{_lambda_.12} parent=0 // pred_check_branch
    %169 = sbr.rel (0) target = $region21
  $region20: #{_lambda_.12} parent=0 // pred_region
    _
  $region21: #{_lambda_.12} parent=0 // pred_fallthru
    _

// kernel: tile.36
$region0: #{tile.36}
  #allocation0 [shape = 's32[1]{0}', space=sflag, size = 0x4, scoped, tag = 'scoped memory for tile.36']
  %s0 = inlined_call_operand.vmem [shape: f32[64], index: 0, kind: input, shape index: {}]
  %s1 = inlined_call_operand.vmem [shape: f32[4,64], index: 1, kind: output, shape index: {}]
  // Predicated region
  $region2: #{tile.36} parent=0 // pred_check
    _
  $region3: #{tile.36} parent=0 // pred_check_branch
    %3 = sbr.rel (0) target = $region5
  $region4: #{tile.36} parent=0 // pred_region
    _
  $region5: #{tile.36} parent=0 // pred_fallthru
    _
  %v4 = vld [vmem:[%s0] ss:$0 sm:$0xff]
  %5 = vst [vmem:[%s1] sm:$0xf] %v4

// kernel: tile.37
$region0: #{tile.37}
  %s0 = inlined_call_operand.vmem [shape: f32[4,64], index: 0, kind: input, shape index: {}]
  %s1 = inlined_call_operand.vmem [shape: f32[1,256], index: 1, kind: output, shape index: {}]
  $region1: #{tile.37} parent=0
    #allocation0 [shape = 'u8[8192]{0}', space=vmem, size = 0x2000, scoped, tag = 'scoped mem for output reshape']
    #allocation1 [shape = 'u8[4096]{0}', space=vmem, size = 0x1000, scoped, tag = 'scoped mem for input reshape']
    %s3 = ssub.s32 16, 1
    %v4 = vld [vmem:[%s0] sm:%s3]
    %5 = vst [vmem:[#allocation1] sm:%s3] %v4
    %s6 = smov 3
    %v7 = vld [vmem:[#allocation1] ss:$2 sm:%s6]
    %vm8 = vcmask 523264
    %9 = vst.msk [vmem:[#allocation0] ss:$8 sm:$0x3] %vm8, %v7
    %s10 = scalar_lea.vmem [#allocation1], 1
    %s11 = smov 3
    %v12 = vld [vmem:[%s10] ss:$2 sm:%s11]
    %13 = vrot.lane.b32.xlu0 %v12, 64
    %v14 = vpop.permute.xlu0 %13
    %vm15 = vcmask 1048064
    %16 = vst.msk [vmem:[#allocation0] ss:$8 sm:$0x3] %vm15, %v14
    %s18 = ssub.s32 2, 1
    %v19 = vld [vmem:[#allocation0] sm:%s18]
    %s21 = ssub.s32 2, 1
    %22 = vst [vmem:[%s1] sm:%s21] %v19
    %s23 = scalar_lea.vmem [#allocation0], 8
    %v24 = vld [vmem:[%s23] sm:%s18]
    %s26 = ssub.s32 2, 1
    %s27 = scalar_lea.vmem %s1, 1
    %28 = vst [vmem:[%s27] sm:%s26] %v24

// kernel: _lambda_.10
$region0: #{_lambda_.10}
  #allocation0 [shape = 'u32[]', space=smem, size = 0x4, offset = 0x4, fixed_abs, tag = 'smem constant byte address 0x4 - core index']
  #allocation1 [shape = 'u32[72,128]{1,0:T(1,128)}', space=vmem, size = 0x9000, scoped, tag = 'internal scratch']
  %s0 = inlined_call_operand.vmem [shape: f32[512,576], index: 0, kind: input, shape index: {}]
  %s1 = inlined_call_operand.vmem [shape: f32[1,576], index: 1, kind: input, shape index: {}]
  %s2 = inlined_call_operand.vmem [shape: f32[1,576], index: 2, kind: input, shape index: {}]
  %s3 = inlined_call_operand.vmem [shape: bf16[576,64], index: 3, kind: input, shape index: {}]
  %s4 = inlined_call_operand.vmem [shape: f32[1,64], index: 4, kind: input, shape index: {}]
  %s5 = inlined_call_operand.vmem [shape: f32[512,64], index: 5, kind: output, shape index: {0}]
  %s6 = inlined_call_operand.vmem [shape: f32[8,64], index: 6, kind: output, shape index: {1}]
  %s7 = inlined_call_operand.vmem [shape: f32[8,64], index: 7, kind: output, shape index: {2}]
  %8 = xla_tuple %s5, %s6, %s7
  %s9 = sld [smem:[#allocation0]]
  $region46: #{_lambda_.10} parent=0
    _
  %s11 = ssub.s32 1, %s9
  %s12 = scalar_select 0, %s11, %s9
  // Predicated region
  $region2: #{_lambda_.10} parent=0 // pred_check
    _
  $region3: #{_lambda_.10} parent=0 // pred_check_branch
    %14 = sbr.rel (0) target = $region5
  $region4: #{_lambda_.10} parent=0 // pred_region
    _
  $region5: #{_lambda_.10} parent=0 // pred_fallthru
    _
  // Predicated region
  $region6: #{_lambda_.10} parent=0 // pred_check
    _
  $region7: #{_lambda_.10} parent=0 // pred_check_branch
    %16 = sbr.rel (0) target = $region9
  $region8: #{_lambda_.10} parent=0 // pred_region
    _
  $region9: #{_lambda_.10} parent=0 // pred_fallthru
    _
  // Predicated region
  $region10: #{_lambda_.10} parent=0 // pred_check
    _
  $region11: #{_lambda_.10} parent=0 // pred_check_branch
    %18 = sbr.rel (0) target = $region13
  $region12: #{_lambda_.10} parent=0 // pred_region
    _
  $region13: #{_lambda_.10} parent=0 // pred_fallthru
    _
  // Predicated region
  $region14: #{_lambda_.10} parent=0 // pred_check
    _
  $region15: #{_lambda_.10} parent=0 // pred_check_branch
    %20 = sbr.rel (0) target = $region17
  $region16: #{_lambda_.10} parent=0 // pred_region
    _
  $region17: #{_lambda_.10} parent=0 // pred_fallthru
    _
  // Predicated region
  $region18: #{_lambda_.10} parent=0 // pred_check
    _
  $region19: #{_lambda_.10} parent=0 // pred_check_branch
    %22 = sbr.rel (0) target = $region21
  $region20: #{_lambda_.10} parent=0 // pred_region
    _
  $region21: #{_lambda_.10} parent=0 // pred_fallthru
    _
  %v24 = vld [vmem:[%s0] sm:$0xff]
  %v25 = vld [vmem:[%s0 + $0x8] sm:$0xff]
  %v26 = vld [vmem:[%s0 + $0x10] sm:$0xff]
  %v27 = vld [vmem:[%s0 + $0x18] sm:$0xff]
  %v28 = vld [vmem:[%s0 + $0x20] sm:$0xff]
  %v29 = vld [vmem:[%s0 + $0x28] sm:$0xff]
  %v30 = vld [vmem:[%s0 + $0x30] sm:$0xff]
  %v31 = vld [vmem:[%s0 + $0x38] sm:$0xff]
  %v32 = vld [vmem:[%s0 + $0x40] sm:$0xff]
  %v33 = vld [vmem:[%s0 + $0x48] sm:$0xff]
  %v34 = vld [vmem:[%s0 + $0x50] sm:$0xff]
  %v35 = vld [vmem:[%s0 + $0x58] sm:$0xff]
  %v36 = vld [vmem:[%s0 + $0x60] sm:$0xff]
  %v37 = vld [vmem:[%s0 + $0x68] sm:$0xff]
  %v38 = vld [vmem:[%s0 + $0x70] sm:$0xff]
  %v39 = vld [vmem:[%s0 + $0x78] sm:$0xff]
  %v40 = vld [vmem:[%s0 + $0x80] sm:$0xff]
  %v41 = vld [vmem:[%s0 + $0x88] sm:$0xff]
  %v42 = vld [vmem:[%s0 + $0x90] sm:$0xff]
  %v43 = vld [vmem:[%s0 + $0x98] sm:$0xff]
  %v44 = vld [vmem:[%s0 + $0xa0] sm:$0xff]
  %v45 = vld [vmem:[%s0 + $0xa8] sm:$0xff]
  %v46 = vld [vmem:[%s0 + $0xb0] sm:$0xff]
  %v47 = vld [vmem:[%s0 + $0xb8] sm:$0xff]
  %v48 = vld [vmem:[%s0 + $0xc0] sm:$0xff]
  %v49 = vld [vmem:[%s0 + $0xc8] sm:$0xff]
  %v50 = vld [vmem:[%s0 + $0xd0] sm:$0xff]
  %v51 = vld [vmem:[%s0 + $0xd8] sm:$0xff]
  %v52 = vld [vmem:[%s0 + $0xe0] sm:$0xff]
  %v53 = vld [vmem:[%s0 + $0xe8] sm:$0xff]
  %v54 = vld [vmem:[%s0 + $0xf0] sm:$0xff]
  %v55 = vld [vmem:[%s0 + $0xf8] sm:$0xff]
  %v56 = vld [vmem:[%s0 + $0x100] sm:$0xff]
  %v57 = vld [vmem:[%s0 + $0x108] sm:$0xff]
  %v58 = vld [vmem:[%s0 + $0x110] sm:$0xff]
  %v59 = vld [vmem:[%s0 + $0x118] sm:$0xff]
  %v60 = vld [vmem:[%s0 + $0x120] sm:$0xff]
  %v61 = vld [vmem:[%s0 + $0x128] sm:$0xff]
  %v62 = vld [vmem:[%s0 + $0x130] sm:$0xff]
  %v63 = vld [vmem:[%s0 + $0x138] sm:$0xff]
  %v64 = vld [vmem:[%s0 + $0x140] sm:$0xff]
  %v65 = vld [vmem:[%s0 + $0x148] sm:$0xff]
  %v66 = vld [vmem:[%s0 + $0x150] sm:$0xff]
  %v67 = vld [vmem:[%s0 + $0x158] sm:$0xff]
  %v68 = vld [vmem:[%s0 + $0x160] sm:$0xff]
  %v69 = vld [vmem:[%s0 + $0x168] sm:$0xff]
  %v70 = vld [vmem:[%s0 + $0x170] sm:$0xff]
  %v71 = vld [vmem:[%s0 + $0x178] sm:$0xff]
  %v72 = vld [vmem:[%s0 + $0x180] sm:$0xff]
  %v73 = vld [vmem:[%s0 + $0x188] sm:$0xff]
  %v74 = vld [vmem:[%s0 + $0x190] sm:$0xff]
  %v75 = vld [vmem:[%s0 + $0x198] sm:$0xff]
  %v76 = vld [vmem:[%s0 + $0x1a0] sm:$0xff]
  %v77 = vld [vmem:[%s0 + $0x1a8] sm:$0xff]
  %v78 = vld [vmem:[%s0 + $0x1b0] sm:$0xff]
  %v79 = vld [vmem:[%s0 + $0x1b8] sm:$0xff]
  %v80 = vld [vmem:[%s0 + $0x1c0] sm:$0xff]
  %v81 = vld [vmem:[%s0 + $0x1c8] sm:$0xff]
  %v82 = vld [vmem:[%s0 + $0x1d0] sm:$0xff]
  %v83 = vld [vmem:[%s0 + $0x1d8] sm:$0xff]
  %v84 = vld [vmem:[%s0 + $0x1e0] sm:$0xff]
  %v85 = vld [vmem:[%s0 + $0x1e8] sm:$0xff]
  %v86 = vld [vmem:[%s0 + $0x1f0] sm:$0xff]
  %v87 = vld [vmem:[%s0 + $0x1f8] sm:$0xff]
  %v88 = vld [vmem:[%s0 + $0x200] sm:$0xff]
  %v89 = vld [vmem:[%s0 + $0x208] sm:$0xff]
  %v90 = vld [vmem:[%s0 + $0x210] sm:$0xff]
  %v91 = vld [vmem:[%s0 + $0x218] sm:$0xff]
  %v92 = vld [vmem:[%s0 + $0x220] sm:$0xff]
  %v93 = vld [vmem:[%s0 + $0x228] sm:$0xff]
  %v94 = vld [vmem:[%s0 + $0x230] sm:$0xff]
  %v95 = vld [vmem:[%s0 + $0x238] sm:$0xff]
  %v96 = vld [vmem:[%s0 + $0x240] sm:$0xff]
  %v97 = vld [vmem:[%s0 + $0x248] sm:$0xff]
  %v98 = vld [vmem:[%s0 + $0x250] sm:$0xff]
  %v99 = vld [vmem:[%s0 + $0x258] sm:$0xff]
  %v100 = vld [vmem:[%s0 + $0x260] sm:$0xff]
  %v101 = vld [vmem:[%s0 + $0x268] sm:$0xff]
  %v102 = vld [vmem:[%s0 + $0x270] sm:$0xff]
  %v103 = vld [vmem:[%s0 + $0x278] sm:$0xff]
  %v104 = vld [vmem:[%s0 + $0x280] sm:$0xff]
  %v105 = vld [vmem:[%s0 + $0x288] sm:$0xff]
  %v106 = vld [vmem:[%s0 + $0x290] sm:$0xff]
  %v107 = vld [vmem:[%s0 + $0x298] sm:$0xff]
  %v108 = vld [vmem:[%s0 + $0x2a0] sm:$0xff]
  %v109 = vld [vmem:[%s0 + $0x2a8] sm:$0xff]
  %v110 = vld [vmem:[%s0 + $0x2b0] sm:$0xff]
  %v111 = vld [vmem:[%s0 + $0x2b8] sm:$0xff]
  %v112 = vld [vmem:[%s0 + $0x2c0] sm:$0xff]
  %v113 = vld [vmem:[%s0 + $0x2c8] sm:$0xff]
  %v114 = vld [vmem:[%s0 + $0x2d0] sm:$0xff]
  %v115 = vld [vmem:[%s0 + $0x2d8] sm:$0xff]
  %v116 = vld [vmem:[%s0 + $0x2e0] sm:$0xff]
  %v117 = vld [vmem:[%s0 + $0x2e8] sm:$0xff]
  %v118 = vld [vmem:[%s0 + $0x2f0] sm:$0xff]
  %v119 = vld [vmem:[%s0 + $0x2f8] sm:$0xff]
  %v120 = vld [vmem:[%s0 + $0x300] sm:$0xff]
  %v121 = vld [vmem:[%s0 + $0x308] sm:$0xff]
  %v122 = vld [vmem:[%s0 + $0x310] sm:$0xff]
  %v123 = vld [vmem:[%s0 + $0x318] sm:$0xff]
  %v124 = vld [vmem:[%s0 + $0x320] sm:$0xff]
  %v125 = vld [vmem:[%s0 + $0x328] sm:$0xff]
  %v126 = vld [vmem:[%s0 + $0x330] sm:$0xff]
  %v127 = vld [vmem:[%s0 + $0x338] sm:$0xff]
  %v128 = vld [vmem:[%s0 + $0x340] sm:$0xff]
  %v129 = vld [vmem:[%s0 + $0x348] sm:$0xff]
  %v130 = vld [vmem:[%s0 + $0x350] sm:$0xff]
  %v131 = vld [vmem:[%s0 + $0x358] sm:$0xff]
  %v132 = vld [vmem:[%s0 + $0x360] sm:$0xff]
  %v133 = vld [vmem:[%s0 + $0x368] sm:$0xff]
  %v134 = vld [vmem:[%s0 + $0x370] sm:$0xff]
  %v135 = vld [vmem:[%s0 + $0x378] sm:$0xff]
  %v136 = vld [vmem:[%s0 + $0x380] sm:$0xff]
  %v137 = vld [vmem:[%s0 + $0x388] sm:$0xff]
  %v138 = vld [vmem:[%s0 + $0x390] sm:$0xff]
  %v139 = vld [vmem:[%s0 + $0x398] sm:$0xff]
  %v140 = vld [vmem:[%s0 + $0x3a0] sm:$0xff]
  %v141 = vld [vmem:[%s0 + $0x3a8] sm:$0xff]
  %v142 = vld [vmem:[%s0 + $0x3b0] sm:$0xff]
  %v143 = vld [vmem:[%s0 + $0x3b8] sm:$0xff]
  %v144 = vld [vmem:[%s0 + $0x3c0] sm:$0xff]
  %v145 = vld [vmem:[%s0 + $0x3c8] sm:$0xff]
  %v146 = vld [vmem:[%s0 + $0x3d0] sm:$0xff]
  %v147 = vld [vmem:[%s0 + $0x3d8] sm:$0xff]
  %v148 = vld [vmem:[%s0 + $0x3e0] sm:$0xff]
  %v149 = vld [vmem:[%s0 + $0x3e8] sm:$0xff]
  %v150 = vld [vmem:[%s0 + $0x3f0] sm:$0xff]
  %v151 = vld [vmem:[%s0 + $0x3f8] sm:$0xff]
  %v152 = vld [vmem:[%s0 + $0x400] sm:$0xff]
  %v153 = vld [vmem:[%s0 + $0x408] sm:$0xff]
  %v154 = vld [vmem:[%s0 + $0x410] sm:$0xff]
  %v155 = vld [vmem:[%s0 + $0x418] sm:$0xff]
  %v156 = vld [vmem:[%s0 + $0x420] sm:$0xff]
  %v157 = vld [vmem:[%s0 + $0x428] sm:$0xff]
  %v158 = vld [vmem:[%s0 + $0x430] sm:$0xff]
  %v159 = vld [vmem:[%s0 + $0x438] sm:$0xff]
  %v160 = vld [vmem:[%s0 + $0x440] sm:$0xff]
  %v161 = vld [vmem:[%s0 + $0x448] sm:$0xff]
  %v162 = vld [vmem:[%s0 + $0x450] sm:$0xff]
  %v163 = vld [vmem:[%s0 + $0x458] sm:$0xff]
  %v164 = vld [vmem:[%s0 + $0x460] sm:$0xff]
  %v165 = vld [vmem:[%s0 + $0x468] sm:$0xff]
  %v166 = vld [vmem:[%s0 + $0x470] sm:$0xff]
  %v167 = vld [vmem:[%s0 + $0x478] sm:$0xff]
  %v168 = vld [vmem:[%s0 + $0x480] sm:$0xff]
  %v169 = vld [vmem:[%s0 + $0x488] sm:$0xff]
  %v170 = vld [vmem:[%s0 + $0x490] sm:$0xff]
  %v171 = vld [vmem:[%s0 + $0x498] sm:$0xff]
  %v172 = vld [vmem:[%s0 + $0x4a0] sm:$0xff]
  %v173 = vld [vmem:[%s0 + $0x4a8] sm:$0xff]
  %v174 = vld [vmem:[%s0 + $0x4b0] sm:$0xff]
  %v175 = vld [vmem:[%s0 + $0x4b8] sm:$0xff]
  %v176 = vld [vmem:[%s0 + $0x4c0] sm:$0xff]
  %v177 = vld [vmem:[%s0 + $0x4c8] sm:$0xff]
  %v178 = vld [vmem:[%s0 + $0x4d0] sm:$0xff]
  %v179 = vld [vmem:[%s0 + $0x4d8] sm:$0xff]
  %v180 = vld [vmem:[%s0 + $0x4e0] sm:$0xff]
  %v181 = vld [vmem:[%s0 + $0x4e8] sm:$0xff]
  %v182 = vld [vmem:[%s0 + $0x4f0] sm:$0xff]
  %v183 = vld [vmem:[%s0 + $0x4f8] sm:$0xff]
  %v184 = vld [vmem:[%s0 + $0x500] sm:$0xff]
  %v185 = vld [vmem:[%s0 + $0x508] sm:$0xff]
  %v186 = vld [vmem:[%s0 + $0x510] sm:$0xff]
  %v187 = vld [vmem:[%s0 + $0x518] sm:$0xff]
  %v188 = vld [vmem:[%s0 + $0x520] sm:$0xff]
  %v189 = vld [vmem:[%s0 + $0x528] sm:$0xff]
  %v190 = vld [vmem:[%s0 + $0x530] sm:$0xff]
  %v191 = vld [vmem:[%s0 + $0x538] sm:$0xff]
  %v192 = vld [vmem:[%s0 + $0x540] sm:$0xff]
  %v193 = vld [vmem:[%s0 + $0x548] sm:$0xff]
  %v194 = vld [vmem:[%s0 + $0x550] sm:$0xff]
  %v195 = vld [vmem:[%s0 + $0x558] sm:$0xff]
  %v196 = vld [vmem:[%s0 + $0x560] sm:$0xff]
  %v197 = vld [vmem:[%s0 + $0x568] sm:$0xff]
  %v198 = vld [vmem:[%s0 + $0x570] sm:$0xff]
  %v199 = vld [vmem:[%s0 + $0x578] sm:$0xff]
  %v200 = vld [vmem:[%s0 + $0x580] sm:$0xff]
  %v201 = vld [vmem:[%s0 + $0x588] sm:$0xff]
  %v202 = vld [vmem:[%s0 + $0x590] sm:$0xff]
  %v203 = vld [vmem:[%s0 + $0x598] sm:$0xff]
  %v204 = vld [vmem:[%s0 + $0x5a0] sm:$0xff]
  %v205 = vld [vmem:[%s0 + $0x5a8] sm:$0xff]
  %v206 = vld [vmem:[%s0 + $0x5b0] sm:$0xff]
  %v207 = vld [vmem:[%s0 + $0x5b8] sm:$0xff]
  %v208 = vld [vmem:[%s0 + $0x5c0] sm:$0xff]
  %v209 = vld [vmem:[%s0 + $0x5c8] sm:$0xff]
  %v210 = vld [vmem:[%s0 + $0x5d0] sm:$0xff]
  %v211 = vld [vmem:[%s0 + $0x5d8] sm:$0xff]
  %v212 = vld [vmem:[%s0 + $0x5e0] sm:$0xff]
  %v213 = vld [vmem:[%s0 + $0x5e8] sm:$0xff]
  %v214 = vld [vmem:[%s0 + $0x5f0] sm:$0xff]
  %v215 = vld [vmem:[%s0 + $0x5f8] sm:$0xff]
  %v216 = vld [vmem:[%s0 + $0x600] sm:$0xff]
  %v217 = vld [vmem:[%s0 + $0x608] sm:$0xff]
  %v218 = vld [vmem:[%s0 + $0x610] sm:$0xff]
  %v219 = vld [vmem:[%s0 + $0x618] sm:$0xff]
  %v220 = vld [vmem:[%s0 + $0x620] sm:$0xff]
  %v221 = vld [vmem:[%s0 + $0x628] sm:$0xff]
  %v222 = vld [vmem:[%s0 + $0x630] sm:$0xff]
  %v223 = vld [vmem:[%s0 + $0x638] sm:$0xff]
  %v224 = vld [vmem:[%s0 + $0x640] sm:$0xff]
  %v225 = vld [vmem:[%s0 + $0x648] sm:$0xff]
  %v226 = vld [vmem:[%s0 + $0x650] sm:$0xff]
  %v227 = vld [vmem:[%s0 + $0x658] sm:$0xff]
  %v228 = vld [vmem:[%s0 + $0x660] sm:$0xff]
  %v229 = vld [vmem:[%s0 + $0x668] sm:$0xff]
  %v230 = vld [vmem:[%s0 + $0x670] sm:$0xff]
  %v231 = vld [vmem:[%s0 + $0x678] sm:$0xff]
  %v232 = vld [vmem:[%s0 + $0x680] sm:$0xff]
  %v233 = vld [vmem:[%s0 + $0x688] sm:$0xff]
  %v234 = vld [vmem:[%s0 + $0x690] sm:$0xff]
  %v235 = vld [vmem:[%s0 + $0x698] sm:$0xff]
  %v236 = vld [vmem:[%s0 + $0x6a0] sm:$0xff]
  %v237 = vld [vmem:[%s0 + $0x6a8] sm:$0xff]
  %v238 = vld [vmem:[%s0 + $0x6b0] sm:$0xff]
  %v239 = vld [vmem:[%s0 + $0x6b8] sm:$0xff]
  %v240 = vld [vmem:[%s0 + $0x6c0] sm:$0xff]
  %v241 = vld [vmem:[%s0 + $0x6c8] sm:$0xff]
  %v242 = vld [vmem:[%s0 + $0x6d0] sm:$0xff]
  %v243 = vld [vmem:[%s0 + $0x6d8] sm:$0xff]
  %v244 = vld [vmem:[%s0 + $0x6e0] sm:$0xff]
  %v245 = vld [vmem:[%s0 + $0x6e8] sm:$0xff]
  %v246 = vld [vmem:[%s0 + $0x6f0] sm:$0xff]
  %v247 = vld [vmem:[%s0 + $0x6f8] sm:$0xff]
  %v248 = vld [vmem:[%s0 + $0x700] sm:$0xff]
  %v249 = vld [vmem:[%s0 + $0x708] sm:$0xff]
  %v250 = vld [vmem:[%s0 + $0x710] sm:$0xff]
  %v251 = vld [vmem:[%s0 + $0x718] sm:$0xff]
  %v252 = vld [vmem:[%s0 + $0x720] sm:$0xff]
  %v253 = vld [vmem:[%s0 + $0x728] sm:$0xff]
  %v254 = vld [vmem:[%s0 + $0x730] sm:$0xff]
  %v255 = vld [vmem:[%s0 + $0x738] sm:$0xff]
  %v256 = vld [vmem:[%s0 + $0x740] sm:$0xff]
  %v257 = vld [vmem:[%s0 + $0x748] sm:$0xff]
  %v258 = vld [vmem:[%s0 + $0x750] sm:$0xff]
  %v259 = vld [vmem:[%s0 + $0x758] sm:$0xff]
  %v260 = vld [vmem:[%s0 + $0x760] sm:$0xff]
  %v261 = vld [vmem:[%s0 + $0x768] sm:$0xff]
  %v262 = vld [vmem:[%s0 + $0x770] sm:$0xff]
  %v263 = vld [vmem:[%s0 + $0x778] sm:$0xff]
  %v264 = vld [vmem:[%s0 + $0x780] sm:$0xff]
  %v265 = vld [vmem:[%s0 + $0x788] sm:$0xff]
  %v266 = vld [vmem:[%s0 + $0x790] sm:$0xff]
  %v267 = vld [vmem:[%s0 + $0x798] sm:$0xff]
  %v268 = vld [vmem:[%s0 + $0x7a0] sm:$0xff]
  %v269 = vld [vmem:[%s0 + $0x7a8] sm:$0xff]
  %v270 = vld [vmem:[%s0 + $0x7b0] sm:$0xff]
  %v271 = vld [vmem:[%s0 + $0x7b8] sm:$0xff]
  %v272 = vld [vmem:[%s0 + $0x7c0] sm:$0xff]
  %v273 = vld [vmem:[%s0 + $0x7c8] sm:$0xff]
  %v274 = vld [vmem:[%s0 + $0x7d0] sm:$0xff]
  %v275 = vld [vmem:[%s0 + $0x7d8] sm:$0xff]
  %v276 = vld [vmem:[%s0 + $0x7e0] sm:$0xff]
  %v277 = vld [vmem:[%s0 + $0x7e8] sm:$0xff]
  %v278 = vld [vmem:[%s0 + $0x7f0] sm:$0xff]
  %v279 = vld [vmem:[%s0 + $0x7f8] sm:$0xff]
  %v280 = vld [vmem:[%s0 + $0x800] sm:$0xff]
  %v281 = vld [vmem:[%s0 + $0x808] sm:$0xff]
  %v282 = vld [vmem:[%s0 + $0x810] sm:$0xff]
  %v283 = vld [vmem:[%s0 + $0x818] sm:$0xff]
  %v284 = vld [vmem:[%s0 + $0x820] sm:$0xff]
  %v285 = vld [vmem:[%s0 + $0x828] sm:$0xff]
  %v286 = vld [vmem:[%s0 + $0x830] sm:$0xff]
  %v287 = vld [vmem:[%s0 + $0x838] sm:$0xff]
  %v288 = vld [vmem:[%s0 + $0x840] sm:$0xff]
  %v289 = vld [vmem:[%s0 + $0x848] sm:$0xff]
  %v290 = vld [vmem:[%s0 + $0x850] sm:$0xff]
  %v291 = vld [vmem:[%s0 + $0x858] sm:$0xff]
  %v292 = vld [vmem:[%s0 + $0x860] sm:$0xff]
  %v293 = vld [vmem:[%s0 + $0x868] sm:$0xff]
  %v294 = vld [vmem:[%s0 + $0x870] sm:$0xff]
  %v295 = vld [vmem:[%s0 + $0x878] sm:$0xff]
  %v296 = vld [vmem:[%s0 + $0x880] sm:$0xff]
  %v297 = vld [vmem:[%s0 + $0x888] sm:$0xff]
  %v298 = vld [vmem:[%s0 + $0x890] sm:$0xff]
  %v299 = vld [vmem:[%s0 + $0x898] sm:$0xff]
  %v300 = vld [vmem:[%s0 + $0x8a0] sm:$0xff]
  %v301 = vld [vmem:[%s0 + $0x8a8] sm:$0xff]
  %v302 = vld [vmem:[%s0 + $0x8b0] sm:$0xff]
  %v303 = vld [vmem:[%s0 + $0x8b8] sm:$0xff]
  %v304 = vld [vmem:[%s0 + $0x8c0] sm:$0xff]
  %v305 = vld [vmem:[%s0 + $0x8c8] sm:$0xff]
  %v306 = vld [vmem:[%s0 + $0x8d0] sm:$0xff]
  %v307 = vld [vmem:[%s0 + $0x8d8] sm:$0xff]
  %v308 = vld [vmem:[%s0 + $0x8e0] sm:$0xff]
  %v309 = vld [vmem:[%s0 + $0x8e8] sm:$0xff]
  %v310 = vld [vmem:[%s0 + $0x8f0] sm:$0xff]
  %v311 = vld [vmem:[%s0 + $0x8f8] sm:$0xff]
  %v312 = vld [vmem:[%s0 + $0x900] sm:$0xff]
  %v313 = vld [vmem:[%s0 + $0x908] sm:$0xff]
  %v314 = vld [vmem:[%s0 + $0x910] sm:$0xff]
  %v315 = vld [vmem:[%s0 + $0x918] sm:$0xff]
  %v316 = vld [vmem:[%s0 + $0x920] sm:$0xff]
  %v317 = vld [vmem:[%s0 + $0x928] sm:$0xff]
  %v318 = vld [vmem:[%s0 + $0x930] sm:$0xff]
  %v319 = vld [vmem:[%s0 + $0x938] sm:$0xff]
  %v320 = vld [vmem:[%s0 + $0x940] sm:$0xff]
  %v321 = vld [vmem:[%s0 + $0x948] sm:$0xff]
  %v322 = vld [vmem:[%s0 + $0x950] sm:$0xff]
  %v323 = vld [vmem:[%s0 + $0x958] sm:$0xff]
  %v324 = vld [vmem:[%s0 + $0x960] sm:$0xff]
  %v325 = vld [vmem:[%s0 + $0x968] sm:$0xff]
  %v326 = vld [vmem:[%s0 + $0x970] sm:$0xff]
  %v327 = vld [vmem:[%s0 + $0x978] sm:$0xff]
  %v328 = vld [vmem:[%s0 + $0x980] sm:$0xff]
  %v329 = vld [vmem:[%s0 + $0x988] sm:$0xff]
  %v330 = vld [vmem:[%s0 + $0x990] sm:$0xff]
  %v331 = vld [vmem:[%s0 + $0x998] sm:$0xff]
  %v332 = vld [vmem:[%s0 + $0x9a0] sm:$0xff]
  %v333 = vld [vmem:[%s0 + $0x9a8] sm:$0xff]
  %v334 = vld [vmem:[%s0 + $0x9b0] sm:$0xff]
  %v335 = vld [vmem:[%s0 + $0x9b8] sm:$0xff]
  %v336 = vld [vmem:[%s0 + $0x9c0] sm:$0xff]
  %v337 = vld [vmem:[%s0 + $0x9c8] sm:$0xff]
  %v338 = vld [vmem:[%s0 + $0x9d0] sm:$0xff]
  %v339 = vld [vmem:[%s0 + $0x9d8] sm:$0xff]
  %v340 = vld [vmem:[%s0 + $0x9e0] sm:$0xff]
  %v341 = vld [vmem:[%s0 + $0x9e8] sm:$0xff]
  %v342 = vld [vmem:[%s0 + $0x9f0] sm:$0xff]
  %v343 = vld [vmem:[%s0 + $0x9f8] sm:$0xff]
  %v344 = vld [vmem:[%s1] sm:$0x1f]
  %v346 = vperm.slane %v344, 0
  %v347 = vperm.slane %v344, 1
  %v348 = vperm.slane %v344, 2
  %v349 = vperm.slane %v344, 3
  %v350 = vperm.slane %v344, 4
  %v356 = vmul.f32 %v24, %v346
  %v357 = vmul.f32 %v25, %v347
  %v358 = vmul.f32 %v26, %v348
  %v359 = vmul.f32 %v27, %v349
  %v360 = vmul.f32 %v28, %v350
  %v361 = vmul.f32 %v29, %v346
  %v362 = vmul.f32 %v30, %v347
  %v363 = vmul.f32 %v31, %v348
  %v364 = vmul.f32 %v32, %v349
  %v365 = vmul.f32 %v33, %v350
  %v366 = vmul.f32 %v34, %v346
  %v367 = vmul.f32 %v35, %v347
  %v368 = vmul.f32 %v36, %v348
  %v369 = vmul.f32 %v37, %v349
  %v370 = vmul.f32 %v38, %v350
  %v371 = vmul.f32 %v39, %v346
  %v372 = vmul.f32 %v40, %v347
  %v373 = vmul.f32 %v41, %v348
  %v374 = vmul.f32 %v42, %v349
  %v375 = vmul.f32 %v43, %v350
  %v376 = vmul.f32 %v44, %v346
  %v377 = vmul.f32 %v45, %v347
  %v378 = vmul.f32 %v46, %v348
  %v379 = vmul.f32 %v47, %v349
  %v380 = vmul.f32 %v48, %v350
  %v381 = vmul.f32 %v49, %v346
  %v382 = vmul.f32 %v50, %v347
  %v383 = vmul.f32 %v51, %v348
  %v384 = vmul.f32 %v52, %v349
  %v385 = vmul.f32 %v53, %v350
  %v386 = vmul.f32 %v54, %v346
  %v387 = vmul.f32 %v55, %v347
  %v388 = vmul.f32 %v56, %v348
  %v389 = vmul.f32 %v57, %v349
  %v390 = vmul.f32 %v58, %v350
  %v391 = vmul.f32 %v59, %v346
  %v392 = vmul.f32 %v60, %v347
  %v393 = vmul.f32 %v61, %v348
  %v394 = vmul.f32 %v62, %v349
  %v395 = vmul.f32 %v63, %v350
  %v396 = vmul.f32 %v64, %v346
  %v397 = vmul.f32 %v65, %v347
  %v398 = vmul.f32 %v66, %v348
  %v399 = vmul.f32 %v67, %v349
  %v400 = vmul.f32 %v68, %v350
  %v401 = vmul.f32 %v69, %v346
  %v402 = vmul.f32 %v70, %v347
  %v403 = vmul.f32 %v71, %v348
  %v404 = vmul.f32 %v72, %v349
  %v405 = vmul.f32 %v73, %v350
  %v406 = vmul.f32 %v74, %v346
  %v407 = vmul.f32 %v75, %v347
  %v408 = vmul.f32 %v76, %v348
  %v409 = vmul.f32 %v77, %v349
  %v410 = vmul.f32 %v78, %v350
  %v411 = vmul.f32 %v79, %v346
  %v412 = vmul.f32 %v80, %v347
  %v413 = vmul.f32 %v81, %v348
  %v414 = vmul.f32 %v82, %v349
  %v415 = vmul.f32 %v83, %v350
  %v416 = vmul.f32 %v84, %v346
  %v417 = vmul.f32 %v85, %v347
  %v418 = vmul.f32 %v86, %v348
  %v419 = vmul.f32 %v87, %v349
  %v420 = vmul.f32 %v88, %v350
  %v421 = vmul.f32 %v89, %v346
  %v422 = vmul.f32 %v90, %v347
  %v423 = vmul.f32 %v91, %v348
  %v424 = vmul.f32 %v92, %v349
  %v425 = vmul.f32 %v93, %v350
  %v426 = vmul.f32 %v94, %v346
  %v427 = vmul.f32 %v95, %v347
  %v428 = vmul.f32 %v96, %v348
  %v429 = vmul.f32 %v97, %v349
  %v430 = vmul.f32 %v98, %v350
  %v431 = vmul.f32 %v99, %v346
  %v432 = vmul.f32 %v100, %v347
  %v433 = vmul.f32 %v101, %v348
  %v434 = vmul.f32 %v102, %v349
  %v435 = vmul.f32 %v103, %v350
  %v436 = vmul.f32 %v104, %v346
  %v437 = vmul.f32 %v105, %v347
  %v438 = vmul.f32 %v106, %v348
  %v439 = vmul.f32 %v107, %v349
  %v440 = vmul.f32 %v108, %v350
  %v441 = vmul.f32 %v109, %v346
  %v442 = vmul.f32 %v110, %v347
  %v443 = vmul.f32 %v111, %v348
  %v444 = vmul.f32 %v112, %v349
  %v445 = vmul.f32 %v113, %v350
  %v446 = vmul.f32 %v114, %v346
  %v447 = vmul.f32 %v115, %v347
  %v448 = vmul.f32 %v116, %v348
  %v449 = vmul.f32 %v117, %v349
  %v450 = vmul.f32 %v118, %v350
  %v451 = vmul.f32 %v119, %v346
  %v452 = vmul.f32 %v120, %v347
  %v453 = vmul.f32 %v121, %v348
  %v454 = vmul.f32 %v122, %v349
  %v455 = vmul.f32 %v123, %v350
  %v456 = vmul.f32 %v124, %v346
  %v457 = vmul.f32 %v125, %v347
  %v458 = vmul.f32 %v126, %v348
  %v459 = vmul.f32 %v127, %v349
  %v460 = vmul.f32 %v128, %v350
  %v461 = vmul.f32 %v129, %v346
  %v462 = vmul.f32 %v130, %v347
  %v463 = vmul.f32 %v131, %v348
  %v464 = vmul.f32 %v132, %v349
  %v465 = vmul.f32 %v133, %v350
  %v466 = vmul.f32 %v134, %v346
  %v467 = vmul.f32 %v135, %v347
  %v468 = vmul.f32 %v136, %v348
  %v469 = vmul.f32 %v137, %v349
  %v470 = vmul.f32 %v138, %v350
  %v471 = vmul.f32 %v139, %v346
  %v472 = vmul.f32 %v140, %v347
  %v473 = vmul.f32 %v141, %v348
  %v474 = vmul.f32 %v142, %v349
  %v475 = vmul.f32 %v143, %v350
  %v476 = vmul.f32 %v144, %v346
  %v477 = vmul.f32 %v145, %v347
  %v478 = vmul.f32 %v146, %v348
  %v479 = vmul.f32 %v147, %v349
  %v480 = vmul.f32 %v148, %v350
  %v481 = vmul.f32 %v149, %v346
  %v482 = vmul.f32 %v150, %v347
  %v483 = vmul.f32 %v151, %v348
  %v484 = vmul.f32 %v152, %v349
  %v485 = vmul.f32 %v153, %v350
  %v486 = vmul.f32 %v154, %v346
  %v487 = vmul.f32 %v155, %v347
  %v488 = vmul.f32 %v156, %v348
  %v489 = vmul.f32 %v157, %v349
  %v490 = vmul.f32 %v158, %v350
  %v491 = vmul.f32 %v159, %v346
  %v492 = vmul.f32 %v160, %v347
  %v493 = vmul.f32 %v161, %v348
  %v494 = vmul.f32 %v162, %v349
  %v495 = vmul.f32 %v163, %v350
  %v496 = vmul.f32 %v164, %v346
  %v497 = vmul.f32 %v165, %v347
  %v498 = vmul.f32 %v166, %v348
  %v499 = vmul.f32 %v167, %v349
  %v500 = vmul.f32 %v168, %v350
  %v501 = vmul.f32 %v169, %v346
  %v502 = vmul.f32 %v170, %v347
  %v503 = vmul.f32 %v171, %v348
  %v504 = vmul.f32 %v172, %v349
  %v505 = vmul.f32 %v173, %v350
  %v506 = vmul.f32 %v174, %v346
  %v507 = vmul.f32 %v175, %v347
  %v508 = vmul.f32 %v176, %v348
  %v509 = vmul.f32 %v177, %v349
  %v510 = vmul.f32 %v178, %v350
  %v511 = vmul.f32 %v179, %v346
  %v512 = vmul.f32 %v180, %v347
  %v513 = vmul.f32 %v181, %v348
  %v514 = vmul.f32 %v182, %v349
  %v515 = vmul.f32 %v183, %v350
  %v516 = vmul.f32 %v184, %v346
  %v517 = vmul.f32 %v185, %v347
  %v518 = vmul.f32 %v186, %v348
  %v519 = vmul.f32 %v187, %v349
  %v520 = vmul.f32 %v188, %v350
  %v521 = vmul.f32 %v189, %v346
  %v522 = vmul.f32 %v190, %v347
  %v523 = vmul.f32 %v191, %v348
  %v524 = vmul.f32 %v192, %v349
  %v525 = vmul.f32 %v193, %v350
  %v526 = vmul.f32 %v194, %v346
  %v527 = vmul.f32 %v195, %v347
  %v528 = vmul.f32 %v196, %v348
  %v529 = vmul.f32 %v197, %v349
  %v530 = vmul.f32 %v198, %v350
  %v531 = vmul.f32 %v199, %v346
  %v532 = vmul.f32 %v200, %v347
  %v533 = vmul.f32 %v201, %v348
  %v534 = vmul.f32 %v202, %v349
  %v535 = vmul.f32 %v203, %v350
  %v536 = vmul.f32 %v204, %v346
  %v537 = vmul.f32 %v205, %v347
  %v538 = vmul.f32 %v206, %v348
  %v539 = vmul.f32 %v207, %v349
  %v540 = vmul.f32 %v208, %v350
  %v541 = vmul.f32 %v209, %v346
  %v542 = vmul.f32 %v210, %v347
  %v543 = vmul.f32 %v211, %v348
  %v544 = vmul.f32 %v212, %v349
  %v545 = vmul.f32 %v213, %v350
  %v546 = vmul.f32 %v214, %v346
  %v547 = vmul.f32 %v215, %v347
  %v548 = vmul.f32 %v216, %v348
  %v549 = vmul.f32 %v217, %v349
  %v550 = vmul.f32 %v218, %v350
  %v551 = vmul.f32 %v219, %v346
  %v552 = vmul.f32 %v220, %v347
  %v553 = vmul.f32 %v221, %v348
  %v554 = vmul.f32 %v222, %v349
  %v555 = vmul.f32 %v223, %v350
  %v556 = vmul.f32 %v224, %v346
  %v557 = vmul.f32 %v225, %v347
  %v558 = vmul.f32 %v226, %v348
  %v559 = vmul.f32 %v227, %v349
  %v560 = vmul.f32 %v228, %v350
  %v561 = vmul.f32 %v229, %v346
  %v562 = vmul.f32 %v230, %v347
  %v563 = vmul.f32 %v231, %v348
  %v564 = vmul.f32 %v232, %v349
  %v565 = vmul.f32 %v233, %v350
  %v566 = vmul.f32 %v234, %v346
  %v567 = vmul.f32 %v235, %v347
  %v568 = vmul.f32 %v236, %v348
  %v569 = vmul.f32 %v237, %v349
  %v570 = vmul.f32 %v238, %v350
  %v571 = vmul.f32 %v239, %v346
  %v572 = vmul.f32 %v240, %v347
  %v573 = vmul.f32 %v241, %v348
  %v574 = vmul.f32 %v242, %v349
  %v575 = vmul.f32 %v243, %v350
  %v576 = vmul.f32 %v244, %v346
  %v577 = vmul.f32 %v245, %v347
  %v578 = vmul.f32 %v246, %v348
  %v579 = vmul.f32 %v247, %v349
  %v580 = vmul.f32 %v248, %v350
  %v581 = vmul.f32 %v249, %v346
  %v582 = vmul.f32 %v250, %v347
  %v583 = vmul.f32 %v251, %v348
  %v584 = vmul.f32 %v252, %v349
  %v585 = vmul.f32 %v253, %v350
  %v586 = vmul.f32 %v254, %v346
  %v587 = vmul.f32 %v255, %v347
  %v588 = vmul.f32 %v256, %v348
  %v589 = vmul.f32 %v257, %v349
  %v590 = vmul.f32 %v258, %v350
  %v591 = vmul.f32 %v259, %v346
  %v592 = vmul.f32 %v260, %v347
  %v593 = vmul.f32 %v261, %v348
  %v594 = vmul.f32 %v262, %v349
  %v595 = vmul.f32 %v263, %v350
  %v596 = vmul.f32 %v264, %v346
  %v597 = vmul.f32 %v265, %v347
  %v598 = vmul.f32 %v266, %v348
  %v599 = vmul.f32 %v267, %v349
  %v600 = vmul.f32 %v268, %v350
  %v601 = vmul.f32 %v269, %v346
  %v602 = vmul.f32 %v270, %v347
  %v603 = vmul.f32 %v271, %v348
  %v604 = vmul.f32 %v272, %v349
  %v605 = vmul.f32 %v273, %v350
  %v606 = vmul.f32 %v274, %v346
  %v607 = vmul.f32 %v275, %v347
  %v608 = vmul.f32 %v276, %v348
  %v609 = vmul.f32 %v277, %v349
  %v610 = vmul.f32 %v278, %v350
  %v611 = vmul.f32 %v279, %v346
  %v612 = vmul.f32 %v280, %v347
  %v613 = vmul.f32 %v281, %v348
  %v614 = vmul.f32 %v282, %v349
  %v615 = vmul.f32 %v283, %v350
  %v616 = vmul.f32 %v284, %v346
  %v617 = vmul.f32 %v285, %v347
  %v618 = vmul.f32 %v286, %v348
  %v619 = vmul.f32 %v287, %v349
  %v620 = vmul.f32 %v288, %v350
  %v621 = vmul.f32 %v289, %v346
  %v622 = vmul.f32 %v290, %v347
  %v623 = vmul.f32 %v291, %v348
  %v624 = vmul.f32 %v292, %v349
  %v625 = vmul.f32 %v293, %v350
  %v626 = vmul.f32 %v294, %v346
  %v627 = vmul.f32 %v295, %v347
  %v628 = vmul.f32 %v296, %v348
  %v629 = vmul.f32 %v297, %v349
  %v630 = vmul.f32 %v298, %v350
  %v631 = vmul.f32 %v299, %v346
  %v632 = vmul.f32 %v300, %v347
  %v633 = vmul.f32 %v301, %v348
  %v634 = vmul.f32 %v302, %v349
  %v635 = vmul.f32 %v303, %v350
  %v636 = vmul.f32 %v304, %v346
  %v637 = vmul.f32 %v305, %v347
  %v638 = vmul.f32 %v306, %v348
  %v639 = vmul.f32 %v307, %v349
  %v640 = vmul.f32 %v308, %v350
  %v641 = vmul.f32 %v309, %v346
  %v642 = vmul.f32 %v310, %v347
  %v643 = vmul.f32 %v311, %v348
  %v644 = vmul.f32 %v312, %v349
  %v645 = vmul.f32 %v313, %v350
  %v646 = vmul.f32 %v314, %v346
  %v647 = vmul.f32 %v315, %v347
  %v648 = vmul.f32 %v316, %v348
  %v649 = vmul.f32 %v317, %v349
  %v650 = vmul.f32 %v318, %v350
  %v651 = vmul.f32 %v319, %v346
  %v652 = vmul.f32 %v320, %v347
  %v653 = vmul.f32 %v321, %v348
  %v654 = vmul.f32 %v322, %v349
  %v655 = vmul.f32 %v323, %v350
  %v656 = vmul.f32 %v324, %v346
  %v657 = vmul.f32 %v325, %v347
  %v658 = vmul.f32 %v326, %v348
  %v659 = vmul.f32 %v327, %v349
  %v660 = vmul.f32 %v328, %v350
  %v661 = vmul.f32 %v329, %v346
  %v662 = vmul.f32 %v330, %v347
  %v663 = vmul.f32 %v331, %v348
  %v664 = vmul.f32 %v332, %v349
  %v665 = vmul.f32 %v333, %v350
  %v666 = vmul.f32 %v334, %v346
  %v667 = vmul.f32 %v335, %v347
  %v668 = vmul.f32 %v336, %v348
  %v669 = vmul.f32 %v337, %v349
  %v670 = vmul.f32 %v338, %v350
  %v671 = vmul.f32 %v339, %v346
  %v672 = vmul.f32 %v340, %v347
  %v673 = vmul.f32 %v341, %v348
  %v674 = vmul.f32 %v342, %v349
  %v675 = vmul.f32 %v343, %v350
  %v676 = vld [vmem:[%s2] sm:$0x1f]
  %v678 = vperm.slane %v676, 0
  %v679 = vperm.slane %v676, 1
  %v680 = vperm.slane %v676, 2
  %v681 = vperm.slane %v676, 3
  %v682 = vperm.slane %v676, 4
  %v688 = vadd.f32 %v356, %v678
  %v689 = vadd.f32 %v357, %v679
  %v690 = vadd.f32 %v358, %v680
  %v691 = vadd.f32 %v359, %v681
  %v692 = vadd.f32 %v360, %v682
  %v693 = vadd.f32 %v361, %v678
  %v694 = vadd.f32 %v362, %v679
  %v695 = vadd.f32 %v363, %v680
  %v696 = vadd.f32 %v364, %v681
  %v697 = vadd.f32 %v365, %v682
  %v698 = vadd.f32 %v366, %v678
  %v699 = vadd.f32 %v367, %v679
  %v700 = vadd.f32 %v368, %v680
  %v701 = vadd.f32 %v369, %v681
  %v702 = vadd.f32 %v370, %v682
  %v703 = vadd.f32 %v371, %v678
  %v704 = vadd.f32 %v372, %v679
  %v705 = vadd.f32 %v373, %v680
  %v706 = vadd.f32 %v374, %v681
  %v707 = vadd.f32 %v375, %v682
  %v708 = vadd.f32 %v376, %v678
  %v709 = vadd.f32 %v377, %v679
  %v710 = vadd.f32 %v378, %v680
  %v711 = vadd.f32 %v379, %v681
  %v712 = vadd.f32 %v380, %v682
  %v713 = vadd.f32 %v381, %v678
  %v714 = vadd.f32 %v382, %v679
  %v715 = vadd.f32 %v383, %v680
  %v716 = vadd.f32 %v384, %v681
  %v717 = vadd.f32 %v385, %v682
  %v718 = vadd.f32 %v386, %v678
  %v719 = vadd.f32 %v387, %v679
  %v720 = vadd.f32 %v388, %v680
  %v721 = vadd.f32 %v389, %v681
  %v722 = vadd.f32 %v390, %v682
  %v723 = vadd.f32 %v391, %v678
  %v724 = vadd.f32 %v392, %v679
  %v725 = vadd.f32 %v393, %v680
  %v726 = vadd.f32 %v394, %v681
  %v727 = vadd.f32 %v395, %v682
  %v728 = vadd.f32 %v396, %v678
  %v729 = vadd.f32 %v397, %v679
  %v730 = vadd.f32 %v398, %v680
  %v731 = vadd.f32 %v399, %v681
  %v732 = vadd.f32 %v400, %v682
  %v733 = vadd.f32 %v401, %v678
  %v734 = vadd.f32 %v402, %v679
  %v735 = vadd.f32 %v403, %v680
  %v736 = vadd.f32 %v404, %v681
  %v737 = vadd.f32 %v405, %v682
  %v738 = vadd.f32 %v406, %v678
  %v739 = vadd.f32 %v407, %v679
  %v740 = vadd.f32 %v408, %v680
  %v741 = vadd.f32 %v409, %v681
  %v742 = vadd.f32 %v410, %v682
  %v743 = vadd.f32 %v411, %v678
  %v744 = vadd.f32 %v412, %v679
  %v745 = vadd.f32 %v413, %v680
  %v746 = vadd.f32 %v414, %v681
  %v747 = vadd.f32 %v415, %v682
  %v748 = vadd.f32 %v416, %v678
  %v749 = vadd.f32 %v417, %v679
  %v750 = vadd.f32 %v418, %v680
  %v751 = vadd.f32 %v419, %v681
  %v752 = vadd.f32 %v420, %v682
  %v753 = vadd.f32 %v421, %v678
  %v754 = vadd.f32 %v422, %v679
  %v755 = vadd.f32 %v423, %v680
  %v756 = vadd.f32 %v424, %v681
  %v757 = vadd.f32 %v425, %v682
  %v758 = vadd.f32 %v426, %v678
  %v759 = vadd.f32 %v427, %v679
  %v760 = vadd.f32 %v428, %v680
  %v761 = vadd.f32 %v429, %v681
  %v762 = vadd.f32 %v430, %v682
  %v763 = vadd.f32 %v431, %v678
  %v764 = vadd.f32 %v432, %v679
  %v765 = vadd.f32 %v433, %v680
  %v766 = vadd.f32 %v434, %v681
  %v767 = vadd.f32 %v435, %v682
  %v768 = vadd.f32 %v436, %v678
  %v769 = vadd.f32 %v437, %v679
  %v770 = vadd.f32 %v438, %v680
  %v771 = vadd.f32 %v439, %v681
  %v772 = vadd.f32 %v440, %v682
  %v773 = vadd.f32 %v441, %v678
  %v774 = vadd.f32 %v442, %v679
  %v775 = vadd.f32 %v443, %v680
  %v776 = vadd.f32 %v444, %v681
  %v777 = vadd.f32 %v445, %v682
  %v778 = vadd.f32 %v446, %v678
  %v779 = vadd.f32 %v447, %v679
  %v780 = vadd.f32 %v448, %v680
  %v781 = vadd.f32 %v449, %v681
  %v782 = vadd.f32 %v450, %v682
  %v783 = vadd.f32 %v451, %v678
  %v784 = vadd.f32 %v452, %v679
  %v785 = vadd.f32 %v453, %v680
  %v786 = vadd.f32 %v454, %v681
  %v787 = vadd.f32 %v455, %v682
  %v788 = vadd.f32 %v456, %v678
  %v789 = vadd.f32 %v457, %v679
  %v790 = vadd.f32 %v458, %v680
  %v791 = vadd.f32 %v459, %v681
  %v792 = vadd.f32 %v460, %v682
  %v793 = vadd.f32 %v461, %v678
  %v794 = vadd.f32 %v462, %v679
  %v795 = vadd.f32 %v463, %v680
  %v796 = vadd.f32 %v464, %v681
  %v797 = vadd.f32 %v465, %v682
  %v798 = vadd.f32 %v466, %v678
  %v799 = vadd.f32 %v467, %v679
  %v800 = vadd.f32 %v468, %v680
  %v801 = vadd.f32 %v469, %v681
  %v802 = vadd.f32 %v470, %v682
  %v803 = vadd.f32 %v471, %v678
  %v804 = vadd.f32 %v472, %v679
  %v805 = vadd.f32 %v473, %v680
  %v806 = vadd.f32 %v474, %v681
  %v807 = vadd.f32 %v475, %v682
  %v808 = vadd.f32 %v476, %v678
  %v809 = vadd.f32 %v477, %v679
  %v810 = vadd.f32 %v478, %v680
  %v811 = vadd.f32 %v479, %v681
  %v812 = vadd.f32 %v480, %v682
  %v813 = vadd.f32 %v481, %v678
  %v814 = vadd.f32 %v482, %v679
  %v815 = vadd.f32 %v483, %v680
  %v816 = vadd.f32 %v484, %v681
  %v817 = vadd.f32 %v485, %v682
  %v818 = vadd.f32 %v486, %v678
  %v819 = vadd.f32 %v487, %v679
  %v820 = vadd.f32 %v488, %v680
  %v821 = vadd.f32 %v489, %v681
  %v822 = vadd.f32 %v490, %v682
  %v823 = vadd.f32 %v491, %v678
  %v824 = vadd.f32 %v492, %v679
  %v825 = vadd.f32 %v493, %v680
  %v826 = vadd.f32 %v494, %v681
  %v827 = vadd.f32 %v495, %v682
  %v828 = vadd.f32 %v496, %v678
  %v829 = vadd.f32 %v497, %v679
  %v830 = vadd.f32 %v498, %v680
  %v831 = vadd.f32 %v499, %v681
  %v832 = vadd.f32 %v500, %v682
  %v833 = vadd.f32 %v501, %v678
  %v834 = vadd.f32 %v502, %v679
  %v835 = vadd.f32 %v503, %v680
  %v836 = vadd.f32 %v504, %v681
  %v837 = vadd.f32 %v505, %v682
  %v838 = vadd.f32 %v506, %v678
  %v839 = vadd.f32 %v507, %v679
  %v840 = vadd.f32 %v508, %v680
  %v841 = vadd.f32 %v509, %v681
  %v842 = vadd.f32 %v510, %v682
  %v843 = vadd.f32 %v511, %v678
  %v844 = vadd.f32 %v512, %v679
  %v845 = vadd.f32 %v513, %v680
  %v846 = vadd.f32 %v514, %v681
  %v847 = vadd.f32 %v515, %v682
  %v848 = vadd.f32 %v516, %v678
  %v849 = vadd.f32 %v517, %v679
  %v850 = vadd.f32 %v518, %v680
  %v851 = vadd.f32 %v519, %v681
  %v852 = vadd.f32 %v520, %v682
  %v853 = vadd.f32 %v521, %v678
  %v854 = vadd.f32 %v522, %v679
  %v855 = vadd.f32 %v523, %v680
  %v856 = vadd.f32 %v524, %v681
  %v857 = vadd.f32 %v525, %v682
  %v858 = vadd.f32 %v526, %v678
  %v859 = vadd.f32 %v527, %v679
  %v860 = vadd.f32 %v528, %v680
  %v861 = vadd.f32 %v529, %v681
  %v862 = vadd.f32 %v530, %v682
  %v863 = vadd.f32 %v531, %v678
  %v864 = vadd.f32 %v532, %v679
  %v865 = vadd.f32 %v533, %v680
  %v866 = vadd.f32 %v534, %v681
  %v867 = vadd.f32 %v535, %v682
  %v868 = vadd.f32 %v536, %v678
  %v869 = vadd.f32 %v537, %v679
  %v870 = vadd.f32 %v538, %v680
  %v871 = vadd.f32 %v539, %v681
  %v872 = vadd.f32 %v540, %v682
  %v873 = vadd.f32 %v541, %v678
  %v874 = vadd.f32 %v542, %v679
  %v875 = vadd.f32 %v543, %v680
  %v876 = vadd.f32 %v544, %v681
  %v877 = vadd.f32 %v545, %v682
  %v878 = vadd.f32 %v546, %v678
  %v879 = vadd.f32 %v547, %v679
  %v880 = vadd.f32 %v548, %v680
  %v881 = vadd.f32 %v549, %v681
  %v882 = vadd.f32 %v550, %v682
  %v883 = vadd.f32 %v551, %v678
  %v884 = vadd.f32 %v552, %v679
  %v885 = vadd.f32 %v553, %v680
  %v886 = vadd.f32 %v554, %v681
  %v887 = vadd.f32 %v555, %v682
  %v888 = vadd.f32 %v556, %v678
  %v889 = vadd.f32 %v557, %v679
  %v890 = vadd.f32 %v558, %v680
  %v891 = vadd.f32 %v559, %v681
  %v892 = vadd.f32 %v560, %v682
  %v893 = vadd.f32 %v561, %v678
  %v894 = vadd.f32 %v562, %v679
  %v895 = vadd.f32 %v563, %v680
  %v896 = vadd.f32 %v564, %v681
  %v897 = vadd.f32 %v565, %v682
  %v898 = vadd.f32 %v566, %v678
  %v899 = vadd.f32 %v567, %v679
  %v900 = vadd.f32 %v568, %v680
  %v901 = vadd.f32 %v569, %v681
  %v902 = vadd.f32 %v570, %v682
  %v903 = vadd.f32 %v571, %v678
  %v904 = vadd.f32 %v572, %v679
  %v905 = vadd.f32 %v573, %v680
  %v906 = vadd.f32 %v574, %v681
  %v907 = vadd.f32 %v575, %v682
  %v908 = vadd.f32 %v576, %v678
  %v909 = vadd.f32 %v577, %v679
  %v910 = vadd.f32 %v578, %v680
  %v911 = vadd.f32 %v579, %v681
  %v912 = vadd.f32 %v580, %v682
  %v913 = vadd.f32 %v581, %v678
  %v914 = vadd.f32 %v582, %v679
  %v915 = vadd.f32 %v583, %v680
  %v916 = vadd.f32 %v584, %v681
  %v917 = vadd.f32 %v585, %v682
  %v918 = vadd.f32 %v586, %v678
  %v919 = vadd.f32 %v587, %v679
  %v920 = vadd.f32 %v588, %v680
  %v921 = vadd.f32 %v589, %v681
  %v922 = vadd.f32 %v590, %v682
  %v923 = vadd.f32 %v591, %v678
  %v924 = vadd.f32 %v592, %v679
  %v925 = vadd.f32 %v593, %v680
  %v926 = vadd.f32 %v594, %v681
  %v927 = vadd.f32 %v595, %v682
  %v928 = vadd.f32 %v596, %v678
  %v929 = vadd.f32 %v597, %v679
  %v930 = vadd.f32 %v598, %v680
  %v931 = vadd.f32 %v599, %v681
  %v932 = vadd.f32 %v600, %v682
  %v933 = vadd.f32 %v601, %v678
  %v934 = vadd.f32 %v602, %v679
  %v935 = vadd.f32 %v603, %v680
  %v936 = vadd.f32 %v604, %v681
  %v937 = vadd.f32 %v605, %v682
  %v938 = vadd.f32 %v606, %v678
  %v939 = vadd.f32 %v607, %v679
  %v940 = vadd.f32 %v608, %v680
  %v941 = vadd.f32 %v609, %v681
  %v942 = vadd.f32 %v610, %v682
  %v943 = vadd.f32 %v611, %v678
  %v944 = vadd.f32 %v612, %v679
  %v945 = vadd.f32 %v613, %v680
  %v946 = vadd.f32 %v614, %v681
  %v947 = vadd.f32 %v615, %v682
  %v948 = vadd.f32 %v616, %v678
  %v949 = vadd.f32 %v617, %v679
  %v950 = vadd.f32 %v618, %v680
  %v951 = vadd.f32 %v619, %v681
  %v952 = vadd.f32 %v620, %v682
  %v953 = vadd.f32 %v621, %v678
  %v954 = vadd.f32 %v622, %v679
  %v955 = vadd.f32 %v623, %v680
  %v956 = vadd.f32 %v624, %v681
  %v957 = vadd.f32 %v625, %v682
  %v958 = vadd.f32 %v626, %v678
  %v959 = vadd.f32 %v627, %v679
  %v960 = vadd.f32 %v628, %v680
  %v961 = vadd.f32 %v629, %v681
  %v962 = vadd.f32 %v630, %v682
  %v963 = vadd.f32 %v631, %v678
  %v964 = vadd.f32 %v632, %v679
  %v965 = vadd.f32 %v633, %v680
  %v966 = vadd.f32 %v634, %v681
  %v967 = vadd.f32 %v635, %v682
  %v968 = vadd.f32 %v636, %v678
  %v969 = vadd.f32 %v637, %v679
  %v970 = vadd.f32 %v638, %v680
  %v971 = vadd.f32 %v639, %v681
  %v972 = vadd.f32 %v640, %v682
  %v973 = vadd.f32 %v641, %v678
  %v974 = vadd.f32 %v642, %v679
  %v975 = vadd.f32 %v643, %v680
  %v976 = vadd.f32 %v644, %v681
  %v977 = vadd.f32 %v645, %v682
  %v978 = vadd.f32 %v646, %v678
  %v979 = vadd.f32 %v647, %v679
  %v980 = vadd.f32 %v648, %v680
  %v981 = vadd.f32 %v649, %v681
  %v982 = vadd.f32 %v650, %v682
  %v983 = vadd.f32 %v651, %v678
  %v984 = vadd.f32 %v652, %v679
  %v985 = vadd.f32 %v653, %v680
  %v986 = vadd.f32 %v654, %v681
  %v987 = vadd.f32 %v655, %v682
  %v988 = vadd.f32 %v656, %v678
  %v989 = vadd.f32 %v657, %v679
  %v990 = vadd.f32 %v658, %v680
  %v991 = vadd.f32 %v659, %v681
  %v992 = vadd.f32 %v660, %v682
  %v993 = vadd.f32 %v661, %v678
  %v994 = vadd.f32 %v662, %v679
  %v995 = vadd.f32 %v663, %v680
  %v996 = vadd.f32 %v664, %v681
  %v997 = vadd.f32 %v665, %v682
  %v998 = vadd.f32 %v666, %v678
  %v999 = vadd.f32 %v667, %v679
  %v1000 = vadd.f32 %v668, %v680
  %v1001 = vadd.f32 %v669, %v681
  %v1002 = vadd.f32 %v670, %v682
  %v1003 = vadd.f32 %v671, %v678
  %v1004 = vadd.f32 %v672, %v679
  %v1005 = vadd.f32 %v673, %v680
  %v1006 = vadd.f32 %v674, %v681
  %v1007 = vadd.f32 %v675, %v682
  %v1008 = vmax.f32 %v688, 0.0
  %v1009 = vmax.f32 %v689, 0.0
  %v1010 = vmax.f32 %v690, 0.0
  %v1011 = vmax.f32 %v691, 0.0
  %v1012 = vmax.f32 %v692, 0.0
  %v1013 = vmax.f32 %v693, 0.0
  %v1014 = vmax.f32 %v694, 0.0
  %v1015 = vmax.f32 %v695, 0.0
  %v1016 = vmax.f32 %v696, 0.0
  %v1017 = vmax.f32 %v697, 0.0
  %v1018 = vmax.f32 %v698, 0.0
  %v1019 = vmax.f32 %v699, 0.0
  %v1020 = vmax.f32 %v700, 0.0
  %v1021 = vmax.f32 %v701, 0.0
  %v1022 = vmax.f32 %v702, 0.0
  %v1023 = vmax.f32 %v703, 0.0
  %v1024 = vmax.f32 %v704, 0.0
  %v1025 = vmax.f32 %v705, 0.0
  %v1026 = vmax.f32 %v706, 0.0
  %v1027 = vmax.f32 %v707, 0.0
  %v1028 = vmax.f32 %v708, 0.0
  %v1029 = vmax.f32 %v709, 0.0
  %v1030 = vmax.f32 %v710, 0.0
  %v1031 = vmax.f32 %v711, 0.0
  %v1032 = vmax.f32 %v712, 0.0
  %v1033 = vmax.f32 %v713, 0.0
  %v1034 = vmax.f32 %v714, 0.0
  %v1035 = vmax.f32 %v715, 0.0
  %v1036 = vmax.f32 %v716, 0.0
  %v1037 = vmax.f32 %v717, 0.0
  %v1038 = vmax.f32 %v718, 0.0
  %v1039 = vmax.f32 %v719, 0.0
  %v1040 = vmax.f32 %v720, 0.0
  %v1041 = vmax.f32 %v721, 0.0
  %v1042 = vmax.f32 %v722, 0.0
  %v1043 = vmax.f32 %v723, 0.0
  %v1044 = vmax.f32 %v724, 0.0
  %v1045 = vmax.f32 %v725, 0.0
  %v1046 = vmax.f32 %v726, 0.0
  %v1047 = vmax.f32 %v727, 0.0
  %v1048 = vmax.f32 %v728, 0.0
  %v1049 = vmax.f32 %v729, 0.0
  %v1050 = vmax.f32 %v730, 0.0
  %v1051 = vmax.f32 %v731, 0.0
  %v1052 = vmax.f32 %v732, 0.0
  %v1053 = vmax.f32 %v733, 0.0
  %v1054 = vmax.f32 %v734, 0.0
  %v1055 = vmax.f32 %v735, 0.0
  %v1056 = vmax.f32 %v736, 0.0
  %v1057 = vmax.f32 %v737, 0.0
  %v1058 = vmax.f32 %v738, 0.0
  %v1059 = vmax.f32 %v739, 0.0
  %v1060 = vmax.f32 %v740, 0.0
  %v1061 = vmax.f32 %v741, 0.0
  %v1062 = vmax.f32 %v742, 0.0
  %v1063 = vmax.f32 %v743, 0.0
  %v1064 = vmax.f32 %v744, 0.0
  %v1065 = vmax.f32 %v745, 0.0
  %v1066 = vmax.f32 %v746, 0.0
  %v1067 = vmax.f32 %v747, 0.0
  %v1068 = vmax.f32 %v748, 0.0
  %v1069 = vmax.f32 %v749, 0.0
  %v1070 = vmax.f32 %v750, 0.0
  %v1071 = vmax.f32 %v751, 0.0
  %v1072 = vmax.f32 %v752, 0.0
  %v1073 = vmax.f32 %v753, 0.0
  %v1074 = vmax.f32 %v754, 0.0
  %v1075 = vmax.f32 %v755, 0.0
  %v1076 = vmax.f32 %v756, 0.0
  %v1077 = vmax.f32 %v757, 0.0
  %v1078 = vmax.f32 %v758, 0.0
  %v1079 = vmax.f32 %v759, 0.0
  %v1080 = vmax.f32 %v760, 0.0
  %v1081 = vmax.f32 %v761, 0.0
  %v1082 = vmax.f32 %v762, 0.0
  %v1083 = vmax.f32 %v763, 0.0
  %v1084 = vmax.f32 %v764, 0.0
  %v1085 = vmax.f32 %v765, 0.0
  %v1086 = vmax.f32 %v766, 0.0
  %v1087 = vmax.f32 %v767, 0.0
  %v1088 = vmax.f32 %v768, 0.0
  %v1089 = vmax.f32 %v769, 0.0
  %v1090 = vmax.f32 %v770, 0.0
  %v1091 = vmax.f32 %v771, 0.0
  %v1092 = vmax.f32 %v772, 0.0
  %v1093 = vmax.f32 %v773, 0.0
  %v1094 = vmax.f32 %v774, 0.0
  %v1095 = vmax.f32 %v775, 0.0
  %v1096 = vmax.f32 %v776, 0.0
  %v1097 = vmax.f32 %v777, 0.0
  %v1098 = vmax.f32 %v778, 0.0
  %v1099 = vmax.f32 %v779, 0.0
  %v1100 = vmax.f32 %v780, 0.0
  %v1101 = vmax.f32 %v781, 0.0
  %v1102 = vmax.f32 %v782, 0.0
  %v1103 = vmax.f32 %v783, 0.0
  %v1104 = vmax.f32 %v784, 0.0
  %v1105 = vmax.f32 %v785, 0.0
  %v1106 = vmax.f32 %v786, 0.0
  %v1107 = vmax.f32 %v787, 0.0
  %v1108 = vmax.f32 %v788, 0.0
  %v1109 = vmax.f32 %v789, 0.0
  %v1110 = vmax.f32 %v790, 0.0
  %v1111 = vmax.f32 %v791, 0.0
  %v1112 = vmax.f32 %v792, 0.0
  %v1113 = vmax.f32 %v793, 0.0
  %v1114 = vmax.f32 %v794, 0.0
  %v1115 = vmax.f32 %v795, 0.0
  %v1116 = vmax.f32 %v796, 0.0
  %v1117 = vmax.f32 %v797, 0.0
  %v1118 = vmax.f32 %v798, 0.0
  %v1119 = vmax.f32 %v799, 0.0
  %v1120 = vmax.f32 %v800, 0.0
  %v1121 = vmax.f32 %v801, 0.0
  %v1122 = vmax.f32 %v802, 0.0
  %v1123 = vmax.f32 %v803, 0.0
  %v1124 = vmax.f32 %v804, 0.0
  %v1125 = vmax.f32 %v805, 0.0
  %v1126 = vmax.f32 %v806, 0.0
  %v1127 = vmax.f32 %v807, 0.0
  %v1128 = vmax.f32 %v808, 0.0
  %v1129 = vmax.f32 %v809, 0.0
  %v1130 = vmax.f32 %v810, 0.0
  %v1131 = vmax.f32 %v811, 0.0
  %v1132 = vmax.f32 %v812, 0.0
  %v1133 = vmax.f32 %v813, 0.0
  %v1134 = vmax.f32 %v814, 0.0
  %v1135 = vmax.f32 %v815, 0.0
  %v1136 = vmax.f32 %v816, 0.0
  %v1137 = vmax.f32 %v817, 0.0
  %v1138 = vmax.f32 %v818, 0.0
  %v1139 = vmax.f32 %v819, 0.0
  %v1140 = vmax.f32 %v820, 0.0
  %v1141 = vmax.f32 %v821, 0.0
  %v1142 = vmax.f32 %v822, 0.0
  %v1143 = vmax.f32 %v823, 0.0
  %v1144 = vmax.f32 %v824, 0.0
  %v1145 = vmax.f32 %v825, 0.0
  %v1146 = vmax.f32 %v826, 0.0
  %v1147 = vmax.f32 %v827, 0.0
  %v1148 = vmax.f32 %v828, 0.0
  %v1149 = vmax.f32 %v829, 0.0
  %v1150 = vmax.f32 %v830, 0.0
  %v1151 = vmax.f32 %v831, 0.0
  %v1152 = vmax.f32 %v832, 0.0
  %v1153 = vmax.f32 %v833, 0.0
  %v1154 = vmax.f32 %v834, 0.0
  %v1155 = vmax.f32 %v835, 0.0
  %v1156 = vmax.f32 %v836, 0.0
  %v1157 = vmax.f32 %v837, 0.0
  %v1158 = vmax.f32 %v838, 0.0
  %v1159 = vmax.f32 %v839, 0.0
  %v1160 = vmax.f32 %v840, 0.0
  %v1161 = vmax.f32 %v841, 0.0
  %v1162 = vmax.f32 %v842, 0.0
  %v1163 = vmax.f32 %v843, 0.0
  %v1164 = vmax.f32 %v844, 0.0
  %v1165 = vmax.f32 %v845, 0.0
  %v1166 = vmax.f32 %v846, 0.0
  %v1167 = vmax.f32 %v847, 0.0
  %v1168 = vmax.f32 %v848, 0.0
  %v1169 = vmax.f32 %v849, 0.0
  %v1170 = vmax.f32 %v850, 0.0
  %v1171 = vmax.f32 %v851, 0.0
  %v1172 = vmax.f32 %v852, 0.0
  %v1173 = vmax.f32 %v853, 0.0
  %v1174 = vmax.f32 %v854, 0.0
  %v1175 = vmax.f32 %v855, 0.0
  %v1176 = vmax.f32 %v856, 0.0
  %v1177 = vmax.f32 %v857, 0.0
  %v1178 = vmax.f32 %v858, 0.0
  %v1179 = vmax.f32 %v859, 0.0
  %v1180 = vmax.f32 %v860, 0.0
  %v1181 = vmax.f32 %v861, 0.0
  %v1182 = vmax.f32 %v862, 0.0
  %v1183 = vmax.f32 %v863, 0.0
  %v1184 = vmax.f32 %v864, 0.0
  %v1185 = vmax.f32 %v865, 0.0
  %v1186 = vmax.f32 %v866, 0.0
  %v1187 = vmax.f32 %v867, 0.0
  %v1188 = vmax.f32 %v868, 0.0
  %v1189 = vmax.f32 %v869, 0.0
  %v1190 = vmax.f32 %v870, 0.0
  %v1191 = vmax.f32 %v871, 0.0
  %v1192 = vmax.f32 %v872, 0.0
  %v1193 = vmax.f32 %v873, 0.0
  %v1194 = vmax.f32 %v874, 0.0
  %v1195 = vmax.f32 %v875, 0.0
  %v1196 = vmax.f32 %v876, 0.0
  %v1197 = vmax.f32 %v877, 0.0
  %v1198 = vmax.f32 %v878, 0.0
  %v1199 = vmax.f32 %v879, 0.0
  %v1200 = vmax.f32 %v880, 0.0
  %v1201 = vmax.f32 %v881, 0.0
  %v1202 = vmax.f32 %v882, 0.0
  %v1203 = vmax.f32 %v883, 0.0
  %v1204 = vmax.f32 %v884, 0.0
  %v1205 = vmax.f32 %v885, 0.0
  %v1206 = vmax.f32 %v886, 0.0
  %v1207 = vmax.f32 %v887, 0.0
  %v1208 = vmax.f32 %v888, 0.0
  %v1209 = vmax.f32 %v889, 0.0
  %v1210 = vmax.f32 %v890, 0.0
  %v1211 = vmax.f32 %v891, 0.0
  %v1212 = vmax.f32 %v892, 0.0
  %v1213 = vmax.f32 %v893, 0.0
  %v1214 = vmax.f32 %v894, 0.0
  %v1215 = vmax.f32 %v895, 0.0
  %v1216 = vmax.f32 %v896, 0.0
  %v1217 = vmax.f32 %v897, 0.0
  %v1218 = vmax.f32 %v898, 0.0
  %v1219 = vmax.f32 %v899, 0.0
  %v1220 = vmax.f32 %v900, 0.0
  %v1221 = vmax.f32 %v901, 0.0
  %v1222 = vmax.f32 %v902, 0.0
  %v1223 = vmax.f32 %v903, 0.0
  %v1224 = vmax.f32 %v904, 0.0
  %v1225 = vmax.f32 %v905, 0.0
  %v1226 = vmax.f32 %v906, 0.0
  %v1227 = vmax.f32 %v907, 0.0
  %v1228 = vmax.f32 %v908, 0.0
  %v1229 = vmax.f32 %v909, 0.0
  %v1230 = vmax.f32 %v910, 0.0
  %v1231 = vmax.f32 %v911, 0.0
  %v1232 = vmax.f32 %v912, 0.0
  %v1233 = vmax.f32 %v913, 0.0
  %v1234 = vmax.f32 %v914, 0.0
  %v1235 = vmax.f32 %v915, 0.0
  %v1236 = vmax.f32 %v916, 0.0
  %v1237 = vmax.f32 %v917, 0.0
  %v1238 = vmax.f32 %v918, 0.0
  %v1239 = vmax.f32 %v919, 0.0
  %v1240 = vmax.f32 %v920, 0.0
  %v1241 = vmax.f32 %v921, 0.0
  %v1242 = vmax.f32 %v922, 0.0
  %v1243 = vmax.f32 %v923, 0.0
  %v1244 = vmax.f32 %v924, 0.0
  %v1245 = vmax.f32 %v925, 0.0
  %v1246 = vmax.f32 %v926, 0.0
  %v1247 = vmax.f32 %v927, 0.0
  %v1248 = vmax.f32 %v928, 0.0
  %v1249 = vmax.f32 %v929, 0.0
  %v1250 = vmax.f32 %v930, 0.0
  %v1251 = vmax.f32 %v931, 0.0
  %v1252 = vmax.f32 %v932, 0.0
  %v1253 = vmax.f32 %v933, 0.0
  %v1254 = vmax.f32 %v934, 0.0
  %v1255 = vmax.f32 %v935, 0.0
  %v1256 = vmax.f32 %v936, 0.0
  %v1257 = vmax.f32 %v937, 0.0
  %v1258 = vmax.f32 %v938, 0.0
  %v1259 = vmax.f32 %v939, 0.0
  %v1260 = vmax.f32 %v940, 0.0
  %v1261 = vmax.f32 %v941, 0.0
  %v1262 = vmax.f32 %v942, 0.0
  %v1263 = vmax.f32 %v943, 0.0
  %v1264 = vmax.f32 %v944, 0.0
  %v1265 = vmax.f32 %v945, 0.0
  %v1266 = vmax.f32 %v946, 0.0
  %v1267 = vmax.f32 %v947, 0.0
  %v1268 = vmax.f32 %v948, 0.0
  %v1269 = vmax.f32 %v949, 0.0
  %v1270 = vmax.f32 %v950, 0.0
  %v1271 = vmax.f32 %v951, 0.0
  %v1272 = vmax.f32 %v952, 0.0
  %v1273 = vmax.f32 %v953, 0.0
  %v1274 = vmax.f32 %v954, 0.0
  %v1275 = vmax.f32 %v955, 0.0
  %v1276 = vmax.f32 %v956, 0.0
  %v1277 = vmax.f32 %v957, 0.0
  %v1278 = vmax.f32 %v958, 0.0
  %v1279 = vmax.f32 %v959, 0.0
  %v1280 = vmax.f32 %v960, 0.0
  %v1281 = vmax.f32 %v961, 0.0
  %v1282 = vmax.f32 %v962, 0.0
  %v1283 = vmax.f32 %v963, 0.0
  %v1284 = vmax.f32 %v964, 0.0
  %v1285 = vmax.f32 %v965, 0.0
  %v1286 = vmax.f32 %v966, 0.0
  %v1287 = vmax.f32 %v967, 0.0
  %v1288 = vmax.f32 %v968, 0.0
  %v1289 = vmax.f32 %v969, 0.0
  %v1290 = vmax.f32 %v970, 0.0
  %v1291 = vmax.f32 %v971, 0.0
  %v1292 = vmax.f32 %v972, 0.0
  %v1293 = vmax.f32 %v973, 0.0
  %v1294 = vmax.f32 %v974, 0.0
  %v1295 = vmax.f32 %v975, 0.0
  %v1296 = vmax.f32 %v976, 0.0
  %v1297 = vmax.f32 %v977, 0.0
  %v1298 = vmax.f32 %v978, 0.0
  %v1299 = vmax.f32 %v979, 0.0
  %v1300 = vmax.f32 %v980, 0.0
  %v1301 = vmax.f32 %v981, 0.0
  %v1302 = vmax.f32 %v982, 0.0
  %v1303 = vmax.f32 %v983, 0.0
  %v1304 = vmax.f32 %v984, 0.0
  %v1305 = vmax.f32 %v985, 0.0
  %v1306 = vmax.f32 %v986, 0.0
  %v1307 = vmax.f32 %v987, 0.0
  %v1308 = vmax.f32 %v988, 0.0
  %v1309 = vmax.f32 %v989, 0.0
  %v1310 = vmax.f32 %v990, 0.0
  %v1311 = vmax.f32 %v991, 0.0
  %v1312 = vmax.f32 %v992, 0.0
  %v1313 = vmax.f32 %v993, 0.0
  %v1314 = vmax.f32 %v994, 0.0
  %v1315 = vmax.f32 %v995, 0.0
  %v1316 = vmax.f32 %v996, 0.0
  %v1317 = vmax.f32 %v997, 0.0
  %v1318 = vmax.f32 %v998, 0.0
  %v1319 = vmax.f32 %v999, 0.0
  %v1320 = vmax.f32 %v1000, 0.0
  %v1321 = vmax.f32 %v1001, 0.0
  %v1322 = vmax.f32 %v1002, 0.0
  %v1323 = vmax.f32 %v1003, 0.0
  %v1324 = vmax.f32 %v1004, 0.0
  %v1325 = vmax.f32 %v1005, 0.0
  %v1326 = vmax.f32 %v1006, 0.0
  %v1327 = vmax.f32 %v1007, 0.0
  %v1328 = vpack.c.bf16 %v1013, %v1008
  %v1329 = vpack.c.bf16 %v1014, %v1009
  %v1330 = vpack.c.bf16 %v1015, %v1010
  %v1331 = vpack.c.bf16 %v1016, %v1011
  %v1332 = vpack.c.bf16 %v1017, %v1012
  %v1333 = vpack.c.bf16 %v1023, %v1018
  %v1334 = vpack.c.bf16 %v1024, %v1019
  %v1335 = vpack.c.bf16 %v1025, %v1020
  %v1336 = vpack.c.bf16 %v1026, %v1021
  %v1337 = vpack.c.bf16 %v1027, %v1022
  %v1338 = vpack.c.bf16 %v1033, %v1028
  %v1339 = vpack.c.bf16 %v1034, %v1029
  %v1340 = vpack.c.bf16 %v1035, %v1030
  %v1341 = vpack.c.bf16 %v1036, %v1031
  %v1342 = vpack.c.bf16 %v1037, %v1032
  %v1343 = vpack.c.bf16 %v1043, %v1038
  %v1344 = vpack.c.bf16 %v1044, %v1039
  %v1345 = vpack.c.bf16 %v1045, %v1040
  %v1346 = vpack.c.bf16 %v1046, %v1041
  %v1347 = vpack.c.bf16 %v1047, %v1042
  %v1348 = vpack.c.bf16 %v1053, %v1048
  %v1349 = vpack.c.bf16 %v1054, %v1049
  %v1350 = vpack.c.bf16 %v1055, %v1050
  %v1351 = vpack.c.bf16 %v1056, %v1051
  %v1352 = vpack.c.bf16 %v1057, %v1052
  %v1353 = vpack.c.bf16 %v1063, %v1058
  %v1354 = vpack.c.bf16 %v1064, %v1059
  %v1355 = vpack.c.bf16 %v1065, %v1060
  %v1356 = vpack.c.bf16 %v1066, %v1061
  %v1357 = vpack.c.bf16 %v1067, %v1062
  %v1358 = vpack.c.bf16 %v1073, %v1068
  %v1359 = vpack.c.bf16 %v1074, %v1069
  %v1360 = vpack.c.bf16 %v1075, %v1070
  %v1361 = vpack.c.bf16 %v1076, %v1071
  %v1362 = vpack.c.bf16 %v1077, %v1072
  %v1363 = vpack.c.bf16 %v1083, %v1078
  %v1364 = vpack.c.bf16 %v1084, %v1079
  %v1365 = vpack.c.bf16 %v1085, %v1080
  %v1366 = vpack.c.bf16 %v1086, %v1081
  %v1367 = vpack.c.bf16 %v1087, %v1082
  %v1368 = vpack.c.bf16 %v1093, %v1088
  %v1369 = vpack.c.bf16 %v1094, %v1089
  %v1370 = vpack.c.bf16 %v1095, %v1090
  %v1371 = vpack.c.bf16 %v1096, %v1091
  %v1372 = vpack.c.bf16 %v1097, %v1092
  %v1373 = vpack.c.bf16 %v1103, %v1098
  %v1374 = vpack.c.bf16 %v1104, %v1099
  %v1375 = vpack.c.bf16 %v1105, %v1100
  %v1376 = vpack.c.bf16 %v1106, %v1101
  %v1377 = vpack.c.bf16 %v1107, %v1102
  %v1378 = vpack.c.bf16 %v1113, %v1108
  %v1379 = vpack.c.bf16 %v1114, %v1109
  %v1380 = vpack.c.bf16 %v1115, %v1110
  %v1381 = vpack.c.bf16 %v1116, %v1111
  %v1382 = vpack.c.bf16 %v1117, %v1112
  %v1383 = vpack.c.bf16 %v1123, %v1118
  %v1384 = vpack.c.bf16 %v1124, %v1119
  %v1385 = vpack.c.bf16 %v1125, %v1120
  %v1386 = vpack.c.bf16 %v1126, %v1121
  %v1387 = vpack.c.bf16 %v1127, %v1122
  %v1388 = vpack.c.bf16 %v1133, %v1128
  %v1389 = vpack.c.bf16 %v1134, %v1129
  %v1390 = vpack.c.bf16 %v1135, %v1130
  %v1391 = vpack.c.bf16 %v1136, %v1131
  %v1392 = vpack.c.bf16 %v1137, %v1132
  %v1393 = vpack.c.bf16 %v1143, %v1138
  %v1394 = vpack.c.bf16 %v1144, %v1139
  %v1395 = vpack.c.bf16 %v1145, %v1140
  %v1396 = vpack.c.bf16 %v1146, %v1141
  %v1397 = vpack.c.bf16 %v1147, %v1142
  %v1398 = vpack.c.bf16 %v1153, %v1148
  %v1399 = vpack.c.bf16 %v1154, %v1149
  %v1400 = vpack.c.bf16 %v1155, %v1150
  %v1401 = vpack.c.bf16 %v1156, %v1151
  %v1402 = vpack.c.bf16 %v1157, %v1152
  %v1403 = vpack.c.bf16 %v1163, %v1158
  %v1404 = vpack.c.bf16 %v1164, %v1159
  %v1405 = vpack.c.bf16 %v1165, %v1160
  %v1406 = vpack.c.bf16 %v1166, %v1161
  %v1407 = vpack.c.bf16 %v1167, %v1162
  %v1408 = vpack.c.bf16 %v1173, %v1168
  %v1409 = vpack.c.bf16 %v1174, %v1169
  %v1410 = vpack.c.bf16 %v1175, %v1170
  %v1411 = vpack.c.bf16 %v1176, %v1171
  %v1412 = vpack.c.bf16 %v1177, %v1172
  %v1413 = vpack.c.bf16 %v1183, %v1178
  %v1414 = vpack.c.bf16 %v1184, %v1179
  %v1415 = vpack.c.bf16 %v1185, %v1180
  %v1416 = vpack.c.bf16 %v1186, %v1181
  %v1417 = vpack.c.bf16 %v1187, %v1182
  %v1418 = vpack.c.bf16 %v1193, %v1188
  %v1419 = vpack.c.bf16 %v1194, %v1189
  %v1420 = vpack.c.bf16 %v1195, %v1190
  %v1421 = vpack.c.bf16 %v1196, %v1191
  %v1422 = vpack.c.bf16 %v1197, %v1192
  %v1423 = vpack.c.bf16 %v1203, %v1198
  %v1424 = vpack.c.bf16 %v1204, %v1199
  %v1425 = vpack.c.bf16 %v1205, %v1200
  %v1426 = vpack.c.bf16 %v1206, %v1201
  %v1427 = vpack.c.bf16 %v1207, %v1202
  %v1428 = vpack.c.bf16 %v1213, %v1208
  %v1429 = vpack.c.bf16 %v1214, %v1209
  %v1430 = vpack.c.bf16 %v1215, %v1210
  %v1431 = vpack.c.bf16 %v1216, %v1211
  %v1432 = vpack.c.bf16 %v1217, %v1212
  %v1433 = vpack.c.bf16 %v1223, %v1218
  %v1434 = vpack.c.bf16 %v1224, %v1219
  %v1435 = vpack.c.bf16 %v1225, %v1220
  %v1436 = vpack.c.bf16 %v1226, %v1221
  %v1437 = vpack.c.bf16 %v1227, %v1222
  %v1438 = vpack.c.bf16 %v1233, %v1228
  %v1439 = vpack.c.bf16 %v1234, %v1229
  %v1440 = vpack.c.bf16 %v1235, %v1230
  %v1441 = vpack.c.bf16 %v1236, %v1231
  %v1442 = vpack.c.bf16 %v1237, %v1232
  %v1443 = vpack.c.bf16 %v1243, %v1238
  %v1444 = vpack.c.bf16 %v1244, %v1239
  %v1445 = vpack.c.bf16 %v1245, %v1240
  %v1446 = vpack.c.bf16 %v1246, %v1241
  %v1447 = vpack.c.bf16 %v1247, %v1242
  %v1448 = vpack.c.bf16 %v1253, %v1248
  %v1449 = vpack.c.bf16 %v1254, %v1249
  %v1450 = vpack.c.bf16 %v1255, %v1250
  %v1451 = vpack.c.bf16 %v1256, %v1251
  %v1452 = vpack.c.bf16 %v1257, %v1252
  %v1453 = vpack.c.bf16 %v1263, %v1258
  %v1454 = vpack.c.bf16 %v1264, %v1259
  %v1455 = vpack.c.bf16 %v1265, %v1260
  %v1456 = vpack.c.bf16 %v1266, %v1261
  %v1457 = vpack.c.bf16 %v1267, %v1262
  %v1458 = vpack.c.bf16 %v1273, %v1268
  %v1459 = vpack.c.bf16 %v1274, %v1269
  %v1460 = vpack.c.bf16 %v1275, %v1270
  %v1461 = vpack.c.bf16 %v1276, %v1271
  %v1462 = vpack.c.bf16 %v1277, %v1272
  %v1463 = vpack.c.bf16 %v1283, %v1278
  %v1464 = vpack.c.bf16 %v1284, %v1279
  %v1465 = vpack.c.bf16 %v1285, %v1280
  %v1466 = vpack.c.bf16 %v1286, %v1281
  %v1467 = vpack.c.bf16 %v1287, %v1282
  %v1468 = vpack.c.bf16 %v1293, %v1288
  %v1469 = vpack.c.bf16 %v1294, %v1289
  %v1470 = vpack.c.bf16 %v1295, %v1290
  %v1471 = vpack.c.bf16 %v1296, %v1291
  %v1472 = vpack.c.bf16 %v1297, %v1292
  %v1473 = vpack.c.bf16 %v1303, %v1298
  %v1474 = vpack.c.bf16 %v1304, %v1299
  %v1475 = vpack.c.bf16 %v1305, %v1300
  %v1476 = vpack.c.bf16 %v1306, %v1301
  %v1477 = vpack.c.bf16 %v1307, %v1302
  %v1478 = vpack.c.bf16 %v1313, %v1308
  %v1479 = vpack.c.bf16 %v1314, %v1309
  %v1480 = vpack.c.bf16 %v1315, %v1310
  %v1481 = vpack.c.bf16 %v1316, %v1311
  %v1482 = vpack.c.bf16 %v1317, %v1312
  %v1483 = vpack.c.bf16 %v1323, %v1318
  %v1484 = vpack.c.bf16 %v1324, %v1319
  %v1485 = vpack.c.bf16 %v1325, %v1320
  %v1486 = vpack.c.bf16 %v1326, %v1321
  %v1487 = vpack.c.bf16 %v1327, %v1322
  %v1488 = vld [vmem:[%s3] sm:$0xf]
  %v1489 = vld [vmem:[%s3 + $0x4] sm:$0xf]
  %v1490 = vld [vmem:[%s3 + $0x8] sm:$0xf]
  %v1491 = vld [vmem:[%s3 + $0xc] sm:$0xf]
  %v1492 = vld [vmem:[%s3 + $0x10] sm:$0xf]
  %v1493 = vld [vmem:[%s3 + $0x14] sm:$0xf]
  %v1494 = vld [vmem:[%s3 + $0x18] sm:$0xf]
  %v1495 = vld [vmem:[%s3 + $0x1c] sm:$0xf]
  %v1496 = vld [vmem:[%s3 + $0x20] sm:$0xf]
  %v1497 = vld [vmem:[%s3 + $0x24] sm:$0xf]
  %v1498 = vld [vmem:[%s3 + $0x28] sm:$0xf]
  %v1499 = vld [vmem:[%s3 + $0x2c] sm:$0xf]
  %v1500 = vld [vmem:[%s3 + $0x30] sm:$0xf]
  %v1501 = vld [vmem:[%s3 + $0x34] sm:$0xf]
  %v1502 = vld [vmem:[%s3 + $0x38] sm:$0xf]
  %v1503 = vld [vmem:[%s3 + $0x3c] sm:$0xf]
  %v1504 = vld [vmem:[%s3 + $0x40] sm:$0xf]
  %v1505 = vld [vmem:[%s3 + $0x44] sm:$0xf]
  %v1506 = vld [vmem:[%s3 + $0x48] sm:$0xf]
  %v1507 = vld [vmem:[%s3 + $0x4c] sm:$0xf]
  %v1508 = vld [vmem:[%s3 + $0x50] sm:$0xf]
  %v1509 = vld [vmem:[%s3 + $0x54] sm:$0xf]
  %v1510 = vld [vmem:[%s3 + $0x58] sm:$0xf]
  %v1511 = vld [vmem:[%s3 + $0x5c] sm:$0xf]
  %v1512 = vld [vmem:[%s3 + $0x60] sm:$0xf]
  %v1513 = vld [vmem:[%s3 + $0x64] sm:$0xf]
  %v1514 = vld [vmem:[%s3 + $0x68] sm:$0xf]
  %v1515 = vld [vmem:[%s3 + $0x6c] sm:$0xf]
  %v1516 = vld [vmem:[%s3 + $0x70] sm:$0xf]
  %v1517 = vld [vmem:[%s3 + $0x74] sm:$0xf]
  %v1518 = vld [vmem:[%s3 + $0x78] sm:$0xf]
  %v1519 = vld [vmem:[%s3 + $0x7c] sm:$0xf]
  %v1520 = vld [vmem:[%s3 + $0x80] sm:$0xf]
  %v1521 = vld [vmem:[%s3 + $0x84] sm:$0xf]
  %v1522 = vld [vmem:[%s3 + $0x88] sm:$0xf]
  %v1523 = vld [vmem:[%s3 + $0x8c] sm:$0xf]
  %v1524 = vld [vmem:[%s3 + $0x90] sm:$0xf]
  %v1525 = vld [vmem:[%s3 + $0x94] sm:$0xf]
  %v1526 = vld [vmem:[%s3 + $0x98] sm:$0xf]
  %v1527 = vld [vmem:[%s3 + $0x9c] sm:$0xf]
  %v1528 = vld [vmem:[%s3 + $0xa0] sm:$0xf]
  %v1529 = vld [vmem:[%s3 + $0xa4] sm:$0xf]
  %v1530 = vld [vmem:[%s3 + $0xa8] sm:$0xf]
  %v1531 = vld [vmem:[%s3 + $0xac] sm:$0xf]
  %v1532 = vld [vmem:[%s3 + $0xb0] sm:$0xf]
  %v1533 = vld [vmem:[%s3 + $0xb4] sm:$0xf]
  %v1534 = vld [vmem:[%s3 + $0xb8] sm:$0xf]
  %v1535 = vld [vmem:[%s3 + $0xbc] sm:$0xf]
  %v1536 = vld [vmem:[%s3 + $0xc0] sm:$0xf]
  %v1537 = vld [vmem:[%s3 + $0xc4] sm:$0xf]
  %v1538 = vld [vmem:[%s3 + $0xc8] sm:$0xf]
  %v1539 = vld [vmem:[%s3 + $0xcc] sm:$0xf]
  %v1540 = vld [vmem:[%s3 + $0xd0] sm:$0xf]
  %v1541 = vld [vmem:[%s3 + $0xd4] sm:$0xf]
  %v1542 = vld [vmem:[%s3 + $0xd8] sm:$0xf]
  %v1543 = vld [vmem:[%s3 + $0xdc] sm:$0xf]
  %v1544 = vld [vmem:[%s3 + $0xe0] sm:$0xf]
  %v1545 = vld [vmem:[%s3 + $0xe4] sm:$0xf]
  %v1546 = vld [vmem:[%s3 + $0xe8] sm:$0xf]
  %v1547 = vld [vmem:[%s3 + $0xec] sm:$0xf]
  %v1548 = vld [vmem:[%s3 + $0xf0] sm:$0xf]
  %v1549 = vld [vmem:[%s3 + $0xf4] sm:$0xf]
  %v1550 = vld [vmem:[%s3 + $0xf8] sm:$0xf]
  %v1551 = vld [vmem:[%s3 + $0xfc] sm:$0xf]
  %v1552 = vld [vmem:[%s3 + $0x100] sm:$0xf]
  %v1553 = vld [vmem:[%s3 + $0x104] sm:$0xf]
  %v1554 = vld [vmem:[%s3 + $0x108] sm:$0xf]
  %v1555 = vld [vmem:[%s3 + $0x10c] sm:$0xf]
  %v1556 = vld [vmem:[%s3 + $0x110] sm:$0xf]
  %v1557 = vld [vmem:[%s3 + $0x114] sm:$0xf]
  %v1558 = vld [vmem:[%s3 + $0x118] sm:$0xf]
  %v1559 = vld [vmem:[%s3 + $0x11c] sm:$0xf]
  %v1560 = vld [vmem:[%s4] sm:$0x1]
  %v1562 = vperm.slane %v1560, 0
  %v1636 = vunpack.c.l.b16 %v1488
  %v1637 = vunpack.c.l.b16 %v1489
  %v1638 = vunpack.c.l.b16 %v1490
  %v1639 = vunpack.c.l.b16 %v1491
  %v1640 = vunpack.c.l.b16 %v1492
  %v1641 = vunpack.c.l.b16 %v1493
  %v1642 = vunpack.c.l.b16 %v1494
  %v1643 = vunpack.c.l.b16 %v1495
  %v1644 = vunpack.c.l.b16 %v1496
  %v1645 = vunpack.c.l.b16 %v1497
  %v1646 = vunpack.c.l.b16 %v1498
  %v1647 = vunpack.c.l.b16 %v1499
  %v1648 = vunpack.c.l.b16 %v1500
  %v1649 = vunpack.c.l.b16 %v1501
  %v1650 = vunpack.c.l.b16 %v1502
  %v1651 = vunpack.c.l.b16 %v1503
  %v1652 = vunpack.c.l.b16 %v1504
  %v1653 = vunpack.c.l.b16 %v1505
  %v1654 = vunpack.c.l.b16 %v1506
  %v1655 = vunpack.c.l.b16 %v1507
  %v1656 = vunpack.c.l.b16 %v1508
  %v1657 = vunpack.c.l.b16 %v1509
  %v1658 = vunpack.c.l.b16 %v1510
  %v1659 = vunpack.c.l.b16 %v1511
  %v1660 = vunpack.c.l.b16 %v1512
  %v1661 = vunpack.c.l.b16 %v1513
  %v1662 = vunpack.c.l.b16 %v1514
  %v1663 = vunpack.c.l.b16 %v1515
  %v1664 = vunpack.c.l.b16 %v1516
  %v1665 = vunpack.c.l.b16 %v1517
  %v1666 = vunpack.c.l.b16 %v1518
  %v1667 = vunpack.c.l.b16 %v1519
  %v1668 = vunpack.c.l.b16 %v1520
  %v1669 = vunpack.c.l.b16 %v1521
  %v1670 = vunpack.c.l.b16 %v1522
  %v1671 = vunpack.c.l.b16 %v1523
  %v1672 = vunpack.c.l.b16 %v1524
  %v1673 = vunpack.c.l.b16 %v1525
  %v1674 = vunpack.c.l.b16 %v1526
  %v1675 = vunpack.c.l.b16 %v1527
  %v1676 = vunpack.c.l.b16 %v1528
  %v1677 = vunpack.c.l.b16 %v1529
  %v1678 = vunpack.c.l.b16 %v1530
  %v1679 = vunpack.c.l.b16 %v1531
  %v1680 = vunpack.c.l.b16 %v1532
  %v1681 = vunpack.c.l.b16 %v1533
  %v1682 = vunpack.c.l.b16 %v1534
  %v1683 = vunpack.c.l.b16 %v1535
  %v1684 = vunpack.c.l.b16 %v1536
  %v1685 = vunpack.c.l.b16 %v1537
  %v1686 = vunpack.c.l.b16 %v1538
  %v1687 = vunpack.c.l.b16 %v1539
  %v1688 = vunpack.c.l.b16 %v1540
  %v1689 = vunpack.c.l.b16 %v1541
  %v1690 = vunpack.c.l.b16 %v1542
  %v1691 = vunpack.c.l.b16 %v1543
  %v1692 = vunpack.c.l.b16 %v1544
  %v1693 = vunpack.c.l.b16 %v1545
  %v1694 = vunpack.c.l.b16 %v1546
  %v1695 = vunpack.c.l.b16 %v1547
  %v1696 = vunpack.c.l.b16 %v1548
  %v1697 = vunpack.c.l.b16 %v1549
  %v1698 = vunpack.c.l.b16 %v1550
  %v1699 = vunpack.c.l.b16 %v1551
  %v1700 = vunpack.c.l.b16 %v1552
  %v1701 = vunpack.c.l.b16 %v1553
  %v1702 = vunpack.c.l.b16 %v1554
  %v1703 = vunpack.c.l.b16 %v1555
  %v1704 = vunpack.c.l.b16 %v1556
  %v1705 = vunpack.c.l.b16 %v1557
  %v1706 = vunpack.c.l.b16 %v1558
  %v1707 = vunpack.c.l.b16 %v1559
  %v1708 = vpack.c.b16 %v1637, %v1636
  %v1709 = vpack.c.b16 %v1639, %v1638
  %v1710 = vpack.c.b16 %v1641, %v1640
  %v1711 = vpack.c.b16 %v1643, %v1642
  %v1712 = vpack.c.b16 %v1645, %v1644
  %v1713 = vpack.c.b16 %v1647, %v1646
  %v1714 = vpack.c.b16 %v1649, %v1648
  %v1715 = vpack.c.b16 %v1651, %v1650
  %v1716 = vpack.c.b16 %v1653, %v1652
  %v1717 = vpack.c.b16 %v1655, %v1654
  %v1718 = vpack.c.b16 %v1657, %v1656
  %v1719 = vpack.c.b16 %v1659, %v1658
  %v1720 = vpack.c.b16 %v1661, %v1660
  %v1721 = vpack.c.b16 %v1663, %v1662
  %v1722 = vpack.c.b16 %v1665, %v1664
  %v1723 = vpack.c.b16 %v1667, %v1666
  %v1724 = vpack.c.b16 %v1669, %v1668
  %v1725 = vpack.c.b16 %v1671, %v1670
  %v1726 = vpack.c.b16 %v1673, %v1672
  %v1727 = vpack.c.b16 %v1675, %v1674
  %v1728 = vpack.c.b16 %v1677, %v1676
  %v1729 = vpack.c.b16 %v1679, %v1678
  %v1730 = vpack.c.b16 %v1681, %v1680
  %v1731 = vpack.c.b16 %v1683, %v1682
  %v1732 = vpack.c.b16 %v1685, %v1684
  %v1733 = vpack.c.b16 %v1687, %v1686
  %v1734 = vpack.c.b16 %v1689, %v1688
  %v1735 = vpack.c.b16 %v1691, %v1690
  %v1736 = vpack.c.b16 %v1693, %v1692
  %v1737 = vpack.c.b16 %v1695, %v1694
  %v1738 = vpack.c.b16 %v1697, %v1696
  %v1739 = vpack.c.b16 %v1699, %v1698
  %v1740 = vpack.c.b16 %v1701, %v1700
  %v1741 = vpack.c.b16 %v1703, %v1702
  %v1742 = vpack.c.b16 %v1705, %v1704
  %v1743 = vpack.c.b16 %v1707, %v1706
  %vm1780 = vcmask 523264
  %v1782 = vsel %vm1780, %v1332, 0
  %v1785 = vsel %vm1780, %v1337, 0
  %v1788 = vsel %vm1780, %v1342, 0
  %v1791 = vsel %vm1780, %v1347, 0
  %v1794 = vsel %vm1780, %v1352, 0
  %v1797 = vsel %vm1780, %v1357, 0
  %v1800 = vsel %vm1780, %v1362, 0
  %v1803 = vsel %vm1780, %v1367, 0
  %v1806 = vsel %vm1780, %v1372, 0
  %v1809 = vsel %vm1780, %v1377, 0
  %v1812 = vsel %vm1780, %v1382, 0
  %v1815 = vsel %vm1780, %v1387, 0
  %v1818 = vsel %vm1780, %v1392, 0
  %v1821 = vsel %vm1780, %v1397, 0
  %v1824 = vsel %vm1780, %v1402, 0
  %v1827 = vsel %vm1780, %v1407, 0
  %v1830 = vsel %vm1780, %v1412, 0
  %v1833 = vsel %vm1780, %v1417, 0
  %v1836 = vsel %vm1780, %v1422, 0
  %v1839 = vsel %vm1780, %v1427, 0
  %v1842 = vsel %vm1780, %v1432, 0
  %v1845 = vsel %vm1780, %v1437, 0
  %v1848 = vsel %vm1780, %v1442, 0
  %v1851 = vsel %vm1780, %v1447, 0
  %v1854 = vsel %vm1780, %v1452, 0
  %v1857 = vsel %vm1780, %v1457, 0
  %v1860 = vsel %vm1780, %v1462, 0
  %v1863 = vsel %vm1780, %v1467, 0
  %v1866 = vsel %vm1780, %v1472, 0
  %v1869 = vsel %vm1780, %v1477, 0
  %v1872 = vsel %vm1780, %v1482, 0
  %v1875 = vsel %vm1780, %v1487, 0
  %1877 = vmatpush.bf16.msra.mxu0 %v1715
  %1878 = vmatpush.bf16.msra.mxu0 %v1714
  %1879 = vmatpush.bf16.msra.mxu0 %v1713
  %1880 = vmatpush.bf16.msra.mxu0 %v1712
  %1881 = vmatpush.bf16.msra.mxu0 %v1711
  %1882 = vmatpush.bf16.msra.mxu0 %v1710
  %1883 = vmatpush.bf16.msra.mxu0 %v1709
  %1884 = vmatpush.bf16.msra.mxu0 %v1708
  %1885 = vmatmul.bf16.gmra.mxu0 %v1328
  %v1886 = vpop.f32.mrf.mxu0
  %v1887 = vadd.f32 %v1562, %v1886
  %v1888 = vpop.f32.mrf.mxu0
  %v1889 = vadd.f32 %v1562, %v1888
  %1890 = vmatmul.bf16.gmra.mxu0 %v1333
  %v1891 = vpop.f32.mrf.mxu0
  %v1892 = vadd.f32 %v1562, %v1891
  %v1893 = vpop.f32.mrf.mxu0
  %v1894 = vadd.f32 %v1562, %v1893
  %1895 = vmatmul.bf16.gmra.mxu0 %v1338
  %v1896 = vpop.f32.mrf.mxu0
  %v1897 = vadd.f32 %v1562, %v1896
  %v1898 = vpop.f32.mrf.mxu0
  %v1899 = vadd.f32 %v1562, %v1898
  %1900 = vmatmul.bf16.gmra.mxu0 %v1343
  %v1901 = vpop.f32.mrf.mxu0
  %v1902 = vadd.f32 %v1562, %v1901
  %v1903 = vpop.f32.mrf.mxu0
  %v1904 = vadd.f32 %v1562, %v1903
  %1905 = vmatmul.bf16.gmra.mxu0 %v1348
  %v1906 = vpop.f32.mrf.mxu0
  %v1907 = vadd.f32 %v1562, %v1906
  %v1908 = vpop.f32.mrf.mxu0
  %v1909 = vadd.f32 %v1562, %v1908
  %1910 = vmatmul.bf16.gmra.mxu0 %v1353
  %v1911 = vpop.f32.mrf.mxu0
  %v1912 = vadd.f32 %v1562, %v1911
  %v1913 = vpop.f32.mrf.mxu0
  %v1914 = vadd.f32 %v1562, %v1913
  %1915 = vmatmul.bf16.gmra.mxu0 %v1358
  %v1916 = vpop.f32.mrf.mxu0
  %v1917 = vadd.f32 %v1562, %v1916
  %v1918 = vpop.f32.mrf.mxu0
  %v1919 = vadd.f32 %v1562, %v1918
  %1920 = vmatmul.bf16.gmra.mxu0 %v1363
  %v1921 = vpop.f32.mrf.mxu0
  %v1922 = vadd.f32 %v1562, %v1921
  %v1923 = vpop.f32.mrf.mxu0
  %v1924 = vadd.f32 %v1562, %v1923
  %1925 = vmatmul.bf16.gmra.mxu0 %v1368
  %v1926 = vpop.f32.mrf.mxu0
  %v1927 = vadd.f32 %v1562, %v1926
  %v1928 = vpop.f32.mrf.mxu0
  %v1929 = vadd.f32 %v1562, %v1928
  %1930 = vmatmul.bf16.gmra.mxu0 %v1373
  %v1931 = vpop.f32.mrf.mxu0
  %v1932 = vadd.f32 %v1562, %v1931
  %v1933 = vpop.f32.mrf.mxu0
  %v1934 = vadd.f32 %v1562, %v1933
  %1935 = vmatmul.bf16.gmra.mxu0 %v1378
  %v1936 = vpop.f32.mrf.mxu0
  %v1937 = vadd.f32 %v1562, %v1936
  %v1938 = vpop.f32.mrf.mxu0
  %v1939 = vadd.f32 %v1562, %v1938
  %1940 = vmatmul.bf16.gmra.mxu0 %v1383
  %v1941 = vpop.f32.mrf.mxu0
  %v1942 = vadd.f32 %v1562, %v1941
  %v1943 = vpop.f32.mrf.mxu0
  %v1944 = vadd.f32 %v1562, %v1943
  %1945 = vmatmul.bf16.gmra.mxu0 %v1388
  %v1946 = vpop.f32.mrf.mxu0
  %v1947 = vadd.f32 %v1562, %v1946
  %v1948 = vpop.f32.mrf.mxu0
  %v1949 = vadd.f32 %v1562, %v1948
  %1950 = vmatmul.bf16.gmra.mxu0 %v1393
  %v1951 = vpop.f32.mrf.mxu0
  %v1952 = vadd.f32 %v1562, %v1951
  %v1953 = vpop.f32.mrf.mxu0
  %v1954 = vadd.f32 %v1562, %v1953
  %1955 = vmatmul.bf16.gmra.mxu0 %v1398
  %v1956 = vpop.f32.mrf.mxu0
  %v1957 = vadd.f32 %v1562, %v1956
  %v1958 = vpop.f32.mrf.mxu0
  %v1959 = vadd.f32 %v1562, %v1958
  %1960 = vmatmul.bf16.gmra.mxu0 %v1403
  %v1961 = vpop.f32.mrf.mxu0
  %v1962 = vadd.f32 %v1562, %v1961
  %v1963 = vpop.f32.mrf.mxu0
  %v1964 = vadd.f32 %v1562, %v1963
  %1965 = vmatmul.bf16.gmra.mxu0 %v1408
  %v1966 = vpop.f32.mrf.mxu0
  %v1967 = vadd.f32 %v1562, %v1966
  %v1968 = vpop.f32.mrf.mxu0
  %v1969 = vadd.f32 %v1562, %v1968
  %1970 = vmatmul.bf16.gmra.mxu0 %v1413
  %v1971 = vpop.f32.mrf.mxu0
  %v1972 = vadd.f32 %v1562, %v1971
  %v1973 = vpop.f32.mrf.mxu0
  %v1974 = vadd.f32 %v1562, %v1973
  %1975 = vmatmul.bf16.gmra.mxu0 %v1418
  %v1976 = vpop.f32.mrf.mxu0
  %v1977 = vadd.f32 %v1562, %v1976
  %v1978 = vpop.f32.mrf.mxu0
  %v1979 = vadd.f32 %v1562, %v1978
  %1980 = vmatmul.bf16.gmra.mxu0 %v1423
  %v1981 = vpop.f32.mrf.mxu0
  %v1982 = vadd.f32 %v1562, %v1981
  %v1983 = vpop.f32.mrf.mxu0
  %v1984 = vadd.f32 %v1562, %v1983
  %1985 = vmatmul.bf16.gmra.mxu0 %v1428
  %v1986 = vpop.f32.mrf.mxu0
  %v1987 = vadd.f32 %v1562, %v1986
  %v1988 = vpop.f32.mrf.mxu0
  %v1989 = vadd.f32 %v1562, %v1988
  %1990 = vmatmul.bf16.gmra.mxu0 %v1433
  %v1991 = vpop.f32.mrf.mxu0
  %v1992 = vadd.f32 %v1562, %v1991
  %v1993 = vpop.f32.mrf.mxu0
  %v1994 = vadd.f32 %v1562, %v1993
  %1995 = vmatmul.bf16.gmra.mxu0 %v1438
  %v1996 = vpop.f32.mrf.mxu0
  %v1997 = vadd.f32 %v1562, %v1996
  %v1998 = vpop.f32.mrf.mxu0
  %v1999 = vadd.f32 %v1562, %v1998
  %2000 = vmatmul.bf16.gmra.mxu0 %v1443
  %v2001 = vpop.f32.mrf.mxu0
  %v2002 = vadd.f32 %v1562, %v2001
  %v2003 = vpop.f32.mrf.mxu0
  %v2004 = vadd.f32 %v1562, %v2003
  %2005 = vmatmul.bf16.gmra.mxu0 %v1448
  %v2006 = vpop.f32.mrf.mxu0
  %v2007 = vadd.f32 %v1562, %v2006
  %v2008 = vpop.f32.mrf.mxu0
  %v2009 = vadd.f32 %v1562, %v2008
  %2010 = vmatmul.bf16.gmra.mxu0 %v1453
  %v2011 = vpop.f32.mrf.mxu0
  %v2012 = vadd.f32 %v1562, %v2011
  %v2013 = vpop.f32.mrf.mxu0
  %v2014 = vadd.f32 %v1562, %v2013
  %2015 = vmatmul.bf16.gmra.mxu0 %v1458
  %v2016 = vpop.f32.mrf.mxu0
  %v2017 = vadd.f32 %v1562, %v2016
  %v2018 = vpop.f32.mrf.mxu0
  %v2019 = vadd.f32 %v1562, %v2018
  %2020 = vmatmul.bf16.gmra.mxu0 %v1463
  %v2021 = vpop.f32.mrf.mxu0
  %v2022 = vadd.f32 %v1562, %v2021
  %v2023 = vpop.f32.mrf.mxu0
  %v2024 = vadd.f32 %v1562, %v2023
  %2025 = vmatmul.bf16.gmra.mxu0 %v1468
  %v2026 = vpop.f32.mrf.mxu0
  %v2027 = vadd.f32 %v1562, %v2026
  %v2028 = vpop.f32.mrf.mxu0
  %v2029 = vadd.f32 %v1562, %v2028
  %2030 = vmatmul.bf16.gmra.mxu0 %v1473
  %v2031 = vpop.f32.mrf.mxu0
  %v2032 = vadd.f32 %v1562, %v2031
  %v2033 = vpop.f32.mrf.mxu0
  %v2034 = vadd.f32 %v1562, %v2033
  %2035 = vmatmul.bf16.gmra.mxu0 %v1478
  %v2036 = vpop.f32.mrf.mxu0
  %v2037 = vadd.f32 %v1562, %v2036
  %v2038 = vpop.f32.mrf.mxu0
  %v2039 = vadd.f32 %v1562, %v2038
  %2040 = vmatmul.bf16.gmra.mxu0 %v1483
  %v2041 = vpop.f32.mrf.mxu0
  %v2042 = vadd.f32 %v1562, %v2041
  %v2043 = vpop.f32.mrf.mxu0
  %v2044 = vadd.f32 %v1562, %v2043
  %2045 = vdwg.mxu0
  %2046 = vmatpush.bf16.msra.mxu0 %v1723
  %2047 = vmatpush.bf16.msra.mxu0 %v1722
  %2048 = vmatpush.bf16.msra.mxu0 %v1721
  %2049 = vmatpush.bf16.msra.mxu0 %v1720
  %2050 = vmatpush.bf16.msra.mxu0 %v1719
  %2051 = vmatpush.bf16.msra.mxu0 %v1718
  %2052 = vmatpush.bf16.msra.mxu0 %v1717
  %2053 = vmatpush.bf16.msra.mxu0 %v1716
  %2054 = vmatmul.bf16.gmra.mxu0 %v1329
  %v2055 = vpop.f32.mrf.mxu0
  %v2056 = vadd.f32 %v1887, %v2055
  %v2057 = vpop.f32.mrf.mxu0
  %v2058 = vadd.f32 %v1889, %v2057
  %2059 = vmatmul.bf16.gmra.mxu0 %v1334
  %v2060 = vpop.f32.mrf.mxu0
  %v2061 = vadd.f32 %v1892, %v2060
  %v2062 = vpop.f32.mrf.mxu0
  %v2063 = vadd.f32 %v1894, %v2062
  %2064 = vmatmul.bf16.gmra.mxu0 %v1339
  %v2065 = vpop.f32.mrf.mxu0
  %v2066 = vadd.f32 %v1897, %v2065
  %v2067 = vpop.f32.mrf.mxu0
  %v2068 = vadd.f32 %v1899, %v2067
  %2069 = vmatmul.bf16.gmra.mxu0 %v1344
  %v2070 = vpop.f32.mrf.mxu0
  %v2071 = vadd.f32 %v1902, %v2070
  %v2072 = vpop.f32.mrf.mxu0
  %v2073 = vadd.f32 %v1904, %v2072
  %2074 = vmatmul.bf16.gmra.mxu0 %v1349
  %v2075 = vpop.f32.mrf.mxu0
  %v2076 = vadd.f32 %v1907, %v2075
  %v2077 = vpop.f32.mrf.mxu0
  %v2078 = vadd.f32 %v1909, %v2077
  %2079 = vmatmul.bf16.gmra.mxu0 %v1354
  %v2080 = vpop.f32.mrf.mxu0
  %v2081 = vadd.f32 %v1912, %v2080
  %v2082 = vpop.f32.mrf.mxu0
  %v2083 = vadd.f32 %v1914, %v2082
  %2084 = vmatmul.bf16.gmra.mxu0 %v1359
  %v2085 = vpop.f32.mrf.mxu0
  %v2086 = vadd.f32 %v1917, %v2085
  %v2087 = vpop.f32.mrf.mxu0
  %v2088 = vadd.f32 %v1919, %v2087
  %2089 = vmatmul.bf16.gmra.mxu0 %v1364
  %v2090 = vpop.f32.mrf.mxu0
  %v2091 = vadd.f32 %v1922, %v2090
  %v2092 = vpop.f32.mrf.mxu0
  %v2093 = vadd.f32 %v1924, %v2092
  %2094 = vmatmul.bf16.gmra.mxu0 %v1369
  %v2095 = vpop.f32.mrf.mxu0
  %v2096 = vadd.f32 %v1927, %v2095
  %v2097 = vpop.f32.mrf.mxu0
  %v2098 = vadd.f32 %v1929, %v2097
  %2099 = vmatmul.bf16.gmra.mxu0 %v1374
  %v2100 = vpop.f32.mrf.mxu0
  %v2101 = vadd.f32 %v1932, %v2100
  %v2102 = vpop.f32.mrf.mxu0
  %v2103 = vadd.f32 %v1934, %v2102
  %2104 = vmatmul.bf16.gmra.mxu0 %v1379
  %v2105 = vpop.f32.mrf.mxu0
  %v2106 = vadd.f32 %v1937, %v2105
  %v2107 = vpop.f32.mrf.mxu0
  %v2108 = vadd.f32 %v1939, %v2107
  %2109 = vmatmul.bf16.gmra.mxu0 %v1384
  %v2110 = vpop.f32.mrf.mxu0
  %v2111 = vadd.f32 %v1942, %v2110
  %v2112 = vpop.f32.mrf.mxu0
  %v2113 = vadd.f32 %v1944, %v2112
  %2114 = vmatmul.bf16.gmra.mxu0 %v1389
  %v2115 = vpop.f32.mrf.mxu0
  %v2116 = vadd.f32 %v1947, %v2115
  %v2117 = vpop.f32.mrf.mxu0
  %v2118 = vadd.f32 %v1949, %v2117
  %2119 = vmatmul.bf16.gmra.mxu0 %v1394
  %v2120 = vpop.f32.mrf.mxu0
  %v2121 = vadd.f32 %v1952, %v2120
  %v2122 = vpop.f32.mrf.mxu0
  %v2123 = vadd.f32 %v1954, %v2122
  %2124 = vmatmul.bf16.gmra.mxu0 %v1399
  %v2125 = vpop.f32.mrf.mxu0
  %v2126 = vadd.f32 %v1957, %v2125
  %v2127 = vpop.f32.mrf.mxu0
  %v2128 = vadd.f32 %v1959, %v2127
  %2129 = vmatmul.bf16.gmra.mxu0 %v1404
  %v2130 = vpop.f32.mrf.mxu0
  %v2131 = vadd.f32 %v1962, %v2130
  %v2132 = vpop.f32.mrf.mxu0
  %v2133 = vadd.f32 %v1964, %v2132
  %2134 = vmatmul.bf16.gmra.mxu0 %v1409
  %v2135 = vpop.f32.mrf.mxu0
  %v2136 = vadd.f32 %v1967, %v2135
  %v2137 = vpop.f32.mrf.mxu0
  %v2138 = vadd.f32 %v1969, %v2137
  %2139 = vmatmul.bf16.gmra.mxu0 %v1414
  %v2140 = vpop.f32.mrf.mxu0
  %v2141 = vadd.f32 %v1972, %v2140
  %v2142 = vpop.f32.mrf.mxu0
  %v2143 = vadd.f32 %v1974, %v2142
  %2144 = vmatmul.bf16.gmra.mxu0 %v1419
  %v2145 = vpop.f32.mrf.mxu0
  %v2146 = vadd.f32 %v1977, %v2145
  %v2147 = vpop.f32.mrf.mxu0
  %v2148 = vadd.f32 %v1979, %v2147
  %2149 = vmatmul.bf16.gmra.mxu0 %v1424
  %v2150 = vpop.f32.mrf.mxu0
  %v2151 = vadd.f32 %v1982, %v2150
  %v2152 = vpop.f32.mrf.mxu0
  %v2153 = vadd.f32 %v1984, %v2152
  %2154 = vmatmul.bf16.gmra.mxu0 %v1429
  %v2155 = vpop.f32.mrf.mxu0
  %v2156 = vadd.f32 %v1987, %v2155
  %v2157 = vpop.f32.mrf.mxu0
  %v2158 = vadd.f32 %v1989, %v2157
  %2159 = vmatmul.bf16.gmra.mxu0 %v1434
  %v2160 = vpop.f32.mrf.mxu0
  %v2161 = vadd.f32 %v1992, %v2160
  %v2162 = vpop.f32.mrf.mxu0
  %v2163 = vadd.f32 %v1994, %v2162
  %2164 = vmatmul.bf16.gmra.mxu0 %v1439
  %v2165 = vpop.f32.mrf.mxu0
  %v2166 = vadd.f32 %v1997, %v2165
  %v2167 = vpop.f32.mrf.mxu0
  %v2168 = vadd.f32 %v1999, %v2167
  %2169 = vmatmul.bf16.gmra.mxu0 %v1444
  %v2170 = vpop.f32.mrf.mxu0
  %v2171 = vadd.f32 %v2002, %v2170
  %v2172 = vpop.f32.mrf.mxu0
  %v2173 = vadd.f32 %v2004, %v2172
  %2174 = vmatmul.bf16.gmra.mxu0 %v1449
  %v2175 = vpop.f32.mrf.mxu0
  %v2176 = vadd.f32 %v2007, %v2175
  %v2177 = vpop.f32.mrf.mxu0
  %v2178 = vadd.f32 %v2009, %v2177
  %2179 = vmatmul.bf16.gmra.mxu0 %v1454
  %v2180 = vpop.f32.mrf.mxu0
  %v2181 = vadd.f32 %v2012, %v2180
  %v2182 = vpop.f32.mrf.mxu0
  %v2183 = vadd.f32 %v2014, %v2182
  %2184 = vmatmul.bf16.gmra.mxu0 %v1459
  %v2185 = vpop.f32.mrf.mxu0
  %v2186 = vadd.f32 %v2017, %v2185
  %v2187 = vpop.f32.mrf.mxu0
  %v2188 = vadd.f32 %v2019, %v2187
  %2189 = vmatmul.bf16.gmra.mxu0 %v1464
  %v2190 = vpop.f32.mrf.mxu0
  %v2191 = vadd.f32 %v2022, %v2190
  %v2192 = vpop.f32.mrf.mxu0
  %v2193 = vadd.f32 %v2024, %v2192
  %2194 = vmatmul.bf16.gmra.mxu0 %v1469
  %v2195 = vpop.f32.mrf.mxu0
  %v2196 = vadd.f32 %v2027, %v2195
  %v2197 = vpop.f32.mrf.mxu0
  %v2198 = vadd.f32 %v2029, %v2197
  %2199 = vmatmul.bf16.gmra.mxu0 %v1474
  %v2200 = vpop.f32.mrf.mxu0
  %v2201 = vadd.f32 %v2032, %v2200
  %v2202 = vpop.f32.mrf.mxu0
  %v2203 = vadd.f32 %v2034, %v2202
  %2204 = vmatmul.bf16.gmra.mxu0 %v1479
  %v2205 = vpop.f32.mrf.mxu0
  %v2206 = vadd.f32 %v2037, %v2205
  %v2207 = vpop.f32.mrf.mxu0
  %v2208 = vadd.f32 %v2039, %v2207
  %2209 = vmatmul.bf16.gmra.mxu0 %v1484
  %v2210 = vpop.f32.mrf.mxu0
  %v2211 = vadd.f32 %v2042, %v2210
  %v2212 = vpop.f32.mrf.mxu0
  %v2213 = vadd.f32 %v2044, %v2212
  %2214 = vdwg.mxu0
  %2215 = vmatpush.bf16.msra.mxu0 %v1731
  %2216 = vmatpush.bf16.msra.mxu0 %v1730
  %2217 = vmatpush.bf16.msra.mxu0 %v1729
  %2218 = vmatpush.bf16.msra.mxu0 %v1728
  %2219 = vmatpush.bf16.msra.mxu0 %v1727
  %2220 = vmatpush.bf16.msra.mxu0 %v1726
  %2221 = vmatpush.bf16.msra.mxu0 %v1725
  %2222 = vmatpush.bf16.msra.mxu0 %v1724
  %2223 = vmatmul.bf16.gmra.mxu0 %v1330
  %v2224 = vpop.f32.mrf.mxu0
  %v2225 = vadd.f32 %v2056, %v2224
  %v2226 = vpop.f32.mrf.mxu0
  %v2227 = vadd.f32 %v2058, %v2226
  %2228 = vmatmul.bf16.gmra.mxu0 %v1335
  %v2229 = vpop.f32.mrf.mxu0
  %v2230 = vadd.f32 %v2061, %v2229
  %v2231 = vpop.f32.mrf.mxu0
  %v2232 = vadd.f32 %v2063, %v2231
  %2233 = vmatmul.bf16.gmra.mxu0 %v1340
  %v2234 = vpop.f32.mrf.mxu0
  %v2235 = vadd.f32 %v2066, %v2234
  %v2236 = vpop.f32.mrf.mxu0
  %v2237 = vadd.f32 %v2068, %v2236
  %2238 = vmatmul.bf16.gmra.mxu0 %v1345
  %v2239 = vpop.f32.mrf.mxu0
  %v2240 = vadd.f32 %v2071, %v2239
  %v2241 = vpop.f32.mrf.mxu0
  %v2242 = vadd.f32 %v2073, %v2241
  %2243 = vmatmul.bf16.gmra.mxu0 %v1350
  %v2244 = vpop.f32.mrf.mxu0
  %v2245 = vadd.f32 %v2076, %v2244
  %v2246 = vpop.f32.mrf.mxu0
  %v2247 = vadd.f32 %v2078, %v2246
  %2248 = vmatmul.bf16.gmra.mxu0 %v1355
  %v2249 = vpop.f32.mrf.mxu0
  %v2250 = vadd.f32 %v2081, %v2249
  %v2251 = vpop.f32.mrf.mxu0
  %v2252 = vadd.f32 %v2083, %v2251
  %2253 = vmatmul.bf16.gmra.mxu0 %v1360
  %v2254 = vpop.f32.mrf.mxu0
  %v2255 = vadd.f32 %v2086, %v2254
  %v2256 = vpop.f32.mrf.mxu0
  %v2257 = vadd.f32 %v2088, %v2256
  %2258 = vmatmul.bf16.gmra.mxu0 %v1365
  %v2259 = vpop.f32.mrf.mxu0
  %v2260 = vadd.f32 %v2091, %v2259
  %v2261 = vpop.f32.mrf.mxu0
  %v2262 = vadd.f32 %v2093, %v2261
  %2263 = vmatmul.bf16.gmra.mxu0 %v1370
  %v2264 = vpop.f32.mrf.mxu0
  %v2265 = vadd.f32 %v2096, %v2264
  %v2266 = vpop.f32.mrf.mxu0
  %v2267 = vadd.f32 %v2098, %v2266
  %2268 = vmatmul.bf16.gmra.mxu0 %v1375
  %v2269 = vpop.f32.mrf.mxu0
  %v2270 = vadd.f32 %v2101, %v2269
  %v2271 = vpop.f32.mrf.mxu0
  %v2272 = vadd.f32 %v2103, %v2271
  %2273 = vmatmul.bf16.gmra.mxu0 %v1380
  %v2274 = vpop.f32.mrf.mxu0
  %v2275 = vadd.f32 %v2106, %v2274
  %v2276 = vpop.f32.mrf.mxu0
  %v2277 = vadd.f32 %v2108, %v2276
  %2278 = vmatmul.bf16.gmra.mxu0 %v1385
  %v2279 = vpop.f32.mrf.mxu0
  %v2280 = vadd.f32 %v2111, %v2279
  %v2281 = vpop.f32.mrf.mxu0
  %v2282 = vadd.f32 %v2113, %v2281
  %2283 = vmatmul.bf16.gmra.mxu0 %v1390
  %v2284 = vpop.f32.mrf.mxu0
  %v2285 = vadd.f32 %v2116, %v2284
  %v2286 = vpop.f32.mrf.mxu0
  %v2287 = vadd.f32 %v2118, %v2286
  %2288 = vmatmul.bf16.gmra.mxu0 %v1395
  %v2289 = vpop.f32.mrf.mxu0
  %v2290 = vadd.f32 %v2121, %v2289
  %v2291 = vpop.f32.mrf.mxu0
  %v2292 = vadd.f32 %v2123, %v2291
  %2293 = vmatmul.bf16.gmra.mxu0 %v1400
  %v2294 = vpop.f32.mrf.mxu0
  %v2295 = vadd.f32 %v2126, %v2294
  %v2296 = vpop.f32.mrf.mxu0
  %v2297 = vadd.f32 %v2128, %v2296
  %2298 = vmatmul.bf16.gmra.mxu0 %v1405
  %v2299 = vpop.f32.mrf.mxu0
  %v2300 = vadd.f32 %v2131, %v2299
  %v2301 = vpop.f32.mrf.mxu0
  %v2302 = vadd.f32 %v2133, %v2301
  %2303 = vmatmul.bf16.gmra.mxu0 %v1410
  %v2304 = vpop.f32.mrf.mxu0
  %v2305 = vadd.f32 %v2136, %v2304
  %v2306 = vpop.f32.mrf.mxu0
  %v2307 = vadd.f32 %v2138, %v2306
  %2308 = vmatmul.bf16.gmra.mxu0 %v1415
  %v2309 = vpop.f32.mrf.mxu0
  %v2310 = vadd.f32 %v2141, %v2309
  %v2311 = vpop.f32.mrf.mxu0
  %v2312 = vadd.f32 %v2143, %v2311
  %2313 = vmatmul.bf16.gmra.mxu0 %v1420
  %v2314 = vpop.f32.mrf.mxu0
  %v2315 = vadd.f32 %v2146, %v2314
  %v2316 = vpop.f32.mrf.mxu0
  %v2317 = vadd.f32 %v2148, %v2316
  %2318 = vmatmul.bf16.gmra.mxu0 %v1425
  %v2319 = vpop.f32.mrf.mxu0
  %v2320 = vadd.f32 %v2151, %v2319
  %v2321 = vpop.f32.mrf.mxu0
  %v2322 = vadd.f32 %v2153, %v2321
  %2323 = vmatmul.bf16.gmra.mxu0 %v1430
  %v2324 = vpop.f32.mrf.mxu0
  %v2325 = vadd.f32 %v2156, %v2324
  %v2326 = vpop.f32.mrf.mxu0
  %v2327 = vadd.f32 %v2158, %v2326
  %2328 = vmatmul.bf16.gmra.mxu0 %v1435
  %v2329 = vpop.f32.mrf.mxu0
  %v2330 = vadd.f32 %v2161, %v2329
  %v2331 = vpop.f32.mrf.mxu0
  %v2332 = vadd.f32 %v2163, %v2331
  %2333 = vmatmul.bf16.gmra.mxu0 %v1440
  %v2334 = vpop.f32.mrf.mxu0
  %v2335 = vadd.f32 %v2166, %v2334
  %v2336 = vpop.f32.mrf.mxu0
  %v2337 = vadd.f32 %v2168, %v2336
  %2338 = vmatmul.bf16.gmra.mxu0 %v1445
  %v2339 = vpop.f32.mrf.mxu0
  %v2340 = vadd.f32 %v2171, %v2339
  %v2341 = vpop.f32.mrf.mxu0
  %v2342 = vadd.f32 %v2173, %v2341
  %2343 = vmatmul.bf16.gmra.mxu0 %v1450
  %v2344 = vpop.f32.mrf.mxu0
  %v2345 = vadd.f32 %v2176, %v2344
  %v2346 = vpop.f32.mrf.mxu0
  %v2347 = vadd.f32 %v2178, %v2346
  %2348 = vmatmul.bf16.gmra.mxu0 %v1455
  %v2349 = vpop.f32.mrf.mxu0
  %v2350 = vadd.f32 %v2181, %v2349
  %v2351 = vpop.f32.mrf.mxu0
  %v2352 = vadd.f32 %v2183, %v2351
  %2353 = vmatmul.bf16.gmra.mxu0 %v1460
  %v2354 = vpop.f32.mrf.mxu0
  %v2355 = vadd.f32 %v2186, %v2354
  %v2356 = vpop.f32.mrf.mxu0
  %v2357 = vadd.f32 %v2188, %v2356
  %2358 = vmatmul.bf16.gmra.mxu0 %v1465
  %v2359 = vpop.f32.mrf.mxu0
  %v2360 = vadd.f32 %v2191, %v2359
  %v2361 = vpop.f32.mrf.mxu0
  %v2362 = vadd.f32 %v2193, %v2361
  %2363 = vmatmul.bf16.gmra.mxu0 %v1470
  %v2364 = vpop.f32.mrf.mxu0
  %v2365 = vadd.f32 %v2196, %v2364
  %v2366 = vpop.f32.mrf.mxu0
  %v2367 = vadd.f32 %v2198, %v2366
  %2368 = vmatmul.bf16.gmra.mxu0 %v1475
  %v2369 = vpop.f32.mrf.mxu0
  %v2370 = vadd.f32 %v2201, %v2369
  %v2371 = vpop.f32.mrf.mxu0
  %v2372 = vadd.f32 %v2203, %v2371
  %2373 = vmatmul.bf16.gmra.mxu0 %v1480
  %v2374 = vpop.f32.mrf.mxu0
  %v2375 = vadd.f32 %v2206, %v2374
  %v2376 = vpop.f32.mrf.mxu0
  %v2377 = vadd.f32 %v2208, %v2376
  %2378 = vmatmul.bf16.gmra.mxu0 %v1485
  %v2379 = vpop.f32.mrf.mxu0
  %v2380 = vadd.f32 %v2211, %v2379
  %v2381 = vpop.f32.mrf.mxu0
  %v2382 = vadd.f32 %v2213, %v2381
  %2383 = vdwg.mxu0
  %2384 = vmatpush.bf16.msra.mxu0 %v1739
  %2385 = vmatpush.bf16.msra.mxu0 %v1738
  %2386 = vmatpush.bf16.msra.mxu0 %v1737
  %2387 = vmatpush.bf16.msra.mxu0 %v1736
  %2388 = vmatpush.bf16.msra.mxu0 %v1735
  %2389 = vmatpush.bf16.msra.mxu0 %v1734
  %2390 = vmatpush.bf16.msra.mxu0 %v1733
  %2391 = vmatpush.bf16.msra.mxu0 %v1732
  %2392 = vmatmul.bf16.gmra.mxu0 %v1331
  %v2393 = vpop.f32.mrf.mxu0
  %v2394 = vadd.f32 %v2225, %v2393
  %v2395 = vpop.f32.mrf.mxu0
  %v2396 = vadd.f32 %v2227, %v2395
  %2397 = vmatmul.bf16.gmra.mxu0 %v1336
  %v2398 = vpop.f32.mrf.mxu0
  %v2399 = vadd.f32 %v2230, %v2398
  %v2400 = vpop.f32.mrf.mxu0
  %v2401 = vadd.f32 %v2232, %v2400
  %2402 = vmatmul.bf16.gmra.mxu0 %v1341
  %v2403 = vpop.f32.mrf.mxu0
  %v2404 = vadd.f32 %v2235, %v2403
  %v2405 = vpop.f32.mrf.mxu0
  %v2406 = vadd.f32 %v2237, %v2405
  %2407 = vmatmul.bf16.gmra.mxu0 %v1346
  %v2408 = vpop.f32.mrf.mxu0
  %v2409 = vadd.f32 %v2240, %v2408
  %v2410 = vpop.f32.mrf.mxu0
  %v2411 = vadd.f32 %v2242, %v2410
  %2412 = vmatmul.bf16.gmra.mxu0 %v1351
  %v2413 = vpop.f32.mrf.mxu0
  %v2414 = vadd.f32 %v2245, %v2413
  %v2415 = vpop.f32.mrf.mxu0
  %v2416 = vadd.f32 %v2247, %v2415
  %2417 = vmatmul.bf16.gmra.mxu0 %v1356
  %v2418 = vpop.f32.mrf.mxu0
  %v2419 = vadd.f32 %v2250, %v2418
  %v2420 = vpop.f32.mrf.mxu0
  %v2421 = vadd.f32 %v2252, %v2420
  %2422 = vmatmul.bf16.gmra.mxu0 %v1361
  %v2423 = vpop.f32.mrf.mxu0
  %v2424 = vadd.f32 %v2255, %v2423
  %v2425 = vpop.f32.mrf.mxu0
  %v2426 = vadd.f32 %v2257, %v2425
  %2427 = vmatmul.bf16.gmra.mxu0 %v1366
  %v2428 = vpop.f32.mrf.mxu0
  %v2429 = vadd.f32 %v2260, %v2428
  %v2430 = vpop.f32.mrf.mxu0
  %v2431 = vadd.f32 %v2262, %v2430
  %2432 = vmatmul.bf16.gmra.mxu0 %v1371
  %v2433 = vpop.f32.mrf.mxu0
  %v2434 = vadd.f32 %v2265, %v2433
  %v2435 = vpop.f32.mrf.mxu0
  %v2436 = vadd.f32 %v2267, %v2435
  %2437 = vmatmul.bf16.gmra.mxu0 %v1376
  %v2438 = vpop.f32.mrf.mxu0
  %v2439 = vadd.f32 %v2270, %v2438
  %v2440 = vpop.f32.mrf.mxu0
  %v2441 = vadd.f32 %v2272, %v2440
  %2442 = vmatmul.bf16.gmra.mxu0 %v1381
  %v2443 = vpop.f32.mrf.mxu0
  %v2444 = vadd.f32 %v2275, %v2443
  %v2445 = vpop.f32.mrf.mxu0
  %v2446 = vadd.f32 %v2277, %v2445
  %2447 = vmatmul.bf16.gmra.mxu0 %v1386
  %v2448 = vpop.f32.mrf.mxu0
  %v2449 = vadd.f32 %v2280, %v2448
  %v2450 = vpop.f32.mrf.mxu0
  %v2451 = vadd.f32 %v2282, %v2450
  %2452 = vmatmul.bf16.gmra.mxu0 %v1391
  %v2453 = vpop.f32.mrf.mxu0
  %v2454 = vadd.f32 %v2285, %v2453
  %v2455 = vpop.f32.mrf.mxu0
  %v2456 = vadd.f32 %v2287, %v2455
  %2457 = vmatmul.bf16.gmra.mxu0 %v1396
  %v2458 = vpop.f32.mrf.mxu0
  %v2459 = vadd.f32 %v2290, %v2458
  %v2460 = vpop.f32.mrf.mxu0
  %v2461 = vadd.f32 %v2292, %v2460
  %2462 = vmatmul.bf16.gmra.mxu0 %v1401
  %v2463 = vpop.f32.mrf.mxu0
  %v2464 = vadd.f32 %v2295, %v2463
  %v2465 = vpop.f32.mrf.mxu0
  %v2466 = vadd.f32 %v2297, %v2465
  %2467 = vmatmul.bf16.gmra.mxu0 %v1406
  %v2468 = vpop.f32.mrf.mxu0
  %v2469 = vadd.f32 %v2300, %v2468
  %v2470 = vpop.f32.mrf.mxu0
  %v2471 = vadd.f32 %v2302, %v2470
  %2472 = vmatmul.bf16.gmra.mxu0 %v1411
  %v2473 = vpop.f32.mrf.mxu0
  %v2474 = vadd.f32 %v2305, %v2473
  %v2475 = vpop.f32.mrf.mxu0
  %v2476 = vadd.f32 %v2307, %v2475
  %2477 = vmatmul.bf16.gmra.mxu0 %v1416
  %v2478 = vpop.f32.mrf.mxu0
  %v2479 = vadd.f32 %v2310, %v2478
  %v2480 = vpop.f32.mrf.mxu0
  %v2481 = vadd.f32 %v2312, %v2480
  %2482 = vmatmul.bf16.gmra.mxu0 %v1421
  %v2483 = vpop.f32.mrf.mxu0
  %v2484 = vadd.f32 %v2315, %v2483
  %v2485 = vpop.f32.mrf.mxu0
  %v2486 = vadd.f32 %v2317, %v2485
  %2487 = vmatmul.bf16.gmra.mxu0 %v1426
  %v2488 = vpop.f32.mrf.mxu0
  %v2489 = vadd.f32 %v2320, %v2488
  %v2490 = vpop.f32.mrf.mxu0
  %v2491 = vadd.f32 %v2322, %v2490
  %2492 = vmatmul.bf16.gmra.mxu0 %v1431
  %v2493 = vpop.f32.mrf.mxu0
  %v2494 = vadd.f32 %v2325, %v2493
  %v2495 = vpop.f32.mrf.mxu0
  %v2496 = vadd.f32 %v2327, %v2495
  %2497 = vmatmul.bf16.gmra.mxu0 %v1436
  %v2498 = vpop.f32.mrf.mxu0
  %v2499 = vadd.f32 %v2330, %v2498
  %v2500 = vpop.f32.mrf.mxu0
  %v2501 = vadd.f32 %v2332, %v2500
  %2502 = vmatmul.bf16.gmra.mxu0 %v1441
  %v2503 = vpop.f32.mrf.mxu0
  %v2504 = vadd.f32 %v2335, %v2503
  %v2505 = vpop.f32.mrf.mxu0
  %v2506 = vadd.f32 %v2337, %v2505
  %2507 = vmatmul.bf16.gmra.mxu0 %v1446
  %v2508 = vpop.f32.mrf.mxu0
  %v2509 = vadd.f32 %v2340, %v2508
  %v2510 = vpop.f32.mrf.mxu0
  %v2511 = vadd.f32 %v2342, %v2510
  %2512 = vmatmul.bf16.gmra.mxu0 %v1451
  %v2513 = vpop.f32.mrf.mxu0
  %v2514 = vadd.f32 %v2345, %v2513
  %v2515 = vpop.f32.mrf.mxu0
  %v2516 = vadd.f32 %v2347, %v2515
  %2517 = vmatmul.bf16.gmra.mxu0 %v1456
  %v2518 = vpop.f32.mrf.mxu0
  %v2519 = vadd.f32 %v2350, %v2518
  %v2520 = vpop.f32.mrf.mxu0
  %v2521 = vadd.f32 %v2352, %v2520
  %2522 = vmatmul.bf16.gmra.mxu0 %v1461
  %v2523 = vpop.f32.mrf.mxu0
  %v2524 = vadd.f32 %v2355, %v2523
  %v2525 = vpop.f32.mrf.mxu0
  %v2526 = vadd.f32 %v2357, %v2525
  %2527 = vmatmul.bf16.gmra.mxu0 %v1466
  %v2528 = vpop.f32.mrf.mxu0
  %v2529 = vadd.f32 %v2360, %v2528
  %v2530 = vpop.f32.mrf.mxu0
  %v2531 = vadd.f32 %v2362, %v2530
  %2532 = vmatmul.bf16.gmra.mxu0 %v1471
  %v2533 = vpop.f32.mrf.mxu0
  %v2534 = vadd.f32 %v2365, %v2533
  %v2535 = vpop.f32.mrf.mxu0
  %v2536 = vadd.f32 %v2367, %v2535
  %2537 = vmatmul.bf16.gmra.mxu0 %v1476
  %v2538 = vpop.f32.mrf.mxu0
  %v2539 = vadd.f32 %v2370, %v2538
  %v2540 = vpop.f32.mrf.mxu0
  %v2541 = vadd.f32 %v2372, %v2540
  %2542 = vmatmul.bf16.gmra.mxu0 %v1481
  %v2543 = vpop.f32.mrf.mxu0
  %v2544 = vadd.f32 %v2375, %v2543
  %v2545 = vpop.f32.mrf.mxu0
  %v2546 = vadd.f32 %v2377, %v2545
  %2547 = vmatmul.bf16.gmra.mxu0 %v1486
  %v2548 = vpop.f32.mrf.mxu0
  %v2549 = vadd.f32 %v2380, %v2548
  %v2550 = vpop.f32.mrf.mxu0
  %v2551 = vadd.f32 %v2382, %v2550
  %2552 = vdwg.mxu0
  %2553 = vmatpush.bf16.msra.mxu0 0
  %2554 = vmatpush.bf16.msra.mxu0 0
  %2555 = vmatpush.bf16.msra.mxu0 0
  %2556 = vmatpush.bf16.msra.mxu0 0
  %2557 = vmatpush.bf16.msra.mxu0 %v1743
  %2558 = vmatpush.bf16.msra.mxu0 %v1742
  %2559 = vmatpush.bf16.msra.mxu0 %v1741
  %2560 = vmatpush.bf16.msra.mxu0 %v1740
  %2561 = vmatmul.bf16.gmra.mxu0 %v1782
  %v2562 = vpop.f32.mrf.mxu0
  %v2563 = vadd.f32 %v2394, %v2562
  %v2564 = vpop.f32.mrf.mxu0
  %v2565 = vadd.f32 %v2396, %v2564
  %2566 = vmatmul.bf16.gmra.mxu0 %v1785
  %v2567 = vpop.f32.mrf.mxu0
  %v2568 = vadd.f32 %v2399, %v2567
  %v2569 = vpop.f32.mrf.mxu0
  %v2570 = vadd.f32 %v2401, %v2569
  %2571 = vmatmul.bf16.gmra.mxu0 %v1788
  %v2572 = vpop.f32.mrf.mxu0
  %v2573 = vadd.f32 %v2404, %v2572
  %v2574 = vpop.f32.mrf.mxu0
  %v2575 = vadd.f32 %v2406, %v2574
  %2576 = vmatmul.bf16.gmra.mxu0 %v1791
  %v2577 = vpop.f32.mrf.mxu0
  %v2578 = vadd.f32 %v2409, %v2577
  %v2579 = vpop.f32.mrf.mxu0
  %v2580 = vadd.f32 %v2411, %v2579
  %2581 = vmatmul.bf16.gmra.mxu0 %v1794
  %v2582 = vpop.f32.mrf.mxu0
  %v2583 = vadd.f32 %v2414, %v2582
  %v2584 = vpop.f32.mrf.mxu0
  %v2585 = vadd.f32 %v2416, %v2584
  %2586 = vmatmul.bf16.gmra.mxu0 %v1797
  %v2587 = vpop.f32.mrf.mxu0
  %v2588 = vadd.f32 %v2419, %v2587
  %v2589 = vpop.f32.mrf.mxu0
  %v2590 = vadd.f32 %v2421, %v2589
  %2591 = vmatmul.bf16.gmra.mxu0 %v1800
  %v2592 = vpop.f32.mrf.mxu0
  %v2593 = vadd.f32 %v2424, %v2592
  %v2594 = vpop.f32.mrf.mxu0
  %v2595 = vadd.f32 %v2426, %v2594
  %2596 = vmatmul.bf16.gmra.mxu0 %v1803
  %v2597 = vpop.f32.mrf.mxu0
  %v2598 = vadd.f32 %v2429, %v2597
  %v2599 = vpop.f32.mrf.mxu0
  %v2600 = vadd.f32 %v2431, %v2599
  %2601 = vmatmul.bf16.gmra.mxu0 %v1806
  %v2602 = vpop.f32.mrf.mxu0
  %v2603 = vadd.f32 %v2434, %v2602
  %v2604 = vpop.f32.mrf.mxu0
  %v2605 = vadd.f32 %v2436, %v2604
  %2606 = vmatmul.bf16.gmra.mxu0 %v1809
  %v2607 = vpop.f32.mrf.mxu0
  %v2608 = vadd.f32 %v2439, %v2607
  %v2609 = vpop.f32.mrf.mxu0
  %v2610 = vadd.f32 %v2441, %v2609
  %2611 = vmatmul.bf16.gmra.mxu0 %v1812
  %v2612 = vpop.f32.mrf.mxu0
  %v2613 = vadd.f32 %v2444, %v2612
  %v2614 = vpop.f32.mrf.mxu0
  %v2615 = vadd.f32 %v2446, %v2614
  %2616 = vmatmul.bf16.gmra.mxu0 %v1815
  %v2617 = vpop.f32.mrf.mxu0
  %v2618 = vadd.f32 %v2449, %v2617
  %v2619 = vpop.f32.mrf.mxu0
  %v2620 = vadd.f32 %v2451, %v2619
  %2621 = vmatmul.bf16.gmra.mxu0 %v1818
  %v2622 = vpop.f32.mrf.mxu0
  %v2623 = vadd.f32 %v2454, %v2622
  %v2624 = vpop.f32.mrf.mxu0
  %v2625 = vadd.f32 %v2456, %v2624
  %2626 = vmatmul.bf16.gmra.mxu0 %v1821
  %v2627 = vpop.f32.mrf.mxu0
  %v2628 = vadd.f32 %v2459, %v2627
  %v2629 = vpop.f32.mrf.mxu0
  %v2630 = vadd.f32 %v2461, %v2629
  %2631 = vmatmul.bf16.gmra.mxu0 %v1824
  %v2632 = vpop.f32.mrf.mxu0
  %v2633 = vadd.f32 %v2464, %v2632
  %v2634 = vpop.f32.mrf.mxu0
  %v2635 = vadd.f32 %v2466, %v2634
  %2636 = vmatmul.bf16.gmra.mxu0 %v1827
  %v2637 = vpop.f32.mrf.mxu0
  %v2638 = vadd.f32 %v2469, %v2637
  %v2639 = vpop.f32.mrf.mxu0
  %v2640 = vadd.f32 %v2471, %v2639
  %2641 = vmatmul.bf16.gmra.mxu0 %v1830
  %v2642 = vpop.f32.mrf.mxu0
  %v2643 = vadd.f32 %v2474, %v2642
  %v2644 = vpop.f32.mrf.mxu0
  %v2645 = vadd.f32 %v2476, %v2644
  %2646 = vmatmul.bf16.gmra.mxu0 %v1833
  %v2647 = vpop.f32.mrf.mxu0
  %v2648 = vadd.f32 %v2479, %v2647
  %v2649 = vpop.f32.mrf.mxu0
  %v2650 = vadd.f32 %v2481, %v2649
  %2651 = vmatmul.bf16.gmra.mxu0 %v1836
  %v2652 = vpop.f32.mrf.mxu0
  %v2653 = vadd.f32 %v2484, %v2652
  %v2654 = vpop.f32.mrf.mxu0
  %v2655 = vadd.f32 %v2486, %v2654
  %2656 = vmatmul.bf16.gmra.mxu0 %v1839
  %v2657 = vpop.f32.mrf.mxu0
  %v2658 = vadd.f32 %v2489, %v2657
  %v2659 = vpop.f32.mrf.mxu0
  %v2660 = vadd.f32 %v2491, %v2659
  %2661 = vmatmul.bf16.gmra.mxu0 %v1842
  %v2662 = vpop.f32.mrf.mxu0
  %v2663 = vadd.f32 %v2494, %v2662
  %v2664 = vpop.f32.mrf.mxu0
  %v2665 = vadd.f32 %v2496, %v2664
  %2666 = vmatmul.bf16.gmra.mxu0 %v1845
  %v2667 = vpop.f32.mrf.mxu0
  %v2668 = vadd.f32 %v2499, %v2667
  %v2669 = vpop.f32.mrf.mxu0
  %v2670 = vadd.f32 %v2501, %v2669
  %2671 = vmatmul.bf16.gmra.mxu0 %v1848
  %v2672 = vpop.f32.mrf.mxu0
  %v2673 = vadd.f32 %v2504, %v2672
  %v2674 = vpop.f32.mrf.mxu0
  %v2675 = vadd.f32 %v2506, %v2674
  %2676 = vmatmul.bf16.gmra.mxu0 %v1851
  %v2677 = vpop.f32.mrf.mxu0
  %v2678 = vadd.f32 %v2509, %v2677
  %v2679 = vpop.f32.mrf.mxu0
  %v2680 = vadd.f32 %v2511, %v2679
  %2681 = vmatmul.bf16.gmra.mxu0 %v1854
  %v2682 = vpop.f32.mrf.mxu0
  %v2683 = vadd.f32 %v2514, %v2682
  %v2684 = vpop.f32.mrf.mxu0
  %v2685 = vadd.f32 %v2516, %v2684
  %2686 = vmatmul.bf16.gmra.mxu0 %v1857
  %v2687 = vpop.f32.mrf.mxu0
  %v2688 = vadd.f32 %v2519, %v2687
  %v2689 = vpop.f32.mrf.mxu0
  %v2690 = vadd.f32 %v2521, %v2689
  %2691 = vmatmul.bf16.gmra.mxu0 %v1860
  %v2692 = vpop.f32.mrf.mxu0
  %v2693 = vadd.f32 %v2524, %v2692
  %v2694 = vpop.f32.mrf.mxu0
  %v2695 = vadd.f32 %v2526, %v2694
  %2696 = vmatmul.bf16.gmra.mxu0 %v1863
  %v2697 = vpop.f32.mrf.mxu0
  %v2698 = vadd.f32 %v2529, %v2697
  %v2699 = vpop.f32.mrf.mxu0
  %v2700 = vadd.f32 %v2531, %v2699
  %2701 = vmatmul.bf16.gmra.mxu0 %v1866
  %v2702 = vpop.f32.mrf.mxu0
  %v2703 = vadd.f32 %v2534, %v2702
  %v2704 = vpop.f32.mrf.mxu0
  %v2705 = vadd.f32 %v2536, %v2704
  %2706 = vmatmul.bf16.gmra.mxu0 %v1869
  %v2707 = vpop.f32.mrf.mxu0
  %v2708 = vadd.f32 %v2539, %v2707
  %v2709 = vpop.f32.mrf.mxu0
  %v2710 = vadd.f32 %v2541, %v2709
  %2711 = vmatmul.bf16.gmra.mxu0 %v1872
  %v2712 = vpop.f32.mrf.mxu0
  %v2713 = vadd.f32 %v2544, %v2712
  %v2714 = vpop.f32.mrf.mxu0
  %v2715 = vadd.f32 %v2546, %v2714
  %2716 = vmatmul.bf16.gmra.mxu0 %v1875
  %v2717 = vpop.f32.mrf.mxu0
  %v2718 = vadd.f32 %v2549, %v2717
  %v2719 = vpop.f32.mrf.mxu0
  %v2720 = vadd.f32 %v2551, %v2719
  %2721 = vdwg.mxu0
  %v2722 = vsel %vm1780, %v2563, 0.0
  %v2723 = vsel %vm1780, %v2565, 0.0
  %v2724 = vadd.f32 %v2722, %v2723
  %v2725 = vsel %vm1780, %v2568, 0.0
  %v2726 = vadd.f32 %v2724, %v2725
  %v2727 = vsel %vm1780, %v2570, 0.0
  %v2728 = vadd.f32 %v2726, %v2727
  %v2729 = vsel %vm1780, %v2573, 0.0
  %v2730 = vadd.f32 %v2728, %v2729
  %v2731 = vsel %vm1780, %v2575, 0.0
  %v2732 = vadd.f32 %v2730, %v2731
  %v2733 = vsel %vm1780, %v2578, 0.0
  %v2734 = vadd.f32 %v2732, %v2733
  %v2735 = vsel %vm1780, %v2580, 0.0
  %v2736 = vadd.f32 %v2734, %v2735
  %v2737 = vsel %vm1780, %v2583, 0.0
  %v2738 = vadd.f32 %v2736, %v2737
  %v2739 = vsel %vm1780, %v2585, 0.0
  %v2740 = vadd.f32 %v2738, %v2739
  %v2741 = vsel %vm1780, %v2588, 0.0
  %v2742 = vadd.f32 %v2740, %v2741
  %v2743 = vsel %vm1780, %v2590, 0.0
  %v2744 = vadd.f32 %v2742, %v2743
  %v2745 = vsel %vm1780, %v2593, 0.0
  %v2746 = vadd.f32 %v2744, %v2745
  %v2747 = vsel %vm1780, %v2595, 0.0
  %v2748 = vadd.f32 %v2746, %v2747
  %v2749 = vsel %vm1780, %v2598, 0.0
  %v2750 = vadd.f32 %v2748, %v2749
  %v2751 = vsel %vm1780, %v2600, 0.0
  %v2752 = vadd.f32 %v2750, %v2751
  %v2753 = vsel %vm1780, %v2603, 0.0
  %v2754 = vadd.f32 %v2752, %v2753
  %v2755 = vsel %vm1780, %v2605, 0.0
  %v2756 = vadd.f32 %v2754, %v2755
  %v2757 = vsel %vm1780, %v2608, 0.0
  %v2758 = vadd.f32 %v2756, %v2757
  %v2759 = vsel %vm1780, %v2610, 0.0
  %v2760 = vadd.f32 %v2758, %v2759
  %v2761 = vsel %vm1780, %v2613, 0.0
  %v2762 = vadd.f32 %v2760, %v2761
  %v2763 = vsel %vm1780, %v2615, 0.0
  %v2764 = vadd.f32 %v2762, %v2763
  %v2765 = vsel %vm1780, %v2618, 0.0
  %v2766 = vadd.f32 %v2764, %v2765
  %v2767 = vsel %vm1780, %v2620, 0.0
  %v2768 = vadd.f32 %v2766, %v2767
  %v2769 = vsel %vm1780, %v2623, 0.0
  %v2770 = vadd.f32 %v2768, %v2769
  %v2771 = vsel %vm1780, %v2625, 0.0
  %v2772 = vadd.f32 %v2770, %v2771
  %v2773 = vsel %vm1780, %v2628, 0.0
  %v2774 = vadd.f32 %v2772, %v2773
  %v2775 = vsel %vm1780, %v2630, 0.0
  %v2776 = vadd.f32 %v2774, %v2775
  %v2777 = vsel %vm1780, %v2633, 0.0
  %v2778 = vadd.f32 %v2776, %v2777
  %v2779 = vsel %vm1780, %v2635, 0.0
  %v2780 = vadd.f32 %v2778, %v2779
  %v2781 = vsel %vm1780, %v2638, 0.0
  %v2782 = vadd.f32 %v2780, %v2781
  %v2783 = vsel %vm1780, %v2640, 0.0
  %v2784 = vadd.f32 %v2782, %v2783
  %v2785 = vsel %vm1780, %v2643, 0.0
  %v2786 = vadd.f32 %v2784, %v2785
  %v2787 = vsel %vm1780, %v2645, 0.0
  %v2788 = vadd.f32 %v2786, %v2787
  %v2789 = vsel %vm1780, %v2648, 0.0
  %v2790 = vadd.f32 %v2788, %v2789
  %v2791 = vsel %vm1780, %v2650, 0.0
  %v2792 = vadd.f32 %v2790, %v2791
  %v2793 = vsel %vm1780, %v2653, 0.0
  %v2794 = vadd.f32 %v2792, %v2793
  %v2795 = vsel %vm1780, %v2655, 0.0
  %v2796 = vadd.f32 %v2794, %v2795
  %v2797 = vsel %vm1780, %v2658, 0.0
  %v2798 = vadd.f32 %v2796, %v2797
  %v2799 = vsel %vm1780, %v2660, 0.0
  %v2800 = vadd.f32 %v2798, %v2799
  %v2801 = vsel %vm1780, %v2663, 0.0
  %v2802 = vadd.f32 %v2800, %v2801
  %v2803 = vsel %vm1780, %v2665, 0.0
  %v2804 = vadd.f32 %v2802, %v2803
  %v2805 = vsel %vm1780, %v2668, 0.0
  %v2806 = vadd.f32 %v2804, %v2805
  %v2807 = vsel %vm1780, %v2670, 0.0
  %v2808 = vadd.f32 %v2806, %v2807
  %v2809 = vsel %vm1780, %v2673, 0.0
  %v2810 = vadd.f32 %v2808, %v2809
  %v2811 = vsel %vm1780, %v2675, 0.0
  %v2812 = vadd.f32 %v2810, %v2811
  %v2813 = vsel %vm1780, %v2678, 0.0
  %v2814 = vadd.f32 %v2812, %v2813
  %v2815 = vsel %vm1780, %v2680, 0.0
  %v2816 = vadd.f32 %v2814, %v2815
  %v2817 = vsel %vm1780, %v2683, 0.0
  %v2818 = vadd.f32 %v2816, %v2817
  %v2819 = vsel %vm1780, %v2685, 0.0
  %v2820 = vadd.f32 %v2818, %v2819
  %v2821 = vsel %vm1780, %v2688, 0.0
  %v2822 = vadd.f32 %v2820, %v2821
  %v2823 = vsel %vm1780, %v2690, 0.0
  %v2824 = vadd.f32 %v2822, %v2823
  %v2825 = vsel %vm1780, %v2693, 0.0
  %v2826 = vadd.f32 %v2824, %v2825
  %v2827 = vsel %vm1780, %v2695, 0.0
  %v2828 = vadd.f32 %v2826, %v2827
  %v2829 = vsel %vm1780, %v2698, 0.0
  %v2830 = vadd.f32 %v2828, %v2829
  %v2831 = vsel %vm1780, %v2700, 0.0
  %v2832 = vadd.f32 %v2830, %v2831
  %v2833 = vsel %vm1780, %v2703, 0.0
  %v2834 = vadd.f32 %v2832, %v2833
  %v2835 = vsel %vm1780, %v2705, 0.0
  %v2836 = vadd.f32 %v2834, %v2835
  %v2837 = vsel %vm1780, %v2708, 0.0
  %v2838 = vadd.f32 %v2836, %v2837
  %v2839 = vsel %vm1780, %v2710, 0.0
  %v2840 = vadd.f32 %v2838, %v2839
  %v2841 = vsel %vm1780, %v2713, 0.0
  %v2842 = vadd.f32 %v2840, %v2841
  %v2843 = vsel %vm1780, %v2715, 0.0
  %v2844 = vadd.f32 %v2842, %v2843
  %v2845 = vsel %vm1780, %v2718, 0.0
  %v2846 = vadd.f32 %v2844, %v2845
  %v2847 = vsel %vm1780, %v2720, 0.0
  %v2848 = vadd.f32 %v2846, %v2847
  %v2849 = vrot.slane %v2848, 4
  %v2850 = vadd.f32 %v2848, %v2849
  %v2851 = vrot.slane %v2850, 2
  %v2852 = vadd.f32 %v2850, %v2851
  %v2853 = vrot.slane %v2852, 1
  %v2854 = vadd.f32 %v2852, %v2853
  %2855 = vst.msk [vmem:[%s6] sm:$0xff] %vm1780, %v2854
  %v2856 = vmul.f32 %v2563, %v2563
  %v2857 = vmul.f32 %v2565, %v2565
  %v2858 = vmul.f32 %v2568, %v2568
  %v2859 = vmul.f32 %v2570, %v2570
  %v2860 = vmul.f32 %v2573, %v2573
  %v2861 = vmul.f32 %v2575, %v2575
  %v2862 = vmul.f32 %v2578, %v2578
  %v2863 = vmul.f32 %v2580, %v2580
  %v2864 = vmul.f32 %v2583, %v2583
  %v2865 = vmul.f32 %v2585, %v2585
  %v2866 = vmul.f32 %v2588, %v2588
  %v2867 = vmul.f32 %v2590, %v2590
  %v2868 = vmul.f32 %v2593, %v2593
  %v2869 = vmul.f32 %v2595, %v2595
  %v2870 = vmul.f32 %v2598, %v2598
  %v2871 = vmul.f32 %v2600, %v2600
  %v2872 = vmul.f32 %v2603, %v2603
  %v2873 = vmul.f32 %v2605, %v2605
  %v2874 = vmul.f32 %v2608, %v2608
  %v2875 = vmul.f32 %v2610, %v2610
  %v2876 = vmul.f32 %v2613, %v2613
  %v2877 = vmul.f32 %v2615, %v2615
  %v2878 = vmul.f32 %v2618, %v2618
  %v2879 = vmul.f32 %v2620, %v2620
  %v2880 = vmul.f32 %v2623, %v2623
  %v2881 = vmul.f32 %v2625, %v2625
  %v2882 = vmul.f32 %v2628, %v2628
  %v2883 = vmul.f32 %v2630, %v2630
  %v2884 = vmul.f32 %v2633, %v2633
  %v2885 = vmul.f32 %v2635, %v2635
  %v2886 = vmul.f32 %v2638, %v2638
  %v2887 = vmul.f32 %v2640, %v2640
  %v2888 = vmul.f32 %v2643, %v2643
  %v2889 = vmul.f32 %v2645, %v2645
  %v2890 = vmul.f32 %v2648, %v2648
  %v2891 = vmul.f32 %v2650, %v2650
  %v2892 = vmul.f32 %v2653, %v2653
  %v2893 = vmul.f32 %v2655, %v2655
  %v2894 = vmul.f32 %v2658, %v2658
  %v2895 = vmul.f32 %v2660, %v2660
  %v2896 = vmul.f32 %v2663, %v2663
  %v2897 = vmul.f32 %v2665, %v2665
  %v2898 = vmul.f32 %v2668, %v2668
  %v2899 = vmul.f32 %v2670, %v2670
  %v2900 = vmul.f32 %v2673, %v2673
  %v2901 = vmul.f32 %v2675, %v2675
  %v2902 = vmul.f32 %v2678, %v2678
  %v2903 = vmul.f32 %v2680, %v2680
  %v2904 = vmul.f32 %v2683, %v2683
  %v2905 = vmul.f32 %v2685, %v2685
  %v2906 = vmul.f32 %v2688, %v2688
  %v2907 = vmul.f32 %v2690, %v2690
  %v2908 = vmul.f32 %v2693, %v2693
  %v2909 = vmul.f32 %v2695, %v2695
  %v2910 = vmul.f32 %v2698, %v2698
  %v2911 = vmul.f32 %v2700, %v2700
  %v2912 = vmul.f32 %v2703, %v2703
  %v2913 = vmul.f32 %v2705, %v2705
  %v2914 = vmul.f32 %v2708, %v2708
  %v2915 = vmul.f32 %v2710, %v2710
  %v2916 = vmul.f32 %v2713, %v2713
  %v2917 = vmul.f32 %v2715, %v2715
  %v2918 = vmul.f32 %v2718, %v2718
  %v2919 = vmul.f32 %v2720, %v2720
  %v2920 = vsel %vm1780, %v2856, 0.0
  %v2921 = vsel %vm1780, %v2857, 0.0
  %v2922 = vadd.f32 %v2920, %v2921
  %v2923 = vsel %vm1780, %v2858, 0.0
  %v2924 = vadd.f32 %v2922, %v2923
  %v2925 = vsel %vm1780, %v2859, 0.0
  %v2926 = vadd.f32 %v2924, %v2925
  %v2927 = vsel %vm1780, %v2860, 0.0
  %v2928 = vadd.f32 %v2926, %v2927
  %v2929 = vsel %vm1780, %v2861, 0.0
  %v2930 = vadd.f32 %v2928, %v2929
  %v2931 = vsel %vm1780, %v2862, 0.0
  %v2932 = vadd.f32 %v2930, %v2931
  %v2933 = vsel %vm1780, %v2863, 0.0
  %v2934 = vadd.f32 %v2932, %v2933
  %v2935 = vsel %vm1780, %v2864, 0.0
  %v2936 = vadd.f32 %v2934, %v2935
  %v2937 = vsel %vm1780, %v2865, 0.0
  %v2938 = vadd.f32 %v2936, %v2937
  %v2939 = vsel %vm1780, %v2866, 0.0
  %v2940 = vadd.f32 %v2938, %v2939
  %v2941 = vsel %vm1780, %v2867, 0.0
  %v2942 = vadd.f32 %v2940, %v2941
  %v2943 = vsel %vm1780, %v2868, 0.0
  %v2944 = vadd.f32 %v2942, %v2943
  %v2945 = vsel %vm1780, %v2869, 0.0
  %v2946 = vadd.f32 %v2944, %v2945
  %v2947 = vsel %vm1780, %v2870, 0.0
  %v2948 = vadd.f32 %v2946, %v2947
  %v2949 = vsel %vm1780, %v2871, 0.0
  %v2950 = vadd.f32 %v2948, %v2949
  %v2951 = vsel %vm1780, %v2872, 0.0
  %v2952 = vadd.f32 %v2950, %v2951
  %v2953 = vsel %vm1780, %v2873, 0.0
  %v2954 = vadd.f32 %v2952, %v2953
  %v2955 = vsel %vm1780, %v2874, 0.0
  %v2956 = vadd.f32 %v2954, %v2955
  %v2957 = vsel %vm1780, %v2875, 0.0
  %v2958 = vadd.f32 %v2956, %v2957
  %v2959 = vsel %vm1780, %v2876, 0.0
  %v2960 = vadd.f32 %v2958, %v2959
  %v2961 = vsel %vm1780, %v2877, 0.0
  %v2962 = vadd.f32 %v2960, %v2961
  %v2963 = vsel %vm1780, %v2878, 0.0
  %v2964 = vadd.f32 %v2962, %v2963
  %v2965 = vsel %vm1780, %v2879, 0.0
  %v2966 = vadd.f32 %v2964, %v2965
  %v2967 = vsel %vm1780, %v2880, 0.0
  %v2968 = vadd.f32 %v2966, %v2967
  %v2969 = vsel %vm1780, %v2881, 0.0
  %v2970 = vadd.f32 %v2968, %v2969
  %v2971 = vsel %vm1780, %v2882, 0.0
  %v2972 = vadd.f32 %v2970, %v2971
  %v2973 = vsel %vm1780, %v2883, 0.0
  %v2974 = vadd.f32 %v2972, %v2973
  %v2975 = vsel %vm1780, %v2884, 0.0
  %v2976 = vadd.f32 %v2974, %v2975
  %v2977 = vsel %vm1780, %v2885, 0.0
  %v2978 = vadd.f32 %v2976, %v2977
  %v2979 = vsel %vm1780, %v2886, 0.0
  %v2980 = vadd.f32 %v2978, %v2979
  %v2981 = vsel %vm1780, %v2887, 0.0
  %v2982 = vadd.f32 %v2980, %v2981
  %v2983 = vsel %vm1780, %v2888, 0.0
  %v2984 = vadd.f32 %v2982, %v2983
  %v2985 = vsel %vm1780, %v2889, 0.0
  %v2986 = vadd.f32 %v2984, %v2985
  %v2987 = vsel %vm1780, %v2890, 0.0
  %v2988 = vadd.f32 %v2986, %v2987
  %v2989 = vsel %vm1780, %v2891, 0.0
  %v2990 = vadd.f32 %v2988, %v2989
  %v2991 = vsel %vm1780, %v2892, 0.0
  %v2992 = vadd.f32 %v2990, %v2991
  %v2993 = vsel %vm1780, %v2893, 0.0
  %v2994 = vadd.f32 %v2992, %v2993
  %v2995 = vsel %vm1780, %v2894, 0.0
  %v2996 = vadd.f32 %v2994, %v2995
  %v2997 = vsel %vm1780, %v2895, 0.0
  %v2998 = vadd.f32 %v2996, %v2997
  %v2999 = vsel %vm1780, %v2896, 0.0
  %v3000 = vadd.f32 %v2998, %v2999
  %v3001 = vsel %vm1780, %v2897, 0.0
  %v3002 = vadd.f32 %v3000, %v3001
  %v3003 = vsel %vm1780, %v2898, 0.0
  %v3004 = vadd.f32 %v3002, %v3003
  %v3005 = vsel %vm1780, %v2899, 0.0
  %v3006 = vadd.f32 %v3004, %v3005
  %v3007 = vsel %vm1780, %v2900, 0.0
  %v3008 = vadd.f32 %v3006, %v3007
  %v3009 = vsel %vm1780, %v2901, 0.0
  %v3010 = vadd.f32 %v3008, %v3009
  %v3011 = vsel %vm1780, %v2902, 0.0
  %v3012 = vadd.f32 %v3010, %v3011
  %v3013 = vsel %vm1780, %v2903, 0.0
  %v3014 = vadd.f32 %v3012, %v3013
  %v3015 = vsel %vm1780, %v2904, 0.0
  %v3016 = vadd.f32 %v3014, %v3015
  %v3017 = vsel %vm1780, %v2905, 0.0
  %v3018 = vadd.f32 %v3016, %v3017
  %v3019 = vsel %vm1780, %v2906, 0.0
  %v3020 = vadd.f32 %v3018, %v3019
  %v3021 = vsel %vm1780, %v2907, 0.0
  %v3022 = vadd.f32 %v3020, %v3021
  %v3023 = vsel %vm1780, %v2908, 0.0
  %v3024 = vadd.f32 %v3022, %v3023
  %v3025 = vsel %vm1780, %v2909, 0.0
  %v3026 = vadd.f32 %v3024, %v3025
  %v3027 = vsel %vm1780, %v2910, 0.0
  %v3028 = vadd.f32 %v3026, %v3027
  %v3029 = vsel %vm1780, %v2911, 0.0
  %v3030 = vadd.f32 %v3028, %v3029
  %v3031 = vsel %vm1780, %v2912, 0.0
  %v3032 = vadd.f32 %v3030, %v3031
  %v3033 = vsel %vm1780, %v2913, 0.0
  %v3034 = vadd.f32 %v3032, %v3033
  %v3035 = vsel %vm1780, %v2914, 0.0
  %v3036 = vadd.f32 %v3034, %v3035
  %v3037 = vsel %vm1780, %v2915, 0.0
  %v3038 = vadd.f32 %v3036, %v3037
  %v3039 = vsel %vm1780, %v2916, 0.0
  %v3040 = vadd.f32 %v3038, %v3039
  %v3041 = vsel %vm1780, %v2917, 0.0
  %v3042 = vadd.f32 %v3040, %v3041
  %v3043 = vsel %vm1780, %v2918, 0.0
  %v3044 = vadd.f32 %v3042, %v3043
  %v3045 = vsel %vm1780, %v2919, 0.0
  %v3046 = vadd.f32 %v3044, %v3045
  %v3047 = vrot.slane %v3046, 4
  %v3048 = vadd.f32 %v3046, %v3047
  %v3049 = vrot.slane %v3048, 2
  %v3050 = vadd.f32 %v3048, %v3049
  %v3051 = vrot.slane %v3050, 1
  %v3052 = vadd.f32 %v3050, %v3051
  %3053 = vst.msk [vmem:[%s7] sm:$0xff] %vm1780, %v3052
  %3054 = vst.msk [vmem:[%s5] sm:$0xff] %vm1780, %v2563
  %3055 = vst.msk [vmem:[%s5 + $0x8] sm:$0xff] %vm1780, %v2565
  %3056 = vst.msk [vmem:[%s5 + $0x10] sm:$0xff] %vm1780, %v2568
  %3057 = vst.msk [vmem:[%s5 + $0x18] sm:$0xff] %vm1780, %v2570
  %3058 = vst.msk [vmem:[%s5 + $0x20] sm:$0xff] %vm1780, %v2573
  %3059 = vst.msk [vmem:[%s5 + $0x28] sm:$0xff] %vm1780, %v2575
  %3060 = vst.msk [vmem:[%s5 + $0x30] sm:$0xff] %vm1780, %v2578
  %3061 = vst.msk [vmem:[%s5 + $0x38] sm:$0xff] %vm1780, %v2580
  %3062 = vst.msk [vmem:[%s5 + $0x40] sm:$0xff] %vm1780, %v2583
  %3063 = vst.msk [vmem:[%s5 + $0x48] sm:$0xff] %vm1780, %v2585
  %3064 = vst.msk [vmem:[%s5 + $0x50] sm:$0xff] %vm1780, %v2588
  %3065 = vst.msk [vmem:[%s5 + $0x58] sm:$0xff] %vm1780, %v2590
  %3066 = vst.msk [vmem:[%s5 + $0x60] sm:$0xff] %vm1780, %v2593
  %3067 = vst.msk [vmem:[%s5 + $0x68] sm:$0xff] %vm1780, %v2595
  %3068 = vst.msk [vmem:[%s5 + $0x70] sm:$0xff] %vm1780, %v2598
  %3069 = vst.msk [vmem:[%s5 + $0x78] sm:$0xff] %vm1780, %v2600
  %3070 = vst.msk [vmem:[%s5 + $0x80] sm:$0xff] %vm1780, %v2603
  %3071 = vst.msk [vmem:[%s5 + $0x88] sm:$0xff] %vm1780, %v2605
  %3072 = vst.msk [vmem:[%s5 + $0x90] sm:$0xff] %vm1780, %v2608
  %3073 = vst.msk [vmem:[%s5 + $0x98] sm:$0xff] %vm1780, %v2610
  %3074 = vst.msk [vmem:[%s5 + $0xa0] sm:$0xff] %vm1780, %v2613
  %3075 = vst.msk [vmem:[%s5 + $0xa8] sm:$0xff] %vm1780, %v2615
  %3076 = vst.msk [vmem:[%s5 + $0xb0] sm:$0xff] %vm1780, %v2618
  %3077 = vst.msk [vmem:[%s5 + $0xb8] sm:$0xff] %vm1780, %v2620
  %3078 = vst.msk [vmem:[%s5 + $0xc0] sm:$0xff] %vm1780, %v2623
  %3079 = vst.msk [vmem:[%s5 + $0xc8] sm:$0xff] %vm1780, %v2625
  %3080 = vst.msk [vmem:[%s5 + $0xd0] sm:$0xff] %vm1780, %v2628
  %3081 = vst.msk [vmem:[%s5 + $0xd8] sm:$0xff] %vm1780, %v2630
  %3082 = vst.msk [vmem:[%s5 + $0xe0] sm:$0xff] %vm1780, %v2633
  %3083 = vst.msk [vmem:[%s5 + $0xe8] sm:$0xff] %vm1780, %v2635
  %3084 = vst.msk [vmem:[%s5 + $0xf0] sm:$0xff] %vm1780, %v2638
  %3085 = vst.msk [vmem:[%s5 + $0xf8] sm:$0xff] %vm1780, %v2640
  %3086 = vst.msk [vmem:[%s5 + $0x100] sm:$0xff] %vm1780, %v2643
  %3087 = vst.msk [vmem:[%s5 + $0x108] sm:$0xff] %vm1780, %v2645
  %3088 = vst.msk [vmem:[%s5 + $0x110] sm:$0xff] %vm1780, %v2648
  %3089 = vst.msk [vmem:[%s5 + $0x118] sm:$0xff] %vm1780, %v2650
  %3090 = vst.msk [vmem:[%s5 + $0x120] sm:$0xff] %vm1780, %v2653
  %3091 = vst.msk [vmem:[%s5 + $0x128] sm:$0xff] %vm1780, %v2655
  %3092 = vst.msk [vmem:[%s5 + $0x130] sm:$0xff] %vm1780, %v2658
  %3093 = vst.msk [vmem:[%s5 + $0x138] sm:$0xff] %vm1780, %v2660
  %3094 = vst.msk [vmem:[%s5 + $0x140] sm:$0xff] %vm1780, %v2663
  %3095 = vst.msk [vmem:[%s5 + $0x148] sm:$0xff] %vm1780, %v2665
  %3096 = vst.msk [vmem:[%s5 + $0x150] sm:$0xff] %vm1780, %v2668
  %3097 = vst.msk [vmem:[%s5 + $0x158] sm:$0xff] %vm1780, %v2670
  %3098 = vst.msk [vmem:[%s5 + $0x160] sm:$0xff] %vm1780, %v2673
  %3099 = vst.msk [vmem:[%s5 + $0x168] sm:$0xff] %vm1780, %v2675
  %3100 = vst.msk [vmem:[%s5 + $0x170] sm:$0xff] %vm1780, %v2678
  %3101 = vst.msk [vmem:[%s5 + $0x178] sm:$0xff] %vm1780, %v2680
  %3102 = vst.msk [vmem:[%s5 + $0x180] sm:$0xff] %vm1780, %v2683
  %3103 = vst.msk [vmem:[%s5 + $0x188] sm:$0xff] %vm1780, %v2685
  %3104 = vst.msk [vmem:[%s5 + $0x190] sm:$0xff] %vm1780, %v2688
  %3105 = vst.msk [vmem:[%s5 + $0x198] sm:$0xff] %vm1780, %v2690
  %3106 = vst.msk [vmem:[%s5 + $0x1a0] sm:$0xff] %vm1780, %v2693
  %3107 = vst.msk [vmem:[%s5 + $0x1a8] sm:$0xff] %vm1780, %v2695
  %3108 = vst.msk [vmem:[%s5 + $0x1b0] sm:$0xff] %vm1780, %v2698
  %3109 = vst.msk [vmem:[%s5 + $0x1b8] sm:$0xff] %vm1780, %v2700
  %3110 = vst.msk [vmem:[%s5 + $0x1c0] sm:$0xff] %vm1780, %v2703
  %3111 = vst.msk [vmem:[%s5 + $0x1c8] sm:$0xff] %vm1780, %v2705
  %3112 = vst.msk [vmem:[%s5 + $0x1d0] sm:$0xff] %vm1780, %v2708
  %3113 = vst.msk [vmem:[%s5 + $0x1d8] sm:$0xff] %vm1780, %v2710
  %3114 = vst.msk [vmem:[%s5 + $0x1e0] sm:$0xff] %vm1780, %v2713
  %3115 = vst.msk [vmem:[%s5 + $0x1e8] sm:$0xff] %vm1780, %v2715
  %3116 = vst.msk [vmem:[%s5 + $0x1f0] sm:$0xff] %vm1780, %v2718
  %3117 = vst.msk [vmem:[%s5 + $0x1f8] sm:$0xff] %vm1780, %v2720
  // Predicated region
  $region22: #{_lambda_.10} parent=0 // pred_check
    _
  $region23: #{_lambda_.10} parent=0 // pred_check_branch
    %3119 = sbr.rel (0) target = $region25
  $region24: #{_lambda_.10} parent=0 // pred_region
    _
  $region25: #{_lambda_.10} parent=0 // pred_fallthru
    _
  // Predicated region
  $region26: #{_lambda_.10} parent=0 // pred_check
    _
  $region27: #{_lambda_.10} parent=0 // pred_check_branch
    %3121 = sbr.rel (0) target = $region29
  $region28: #{_lambda_.10} parent=0 // pred_region
    _
  $region29: #{_lambda_.10} parent=0 // pred_fallthru
    _
  // Predicated region
  $region30: #{_lambda_.10} parent=0 // pred_check
    _
  $region31: #{_lambda_.10} parent=0 // pred_check_branch
    %3123 = sbr.rel (0) target = $region33
  $region32: #{_lambda_.10} parent=0 // pred_region
    _
  $region33: #{_lambda_.10} parent=0 // pred_fallthru
    _
  // Predicated region
  $region34: #{_lambda_.10} parent=0 // pred_check
    _
  $region35: #{_lambda_.10} parent=0 // pred_check_branch
    %3125 = sbr.rel (0) target = $region37
  $region36: #{_lambda_.10} parent=0 // pred_region
    _
  $region37: #{_lambda_.10} parent=0 // pred_fallthru
    _
  // Predicated region
  $region38: #{_lambda_.10} parent=0 // pred_check
    _
  $region39: #{_lambda_.10} parent=0 // pred_check_branch
    %3127 = sbr.rel (0) target = $region41
  $region40: #{_lambda_.10} parent=0 // pred_region
    _
  $region41: #{_lambda_.10} parent=0 // pred_fallthru
    _
  // Predicated region
  $region42: #{_lambda_.10} parent=0 // pred_check
    _
  $region43: #{_lambda_.10} parent=0 // pred_check_branch
    %3129 = sbr.rel (0) target = $region45
  $region44: #{_lambda_.10} parent=0 // pred_region
    _
  $region45: #{_lambda_.10} parent=0 // pred_fallthru
    _

// kernel: _lambda_.15
$region0: #{_lambda_.15}
  #allocation0 [shape = 'u32[]', space=smem, size = 0x4, offset = 0x4, fixed_abs, tag = 'smem constant byte address 0x4 - core index']
  #allocation1 [shape = 'u32[72,128]{1,0:T(1,128)}', space=vmem, size = 0x9000, scoped, tag = 'internal scratch']
  %s0 = inlined_call_operand.vmem [shape: f32[128,32], index: 0, kind: input, shape index: {}]
  %s1 = inlined_call_operand.vmem [shape: bf16[32,256], index: 1, kind: input, shape index: {}]
  %s2 = inlined_call_operand.vmem [shape: f32[1,256], index: 2, kind: input, shape index: {}]
  %s3 = inlined_call_operand.vmem [shape: f32[128,256], index: 3, kind: output, shape index: {0}]
  %s4 = inlined_call_operand.vmem [shape: f32[8,256], index: 4, kind: output, shape index: {1}]
  %s5 = inlined_call_operand.vmem [shape: f32[8,256], index: 5, kind: output, shape index: {2}]
  %6 = xla_tuple %s3, %s4, %s5
  %s7 = sld [smem:[#allocation0]]
  $region38: #{_lambda_.15} parent=0
    _
  %s9 = ssub.s32 1, %s7
  %s10 = scalar_select 0, %s9, %s7
  // Predicated region
  $region2: #{_lambda_.15} parent=0 // pred_check
    _
  $region3: #{_lambda_.15} parent=0 // pred_check_branch
    %12 = sbr.rel (0) target = $region5
  $region4: #{_lambda_.15} parent=0 // pred_region
    _
  $region5: #{_lambda_.15} parent=0 // pred_fallthru
    _
  // Predicated region
  $region6: #{_lambda_.15} parent=0 // pred_check
    _
  $region7: #{_lambda_.15} parent=0 // pred_check_branch
    %14 = sbr.rel (0) target = $region9
  $region8: #{_lambda_.15} parent=0 // pred_region
    _
  $region9: #{_lambda_.15} parent=0 // pred_fallthru
    _
  // Predicated region
  $region10: #{_lambda_.15} parent=0 // pred_check
    _
  $region11: #{_lambda_.15} parent=0 // pred_check_branch
    %16 = sbr.rel (0) target = $region13
  $region12: #{_lambda_.15} parent=0 // pred_region
    _
  $region13: #{_lambda_.15} parent=0 // pred_fallthru
    _
  %v18 = vld [vmem:[%s0] sm:$0xff]
  %v19 = vld [vmem:[%s0 + $0x8] sm:$0xff]
  %v20 = vld [vmem:[%s0 + $0x10] sm:$0xff]
  %v21 = vld [vmem:[%s0 + $0x18] sm:$0xff]
  %v22 = vld [vmem:[%s0 + $0x20] sm:$0xff]
  %v23 = vld [vmem:[%s0 + $0x28] sm:$0xff]
  %v24 = vld [vmem:[%s0 + $0x30] sm:$0xff]
  %v25 = vld [vmem:[%s0 + $0x38] sm:$0xff]
  %v26 = vld [vmem:[%s0 + $0x40] sm:$0xff]
  %v27 = vld [vmem:[%s0 + $0x48] sm:$0xff]
  %v28 = vld [vmem:[%s0 + $0x50] sm:$0xff]
  %v29 = vld [vmem:[%s0 + $0x58] sm:$0xff]
  %v30 = vld [vmem:[%s0 + $0x60] sm:$0xff]
  %v31 = vld [vmem:[%s0 + $0x68] sm:$0xff]
  %v32 = vld [vmem:[%s0 + $0x70] sm:$0xff]
  %v33 = vld [vmem:[%s0 + $0x78] sm:$0xff]
  %v34 = vpack.c.bf16 %v19, %v18
  %v35 = vpack.c.bf16 %v21, %v20
  %v36 = vpack.c.bf16 %v23, %v22
  %v37 = vpack.c.bf16 %v25, %v24
  %v38 = vpack.c.bf16 %v27, %v26
  %v39 = vpack.c.bf16 %v29, %v28
  %v40 = vpack.c.bf16 %v31, %v30
  %v41 = vpack.c.bf16 %v33, %v32
  %v42 = vld [vmem:[%s1] sm:$0xff]
  %v43 = vld [vmem:[%s1 + $0x8] sm:$0xff]
  %v44 = vld [vmem:[%s1 + $0x10] sm:$0xff]
  %v45 = vld [vmem:[%s1 + $0x18] sm:$0xff]
  %v46 = vld [vmem:[%s2] sm:$0x3]
  %v48 = vperm.slane %v46, 0
  %v49 = vperm.slane %v46, 1
  %v56 = vunpack.c.l.b16 %v42
  %v57 = vunpack.c.h.b16 %v42
  %v58 = vunpack.c.l.b16 %v43
  %v59 = vunpack.c.h.b16 %v43
  %v60 = vunpack.c.l.b16 %v44
  %v61 = vunpack.c.h.b16 %v44
  %v62 = vunpack.c.l.b16 %v45
  %v63 = vunpack.c.h.b16 %v45
  %v64 = vpack.c.b16 %v58, %v56
  %v65 = vpack.c.b16 %v59, %v57
  %v66 = vpack.c.b16 %v62, %v60
  %v67 = vpack.c.b16 %v63, %v61
  %vm72 = vcmask 261120
  %v74 = vsel %vm72, %v34, 0
  %v77 = vsel %vm72, %v35, 0
  %v80 = vsel %vm72, %v36, 0
  %v83 = vsel %vm72, %v37, 0
  %v86 = vsel %vm72, %v38, 0
  %v89 = vsel %vm72, %v39, 0
  %v92 = vsel %vm72, %v40, 0
  %v95 = vsel %vm72, %v41, 0
  %97 = vmatpush.bf16.msra.mxu0 0
  %98 = vmatpush.bf16.msra.mxu0 0
  %99 = vmatpush.bf16.msra.mxu0 0
  %100 = vmatpush.bf16.msra.mxu0 0
  %101 = vmatpush.bf16.msra.mxu0 0
  %102 = vmatpush.bf16.msra.mxu0 0
  %103 = vmatpush.bf16.msra.mxu0 %v66
  %104 = vmatpush.bf16.msra.mxu0 %v64
  %105 = vmatmul.bf16.gmra.mxu0 %v74
  %v106 = vpop.f32.mrf.mxu0
  %v107 = vadd.f32 %v48, %v106
  %v108 = vpop.f32.mrf.mxu0
  %v109 = vadd.f32 %v48, %v108
  %110 = vmatmul.bf16.gmra.mxu0 %v77
  %v111 = vpop.f32.mrf.mxu0
  %v112 = vadd.f32 %v48, %v111
  %v113 = vpop.f32.mrf.mxu0
  %v114 = vadd.f32 %v48, %v113
  %115 = vmatmul.bf16.gmra.mxu0 %v80
  %v116 = vpop.f32.mrf.mxu0
  %v117 = vadd.f32 %v48, %v116
  %v118 = vpop.f32.mrf.mxu0
  %v119 = vadd.f32 %v48, %v118
  %120 = vmatmul.bf16.gmra.mxu0 %v83
  %v121 = vpop.f32.mrf.mxu0
  %v122 = vadd.f32 %v48, %v121
  %v123 = vpop.f32.mrf.mxu0
  %v124 = vadd.f32 %v48, %v123
  %125 = vmatmul.bf16.gmra.mxu0 %v86
  %v126 = vpop.f32.mrf.mxu0
  %v127 = vadd.f32 %v48, %v126
  %v128 = vpop.f32.mrf.mxu0
  %v129 = vadd.f32 %v48, %v128
  %130 = vmatmul.bf16.gmra.mxu0 %v89
  %v131 = vpop.f32.mrf.mxu0
  %v132 = vadd.f32 %v48, %v131
  %v133 = vpop.f32.mrf.mxu0
  %v134 = vadd.f32 %v48, %v133
  %135 = vmatmul.bf16.gmra.mxu0 %v92
  %v136 = vpop.f32.mrf.mxu0
  %v137 = vadd.f32 %v48, %v136
  %v138 = vpop.f32.mrf.mxu0
  %v139 = vadd.f32 %v48, %v138
  %140 = vmatmul.bf16.gmra.mxu0 %v95
  %v141 = vpop.f32.mrf.mxu0
  %v142 = vadd.f32 %v48, %v141
  %v143 = vpop.f32.mrf.mxu0
  %v144 = vadd.f32 %v48, %v143
  %145 = vdwg.mxu0
  %146 = vmatpush.bf16.msra.mxu0 0
  %147 = vmatpush.bf16.msra.mxu0 0
  %148 = vmatpush.bf16.msra.mxu0 0
  %149 = vmatpush.bf16.msra.mxu0 0
  %150 = vmatpush.bf16.msra.mxu0 0
  %151 = vmatpush.bf16.msra.mxu0 0
  %152 = vmatpush.bf16.msra.mxu0 %v67
  %153 = vmatpush.bf16.msra.mxu0 %v65
  %154 = vmatmul.bf16.gmra.mxu0 %v74
  %v155 = vpop.f32.mrf.mxu0
  %v156 = vadd.f32 %v49, %v155
  %v157 = vpop.f32.mrf.mxu0
  %v158 = vadd.f32 %v49, %v157
  %159 = vmatmul.bf16.gmra.mxu0 %v77
  %v160 = vpop.f32.mrf.mxu0
  %v161 = vadd.f32 %v49, %v160
  %v162 = vpop.f32.mrf.mxu0
  %v163 = vadd.f32 %v49, %v162
  %164 = vmatmul.bf16.gmra.mxu0 %v80
  %v165 = vpop.f32.mrf.mxu0
  %v166 = vadd.f32 %v49, %v165
  %v167 = vpop.f32.mrf.mxu0
  %v168 = vadd.f32 %v49, %v167
  %169 = vmatmul.bf16.gmra.mxu0 %v83
  %v170 = vpop.f32.mrf.mxu0
  %v171 = vadd.f32 %v49, %v170
  %v172 = vpop.f32.mrf.mxu0
  %v173 = vadd.f32 %v49, %v172
  %174 = vmatmul.bf16.gmra.mxu0 %v86
  %v175 = vpop.f32.mrf.mxu0
  %v176 = vadd.f32 %v49, %v175
  %v177 = vpop.f32.mrf.mxu0
  %v178 = vadd.f32 %v49, %v177
  %179 = vmatmul.bf16.gmra.mxu0 %v89
  %v180 = vpop.f32.mrf.mxu0
  %v181 = vadd.f32 %v49, %v180
  %v182 = vpop.f32.mrf.mxu0
  %v183 = vadd.f32 %v49, %v182
  %184 = vmatmul.bf16.gmra.mxu0 %v92
  %v185 = vpop.f32.mrf.mxu0
  %v186 = vadd.f32 %v49, %v185
  %v187 = vpop.f32.mrf.mxu0
  %v188 = vadd.f32 %v49, %v187
  %189 = vmatmul.bf16.gmra.mxu0 %v95
  %v190 = vpop.f32.mrf.mxu0
  %v191 = vadd.f32 %v49, %v190
  %v192 = vpop.f32.mrf.mxu0
  %v193 = vadd.f32 %v49, %v192
  %194 = vdwg.mxu0
  %v195 = vadd.f32 %v107, %v109
  %v196 = vadd.f32 %v195, %v112
  %v197 = vadd.f32 %v196, %v114
  %v198 = vadd.f32 %v197, %v117
  %v199 = vadd.f32 %v198, %v119
  %v200 = vadd.f32 %v199, %v122
  %v201 = vadd.f32 %v200, %v124
  %v202 = vadd.f32 %v201, %v127
  %v203 = vadd.f32 %v202, %v129
  %v204 = vadd.f32 %v203, %v132
  %v205 = vadd.f32 %v204, %v134
  %v206 = vadd.f32 %v205, %v137
  %v207 = vadd.f32 %v206, %v139
  %v208 = vadd.f32 %v207, %v142
  %v209 = vadd.f32 %v208, %v144
  %v210 = vrot.slane %v209, 4
  %v211 = vadd.f32 %v209, %v210
  %v212 = vrot.slane %v211, 2
  %v213 = vadd.f32 %v211, %v212
  %v214 = vrot.slane %v213, 1
  %v215 = vadd.f32 %v213, %v214
  %v216 = vadd.f32 %v156, %v158
  %v217 = vadd.f32 %v216, %v161
  %v218 = vadd.f32 %v217, %v163
  %v219 = vadd.f32 %v218, %v166
  %v220 = vadd.f32 %v219, %v168
  %v221 = vadd.f32 %v220, %v171
  %v222 = vadd.f32 %v221, %v173
  %v223 = vadd.f32 %v222, %v176
  %v224 = vadd.f32 %v223, %v178
  %v225 = vadd.f32 %v224, %v181
  %v226 = vadd.f32 %v225, %v183
  %v227 = vadd.f32 %v226, %v186
  %v228 = vadd.f32 %v227, %v188
  %v229 = vadd.f32 %v228, %v191
  %v230 = vadd.f32 %v229, %v193
  %v231 = vrot.slane %v230, 4
  %v232 = vadd.f32 %v230, %v231
  %v233 = vrot.slane %v232, 2
  %v234 = vadd.f32 %v232, %v233
  %v235 = vrot.slane %v234, 1
  %v236 = vadd.f32 %v234, %v235
  %237 = vst [vmem:[%s4] sm:$0xff] %v215
  %238 = vst [vmem:[%s4 + $0x8] sm:$0xff] %v236
  %v239 = vmul.f32 %v107, %v107
  %v240 = vmul.f32 %v156, %v156
  %v241 = vmul.f32 %v109, %v109
  %v242 = vmul.f32 %v158, %v158
  %v243 = vmul.f32 %v112, %v112
  %v244 = vmul.f32 %v161, %v161
  %v245 = vmul.f32 %v114, %v114
  %v246 = vmul.f32 %v163, %v163
  %v247 = vmul.f32 %v117, %v117
  %v248 = vmul.f32 %v166, %v166
  %v249 = vmul.f32 %v119, %v119
  %v250 = vmul.f32 %v168, %v168
  %v251 = vmul.f32 %v122, %v122
  %v252 = vmul.f32 %v171, %v171
  %v253 = vmul.f32 %v124, %v124
  %v254 = vmul.f32 %v173, %v173
  %v255 = vmul.f32 %v127, %v127
  %v256 = vmul.f32 %v176, %v176
  %v257 = vmul.f32 %v129, %v129
  %v258 = vmul.f32 %v178, %v178
  %v259 = vmul.f32 %v132, %v132
  %v260 = vmul.f32 %v181, %v181
  %v261 = vmul.f32 %v134, %v134
  %v262 = vmul.f32 %v183, %v183
  %v263 = vmul.f32 %v137, %v137
  %v264 = vmul.f32 %v186, %v186
  %v265 = vmul.f32 %v139, %v139
  %v266 = vmul.f32 %v188, %v188
  %v267 = vmul.f32 %v142, %v142
  %v268 = vmul.f32 %v191, %v191
  %v269 = vmul.f32 %v144, %v144
  %v270 = vmul.f32 %v193, %v193
  %v271 = vadd.f32 %v239, %v241
  %v272 = vadd.f32 %v271, %v243
  %v273 = vadd.f32 %v272, %v245
  %v274 = vadd.f32 %v273, %v247
  %v275 = vadd.f32 %v274, %v249
  %v276 = vadd.f32 %v275, %v251
  %v277 = vadd.f32 %v276, %v253
  %v278 = vadd.f32 %v277, %v255
  %v279 = vadd.f32 %v278, %v257
  %v280 = vadd.f32 %v279, %v259
  %v281 = vadd.f32 %v280, %v261
  %v282 = vadd.f32 %v281, %v263
  %v283 = vadd.f32 %v282, %v265
  %v284 = vadd.f32 %v283, %v267
  %v285 = vadd.f32 %v284, %v269
  %v286 = vrot.slane %v285, 4
  %v287 = vadd.f32 %v285, %v286
  %v288 = vrot.slane %v287, 2
  %v289 = vadd.f32 %v287, %v288
  %v290 = vrot.slane %v289, 1
  %v291 = vadd.f32 %v289, %v290
  %v292 = vadd.f32 %v240, %v242
  %v293 = vadd.f32 %v292, %v244
  %v294 = vadd.f32 %v293, %v246
  %v295 = vadd.f32 %v294, %v248
  %v296 = vadd.f32 %v295, %v250
  %v297 = vadd.f32 %v296, %v252
  %v298 = vadd.f32 %v297, %v254
  %v299 = vadd.f32 %v298, %v256
  %v300 = vadd.f32 %v299, %v258
  %v301 = vadd.f32 %v300, %v260
  %v302 = vadd.f32 %v301, %v262
  %v303 = vadd.f32 %v302, %v264
  %v304 = vadd.f32 %v303, %v266
  %v305 = vadd.f32 %v304, %v268
  %v306 = vadd.f32 %v305, %v270
  %v307 = vrot.slane %v306, 4
  %v308 = vadd.f32 %v306, %v307
  %v309 = vrot.slane %v308, 2
  %v310 = vadd.f32 %v308, %v309
  %v311 = vrot.slane %v310, 1
  %v312 = vadd.f32 %v310, %v311
  %313 = vst [vmem:[%s5] sm:$0xff] %v291
  %314 = vst [vmem:[%s5 + $0x8] sm:$0xff] %v312
  %315 = vst [vmem:[%s3] sm:$0xff] %v107
  %316 = vst [vmem:[%s3 + $0x8] sm:$0xff] %v156
  %317 = vst [vmem:[%s3 + $0x10] sm:$0xff] %v109
  %318 = vst [vmem:[%s3 + $0x18] sm:$0xff] %v158
  %319 = vst [vmem:[%s3 + $0x20] sm:$0xff] %v112
  %320 = vst [vmem:[%s3 + $0x28] sm:$0xff] %v161
  %321 = vst [vmem:[%s3 + $0x30] sm:$0xff] %v114
  %322 = vst [vmem:[%s3 + $0x38] sm:$0xff] %v163
  %323 = vst [vmem:[%s3 + $0x40] sm:$0xff] %v117
  %324 = vst [vmem:[%s3 + $0x48] sm:$0xff] %v166
  %325 = vst [vmem:[%s3 + $0x50] sm:$0xff] %v119
  %326 = vst [vmem:[%s3 + $0x58] sm:$0xff] %v168
  %327 = vst [vmem:[%s3 + $0x60] sm:$0xff] %v122
  %328 = vst [vmem:[%s3 + $0x68] sm:$0xff] %v171
  %329 = vst [vmem:[%s3 + $0x70] sm:$0xff] %v124
  %330 = vst [vmem:[%s3 + $0x78] sm:$0xff] %v173
  %331 = vst [vmem:[%s3 + $0x80] sm:$0xff] %v127
  %332 = vst [vmem:[%s3 + $0x88] sm:$0xff] %v176
  %333 = vst [vmem:[%s3 + $0x90] sm:$0xff] %v129
  %334 = vst [vmem:[%s3 + $0x98] sm:$0xff] %v178
  %335 = vst [vmem:[%s3 + $0xa0] sm:$0xff] %v132
  %336 = vst [vmem:[%s3 + $0xa8] sm:$0xff] %v181
  %337 = vst [vmem:[%s3 + $0xb0] sm:$0xff] %v134
  %338 = vst [vmem:[%s3 + $0xb8] sm:$0xff] %v183
  %339 = vst [vmem:[%s3 + $0xc0] sm:$0xff] %v137
  %340 = vst [vmem:[%s3 + $0xc8] sm:$0xff] %v186
  %341 = vst [vmem:[%s3 + $0xd0] sm:$0xff] %v139
  %342 = vst [vmem:[%s3 + $0xd8] sm:$0xff] %v188
  %343 = vst [vmem:[%s3 + $0xe0] sm:$0xff] %v142
  %344 = vst [vmem:[%s3 + $0xe8] sm:$0xff] %v191
  %345 = vst [vmem:[%s3 + $0xf0] sm:$0xff] %v144
  %346 = vst [vmem:[%s3 + $0xf8] sm:$0xff] %v193
  // Predicated region
  $region14: #{_lambda_.15} parent=0 // pred_check
    _
  $region15: #{_lambda_.15} parent=0 // pred_check_branch
    %348 = sbr.rel (0) target = $region17
  $region16: #{_lambda_.15} parent=0 // pred_region
    _
  $region17: #{_lambda_.15} parent=0 // pred_fallthru
    _
  // Predicated region
  $region18: #{_lambda_.15} parent=0 // pred_check
    _
  $region19: #{_lambda_.15} parent=0 // pred_check_branch
    %350 = sbr.rel (0) target = $region21
  $region20: #{_lambda_.15} parent=0 // pred_region
    _
  $region21: #{_lambda_.15} parent=0 // pred_fallthru
    _
  // Predicated region
  $region22: #{_lambda_.15} parent=0 // pred_check
    _
  $region23: #{_lambda_.15} parent=0 // pred_check_branch
    %352 = sbr.rel (0) target = $region25
  $region24: #{_lambda_.15} parent=0 // pred_region
    _
  $region25: #{_lambda_.15} parent=0 // pred_fallthru
    _
  // Predicated region
  $region26: #{_lambda_.15} parent=0 // pred_check
    _
  $region27: #{_lambda_.15} parent=0 // pred_check_branch
    %354 = sbr.rel (0) target = $region29
  $region28: #{_lambda_.15} parent=0 // pred_region
    _
  $region29: #{_lambda_.15} parent=0 // pred_fallthru
    _
  // Predicated region
  $region30: #{_lambda_.15} parent=0 // pred_check
    _
  $region31: #{_lambda_.15} parent=0 // pred_check_branch
    %356 = sbr.rel (0) target = $region33
  $region32: #{_lambda_.15} parent=0 // pred_region
    _
  $region33: #{_lambda_.15} parent=0 // pred_fallthru
    _
  // Predicated region
  $region34: #{_lambda_.15} parent=0 // pred_check
    _
  $region35: #{_lambda_.15} parent=0 // pred_check_branch
    %358 = sbr.rel (0) target = $region37
  $region36: #{_lambda_.15} parent=0 // pred_region
    _
  $region37: #{_lambda_.15} parent=0 // pred_fallthru
    _

// kernel: _lambda_.13
$region0: #{_lambda_.13}
  #allocation0 [shape = 'u32[]', space=smem, size = 0x4, offset = 0x4, fixed_abs, tag = 'smem constant byte address 0x4 - core index']
  #allocation1 [shape = 'u32[72,128]{1,0:T(1,128)}', space=vmem, size = 0x9000, scoped, tag = 'internal scratch']
  %s0 = inlined_call_operand.vmem [shape: f32[2,64,32], index: 0, kind: input, shape index: {}]
  %s1 = inlined_call_operand.vmem [shape: f32[1,32], index: 1, kind: input, shape index: {}]
  %s2 = inlined_call_operand.vmem [shape: f32[1,32], index: 2, kind: input, shape index: {}]
  %s3 = inlined_call_operand.vmem [shape: bf16[32,96], index: 3, kind: input, shape index: {}]
  %s4 = inlined_call_operand.vmem [shape: bf16[32,32], index: 4, kind: input, shape index: {}]
  %s5 = inlined_call_operand.vmem [shape: f32[1,32], index: 5, kind: input, shape index: {}]
  %s6 = inlined_call_operand.vmem [shape: f32[1,32], index: 6, kind: input, shape index: {}]
  %s7 = inlined_call_operand.vmem [shape: f32[1,32], index: 7, kind: input, shape index: {}]
  %s8 = inlined_call_operand.vmem [shape: bf16[32,128], index: 8, kind: input, shape index: {}]
  %s9 = inlined_call_operand.vmem [shape: f32[1,128], index: 9, kind: input, shape index: {}]
  %s10 = inlined_call_operand.vmem [shape: bf16[128,32], index: 10, kind: input, shape index: {}]
  %s11 = inlined_call_operand.vmem [shape: f32[1,32], index: 11, kind: input, shape index: {}]
  %s12 = inlined_call_operand.vmem [shape: f32[2,64,32], index: 12, kind: output, shape index: {}]
  %s13 = sld [smem:[#allocation0]]
  $region81: #{_lambda_.13} parent=0
    _
  %s15 = ssub.s32 1, %s13
  %s16 = scalar_select 0, %s15, %s13
  loop: start=0, step=1, limit=4
  $region2: #{_lambda_.13} parent=0 // loop_pre_header
    _
  $region3: #{_lambda_.13} parent=0 // loop_header
    %s18 = sphi 0, %s22
    %p19 = scmp.ge.s32.totalorder %s18, 4
    %s28 = sphi 0, %s30
    %s31 = sphi 0, %s28
    %s32 = sphi 0, %s31
    %s48 = sphi 0, %s32
    %s52 = sphi 0, %s52
    %s54 = sphi 0, %s52
    %s55 = sphi 0, %s54
    %s69 = sphi 0, %s55
    %s73 = sphi 0, %s73
    %s75 = sphi 0, %s73
    %s76 = sphi 0, %s75
    %s90 = sphi 0, %s76
    %s94 = sphi 0, %s94
    %s96 = sphi 0, %s94
    %s97 = sphi 0, %s96
    %s111 = sphi 0, %s97
    %s115 = sphi 0, %s115
    %s117 = sphi 0, %s115
    %s118 = sphi 0, %s117
    %s132 = sphi 0, %s118
    %s136 = sphi 0, %s136
    %s138 = sphi 0, %s136
    %s139 = sphi 0, %s138
    %s153 = sphi 0, %s139
    %s157 = sphi 0, %s157
    %s159 = sphi 0, %s157
    %s160 = sphi 0, %s159
    %s174 = sphi 0, %s160
    %s178 = sphi 0, %s178
    %s180 = sphi 0, %s178
    %s181 = sphi 0, %s180
    %s195 = sphi 0, %s181
    %s199 = sphi 0, %s199
    %s201 = sphi 0, %s199
    %s202 = sphi 0, %s201
    %s216 = sphi 0, %s202
    %s220 = sphi 0, %s220
    %s222 = sphi 0, %s220
    %s223 = sphi 0, %s222
    %s237 = sphi 0, %s223
    %s241 = sphi 0, %s241
    %s243 = sphi 0, %s241
    %s244 = sphi 0, %s243
    %s258 = sphi 0, %s244
    %s262 = sphi 0, %s262
    %s264 = sphi 0, %s262
    %s265 = sphi 0, %s264
    %s279 = sphi 0, %s265
    %s285 = sphi 0, %s287
    %s288 = sphi 0, %s285
    %s289 = sphi 0, %s288
    %s305 = sphi 0, %s289
  $region4: #{_lambda_.13} parent=0 // loop_header_branch
    %21 = sbr.rel (%p19) target = $region8
  $region5: #{_lambda_.13} parent=0 // loop_body
    %s23 = ssub.s32 %s18, 1
    %s24 = ssub.s32 %s18, 2
    %s25 = sadd.s32 %s18, 1
    %s26 = ssub.s32 %s18, %s25
    %p27 = scmp.eq.s32.totalorder %s26, 0
    %s29 = sadd.s32 %s28, 1
    %s30 = scalar_select %p27, %s28, %s29
    %p33 = pneg %p27
    %p34 = scmp.eq.s32.totalorder %s18, 1
    %p35 = por %p33, %p34
    %p36 = scmp.ne.s32.totalorder %s28, %s31
    %p37 = scmp.eq.s32.totalorder %s18, 0
    %p38 = por %p36, %p37
    %p39 = scmp.ne.s32.totalorder %s28, %s31
    %p40 = scmp.eq.s32.totalorder %s23, 1
    %p41 = por %p39, %p40
    %p42 = scmp.ne.s32.totalorder %s31, %s32
    %p43 = scmp.eq.s32.totalorder %s23, 0
    %p44 = por %p42, %p43
    %p45 = scmp.ne.s32.totalorder %s31, %s32
    %p46 = scmp.eq.s32.totalorder %s24, 1
    %p47 = por %p45, %p46
    %p49 = scmp.ne.s32.totalorder %s32, %s48
    %p50 = scmp.eq.s32.totalorder %s24, 0
    %p51 = por %p49, %p50
    %s53 = sadd.s32 %s52, 1
    %p56 = scmp.eq.s32.totalorder %s18, 1
    %p57 = scmp.ne.s32.totalorder %s52, %s54
    %p58 = scmp.eq.s32.totalorder %s18, 0
    %p59 = por %p57, %p58
    %p60 = scmp.ne.s32.totalorder %s52, %s54
    %p61 = scmp.eq.s32.totalorder %s23, 1
    %p62 = por %p60, %p61
    %p63 = scmp.ne.s32.totalorder %s54, %s55
    %p64 = scmp.eq.s32.totalorder %s23, 0
    %p65 = por %p63, %p64
    %p66 = scmp.ne.s32.totalorder %s54, %s55
    %p67 = scmp.eq.s32.totalorder %s24, 1
    %p68 = por %p66, %p67
    %p70 = scmp.ne.s32.totalorder %s55, %s69
    %p71 = scmp.eq.s32.totalorder %s24, 0
    %p72 = por %p70, %p71
    %s74 = sadd.s32 %s73, 1
    %p77 = scmp.eq.s32.totalorder %s18, 1
    %p78 = scmp.ne.s32.totalorder %s73, %s75
    %p79 = scmp.eq.s32.totalorder %s18, 0
    %p80 = por %p78, %p79
    %p81 = scmp.ne.s32.totalorder %s73, %s75
    %p82 = scmp.eq.s32.totalorder %s23, 1
    %p83 = por %p81, %p82
    %p84 = scmp.ne.s32.totalorder %s75, %s76
    %p85 = scmp.eq.s32.totalorder %s23, 0
    %p86 = por %p84, %p85
    %p87 = scmp.ne.s32.totalorder %s75, %s76
    %p88 = scmp.eq.s32.totalorder %s24, 1
    %p89 = por %p87, %p88
    %p91 = scmp.ne.s32.totalorder %s76, %s90
    %p92 = scmp.eq.s32.totalorder %s24, 0
    %p93 = por %p91, %p92
    %s95 = sadd.s32 %s94, 1
    %p98 = scmp.eq.s32.totalorder %s18, 1
    %p99 = scmp.ne.s32.totalorder %s94, %s96
    %p100 = scmp.eq.s32.totalorder %s18, 0
    %p101 = por %p99, %p100
    %p102 = scmp.ne.s32.totalorder %s94, %s96
    %p103 = scmp.eq.s32.totalorder %s23, 1
    %p104 = por %p102, %p103
    %p105 = scmp.ne.s32.totalorder %s96, %s97
    %p106 = scmp.eq.s32.totalorder %s23, 0
    %p107 = por %p105, %p106
    %p108 = scmp.ne.s32.totalorder %s96, %s97
    %p109 = scmp.eq.s32.totalorder %s24, 1
    %p110 = por %p108, %p109
    %p112 = scmp.ne.s32.totalorder %s97, %s111
    %p113 = scmp.eq.s32.totalorder %s24, 0
    %p114 = por %p112, %p113
    %s116 = sadd.s32 %s115, 1
    %p119 = scmp.eq.s32.totalorder %s18, 1
    %p120 = scmp.ne.s32.totalorder %s115, %s117
    %p121 = scmp.eq.s32.totalorder %s18, 0
    %p122 = por %p120, %p121
    %p123 = scmp.ne.s32.totalorder %s115, %s117
    %p124 = scmp.eq.s32.totalorder %s23, 1
    %p125 = por %p123, %p124
    %p126 = scmp.ne.s32.totalorder %s117, %s118
    %p127 = scmp.eq.s32.totalorder %s23, 0
    %p128 = por %p126, %p127
    %p129 = scmp.ne.s32.totalorder %s117, %s118
    %p130 = scmp.eq.s32.totalorder %s24, 1
    %p131 = por %p129, %p130
    %p133 = scmp.ne.s32.totalorder %s118, %s132
    %p134 = scmp.eq.s32.totalorder %s24, 0
    %p135 = por %p133, %p134
    %s137 = sadd.s32 %s136, 1
    %p140 = scmp.eq.s32.totalorder %s18, 1
    %p141 = scmp.ne.s32.totalorder %s136, %s138
    %p142 = scmp.eq.s32.totalorder %s18, 0
    %p143 = por %p141, %p142
    %p144 = scmp.ne.s32.totalorder %s136, %s138
    %p145 = scmp.eq.s32.totalorder %s23, 1
    %p146 = por %p144, %p145
    %p147 = scmp.ne.s32.totalorder %s138, %s139
    %p148 = scmp.eq.s32.totalorder %s23, 0
    %p149 = por %p147, %p148
    %p150 = scmp.ne.s32.totalorder %s138, %s139
    %p151 = scmp.eq.s32.totalorder %s24, 1
    %p152 = por %p150, %p151
    %p154 = scmp.ne.s32.totalorder %s139, %s153
    %p155 = scmp.eq.s32.totalorder %s24, 0
    %p156 = por %p154, %p155
    %s158 = sadd.s32 %s157, 1
    %p161 = scmp.eq.s32.totalorder %s18, 1
    %p162 = scmp.ne.s32.totalorder %s157, %s159
    %p163 = scmp.eq.s32.totalorder %s18, 0
    %p164 = por %p162, %p163
    %p165 = scmp.ne.s32.totalorder %s157, %s159
    %p166 = scmp.eq.s32.totalorder %s23, 1
    %p167 = por %p165, %p166
    %p168 = scmp.ne.s32.totalorder %s159, %s160
    %p169 = scmp.eq.s32.totalorder %s23, 0
    %p170 = por %p168, %p169
    %p171 = scmp.ne.s32.totalorder %s159, %s160
    %p172 = scmp.eq.s32.totalorder %s24, 1
    %p173 = por %p171, %p172
    %p175 = scmp.ne.s32.totalorder %s160, %s174
    %p176 = scmp.eq.s32.totalorder %s24, 0
    %p177 = por %p175, %p176
    %s179 = sadd.s32 %s178, 1
    %p182 = scmp.eq.s32.totalorder %s18, 1
    %p183 = scmp.ne.s32.totalorder %s178, %s180
    %p184 = scmp.eq.s32.totalorder %s18, 0
    %p185 = por %p183, %p184
    %p186 = scmp.ne.s32.totalorder %s178, %s180
    %p187 = scmp.eq.s32.totalorder %s23, 1
    %p188 = por %p186, %p187
    %p189 = scmp.ne.s32.totalorder %s180, %s181
    %p190 = scmp.eq.s32.totalorder %s23, 0
    %p191 = por %p189, %p190
    %p192 = scmp.ne.s32.totalorder %s180, %s181
    %p193 = scmp.eq.s32.totalorder %s24, 1
    %p194 = por %p192, %p193
    %p196 = scmp.ne.s32.totalorder %s181, %s195
    %p197 = scmp.eq.s32.totalorder %s24, 0
    %p198 = por %p196, %p197
    %s200 = sadd.s32 %s199, 1
    %p203 = scmp.eq.s32.totalorder %s18, 1
    %p204 = scmp.ne.s32.totalorder %s199, %s201
    %p205 = scmp.eq.s32.totalorder %s18, 0
    %p206 = por %p204, %p205
    %p207 = scmp.ne.s32.totalorder %s199, %s201
    %p208 = scmp.eq.s32.totalorder %s23, 1
    %p209 = por %p207, %p208
    %p210 = scmp.ne.s32.totalorder %s201, %s202
    %p211 = scmp.eq.s32.totalorder %s23, 0
    %p212 = por %p210, %p211
    %p213 = scmp.ne.s32.totalorder %s201, %s202
    %p214 = scmp.eq.s32.totalorder %s24, 1
    %p215 = por %p213, %p214
    %p217 = scmp.ne.s32.totalorder %s202, %s216
    %p218 = scmp.eq.s32.totalorder %s24, 0
    %p219 = por %p217, %p218
    %s221 = sadd.s32 %s220, 1
    %p224 = scmp.eq.s32.totalorder %s18, 1
    %p225 = scmp.ne.s32.totalorder %s220, %s222
    %p226 = scmp.eq.s32.totalorder %s18, 0
    %p227 = por %p225, %p226
    %p228 = scmp.ne.s32.totalorder %s220, %s222
    %p229 = scmp.eq.s32.totalorder %s23, 1
    %p230 = por %p228, %p229
    %p231 = scmp.ne.s32.totalorder %s222, %s223
    %p232 = scmp.eq.s32.totalorder %s23, 0
    %p233 = por %p231, %p232
    %p234 = scmp.ne.s32.totalorder %s222, %s223
    %p235 = scmp.eq.s32.totalorder %s24, 1
    %p236 = por %p234, %p235
    %p238 = scmp.ne.s32.totalorder %s223, %s237
    %p239 = scmp.eq.s32.totalorder %s24, 0
    %p240 = por %p238, %p239
    %s242 = sadd.s32 %s241, 1
    %p245 = scmp.eq.s32.totalorder %s18, 1
    %p246 = scmp.ne.s32.totalorder %s241, %s243
    %p247 = scmp.eq.s32.totalorder %s18, 0
    %p248 = por %p246, %p247
    %p249 = scmp.ne.s32.totalorder %s241, %s243
    %p250 = scmp.eq.s32.totalorder %s23, 1
    %p251 = por %p249, %p250
    %p252 = scmp.ne.s32.totalorder %s243, %s244
    %p253 = scmp.eq.s32.totalorder %s23, 0
    %p254 = por %p252, %p253
    %p255 = scmp.ne.s32.totalorder %s243, %s244
    %p256 = scmp.eq.s32.totalorder %s24, 1
    %p257 = por %p255, %p256
    %p259 = scmp.ne.s32.totalorder %s244, %s258
    %p260 = scmp.eq.s32.totalorder %s24, 0
    %p261 = por %p259, %p260
    %s263 = sadd.s32 %s262, 1
    %p266 = scmp.eq.s32.totalorder %s18, 1
    %p267 = scmp.ne.s32.totalorder %s262, %s264
    %p268 = scmp.eq.s32.totalorder %s18, 0
    %p269 = por %p267, %p268
    %p270 = scmp.ne.s32.totalorder %s262, %s264
    %p271 = scmp.eq.s32.totalorder %s23, 1
    %p272 = por %p270, %p271
    %p273 = scmp.ne.s32.totalorder %s264, %s265
    %p274 = scmp.eq.s32.totalorder %s23, 0
    %p275 = por %p273, %p274
    %p276 = scmp.ne.s32.totalorder %s264, %s265
    %p277 = scmp.eq.s32.totalorder %s24, 1
    %p278 = por %p276, %p277
    %p280 = scmp.ne.s32.totalorder %s265, %s279
    %p281 = scmp.eq.s32.totalorder %s24, 0
    %p282 = por %p280, %p281
    %s283 = ssub.s32 %s18, %s25
    %p284 = scmp.eq.s32.totalorder %s283, 0
    %s286 = sadd.s32 %s285, 1
    %s287 = scalar_select %p284, %s285, %s286
    %p290 = pneg %p284
    %p291 = scmp.eq.s32.totalorder %s18, 1
    %p292 = por %p290, %p291
    %p293 = scmp.ne.s32.totalorder %s285, %s288
    %p294 = scmp.eq.s32.totalorder %s18, 0
    %p295 = por %p293, %p294
    %p296 = scmp.ne.s32.totalorder %s285, %s288
    %p297 = scmp.eq.s32.totalorder %s23, 1
    %p298 = por %p296, %p297
    %p299 = scmp.ne.s32.totalorder %s288, %s289
    %p300 = scmp.eq.s32.totalorder %s23, 0
    %p301 = por %p299, %p300
    %p302 = scmp.ne.s32.totalorder %s288, %s289
    %p303 = scmp.eq.s32.totalorder %s24, 1
    %p304 = por %p302, %p303
    %p306 = scmp.ne.s32.totalorder %s289, %s305
    %p307 = scmp.eq.s32.totalorder %s24, 0
    %p308 = por %p306, %p307
    %p309 = scmp.le.s32.totalorder 1, %s18
    %p310 = scmp.lt.s32.totalorder %s18, 3
    %p311 = pnand %p309, %p310
    %p312 = pneg %p311
    // Predicated region
    $region9: #{_lambda_.13} parent=5 // pred_check
      _
    $region10: #{_lambda_.13} parent=5 // pred_check_branch
      %314 = sbr.rel (%p311) target = $region12
    $region11: #{_lambda_.13} parent=5 // pred_region
      %s315 = ssub.s32 %s18, 1
      // Predicated region
      $region13: #{_lambda_.13} parent=11 // pred_check
        %p316 = pneg %p65
      $region14: #{_lambda_.13} parent=11 // pred_check_branch
        %318 = sbr.rel (%p316) target = $region16
      $region15: #{_lambda_.13} parent=11 // pred_region
        _
      $region16: #{_lambda_.13} parent=11 // pred_fallthru
        _
      // Predicated region
      $region17: #{_lambda_.13} parent=11 // pred_check
        %p319 = pneg %p86
      $region18: #{_lambda_.13} parent=11 // pred_check_branch
        %321 = sbr.rel (%p319) target = $region20
      $region19: #{_lambda_.13} parent=11 // pred_region
        _
      $region20: #{_lambda_.13} parent=11 // pred_fallthru
        _
      // Predicated region
      $region21: #{_lambda_.13} parent=11 // pred_check
        %p322 = pneg %p107
      $region22: #{_lambda_.13} parent=11 // pred_check_branch
        %324 = sbr.rel (%p322) target = $region24
      $region23: #{_lambda_.13} parent=11 // pred_region
        _
      $region24: #{_lambda_.13} parent=11 // pred_fallthru
        _
      // Predicated region
      $region25: #{_lambda_.13} parent=11 // pred_check
        %p325 = pneg %p128
      $region26: #{_lambda_.13} parent=11 // pred_check_branch
        %327 = sbr.rel (%p325) target = $region28
      $region27: #{_lambda_.13} parent=11 // pred_region
        _
      $region28: #{_lambda_.13} parent=11 // pred_fallthru
        _
      // Predicated region
      $region29: #{_lambda_.13} parent=11 // pred_check
        %p328 = pneg %p149
      $region30: #{_lambda_.13} parent=11 // pred_check_branch
        %330 = sbr.rel (%p328) target = $region32
      $region31: #{_lambda_.13} parent=11 // pred_region
        _
      $region32: #{_lambda_.13} parent=11 // pred_fallthru
        _
      // Predicated region
      $region33: #{_lambda_.13} parent=11 // pred_check
        %p331 = pneg %p170
      $region34: #{_lambda_.13} parent=11 // pred_check_branch
        %333 = sbr.rel (%p331) target = $region36
      $region35: #{_lambda_.13} parent=11 // pred_region
        _
      $region36: #{_lambda_.13} parent=11 // pred_fallthru
        _
      // Predicated region
      $region37: #{_lambda_.13} parent=11 // pred_check
        %p334 = pneg %p191
      $region38: #{_lambda_.13} parent=11 // pred_check_branch
        %336 = sbr.rel (%p334) target = $region40
      $region39: #{_lambda_.13} parent=11 // pred_region
        _
      $region40: #{_lambda_.13} parent=11 // pred_fallthru
        _
      // Predicated region
      $region41: #{_lambda_.13} parent=11 // pred_check
        %p337 = pneg %p212
      $region42: #{_lambda_.13} parent=11 // pred_check_branch
        %339 = sbr.rel (%p337) target = $region44
      $region43: #{_lambda_.13} parent=11 // pred_region
        _
      $region44: #{_lambda_.13} parent=11 // pred_fallthru
        _
      // Predicated region
      $region45: #{_lambda_.13} parent=11 // pred_check
        %p340 = pneg %p233
      $region46: #{_lambda_.13} parent=11 // pred_check_branch
        %342 = sbr.rel (%p340) target = $region48
      $region47: #{_lambda_.13} parent=11 // pred_region
        _
      $region48: #{_lambda_.13} parent=11 // pred_fallthru
        _
      // Predicated region
      $region49: #{_lambda_.13} parent=11 // pred_check
        %p343 = pneg %p254
      $region50: #{_lambda_.13} parent=11 // pred_check_branch
        %345 = sbr.rel (%p343) target = $region52
      $region51: #{_lambda_.13} parent=11 // pred_region
        _
      $region52: #{_lambda_.13} parent=11 // pred_fallthru
        _
      // Predicated region
      $region53: #{_lambda_.13} parent=11 // pred_check
        %p346 = pneg %p275
      $region54: #{_lambda_.13} parent=11 // pred_check_branch
        %348 = sbr.rel (%p346) target = $region56
      $region55: #{_lambda_.13} parent=11 // pred_region
        _
      $region56: #{_lambda_.13} parent=11 // pred_fallthru
        _
    $region12: #{_lambda_.13} parent=5 // pred_fallthru
      _
    %p349 = scmp.lt.s32.totalorder %s18, 2
    // Predicated region
    $region57: #{_lambda_.13} parent=5 // pred_check
      %p350 = pneg %p349
    $region58: #{_lambda_.13} parent=5 // pred_check_branch
      %352 = sbr.rel (%p350) target = $region60
    $region59: #{_lambda_.13} parent=5 // pred_region
      // Predicated region
      $region61: #{_lambda_.13} parent=59 // pred_check
        %p353 = pneg %p38
      $region62: #{_lambda_.13} parent=59 // pred_check_branch
        %355 = sbr.rel (%p353) target = $region64
      $region63: #{_lambda_.13} parent=59 // pred_region
        %p356 = scmp.lt.s32.totalorder %s18, 1
        %s357 = scalar_select %p356, %s18, 1
        %s358 = smul.addr %s357, 8
        %s359 = smul.addr %s358, 8
        %s360 = scalar_lea.vmem %s0, %s359
      $region64: #{_lambda_.13} parent=59 // pred_fallthru
        _
    $region60: #{_lambda_.13} parent=5 // pred_fallthru
      _
    %p361 = scmp.le.s32.totalorder 1, %s18
    %p362 = scmp.lt.s32.totalorder %s18, 3
    %p363 = pnand %p361, %p362
    %p364 = pneg %p363
    // Predicated region
    $region65: #{_lambda_.13} parent=5 // pred_check
      _
    $region66: #{_lambda_.13} parent=5 // pred_check_branch
      %366 = sbr.rel (%p363) target = $region68
    $region67: #{_lambda_.13} parent=5 // pred_region
      %s367 = ssub.s32 %s18, 1
      %p368 = scmp.lt.s32.totalorder %s23, 1
      %s369 = scalar_select %p368, %s23, 1
      %s370 = smul.addr %s369, 8
      %s371 = smul.addr %s370, 8
      %s372 = scalar_lea.vmem %s0, %s371
      %p373 = pneg %p44
      %p374 = pneg %p41
      %p375 = pneg %p65
      %p376 = pneg %p62
      %p377 = pneg %p86
      %p378 = pneg %p83
      %p379 = pneg %p107
      %p380 = pneg %p104
      %p381 = pneg %p128
      %p382 = pneg %p125
      %p383 = pneg %p149
      %p384 = pneg %p146
      %p385 = pneg %p170
      %p386 = pneg %p167
      %p387 = pneg %p191
      %p388 = pneg %p188
      %p389 = pneg %p212
      %p390 = pneg %p209
      %p391 = pneg %p233
      %p392 = pneg %p230
      %p393 = pneg %p254
      %p394 = pneg %p251
      %p395 = pneg %p275
      %p396 = pneg %p272
      %p397 = pneg %p301
      %p398 = pneg %p298
      %p399 = scmp.lt.s32.totalorder %s23, 1
      %s400 = scalar_select %p399, %s23, 1
      %s401 = smul.addr %s400, 8
      %s402 = smul.addr %s401, 8
      %s403 = scalar_lea.vmem %s12, %s402
      %p404 = scmp.lt.s32.totalorder %s23, 1
      %s405 = scalar_select %p404, %s23, 1
      %s406 = smul.addr %s405, 8
      %s407 = smul.addr %s406, 8
      %s408 = scalar_lea.vmem %s0, %s407
      %p409 = scmp.lt.s32.totalorder %s23, 1
      %s410 = scalar_select %p409, %s23, 1
      %s411 = smul.addr %s410, 8
      %s412 = smul.addr %s411, 8
      %s413 = scalar_lea.vmem %s12, %s412
      %v415 = vld [vmem:[%s408] sm:$0xff]
      %v416 = vld [vmem:[%s408 + $0x8] sm:$0xff]
      %v417 = vld [vmem:[%s408 + $0x10] sm:$0xff]
      %v418 = vld [vmem:[%s408 + $0x18] sm:$0xff]
      %v419 = vld [vmem:[%s408 + $0x20] sm:$0xff]
      %v420 = vld [vmem:[%s408 + $0x28] sm:$0xff]
      %v421 = vld [vmem:[%s408 + $0x30] sm:$0xff]
      %v422 = vld [vmem:[%s408 + $0x38] sm:$0xff]
      %vm423 = vcmask 261120
      %v424 = vsel %vm423, %v415, 0.0
      %425 = vadd.xlane.f32.xlu0 %v424
      %v426 = vpop.xlane.xlu0 %425
      %v427 = vsel %vm423, %v416, 0.0
      %428 = vadd.xlane.f32.xlu0 %v427
      %v429 = vpop.xlane.xlu0 %428
      %v430 = vsel %vm423, %v417, 0.0
      %431 = vadd.xlane.f32.xlu0 %v430
      %v432 = vpop.xlane.xlu0 %431
      %v433 = vsel %vm423, %v418, 0.0
      %434 = vadd.xlane.f32.xlu0 %v433
      %v435 = vpop.xlane.xlu0 %434
      %v436 = vsel %vm423, %v419, 0.0
      %437 = vadd.xlane.f32.xlu0 %v436
      %v438 = vpop.xlane.xlu0 %437
      %v439 = vsel %vm423, %v420, 0.0
      %440 = vadd.xlane.f32.xlu0 %v439
      %v441 = vpop.xlane.xlu0 %440
      %v442 = vsel %vm423, %v421, 0.0
      %443 = vadd.xlane.f32.xlu0 %v442
      %v444 = vpop.xlane.xlu0 %443
      %v445 = vsel %vm423, %v422, 0.0
      %446 = vadd.xlane.f32.xlu0 %v445
      %v447 = vpop.xlane.xlu0 %446
      %v448 = vrcp.pop 32.0
      %v449 = vmul.f32 32.0, %v448
      %v450 = vsub.f32 1.0, %v449
      %v451 = vmul.f32 %v448, %v450
      %v452 = vadd.f32 %v448, %v451
      %vm453 = vweird.f32 %v448
      %v454 = vsel %vm453, %v448, %v452
      %v455 = vmul.f32 %v426, %v454
      %v456 = vmul.f32 %v429, %v454
      %v457 = vmul.f32 %v432, %v454
      %v458 = vmul.f32 %v435, %v454
      %v459 = vmul.f32 %v438, %v454
      %v460 = vmul.f32 %v441, %v454
      %v461 = vmul.f32 %v444, %v454
      %v462 = vmul.f32 %v447, %v454
      %v463 = vsub.f32 %v415, %v455
      %v464 = vsub.f32 %v416, %v456
      %v465 = vsub.f32 %v417, %v457
      %v466 = vsub.f32 %v418, %v458
      %v467 = vsub.f32 %v419, %v459
      %v468 = vsub.f32 %v420, %v460
      %v469 = vsub.f32 %v421, %v461
      %v470 = vsub.f32 %v422, %v462
      %v471 = vmul.f32 %v463, %v463
      %v472 = vmul.f32 %v464, %v464
      %v473 = vmul.f32 %v465, %v465
      %v474 = vmul.f32 %v466, %v466
      %v475 = vmul.f32 %v467, %v467
      %v476 = vmul.f32 %v468, %v468
      %v477 = vmul.f32 %v469, %v469
      %v478 = vmul.f32 %v470, %v470
      %v479 = vsel %vm423, %v471, 0.0
      %480 = vadd.xlane.f32.xlu0 %v479
      %v481 = vpop.xlane.xlu0 %480
      %v482 = vsel %vm423, %v472, 0.0
      %483 = vadd.xlane.f32.xlu0 %v482
      %v484 = vpop.xlane.xlu0 %483
      %v485 = vsel %vm423, %v473, 0.0
      %486 = vadd.xlane.f32.xlu0 %v485
      %v487 = vpop.xlane.xlu0 %486
      %v488 = vsel %vm423, %v474, 0.0
      %489 = vadd.xlane.f32.xlu0 %v488
      %v490 = vpop.xlane.xlu0 %489
      %v491 = vsel %vm423, %v475, 0.0
      %492 = vadd.xlane.f32.xlu0 %v491
      %v493 = vpop.xlane.xlu0 %492
      %v494 = vsel %vm423, %v476, 0.0
      %495 = vadd.xlane.f32.xlu0 %v494
      %v496 = vpop.xlane.xlu0 %495
      %v497 = vsel %vm423, %v477, 0.0
      %498 = vadd.xlane.f32.xlu0 %v497
      %v499 = vpop.xlane.xlu0 %498
      %v500 = vsel %vm423, %v478, 0.0
      %501 = vadd.xlane.f32.xlu0 %v500
      %v502 = vpop.xlane.xlu0 %501
      %v503 = vmul.f32 %v481, %v454
      %v504 = vmul.f32 %v484, %v454
      %v505 = vmul.f32 %v487, %v454
      %v506 = vmul.f32 %v490, %v454
      %v507 = vmul.f32 %v493, %v454
      %v508 = vmul.f32 %v496, %v454
      %v509 = vmul.f32 %v499, %v454
      %v510 = vmul.f32 %v502, %v454
      %v511 = vadd.f32 %v503, 1e-05
      %v512 = vadd.f32 %v504, 1e-05
      %v513 = vadd.f32 %v505, 1e-05
      %v514 = vadd.f32 %v506, 1e-05
      %v515 = vadd.f32 %v507, 1e-05
      %v516 = vadd.f32 %v508, 1e-05
      %v517 = vadd.f32 %v509, 1e-05
      %v518 = vadd.f32 %v510, 1e-05
      %v519 = vrsqrt.pop %v511
      %v520 = vmul.f32 %v519, %v511
      %v521 = vmul.f32 %v520, %v519
      %v522 = vmul.f32 0.5, %v521
      %v523 = vsub.f32 1.5, %v522
      %v524 = vmul.f32 %v519, %v523
      %vm525 = vweird.f32 %v511
      %vm526 = vweird.f32 %v519
      %vm527 = vmor %vm525, %vm526
      %v528 = vsel %vm527, %v519, %v524
      %v529 = vrsqrt.pop %v512
      %v530 = vmul.f32 %v529, %v512
      %v531 = vmul.f32 %v530, %v529
      %v532 = vmul.f32 0.5, %v531
      %v533 = vsub.f32 1.5, %v532
      %v534 = vmul.f32 %v529, %v533
      %vm535 = vweird.f32 %v512
      %vm536 = vweird.f32 %v529
      %vm537 = vmor %vm535, %vm536
      %v538 = vsel %vm537, %v529, %v534
      %v539 = vrsqrt.pop %v513
      %v540 = vmul.f32 %v539, %v513
      %v541 = vmul.f32 %v540, %v539
      %v542 = vmul.f32 0.5, %v541
      %v543 = vsub.f32 1.5, %v542
      %v544 = vmul.f32 %v539, %v543
      %vm545 = vweird.f32 %v513
      %vm546 = vweird.f32 %v539
      %vm547 = vmor %vm545, %vm546
      %v548 = vsel %vm547, %v539, %v544
      %v549 = vrsqrt.pop %v514
      %v550 = vmul.f32 %v549, %v514
      %v551 = vmul.f32 %v550, %v549
      %v552 = vmul.f32 0.5, %v551
      %v553 = vsub.f32 1.5, %v552
      %v554 = vmul.f32 %v549, %v553
      %vm555 = vweird.f32 %v514
      %vm556 = vweird.f32 %v549
      %vm557 = vmor %vm555, %vm556
      %v558 = vsel %vm557, %v549, %v554
      %v559 = vrsqrt.pop %v515
      %v560 = vmul.f32 %v559, %v515
      %v561 = vmul.f32 %v560, %v559
      %v562 = vmul.f32 0.5, %v561
      %v563 = vsub.f32 1.5, %v562
      %v564 = vmul.f32 %v559, %v563
      %vm565 = vweird.f32 %v515
      %vm566 = vweird.f32 %v559
      %vm567 = vmor %vm565, %vm566
      %v568 = vsel %vm567, %v559, %v564
      %v569 = vrsqrt.pop %v516
      %v570 = vmul.f32 %v569, %v516
      %v571 = vmul.f32 %v570, %v569
      %v572 = vmul.f32 0.5, %v571
      %v573 = vsub.f32 1.5, %v572
      %v574 = vmul.f32 %v569, %v573
      %vm575 = vweird.f32 %v516
      %vm576 = vweird.f32 %v569
      %vm577 = vmor %vm575, %vm576
      %v578 = vsel %vm577, %v569, %v574
      %v579 = vrsqrt.pop %v517
      %v580 = vmul.f32 %v579, %v517
      %v581 = vmul.f32 %v580, %v579
      %v582 = vmul.f32 0.5, %v581
      %v583 = vsub.f32 1.5, %v582
      %v584 = vmul.f32 %v579, %v583
      %vm585 = vweird.f32 %v517
      %vm586 = vweird.f32 %v579
      %vm587 = vmor %vm585, %vm586
      %v588 = vsel %vm587, %v579, %v584
      %v589 = vrsqrt.pop %v518
      %v590 = vmul.f32 %v589, %v518
      %v591 = vmul.f32 %v590, %v589
      %v592 = vmul.f32 0.5, %v591
      %v593 = vsub.f32 1.5, %v592
      %v594 = vmul.f32 %v589, %v593
      %vm595 = vweird.f32 %v518
      %vm596 = vweird.f32 %v589
      %vm597 = vmor %vm595, %vm596
      %v598 = vsel %vm597, %v589, %v594
      %v599 = vmul.f32 %v463, %v528
      %v600 = vmul.f32 %v464, %v538
      %v601 = vmul.f32 %v465, %v548
      %v602 = vmul.f32 %v466, %v558
      %v603 = vmul.f32 %v467, %v568
      %v604 = vmul.f32 %v468, %v578
      %v605 = vmul.f32 %v469, %v588
      %v606 = vmul.f32 %v470, %v598
      %v607 = vld [vmem:[%s1] sm:$0x1]
      %v609 = vperm.slane %v607, 0
      %v611 = vmul.f32 %v599, %v609
      %v612 = vmul.f32 %v600, %v609
      %v613 = vmul.f32 %v601, %v609
      %v614 = vmul.f32 %v602, %v609
      %v615 = vmul.f32 %v603, %v609
      %v616 = vmul.f32 %v604, %v609
      %v617 = vmul.f32 %v605, %v609
      %v618 = vmul.f32 %v606, %v609
      %v619 = vld [vmem:[%s2] sm:$0x1]
      %v621 = vperm.slane %v619, 0
      %v623 = vadd.f32 %v611, %v621
      %v624 = vadd.f32 %v612, %v621
      %v625 = vadd.f32 %v613, %v621
      %v626 = vadd.f32 %v614, %v621
      %v627 = vadd.f32 %v615, %v621
      %v628 = vadd.f32 %v616, %v621
      %v629 = vadd.f32 %v617, %v621
      %v630 = vadd.f32 %v618, %v621
      %v631 = vpack.c.bf16 %v624, %v623
      %v632 = vpack.c.bf16 %v626, %v625
      %v633 = vpack.c.bf16 %v628, %v627
      %v634 = vpack.c.bf16 %v630, %v629
      %v635 = vld [vmem:[%s3] sm:$0xf]
      %v636 = vld [vmem:[%s3 + $0x4] sm:$0xf]
      %v637 = vld [vmem:[%s3 + $0x8] sm:$0xf]
      %v638 = vld [vmem:[%s3 + $0xc] sm:$0xf]
      %v643 = vunpack.c.l.b16 %v635
      %v644 = vunpack.c.l.b16 %v636
      %v645 = vunpack.c.l.b16 %v637
      %v646 = vunpack.c.l.b16 %v638
      %v647 = vpack.c.b16 %v644, %v643
      %v648 = vpack.c.b16 %v646, %v645
      %v652 = vsel %vm423, %v631, 0
      %v655 = vsel %vm423, %v632, 0
      %v658 = vsel %vm423, %v633, 0
      %v661 = vsel %vm423, %v634, 0
      %663 = vmatpush.bf16.msra.mxu0 0
      %664 = vmatpush.bf16.msra.mxu0 0
      %665 = vmatpush.bf16.msra.mxu0 0
      %666 = vmatpush.bf16.msra.mxu0 0
      %667 = vmatpush.bf16.msra.mxu0 0
      %668 = vmatpush.bf16.msra.mxu0 0
      %669 = vmatpush.bf16.msra.mxu0 %v648
      %670 = vmatpush.bf16.msra.mxu0 %v647
      %671 = vmatmul.bf16.gmra.mxu0 %v652
      %v672 = vpop.f32.mrf.mxu0
      %v673 = vadd.f32 0.0, %v672
      %v674 = vpop.f32.mrf.mxu0
      %v675 = vadd.f32 0.0, %v674
      %676 = vmatmul.bf16.gmra.mxu0 %v655
      %v677 = vpop.f32.mrf.mxu0
      %v678 = vadd.f32 0.0, %v677
      %v679 = vpop.f32.mrf.mxu0
      %v680 = vadd.f32 0.0, %v679
      %681 = vmatmul.bf16.gmra.mxu0 %v658
      %v682 = vpop.f32.mrf.mxu0
      %v683 = vadd.f32 0.0, %v682
      %v684 = vpop.f32.mrf.mxu0
      %v685 = vadd.f32 0.0, %v684
      %686 = vmatmul.bf16.gmra.mxu0 %v661
      %v687 = vpop.f32.mrf.mxu0
      %v688 = vadd.f32 0.0, %v687
      %v689 = vpop.f32.mrf.mxu0
      %v690 = vadd.f32 0.0, %v689
      %691 = vdwg.mxu0
      %v692 = vpack.c.bf16 %v675, %v673
      %v693 = vpack.c.bf16 %v680, %v678
      %v694 = vpack.c.bf16 %v685, %v683
      %v695 = vpack.c.bf16 %v690, %v688
      %700 = vrot.lane.b32.xlu0 %v692, 96
      %v701 = vpop.permute.xlu0 %700
      %702 = vrot.lane.b32.xlu0 %v693, 96
      %v703 = vpop.permute.xlu0 %702
      %704 = vrot.lane.b32.xlu0 %v694, 96
      %v705 = vpop.permute.xlu0 %704
      %706 = vrot.lane.b32.xlu0 %v695, 96
      %v707 = vpop.permute.xlu0 %706
      %vm708 = vcmask 64512
      %v710 = vsel %vm708, %v692, 0
      %v713 = vsel %vm708, %v693, 0
      %v716 = vsel %vm708, %v694, 0
      %v719 = vsel %vm708, %v695, 0
      %v722 = vsel %vm708, %v701, 0
      %v725 = vsel %vm708, %v703, 0
      %v728 = vsel %vm708, %v705, 0
      %v731 = vsel %vm708, %v707, 0
      %733 = vmatpush.bf16.xpose.msra.mxu0 0
      %734 = vmatpush.bf16.xpose.msra.mxu0 0
      %735 = vmatpush.bf16.xpose.msra.mxu0 0
      %736 = vmatpush.bf16.xpose.msra.mxu0 0
      %737 = vmatpush.bf16.xpose.msra.mxu0 %v731
      %738 = vmatpush.bf16.xpose.msra.mxu0 %v728
      %739 = vmatpush.bf16.xpose.msra.mxu0 %v725
      %740 = vmatpush.bf16.xpose.msra.mxu0 %v722
      %741 = vmatmul.bf16.gmra.mxu0 %v710
      %v742 = vpop.f32.mrf.mxu0
      %v743 = vadd.f32 0.0, %v742
      %v744 = vpop.f32.mrf.mxu0
      %v745 = vadd.f32 0.0, %v744
      %746 = vmatmul.bf16.gmra.mxu0 %v713
      %v747 = vpop.f32.mrf.mxu0
      %v748 = vadd.f32 0.0, %v747
      %v749 = vpop.f32.mrf.mxu0
      %v750 = vadd.f32 0.0, %v749
      %751 = vmatmul.bf16.gmra.mxu0 %v716
      %v752 = vpop.f32.mrf.mxu0
      %v753 = vadd.f32 0.0, %v752
      %v754 = vpop.f32.mrf.mxu0
      %v755 = vadd.f32 0.0, %v754
      %756 = vmatmul.bf16.gmra.mxu0 %v719
      %v757 = vpop.f32.mrf.mxu0
      %v758 = vadd.f32 0.0, %v757
      %v759 = vpop.f32.mrf.mxu0
      %v760 = vadd.f32 0.0, %v759
      %761 = vdwg.mxu0
      %vm762 = vcmask 523264
      %v763 = vsel %vm762, %v743, -inf
      %764 = vmax.xlane.f32.xlu0 %v763
      %v765 = vpop.xlane.xlu0 %764
      %v766 = vsel %vm762, %v745, -inf
      %767 = vmax.xlane.f32.xlu0 %v766
      %v768 = vpop.xlane.xlu0 %767
      %v769 = vsel %vm762, %v748, -inf
      %770 = vmax.xlane.f32.xlu0 %v769
      %v771 = vpop.xlane.xlu0 %770
      %v772 = vsel %vm762, %v750, -inf
      %773 = vmax.xlane.f32.xlu0 %v772
      %v774 = vpop.xlane.xlu0 %773
      %v775 = vsel %vm762, %v753, -inf
      %776 = vmax.xlane.f32.xlu0 %v775
      %v777 = vpop.xlane.xlu0 %776
      %v778 = vsel %vm762, %v755, -inf
      %779 = vmax.xlane.f32.xlu0 %v778
      %v780 = vpop.xlane.xlu0 %779
      %v781 = vsel %vm762, %v758, -inf
      %782 = vmax.xlane.f32.xlu0 %v781
      %v783 = vpop.xlane.xlu0 %782
      %v784 = vsel %vm762, %v760, -inf
      %785 = vmax.xlane.f32.xlu0 %v784
      %v786 = vpop.xlane.xlu0 %785
      %v787 = vsub.f32 %v743, %v765
      %v788 = vsub.f32 %v745, %v768
      %v789 = vsub.f32 %v748, %v771
      %v790 = vsub.f32 %v750, %v774
      %v791 = vsub.f32 %v753, %v777
      %v792 = vsub.f32 %v755, %v780
      %v793 = vsub.f32 %v758, %v783
      %v794 = vsub.f32 %v760, %v786
      %v795 = vmul.f32 %v787, 1.442695
      %v796 = vpow.pop %v795
      %v797 = vmul.f32 %v788, 1.442695
      %v798 = vpow.pop %v797
      %v799 = vmul.f32 %v789, 1.442695
      %v800 = vpow.pop %v799
      %v801 = vmul.f32 %v790, 1.442695
      %v802 = vpow.pop %v801
      %v803 = vmul.f32 %v791, 1.442695
      %v804 = vpow.pop %v803
      %v805 = vmul.f32 %v792, 1.442695
      %v806 = vpow.pop %v805
      %v807 = vmul.f32 %v793, 1.442695
      %v808 = vpow.pop %v807
      %v809 = vmul.f32 %v794, 1.442695
      %v810 = vpow.pop %v809
      %v811 = vsel %vm762, %v796, 0.0
      %812 = vadd.xlane.f32.xlu0 %v811
      %v813 = vpop.xlane.xlu0 %812
      %v814 = vsel %vm762, %v798, 0.0
      %815 = vadd.xlane.f32.xlu0 %v814
      %v816 = vpop.xlane.xlu0 %815
      %v817 = vsel %vm762, %v800, 0.0
      %818 = vadd.xlane.f32.xlu0 %v817
      %v819 = vpop.xlane.xlu0 %818
      %v820 = vsel %vm762, %v802, 0.0
      %821 = vadd.xlane.f32.xlu0 %v820
      %v822 = vpop.xlane.xlu0 %821
      %v823 = vsel %vm762, %v804, 0.0
      %824 = vadd.xlane.f32.xlu0 %v823
      %v825 = vpop.xlane.xlu0 %824
      %v826 = vsel %vm762, %v806, 0.0
      %827 = vadd.xlane.f32.xlu0 %v826
      %v828 = vpop.xlane.xlu0 %827
      %v829 = vsel %vm762, %v808, 0.0
      %830 = vadd.xlane.f32.xlu0 %v829
      %v831 = vpop.xlane.xlu0 %830
      %v832 = vsel %vm762, %v810, 0.0
      %833 = vadd.xlane.f32.xlu0 %v832
      %v834 = vpop.xlane.xlu0 %833
      %v835 = vrcp.pop %v813
      %v836 = vrcp.pop %v816
      %v837 = vrcp.pop %v819
      %v838 = vrcp.pop %v822
      %v839 = vrcp.pop %v825
      %v840 = vrcp.pop %v828
      %v841 = vrcp.pop %v831
      %v842 = vrcp.pop %v834
      %v843 = vmul.f32 %v796, %v835
      %v844 = vmul.f32 %v798, %v836
      %v845 = vmul.f32 %v800, %v837
      %v846 = vmul.f32 %v802, %v838
      %v847 = vmul.f32 %v804, %v839
      %v848 = vmul.f32 %v806, %v840
      %v849 = vmul.f32 %v808, %v841
      %v850 = vmul.f32 %v810, %v842
      %v851 = vpack.c.bf16 %v844, %v843
      %v852 = vpack.c.bf16 %v846, %v845
      %v853 = vpack.c.bf16 %v848, %v847
      %v854 = vpack.c.bf16 %v850, %v849
      %855 = vrot.lane.b32.xlu0 %v692, 64
      %v856 = vpop.permute.xlu0 %855
      %857 = vrot.lane.b32.xlu0 %v693, 64
      %v858 = vpop.permute.xlu0 %857
      %859 = vrot.lane.b32.xlu0 %v694, 64
      %v860 = vpop.permute.xlu0 %859
      %861 = vrot.lane.b32.xlu0 %v695, 64
      %v862 = vpop.permute.xlu0 %861
      %v868 = vsel %vm762, %v851, 0
      %v871 = vsel %vm762, %v852, 0
      %v874 = vsel %vm762, %v853, 0
      %v877 = vsel %vm762, %v854, 0
      %879 = vmatpush.bf16.msra.mxu0 0
      %880 = vmatpush.bf16.msra.mxu0 0
      %881 = vmatpush.bf16.msra.mxu0 0
      %882 = vmatpush.bf16.msra.mxu0 0
      %883 = vmatpush.bf16.msra.mxu0 %v862
      %884 = vmatpush.bf16.msra.mxu0 %v860
      %885 = vmatpush.bf16.msra.mxu0 %v858
      %886 = vmatpush.bf16.msra.mxu0 %v856
      %887 = vmatmul.bf16.gmra.mxu0 %v868
      %v888 = vpop.f32.mrf.mxu0
      %v889 = vadd.f32 0.0, %v888
      %v890 = vpop.f32.mrf.mxu0
      %v891 = vadd.f32 0.0, %v890
      %892 = vmatmul.bf16.gmra.mxu0 %v871
      %v893 = vpop.f32.mrf.mxu0
      %v894 = vadd.f32 0.0, %v893
      %v895 = vpop.f32.mrf.mxu0
      %v896 = vadd.f32 0.0, %v895
      %897 = vmatmul.bf16.gmra.mxu0 %v874
      %v898 = vpop.f32.mrf.mxu0
      %v899 = vadd.f32 0.0, %v898
      %v900 = vpop.f32.mrf.mxu0
      %v901 = vadd.f32 0.0, %v900
      %902 = vmatmul.bf16.gmra.mxu0 %v877
      %v903 = vpop.f32.mrf.mxu0
      %v904 = vadd.f32 0.0, %v903
      %v905 = vpop.f32.mrf.mxu0
      %v906 = vadd.f32 0.0, %v905
      %907 = vdwg.mxu0
      %908 = vrot.lane.b32.xlu0 %v692, 120
      %v909 = vpop.permute.xlu0 %908
      %910 = vrot.lane.b32.xlu0 %v693, 120
      %v911 = vpop.permute.xlu0 %910
      %912 = vrot.lane.b32.xlu0 %v694, 120
      %v913 = vpop.permute.xlu0 %912
      %914 = vrot.lane.b32.xlu0 %v695, 120
      %v915 = vpop.permute.xlu0 %914
      %916 = vrot.lane.b32.xlu0 %v692, 88
      %v917 = vpop.permute.xlu0 %916
      %918 = vrot.lane.b32.xlu0 %v693, 88
      %v919 = vpop.permute.xlu0 %918
      %920 = vrot.lane.b32.xlu0 %v694, 88
      %v921 = vpop.permute.xlu0 %920
      %922 = vrot.lane.b32.xlu0 %v695, 88
      %v923 = vpop.permute.xlu0 %922
      %v925 = vsel %vm708, %v909, 0
      %v928 = vsel %vm708, %v911, 0
      %v931 = vsel %vm708, %v913, 0
      %v934 = vsel %vm708, %v915, 0
      %v937 = vsel %vm708, %v917, 0
      %v940 = vsel %vm708, %v919, 0
      %v943 = vsel %vm708, %v921, 0
      %v946 = vsel %vm708, %v923, 0
      %948 = vmatpush.bf16.xpose.msra.mxu0 0
      %949 = vmatpush.bf16.xpose.msra.mxu0 0
      %950 = vmatpush.bf16.xpose.msra.mxu0 0
      %951 = vmatpush.bf16.xpose.msra.mxu0 0
      %952 = vmatpush.bf16.xpose.msra.mxu0 %v946
      %953 = vmatpush.bf16.xpose.msra.mxu0 %v943
      %954 = vmatpush.bf16.xpose.msra.mxu0 %v940
      %955 = vmatpush.bf16.xpose.msra.mxu0 %v937
      %956 = vmatmul.bf16.gmra.mxu0 %v925
      %v957 = vpop.f32.mrf.mxu0
      %v958 = vadd.f32 0.0, %v957
      %v959 = vpop.f32.mrf.mxu0
      %v960 = vadd.f32 0.0, %v959
      %961 = vmatmul.bf16.gmra.mxu0 %v928
      %v962 = vpop.f32.mrf.mxu0
      %v963 = vadd.f32 0.0, %v962
      %v964 = vpop.f32.mrf.mxu0
      %v965 = vadd.f32 0.0, %v964
      %966 = vmatmul.bf16.gmra.mxu0 %v931
      %v967 = vpop.f32.mrf.mxu0
      %v968 = vadd.f32 0.0, %v967
      %v969 = vpop.f32.mrf.mxu0
      %v970 = vadd.f32 0.0, %v969
      %971 = vmatmul.bf16.gmra.mxu0 %v934
      %v972 = vpop.f32.mrf.mxu0
      %v973 = vadd.f32 0.0, %v972
      %v974 = vpop.f32.mrf.mxu0
      %v975 = vadd.f32 0.0, %v974
      %976 = vdwg.mxu0
      %v977 = vsel %vm762, %v958, -inf
      %978 = vmax.xlane.f32.xlu0 %v977
      %v979 = vpop.xlane.xlu0 %978
      %v980 = vsel %vm762, %v960, -inf
      %981 = vmax.xlane.f32.xlu0 %v980
      %v982 = vpop.xlane.xlu0 %981
      %v983 = vsel %vm762, %v963, -inf
      %984 = vmax.xlane.f32.xlu0 %v983
      %v985 = vpop.xlane.xlu0 %984
      %v986 = vsel %vm762, %v965, -inf
      %987 = vmax.xlane.f32.xlu0 %v986
      %v988 = vpop.xlane.xlu0 %987
      %v989 = vsel %vm762, %v968, -inf
      %990 = vmax.xlane.f32.xlu0 %v989
      %v991 = vpop.xlane.xlu0 %990
      %v992 = vsel %vm762, %v970, -inf
      %993 = vmax.xlane.f32.xlu0 %v992
      %v994 = vpop.xlane.xlu0 %993
      %v995 = vsel %vm762, %v973, -inf
      %996 = vmax.xlane.f32.xlu0 %v995
      %v997 = vpop.xlane.xlu0 %996
      %v998 = vsel %vm762, %v975, -inf
      %999 = vmax.xlane.f32.xlu0 %v998
      %v1000 = vpop.xlane.xlu0 %999
      %v1001 = vsub.f32 %v958, %v979
      %v1002 = vsub.f32 %v960, %v982
      %v1003 = vsub.f32 %v963, %v985
      %v1004 = vsub.f32 %v965, %v988
      %v1005 = vsub.f32 %v968, %v991
      %v1006 = vsub.f32 %v970, %v994
      %v1007 = vsub.f32 %v973, %v997
      %v1008 = vsub.f32 %v975, %v1000
      %v1009 = vmul.f32 %v1001, 1.442695
      %v1010 = vpow.pop %v1009
      %v1011 = vmul.f32 %v1002, 1.442695
      %v1012 = vpow.pop %v1011
      %v1013 = vmul.f32 %v1003, 1.442695
      %v1014 = vpow.pop %v1013
      %v1015 = vmul.f32 %v1004, 1.442695
      %v1016 = vpow.pop %v1015
      %v1017 = vmul.f32 %v1005, 1.442695
      %v1018 = vpow.pop %v1017
      %v1019 = vmul.f32 %v1006, 1.442695
      %v1020 = vpow.pop %v1019
      %v1021 = vmul.f32 %v1007, 1.442695
      %v1022 = vpow.pop %v1021
      %v1023 = vmul.f32 %v1008, 1.442695
      %v1024 = vpow.pop %v1023
      %v1025 = vsel %vm762, %v1010, 0.0
      %1026 = vadd.xlane.f32.xlu0 %v1025
      %v1027 = vpop.xlane.xlu0 %1026
      %v1028 = vsel %vm762, %v1012, 0.0
      %1029 = vadd.xlane.f32.xlu0 %v1028
      %v1030 = vpop.xlane.xlu0 %1029
      %v1031 = vsel %vm762, %v1014, 0.0
      %1032 = vadd.xlane.f32.xlu0 %v1031
      %v1033 = vpop.xlane.xlu0 %1032
      %v1034 = vsel %vm762, %v1016, 0.0
      %1035 = vadd.xlane.f32.xlu0 %v1034
      %v1036 = vpop.xlane.xlu0 %1035
      %v1037 = vsel %vm762, %v1018, 0.0
      %1038 = vadd.xlane.f32.xlu0 %v1037
      %v1039 = vpop.xlane.xlu0 %1038
      %v1040 = vsel %vm762, %v1020, 0.0
      %1041 = vadd.xlane.f32.xlu0 %v1040
      %v1042 = vpop.xlane.xlu0 %1041
      %v1043 = vsel %vm762, %v1022, 0.0
      %1044 = vadd.xlane.f32.xlu0 %v1043
      %v1045 = vpop.xlane.xlu0 %1044
      %v1046 = vsel %vm762, %v1024, 0.0
      %1047 = vadd.xlane.f32.xlu0 %v1046
      %v1048 = vpop.xlane.xlu0 %1047
      %v1049 = vrcp.pop %v1027
      %v1050 = vrcp.pop %v1030
      %v1051 = vrcp.pop %v1033
      %v1052 = vrcp.pop %v1036
      %v1053 = vrcp.pop %v1039
      %v1054 = vrcp.pop %v1042
      %v1055 = vrcp.pop %v1045
      %v1056 = vrcp.pop %v1048
      %v1057 = vmul.f32 %v1010, %v1049
      %v1058 = vmul.f32 %v1012, %v1050
      %v1059 = vmul.f32 %v1014, %v1051
      %v1060 = vmul.f32 %v1016, %v1052
      %v1061 = vmul.f32 %v1018, %v1053
      %v1062 = vmul.f32 %v1020, %v1054
      %v1063 = vmul.f32 %v1022, %v1055
      %v1064 = vmul.f32 %v1024, %v1056
      %v1065 = vpack.c.bf16 %v1058, %v1057
      %v1066 = vpack.c.bf16 %v1060, %v1059
      %v1067 = vpack.c.bf16 %v1062, %v1061
      %v1068 = vpack.c.bf16 %v1064, %v1063
      %1069 = vrot.lane.b32.xlu0 %v692, 56
      %v1070 = vpop.permute.xlu0 %1069
      %1071 = vrot.lane.b32.xlu0 %v693, 56
      %v1072 = vpop.permute.xlu0 %1071
      %1073 = vrot.lane.b32.xlu0 %v694, 56
      %v1074 = vpop.permute.xlu0 %1073
      %1075 = vrot.lane.b32.xlu0 %v695, 56
      %v1076 = vpop.permute.xlu0 %1075
      %v1082 = vsel %vm762, %v1065, 0
      %v1085 = vsel %vm762, %v1066, 0
      %v1088 = vsel %vm762, %v1067, 0
      %v1091 = vsel %vm762, %v1068, 0
      %1093 = vmatpush.bf16.msra.mxu0 0
      %1094 = vmatpush.bf16.msra.mxu0 0
      %1095 = vmatpush.bf16.msra.mxu0 0
      %1096 = vmatpush.bf16.msra.mxu0 0
      %1097 = vmatpush.bf16.msra.mxu0 %v1076
      %1098 = vmatpush.bf16.msra.mxu0 %v1074
      %1099 = vmatpush.bf16.msra.mxu0 %v1072
      %1100 = vmatpush.bf16.msra.mxu0 %v1070
      %1101 = vmatmul.bf16.gmra.mxu0 %v1082
      %v1102 = vpop.f32.mrf.mxu0
      %v1103 = vadd.f32 0.0, %v1102
      %v1104 = vpop.f32.mrf.mxu0
      %v1105 = vadd.f32 0.0, %v1104
      %1106 = vmatmul.bf16.gmra.mxu0 %v1085
      %v1107 = vpop.f32.mrf.mxu0
      %v1108 = vadd.f32 0.0, %v1107
      %v1109 = vpop.f32.mrf.mxu0
      %v1110 = vadd.f32 0.0, %v1109
      %1111 = vmatmul.bf16.gmra.mxu0 %v1088
      %v1112 = vpop.f32.mrf.mxu0
      %v1113 = vadd.f32 0.0, %v1112
      %v1114 = vpop.f32.mrf.mxu0
      %v1115 = vadd.f32 0.0, %v1114
      %1116 = vmatmul.bf16.gmra.mxu0 %v1091
      %v1117 = vpop.f32.mrf.mxu0
      %v1118 = vadd.f32 0.0, %v1117
      %v1119 = vpop.f32.mrf.mxu0
      %v1120 = vadd.f32 0.0, %v1119
      %1121 = vdwg.mxu0
      %1122 = vrot.lane.b32.xlu0 %v692, 112
      %v1123 = vpop.permute.xlu0 %1122
      %1124 = vrot.lane.b32.xlu0 %v693, 112
      %v1125 = vpop.permute.xlu0 %1124
      %1126 = vrot.lane.b32.xlu0 %v694, 112
      %v1127 = vpop.permute.xlu0 %1126
      %1128 = vrot.lane.b32.xlu0 %v695, 112
      %v1129 = vpop.permute.xlu0 %1128
      %1130 = vrot.lane.b32.xlu0 %v692, 80
      %v1131 = vpop.permute.xlu0 %1130
      %1132 = vrot.lane.b32.xlu0 %v693, 80
      %v1133 = vpop.permute.xlu0 %1132
      %1134 = vrot.lane.b32.xlu0 %v694, 80
      %v1135 = vpop.permute.xlu0 %1134
      %1136 = vrot.lane.b32.xlu0 %v695, 80
      %v1137 = vpop.permute.xlu0 %1136
      %v1139 = vsel %vm708, %v1123, 0
      %v1142 = vsel %vm708, %v1125, 0
      %v1145 = vsel %vm708, %v1127, 0
      %v1148 = vsel %vm708, %v1129, 0
      %v1151 = vsel %vm708, %v1131, 0
      %v1154 = vsel %vm708, %v1133, 0
      %v1157 = vsel %vm708, %v1135, 0
      %v1160 = vsel %vm708, %v1137, 0
      %1162 = vmatpush.bf16.xpose.msra.mxu0 0
      %1163 = vmatpush.bf16.xpose.msra.mxu0 0
      %1164 = vmatpush.bf16.xpose.msra.mxu0 0
      %1165 = vmatpush.bf16.xpose.msra.mxu0 0
      %1166 = vmatpush.bf16.xpose.msra.mxu0 %v1160
      %1167 = vmatpush.bf16.xpose.msra.mxu0 %v1157
      %1168 = vmatpush.bf16.xpose.msra.mxu0 %v1154
      %1169 = vmatpush.bf16.xpose.msra.mxu0 %v1151
      %1170 = vmatmul.bf16.gmra.mxu0 %v1139
      %v1171 = vpop.f32.mrf.mxu0
      %v1172 = vadd.f32 0.0, %v1171
      %v1173 = vpop.f32.mrf.mxu0
      %v1174 = vadd.f32 0.0, %v1173
      %1175 = vmatmul.bf16.gmra.mxu0 %v1142
      %v1176 = vpop.f32.mrf.mxu0
      %v1177 = vadd.f32 0.0, %v1176
      %v1178 = vpop.f32.mrf.mxu0
      %v1179 = vadd.f32 0.0, %v1178
      %1180 = vmatmul.bf16.gmra.mxu0 %v1145
      %v1181 = vpop.f32.mrf.mxu0
      %v1182 = vadd.f32 0.0, %v1181
      %v1183 = vpop.f32.mrf.mxu0
      %v1184 = vadd.f32 0.0, %v1183
      %1185 = vmatmul.bf16.gmra.mxu0 %v1148
      %v1186 = vpop.f32.mrf.mxu0
      %v1187 = vadd.f32 0.0, %v1186
      %v1188 = vpop.f32.mrf.mxu0
      %v1189 = vadd.f32 0.0, %v1188
      %1190 = vdwg.mxu0
      %v1191 = vsel %vm762, %v1172, -inf
      %1192 = vmax.xlane.f32.xlu0 %v1191
      %v1193 = vpop.xlane.xlu0 %1192
      %v1194 = vsel %vm762, %v1174, -inf
      %1195 = vmax.xlane.f32.xlu0 %v1194
      %v1196 = vpop.xlane.xlu0 %1195
      %v1197 = vsel %vm762, %v1177, -inf
      %1198 = vmax.xlane.f32.xlu0 %v1197
      %v1199 = vpop.xlane.xlu0 %1198
      %v1200 = vsel %vm762, %v1179, -inf
      %1201 = vmax.xlane.f32.xlu0 %v1200
      %v1202 = vpop.xlane.xlu0 %1201
      %v1203 = vsel %vm762, %v1182, -inf
      %1204 = vmax.xlane.f32.xlu0 %v1203
      %v1205 = vpop.xlane.xlu0 %1204
      %v1206 = vsel %vm762, %v1184, -inf
      %1207 = vmax.xlane.f32.xlu0 %v1206
      %v1208 = vpop.xlane.xlu0 %1207
      %v1209 = vsel %vm762, %v1187, -inf
      %1210 = vmax.xlane.f32.xlu0 %v1209
      %v1211 = vpop.xlane.xlu0 %1210
      %v1212 = vsel %vm762, %v1189, -inf
      %1213 = vmax.xlane.f32.xlu0 %v1212
      %v1214 = vpop.xlane.xlu0 %1213
      %v1215 = vsub.f32 %v1172, %v1193
      %v1216 = vsub.f32 %v1174, %v1196
      %v1217 = vsub.f32 %v1177, %v1199
      %v1218 = vsub.f32 %v1179, %v1202
      %v1219 = vsub.f32 %v1182, %v1205
      %v1220 = vsub.f32 %v1184, %v1208
      %v1221 = vsub.f32 %v1187, %v1211
      %v1222 = vsub.f32 %v1189, %v1214
      %v1223 = vmul.f32 %v1215, 1.442695
      %v1224 = vpow.pop %v1223
      %v1225 = vmul.f32 %v1216, 1.442695
      %v1226 = vpow.pop %v1225
      %v1227 = vmul.f32 %v1217, 1.442695
      %v1228 = vpow.pop %v1227
      %v1229 = vmul.f32 %v1218, 1.442695
      %v1230 = vpow.pop %v1229
      %v1231 = vmul.f32 %v1219, 1.442695
      %v1232 = vpow.pop %v1231
      %v1233 = vmul.f32 %v1220, 1.442695
      %v1234 = vpow.pop %v1233
      %v1235 = vmul.f32 %v1221, 1.442695
      %v1236 = vpow.pop %v1235
      %v1237 = vmul.f32 %v1222, 1.442695
      %v1238 = vpow.pop %v1237
      %v1239 = vsel %vm762, %v1224, 0.0
      %1240 = vadd.xlane.f32.xlu0 %v1239
      %v1241 = vpop.xlane.xlu0 %1240
      %v1242 = vsel %vm762, %v1226, 0.0
      %1243 = vadd.xlane.f32.xlu0 %v1242
      %v1244 = vpop.xlane.xlu0 %1243
      %v1245 = vsel %vm762, %v1228, 0.0
      %1246 = vadd.xlane.f32.xlu0 %v1245
      %v1247 = vpop.xlane.xlu0 %1246
      %v1248 = vsel %vm762, %v1230, 0.0
      %1249 = vadd.xlane.f32.xlu0 %v1248
      %v1250 = vpop.xlane.xlu0 %1249
      %v1251 = vsel %vm762, %v1232, 0.0
      %1252 = vadd.xlane.f32.xlu0 %v1251
      %v1253 = vpop.xlane.xlu0 %1252
      %v1254 = vsel %vm762, %v1234, 0.0
      %1255 = vadd.xlane.f32.xlu0 %v1254
      %v1256 = vpop.xlane.xlu0 %1255
      %v1257 = vsel %vm762, %v1236, 0.0
      %1258 = vadd.xlane.f32.xlu0 %v1257
      %v1259 = vpop.xlane.xlu0 %1258
      %v1260 = vsel %vm762, %v1238, 0.0
      %1261 = vadd.xlane.f32.xlu0 %v1260
      %v1262 = vpop.xlane.xlu0 %1261
      %v1263 = vrcp.pop %v1241
      %v1264 = vrcp.pop %v1244
      %v1265 = vrcp.pop %v1247
      %v1266 = vrcp.pop %v1250
      %v1267 = vrcp.pop %v1253
      %v1268 = vrcp.pop %v1256
      %v1269 = vrcp.pop %v1259
      %v1270 = vrcp.pop %v1262
      %v1271 = vmul.f32 %v1224, %v1263
      %v1272 = vmul.f32 %v1226, %v1264
      %v1273 = vmul.f32 %v1228, %v1265
      %v1274 = vmul.f32 %v1230, %v1266
      %v1275 = vmul.f32 %v1232, %v1267
      %v1276 = vmul.f32 %v1234, %v1268
      %v1277 = vmul.f32 %v1236, %v1269
      %v1278 = vmul.f32 %v1238, %v1270
      %v1279 = vpack.c.bf16 %v1272, %v1271
      %v1280 = vpack.c.bf16 %v1274, %v1273
      %v1281 = vpack.c.bf16 %v1276, %v1275
      %v1282 = vpack.c.bf16 %v1278, %v1277
      %1283 = vrot.lane.b32.xlu0 %v692, 48
      %v1284 = vpop.permute.xlu0 %1283
      %1285 = vrot.lane.b32.xlu0 %v693, 48
      %v1286 = vpop.permute.xlu0 %1285
      %1287 = vrot.lane.b32.xlu0 %v694, 48
      %v1288 = vpop.permute.xlu0 %1287
      %1289 = vrot.lane.b32.xlu0 %v695, 48
      %v1290 = vpop.permute.xlu0 %1289
      %v1296 = vsel %vm762, %v1279, 0
      %v1299 = vsel %vm762, %v1280, 0
      %v1302 = vsel %vm762, %v1281, 0
      %v1305 = vsel %vm762, %v1282, 0
      %1307 = vmatpush.bf16.msra.mxu0 0
      %1308 = vmatpush.bf16.msra.mxu0 0
      %1309 = vmatpush.bf16.msra.mxu0 0
      %1310 = vmatpush.bf16.msra.mxu0 0
      %1311 = vmatpush.bf16.msra.mxu0 %v1290
      %1312 = vmatpush.bf16.msra.mxu0 %v1288
      %1313 = vmatpush.bf16.msra.mxu0 %v1286
      %1314 = vmatpush.bf16.msra.mxu0 %v1284
      %1315 = vmatmul.bf16.gmra.mxu0 %v1296
      %v1316 = vpop.f32.mrf.mxu0
      %v1317 = vadd.f32 0.0, %v1316
      %v1318 = vpop.f32.mrf.mxu0
      %v1319 = vadd.f32 0.0, %v1318
      %1320 = vmatmul.bf16.gmra.mxu0 %v1299
      %v1321 = vpop.f32.mrf.mxu0
      %v1322 = vadd.f32 0.0, %v1321
      %v1323 = vpop.f32.mrf.mxu0
      %v1324 = vadd.f32 0.0, %v1323
      %1325 = vmatmul.bf16.gmra.mxu0 %v1302
      %v1326 = vpop.f32.mrf.mxu0
      %v1327 = vadd.f32 0.0, %v1326
      %v1328 = vpop.f32.mrf.mxu0
      %v1329 = vadd.f32 0.0, %v1328
      %1330 = vmatmul.bf16.gmra.mxu0 %v1305
      %v1331 = vpop.f32.mrf.mxu0
      %v1332 = vadd.f32 0.0, %v1331
      %v1333 = vpop.f32.mrf.mxu0
      %v1334 = vadd.f32 0.0, %v1333
      %1335 = vdwg.mxu0
      %1336 = vrot.lane.b32.xlu0 %v692, 104
      %v1337 = vpop.permute.xlu0 %1336
      %1338 = vrot.lane.b32.xlu0 %v693, 104
      %v1339 = vpop.permute.xlu0 %1338
      %1340 = vrot.lane.b32.xlu0 %v694, 104
      %v1341 = vpop.permute.xlu0 %1340
      %1342 = vrot.lane.b32.xlu0 %v695, 104
      %v1343 = vpop.permute.xlu0 %1342
      %1344 = vrot.lane.b32.xlu0 %v692, 72
      %v1345 = vpop.permute.xlu0 %1344
      %1346 = vrot.lane.b32.xlu0 %v693, 72
      %v1347 = vpop.permute.xlu0 %1346
      %1348 = vrot.lane.b32.xlu0 %v694, 72
      %v1349 = vpop.permute.xlu0 %1348
      %1350 = vrot.lane.b32.xlu0 %v695, 72
      %v1351 = vpop.permute.xlu0 %1350
      %v1353 = vsel %vm708, %v1337, 0
      %v1356 = vsel %vm708, %v1339, 0
      %v1359 = vsel %vm708, %v1341, 0
      %v1362 = vsel %vm708, %v1343, 0
      %v1365 = vsel %vm708, %v1345, 0
      %v1368 = vsel %vm708, %v1347, 0
      %v1371 = vsel %vm708, %v1349, 0
      %v1374 = vsel %vm708, %v1351, 0
      %1376 = vmatpush.bf16.xpose.msra.mxu0 0
      %1377 = vmatpush.bf16.xpose.msra.mxu0 0
      %1378 = vmatpush.bf16.xpose.msra.mxu0 0
      %1379 = vmatpush.bf16.xpose.msra.mxu0 0
      %1380 = vmatpush.bf16.xpose.msra.mxu0 %v1374
      %1381 = vmatpush.bf16.xpose.msra.mxu0 %v1371
      %1382 = vmatpush.bf16.xpose.msra.mxu0 %v1368
      %1383 = vmatpush.bf16.xpose.msra.mxu0 %v1365
      %1384 = vmatmul.bf16.gmra.mxu0 %v1353
      %v1385 = vpop.f32.mrf.mxu0
      %v1386 = vadd.f32 0.0, %v1385
      %v1387 = vpop.f32.mrf.mxu0
      %v1388 = vadd.f32 0.0, %v1387
      %1389 = vmatmul.bf16.gmra.mxu0 %v1356
      %v1390 = vpop.f32.mrf.mxu0
      %v1391 = vadd.f32 0.0, %v1390
      %v1392 = vpop.f32.mrf.mxu0
      %v1393 = vadd.f32 0.0, %v1392
      %1394 = vmatmul.bf16.gmra.mxu0 %v1359
      %v1395 = vpop.f32.mrf.mxu0
      %v1396 = vadd.f32 0.0, %v1395
      %v1397 = vpop.f32.mrf.mxu0
      %v1398 = vadd.f32 0.0, %v1397
      %1399 = vmatmul.bf16.gmra.mxu0 %v1362
      %v1400 = vpop.f32.mrf.mxu0
      %v1401 = vadd.f32 0.0, %v1400
      %v1402 = vpop.f32.mrf.mxu0
      %v1403 = vadd.f32 0.0, %v1402
      %1404 = vdwg.mxu0
      %v1405 = vsel %vm762, %v1386, -inf
      %1406 = vmax.xlane.f32.xlu0 %v1405
      %v1407 = vpop.xlane.xlu0 %1406
      %v1408 = vsel %vm762, %v1388, -inf
      %1409 = vmax.xlane.f32.xlu0 %v1408
      %v1410 = vpop.xlane.xlu0 %1409
      %v1411 = vsel %vm762, %v1391, -inf
      %1412 = vmax.xlane.f32.xlu0 %v1411
      %v1413 = vpop.xlane.xlu0 %1412
      %v1414 = vsel %vm762, %v1393, -inf
      %1415 = vmax.xlane.f32.xlu0 %v1414
      %v1416 = vpop.xlane.xlu0 %1415
      %v1417 = vsel %vm762, %v1396, -inf
      %1418 = vmax.xlane.f32.xlu0 %v1417
      %v1419 = vpop.xlane.xlu0 %1418
      %v1420 = vsel %vm762, %v1398, -inf
      %1421 = vmax.xlane.f32.xlu0 %v1420
      %v1422 = vpop.xlane.xlu0 %1421
      %v1423 = vsel %vm762, %v1401, -inf
      %1424 = vmax.xlane.f32.xlu0 %v1423
      %v1425 = vpop.xlane.xlu0 %1424
      %v1426 = vsel %vm762, %v1403, -inf
      %1427 = vmax.xlane.f32.xlu0 %v1426
      %v1428 = vpop.xlane.xlu0 %1427
      %v1429 = vsub.f32 %v1386, %v1407
      %v1430 = vsub.f32 %v1388, %v1410
      %v1431 = vsub.f32 %v1391, %v1413
      %v1432 = vsub.f32 %v1393, %v1416
      %v1433 = vsub.f32 %v1396, %v1419
      %v1434 = vsub.f32 %v1398, %v1422
      %v1435 = vsub.f32 %v1401, %v1425
      %v1436 = vsub.f32 %v1403, %v1428
      %v1437 = vmul.f32 %v1429, 1.442695
      %v1438 = vpow.pop %v1437
      %v1439 = vmul.f32 %v1430, 1.442695
      %v1440 = vpow.pop %v1439
      %v1441 = vmul.f32 %v1431, 1.442695
      %v1442 = vpow.pop %v1441
      %v1443 = vmul.f32 %v1432, 1.442695
      %v1444 = vpow.pop %v1443
      %v1445 = vmul.f32 %v1433, 1.442695
      %v1446 = vpow.pop %v1445
      %v1447 = vmul.f32 %v1434, 1.442695
      %v1448 = vpow.pop %v1447
      %v1449 = vmul.f32 %v1435, 1.442695
      %v1450 = vpow.pop %v1449
      %v1451 = vmul.f32 %v1436, 1.442695
      %v1452 = vpow.pop %v1451
      %v1453 = vsel %vm762, %v1438, 0.0
      %1454 = vadd.xlane.f32.xlu0 %v1453
      %v1455 = vpop.xlane.xlu0 %1454
      %v1456 = vsel %vm762, %v1440, 0.0
      %1457 = vadd.xlane.f32.xlu0 %v1456
      %v1458 = vpop.xlane.xlu0 %1457
      %v1459 = vsel %vm762, %v1442, 0.0
      %1460 = vadd.xlane.f32.xlu0 %v1459
      %v1461 = vpop.xlane.xlu0 %1460
      %v1462 = vsel %vm762, %v1444, 0.0
      %1463 = vadd.xlane.f32.xlu0 %v1462
      %v1464 = vpop.xlane.xlu0 %1463
      %v1465 = vsel %vm762, %v1446, 0.0
      %1466 = vadd.xlane.f32.xlu0 %v1465
      %v1467 = vpop.xlane.xlu0 %1466
      %v1468 = vsel %vm762, %v1448, 0.0
      %1469 = vadd.xlane.f32.xlu0 %v1468
      %v1470 = vpop.xlane.xlu0 %1469
      %v1471 = vsel %vm762, %v1450, 0.0
      %1472 = vadd.xlane.f32.xlu0 %v1471
      %v1473 = vpop.xlane.xlu0 %1472
      %v1474 = vsel %vm762, %v1452, 0.0
      %1475 = vadd.xlane.f32.xlu0 %v1474
      %v1476 = vpop.xlane.xlu0 %1475
      %v1477 = vrcp.pop %v1455
      %v1478 = vrcp.pop %v1458
      %v1479 = vrcp.pop %v1461
      %v1480 = vrcp.pop %v1464
      %v1481 = vrcp.pop %v1467
      %v1482 = vrcp.pop %v1470
      %v1483 = vrcp.pop %v1473
      %v1484 = vrcp.pop %v1476
      %v1485 = vmul.f32 %v1438, %v1477
      %v1486 = vmul.f32 %v1440, %v1478
      %v1487 = vmul.f32 %v1442, %v1479
      %v1488 = vmul.f32 %v1444, %v1480
      %v1489 = vmul.f32 %v1446, %v1481
      %v1490 = vmul.f32 %v1448, %v1482
      %v1491 = vmul.f32 %v1450, %v1483
      %v1492 = vmul.f32 %v1452, %v1484
      %v1493 = vpack.c.bf16 %v1486, %v1485
      %v1494 = vpack.c.bf16 %v1488, %v1487
      %v1495 = vpack.c.bf16 %v1490, %v1489
      %v1496 = vpack.c.bf16 %v1492, %v1491
      %1497 = vrot.lane.b32.xlu0 %v692, 40
      %v1498 = vpop.permute.xlu0 %1497
      %1499 = vrot.lane.b32.xlu0 %v693, 40
      %v1500 = vpop.permute.xlu0 %1499
      %1501 = vrot.lane.b32.xlu0 %v694, 40
      %v1502 = vpop.permute.xlu0 %1501
      %1503 = vrot.lane.b32.xlu0 %v695, 40
      %v1504 = vpop.permute.xlu0 %1503
      %v1510 = vsel %vm762, %v1493, 0
      %v1513 = vsel %vm762, %v1494, 0
      %v1516 = vsel %vm762, %v1495, 0
      %v1519 = vsel %vm762, %v1496, 0
      %1521 = vmatpush.bf16.msra.mxu0 0
      %1522 = vmatpush.bf16.msra.mxu0 0
      %1523 = vmatpush.bf16.msra.mxu0 0
      %1524 = vmatpush.bf16.msra.mxu0 0
      %1525 = vmatpush.bf16.msra.mxu0 %v1504
      %1526 = vmatpush.bf16.msra.mxu0 %v1502
      %1527 = vmatpush.bf16.msra.mxu0 %v1500
      %1528 = vmatpush.bf16.msra.mxu0 %v1498
      %1529 = vmatmul.bf16.gmra.mxu0 %v1510
      %v1530 = vpop.f32.mrf.mxu0
      %v1531 = vadd.f32 0.0, %v1530
      %v1532 = vpop.f32.mrf.mxu0
      %v1533 = vadd.f32 0.0, %v1532
      %1534 = vmatmul.bf16.gmra.mxu0 %v1513
      %v1535 = vpop.f32.mrf.mxu0
      %v1536 = vadd.f32 0.0, %v1535
      %v1537 = vpop.f32.mrf.mxu0
      %v1538 = vadd.f32 0.0, %v1537
      %1539 = vmatmul.bf16.gmra.mxu0 %v1516
      %v1540 = vpop.f32.mrf.mxu0
      %v1541 = vadd.f32 0.0, %v1540
      %v1542 = vpop.f32.mrf.mxu0
      %v1543 = vadd.f32 0.0, %v1542
      %1544 = vmatmul.bf16.gmra.mxu0 %v1519
      %v1545 = vpop.f32.mrf.mxu0
      %v1546 = vadd.f32 0.0, %v1545
      %v1547 = vpop.f32.mrf.mxu0
      %v1548 = vadd.f32 0.0, %v1547
      %1549 = vdwg.mxu0
      %1558 = vrot.lane.b32.xlu0 %v1103, 8
      %v1559 = vpop.permute.xlu0 %1558
      %1560 = vrot.lane.b32.xlu0 %v1105, 8
      %v1561 = vpop.permute.xlu0 %1560
      %1562 = vrot.lane.b32.xlu0 %v1108, 8
      %v1563 = vpop.permute.xlu0 %1562
      %1564 = vrot.lane.b32.xlu0 %v1110, 8
      %v1565 = vpop.permute.xlu0 %1564
      %1566 = vrot.lane.b32.xlu0 %v1113, 8
      %v1567 = vpop.permute.xlu0 %1566
      %1568 = vrot.lane.b32.xlu0 %v1115, 8
      %v1569 = vpop.permute.xlu0 %1568
      %1570 = vrot.lane.b32.xlu0 %v1118, 8
      %v1571 = vpop.permute.xlu0 %1570
      %1572 = vrot.lane.b32.xlu0 %v1120, 8
      %v1573 = vpop.permute.xlu0 %1572
      %1590 = vrot.lane.b32.xlu0 %v1317, 16
      %v1591 = vpop.permute.xlu0 %1590
      %1592 = vrot.lane.b32.xlu0 %v1319, 16
      %v1593 = vpop.permute.xlu0 %1592
      %1594 = vrot.lane.b32.xlu0 %v1322, 16
      %v1595 = vpop.permute.xlu0 %1594
      %1596 = vrot.lane.b32.xlu0 %v1324, 16
      %v1597 = vpop.permute.xlu0 %1596
      %1598 = vrot.lane.b32.xlu0 %v1327, 16
      %v1599 = vpop.permute.xlu0 %1598
      %1600 = vrot.lane.b32.xlu0 %v1329, 16
      %v1601 = vpop.permute.xlu0 %1600
      %1602 = vrot.lane.b32.xlu0 %v1332, 16
      %v1603 = vpop.permute.xlu0 %1602
      %1604 = vrot.lane.b32.xlu0 %v1334, 16
      %v1605 = vpop.permute.xlu0 %1604
      %1622 = vrot.lane.b32.xlu0 %v1531, 24
      %v1623 = vpop.permute.xlu0 %1622
      %1624 = vrot.lane.b32.xlu0 %v1533, 24
      %v1625 = vpop.permute.xlu0 %1624
      %1626 = vrot.lane.b32.xlu0 %v1536, 24
      %v1627 = vpop.permute.xlu0 %1626
      %1628 = vrot.lane.b32.xlu0 %v1538, 24
      %v1629 = vpop.permute.xlu0 %1628
      %1630 = vrot.lane.b32.xlu0 %v1541, 24
      %v1631 = vpop.permute.xlu0 %1630
      %1632 = vrot.lane.b32.xlu0 %v1543, 24
      %v1633 = vpop.permute.xlu0 %1632
      %1634 = vrot.lane.b32.xlu0 %v1546, 24
      %v1635 = vpop.permute.xlu0 %1634
      %1636 = vrot.lane.b32.xlu0 %v1548, 24
      %v1637 = vpop.permute.xlu0 %1636
      %v1646 = vsel %vm708, %v889, %v1559
      %v1647 = vsel %vm708, %v891, %v1561
      %v1648 = vsel %vm708, %v894, %v1563
      %v1649 = vsel %vm708, %v896, %v1565
      %v1650 = vsel %vm708, %v899, %v1567
      %v1651 = vsel %vm708, %v901, %v1569
      %v1652 = vsel %vm708, %v904, %v1571
      %v1653 = vsel %vm708, %v906, %v1573
      %vm1654 = vcmask 130048
      %v1655 = vsel %vm1654, %v1646, %v1591
      %v1656 = vsel %vm1654, %v1647, %v1593
      %v1657 = vsel %vm1654, %v1648, %v1595
      %v1658 = vsel %vm1654, %v1649, %v1597
      %v1659 = vsel %vm1654, %v1650, %v1599
      %v1660 = vsel %vm1654, %v1651, %v1601
      %v1661 = vsel %vm1654, %v1652, %v1603
      %v1662 = vsel %vm1654, %v1653, %v1605
      %vm1663 = vcmask 195584
      %v1664 = vsel %vm1663, %v1655, %v1623
      %v1665 = vsel %vm1663, %v1656, %v1625
      %v1666 = vsel %vm1663, %v1657, %v1627
      %v1667 = vsel %vm1663, %v1658, %v1629
      %v1668 = vsel %vm1663, %v1659, %v1631
      %v1669 = vsel %vm1663, %v1660, %v1633
      %v1670 = vsel %vm1663, %v1661, %v1635
      %v1671 = vsel %vm1663, %v1662, %v1637
      %v1672 = vpack.c.bf16 %v1665, %v1664
      %v1673 = vpack.c.bf16 %v1667, %v1666
      %v1674 = vpack.c.bf16 %v1669, %v1668
      %v1675 = vpack.c.bf16 %v1671, %v1670
      %v1676 = vld [vmem:[%s4] sm:$0xf]
      %v1677 = vld [vmem:[%s4 + $0x4] sm:$0xf]
      %v1678 = vld [vmem:[%s4 + $0x8] sm:$0xf]
      %v1679 = vld [vmem:[%s4 + $0xc] sm:$0xf]
      %v1684 = vunpack.c.l.b16 %v1676
      %v1685 = vunpack.c.l.b16 %v1677
      %v1686 = vunpack.c.l.b16 %v1678
      %v1687 = vunpack.c.l.b16 %v1679
      %v1688 = vpack.c.b16 %v1685, %v1684
      %v1689 = vpack.c.b16 %v1687, %v1686
      %v1693 = vsel %vm423, %v1672, 0
      %v1696 = vsel %vm423, %v1673, 0
      %v1699 = vsel %vm423, %v1674, 0
      %v1702 = vsel %vm423, %v1675, 0
      %1704 = vmatpush.bf16.msra.mxu0 0
      %1705 = vmatpush.bf16.msra.mxu0 0
      %1706 = vmatpush.bf16.msra.mxu0 0
      %1707 = vmatpush.bf16.msra.mxu0 0
      %1708 = vmatpush.bf16.msra.mxu0 0
      %1709 = vmatpush.bf16.msra.mxu0 0
      %1710 = vmatpush.bf16.msra.mxu0 %v1689
      %1711 = vmatpush.bf16.msra.mxu0 %v1688
      %1712 = vmatmul.bf16.gmra.mxu0 %v1693
      %v1713 = vpop.f32.mrf.mxu0
      %v1714 = vadd.f32 0.0, %v1713
      %v1715 = vpop.f32.mrf.mxu0
      %v1716 = vadd.f32 0.0, %v1715
      %1717 = vmatmul.bf16.gmra.mxu0 %v1696
      %v1718 = vpop.f32.mrf.mxu0
      %v1719 = vadd.f32 0.0, %v1718
      %v1720 = vpop.f32.mrf.mxu0
      %v1721 = vadd.f32 0.0, %v1720
      %1722 = vmatmul.bf16.gmra.mxu0 %v1699
      %v1723 = vpop.f32.mrf.mxu0
      %v1724 = vadd.f32 0.0, %v1723
      %v1725 = vpop.f32.mrf.mxu0
      %v1726 = vadd.f32 0.0, %v1725
      %1727 = vmatmul.bf16.gmra.mxu0 %v1702
      %v1728 = vpop.f32.mrf.mxu0
      %v1729 = vadd.f32 0.0, %v1728
      %v1730 = vpop.f32.mrf.mxu0
      %v1731 = vadd.f32 0.0, %v1730
      %1732 = vdwg.mxu0
      %v1733 = vadd.f32 %v415, %v1714
      %v1734 = vadd.f32 %v416, %v1716
      %v1735 = vadd.f32 %v417, %v1719
      %v1736 = vadd.f32 %v418, %v1721
      %v1737 = vadd.f32 %v419, %v1724
      %v1738 = vadd.f32 %v420, %v1726
      %v1739 = vadd.f32 %v421, %v1729
      %v1740 = vadd.f32 %v422, %v1731
      %v1741 = vld [vmem:[%s5] sm:$0x1]
      %v1743 = vperm.slane %v1741, 0
      %v1745 = vadd.f32 %v1733, %v1743
      %v1746 = vadd.f32 %v1734, %v1743
      %v1747 = vadd.f32 %v1735, %v1743
      %v1748 = vadd.f32 %v1736, %v1743
      %v1749 = vadd.f32 %v1737, %v1743
      %v1750 = vadd.f32 %v1738, %v1743
      %v1751 = vadd.f32 %v1739, %v1743
      %v1752 = vadd.f32 %v1740, %v1743
      %v1753 = vsel %vm423, %v1745, 0.0
      %1754 = vadd.xlane.f32.xlu0 %v1753
      %v1755 = vpop.xlane.xlu0 %1754
      %v1756 = vsel %vm423, %v1746, 0.0
      %1757 = vadd.xlane.f32.xlu0 %v1756
      %v1758 = vpop.xlane.xlu0 %1757
      %v1759 = vsel %vm423, %v1747, 0.0
      %1760 = vadd.xlane.f32.xlu0 %v1759
      %v1761 = vpop.xlane.xlu0 %1760
      %v1762 = vsel %vm423, %v1748, 0.0
      %1763 = vadd.xlane.f32.xlu0 %v1762
      %v1764 = vpop.xlane.xlu0 %1763
      %v1765 = vsel %vm423, %v1749, 0.0
      %1766 = vadd.xlane.f32.xlu0 %v1765
      %v1767 = vpop.xlane.xlu0 %1766
      %v1768 = vsel %vm423, %v1750, 0.0
      %1769 = vadd.xlane.f32.xlu0 %v1768
      %v1770 = vpop.xlane.xlu0 %1769
      %v1771 = vsel %vm423, %v1751, 0.0
      %1772 = vadd.xlane.f32.xlu0 %v1771
      %v1773 = vpop.xlane.xlu0 %1772
      %v1774 = vsel %vm423, %v1752, 0.0
      %1775 = vadd.xlane.f32.xlu0 %v1774
      %v1776 = vpop.xlane.xlu0 %1775
      %v1777 = vmul.f32 %v1755, %v454
      %v1778 = vmul.f32 %v1758, %v454
      %v1779 = vmul.f32 %v1761, %v454
      %v1780 = vmul.f32 %v1764, %v454
      %v1781 = vmul.f32 %v1767, %v454
      %v1782 = vmul.f32 %v1770, %v454
      %v1783 = vmul.f32 %v1773, %v454
      %v1784 = vmul.f32 %v1776, %v454
      %v1785 = vsub.f32 %v1745, %v1777
      %v1786 = vsub.f32 %v1746, %v1778
      %v1787 = vsub.f32 %v1747, %v1779
      %v1788 = vsub.f32 %v1748, %v1780
      %v1789 = vsub.f32 %v1749, %v1781
      %v1790 = vsub.f32 %v1750, %v1782
      %v1791 = vsub.f32 %v1751, %v1783
      %v1792 = vsub.f32 %v1752, %v1784
      %v1793 = vmul.f32 %v1785, %v1785
      %v1794 = vmul.f32 %v1786, %v1786
      %v1795 = vmul.f32 %v1787, %v1787
      %v1796 = vmul.f32 %v1788, %v1788
      %v1797 = vmul.f32 %v1789, %v1789
      %v1798 = vmul.f32 %v1790, %v1790
      %v1799 = vmul.f32 %v1791, %v1791
      %v1800 = vmul.f32 %v1792, %v1792
      %v1801 = vsel %vm423, %v1793, 0.0
      %1802 = vadd.xlane.f32.xlu0 %v1801
      %v1803 = vpop.xlane.xlu0 %1802
      %v1804 = vsel %vm423, %v1794, 0.0
      %1805 = vadd.xlane.f32.xlu0 %v1804
      %v1806 = vpop.xlane.xlu0 %1805
      %v1807 = vsel %vm423, %v1795, 0.0
      %1808 = vadd.xlane.f32.xlu0 %v1807
      %v1809 = vpop.xlane.xlu0 %1808
      %v1810 = vsel %vm423, %v1796, 0.0
      %1811 = vadd.xlane.f32.xlu0 %v1810
      %v1812 = vpop.xlane.xlu0 %1811
      %v1813 = vsel %vm423, %v1797, 0.0
      %1814 = vadd.xlane.f32.xlu0 %v1813
      %v1815 = vpop.xlane.xlu0 %1814
      %v1816 = vsel %vm423, %v1798, 0.0
      %1817 = vadd.xlane.f32.xlu0 %v1816
      %v1818 = vpop.xlane.xlu0 %1817
      %v1819 = vsel %vm423, %v1799, 0.0
      %1820 = vadd.xlane.f32.xlu0 %v1819
      %v1821 = vpop.xlane.xlu0 %1820
      %v1822 = vsel %vm423, %v1800, 0.0
      %1823 = vadd.xlane.f32.xlu0 %v1822
      %v1824 = vpop.xlane.xlu0 %1823
      %v1825 = vmul.f32 %v1803, %v454
      %v1826 = vmul.f32 %v1806, %v454
      %v1827 = vmul.f32 %v1809, %v454
      %v1828 = vmul.f32 %v1812, %v454
      %v1829 = vmul.f32 %v1815, %v454
      %v1830 = vmul.f32 %v1818, %v454
      %v1831 = vmul.f32 %v1821, %v454
      %v1832 = vmul.f32 %v1824, %v454
      %v1833 = vadd.f32 %v1825, 1e-05
      %v1834 = vadd.f32 %v1826, 1e-05
      %v1835 = vadd.f32 %v1827, 1e-05
      %v1836 = vadd.f32 %v1828, 1e-05
      %v1837 = vadd.f32 %v1829, 1e-05
      %v1838 = vadd.f32 %v1830, 1e-05
      %v1839 = vadd.f32 %v1831, 1e-05
      %v1840 = vadd.f32 %v1832, 1e-05
      %v1841 = vrsqrt.pop %v1833
      %v1842 = vmul.f32 %v1841, %v1833
      %v1843 = vmul.f32 %v1842, %v1841
      %v1844 = vmul.f32 0.5, %v1843
      %v1845 = vsub.f32 1.5, %v1844
      %v1846 = vmul.f32 %v1841, %v1845
      %vm1847 = vweird.f32 %v1833
      %vm1848 = vweird.f32 %v1841
      %vm1849 = vmor %vm1847, %vm1848
      %v1850 = vsel %vm1849, %v1841, %v1846
      %v1851 = vrsqrt.pop %v1834
      %v1852 = vmul.f32 %v1851, %v1834
      %v1853 = vmul.f32 %v1852, %v1851
      %v1854 = vmul.f32 0.5, %v1853
      %v1855 = vsub.f32 1.5, %v1854
      %v1856 = vmul.f32 %v1851, %v1855
      %vm1857 = vweird.f32 %v1834
      %vm1858 = vweird.f32 %v1851
      %vm1859 = vmor %vm1857, %vm1858
      %v1860 = vsel %vm1859, %v1851, %v1856
      %v1861 = vrsqrt.pop %v1835
      %v1862 = vmul.f32 %v1861, %v1835
      %v1863 = vmul.f32 %v1862, %v1861
      %v1864 = vmul.f32 0.5, %v1863
      %v1865 = vsub.f32 1.5, %v1864
      %v1866 = vmul.f32 %v1861, %v1865
      %vm1867 = vweird.f32 %v1835
      %vm1868 = vweird.f32 %v1861
      %vm1869 = vmor %vm1867, %vm1868
      %v1870 = vsel %vm1869, %v1861, %v1866
      %v1871 = vrsqrt.pop %v1836
      %v1872 = vmul.f32 %v1871, %v1836
      %v1873 = vmul.f32 %v1872, %v1871
      %v1874 = vmul.f32 0.5, %v1873
      %v1875 = vsub.f32 1.5, %v1874
      %v1876 = vmul.f32 %v1871, %v1875
      %vm1877 = vweird.f32 %v1836
      %vm1878 = vweird.f32 %v1871
      %vm1879 = vmor %vm1877, %vm1878
      %v1880 = vsel %vm1879, %v1871, %v1876
      %v1881 = vrsqrt.pop %v1837
      %v1882 = vmul.f32 %v1881, %v1837
      %v1883 = vmul.f32 %v1882, %v1881
      %v1884 = vmul.f32 0.5, %v1883
      %v1885 = vsub.f32 1.5, %v1884
      %v1886 = vmul.f32 %v1881, %v1885
      %vm1887 = vweird.f32 %v1837
      %vm1888 = vweird.f32 %v1881
      %vm1889 = vmor %vm1887, %vm1888
      %v1890 = vsel %vm1889, %v1881, %v1886
      %v1891 = vrsqrt.pop %v1838
      %v1892 = vmul.f32 %v1891, %v1838
      %v1893 = vmul.f32 %v1892, %v1891
      %v1894 = vmul.f32 0.5, %v1893
      %v1895 = vsub.f32 1.5, %v1894
      %v1896 = vmul.f32 %v1891, %v1895
      %vm1897 = vweird.f32 %v1838
      %vm1898 = vweird.f32 %v1891
      %vm1899 = vmor %vm1897, %vm1898
      %v1900 = vsel %vm1899, %v1891, %v1896
      %v1901 = vrsqrt.pop %v1839
      %v1902 = vmul.f32 %v1901, %v1839
      %v1903 = vmul.f32 %v1902, %v1901
      %v1904 = vmul.f32 0.5, %v1903
      %v1905 = vsub.f32 1.5, %v1904
      %v1906 = vmul.f32 %v1901, %v1905
      %vm1907 = vweird.f32 %v1839
      %vm1908 = vweird.f32 %v1901
      %vm1909 = vmor %vm1907, %vm1908
      %v1910 = vsel %vm1909, %v1901, %v1906
      %v1911 = vrsqrt.pop %v1840
      %v1912 = vmul.f32 %v1911, %v1840
      %v1913 = vmul.f32 %v1912, %v1911
      %v1914 = vmul.f32 0.5, %v1913
      %v1915 = vsub.f32 1.5, %v1914
      %v1916 = vmul.f32 %v1911, %v1915
      %vm1917 = vweird.f32 %v1840
      %vm1918 = vweird.f32 %v1911
      %vm1919 = vmor %vm1917, %vm1918
      %v1920 = vsel %vm1919, %v1911, %v1916
      %v1921 = vmul.f32 %v1785, %v1850
      %v1922 = vmul.f32 %v1786, %v1860
      %v1923 = vmul.f32 %v1787, %v1870
      %v1924 = vmul.f32 %v1788, %v1880
      %v1925 = vmul.f32 %v1789, %v1890
      %v1926 = vmul.f32 %v1790, %v1900
      %v1927 = vmul.f32 %v1791, %v1910
      %v1928 = vmul.f32 %v1792, %v1920
      %v1929 = vld [vmem:[%s6] sm:$0x1]
      %v1931 = vperm.slane %v1929, 0
      %v1933 = vmul.f32 %v1921, %v1931
      %v1934 = vmul.f32 %v1922, %v1931
      %v1935 = vmul.f32 %v1923, %v1931
      %v1936 = vmul.f32 %v1924, %v1931
      %v1937 = vmul.f32 %v1925, %v1931
      %v1938 = vmul.f32 %v1926, %v1931
      %v1939 = vmul.f32 %v1927, %v1931
      %v1940 = vmul.f32 %v1928, %v1931
      %v1941 = vld [vmem:[%s7] sm:$0x1]
      %v1943 = vperm.slane %v1941, 0
      %v1945 = vadd.f32 %v1933, %v1943
      %v1946 = vadd.f32 %v1934, %v1943
      %v1947 = vadd.f32 %v1935, %v1943
      %v1948 = vadd.f32 %v1936, %v1943
      %v1949 = vadd.f32 %v1937, %v1943
      %v1950 = vadd.f32 %v1938, %v1943
      %v1951 = vadd.f32 %v1939, %v1943
      %v1952 = vadd.f32 %v1940, %v1943
      %v1953 = vpack.c.bf16 %v1946, %v1945
      %v1954 = vpack.c.bf16 %v1948, %v1947
      %v1955 = vpack.c.bf16 %v1950, %v1949
      %v1956 = vpack.c.bf16 %v1952, %v1951
      %v1957 = vld [vmem:[%s8] sm:$0xf]
      %v1958 = vld [vmem:[%s8 + $0x4] sm:$0xf]
      %v1959 = vld [vmem:[%s8 + $0x8] sm:$0xf]
      %v1960 = vld [vmem:[%s8 + $0xc] sm:$0xf]
      %v1961 = vld [vmem:[%s9] sm:$0x1]
      %v1963 = vperm.slane %v1961, 0
      %v1969 = vunpack.c.l.b16 %v1957
      %v1970 = vunpack.c.l.b16 %v1958
      %v1971 = vunpack.c.l.b16 %v1959
      %v1972 = vunpack.c.l.b16 %v1960
      %v1973 = vpack.c.b16 %v1970, %v1969
      %v1974 = vpack.c.b16 %v1972, %v1971
      %v1978 = vsel %vm423, %v1953, 0
      %v1981 = vsel %vm423, %v1954, 0
      %v1984 = vsel %vm423, %v1955, 0
      %v1987 = vsel %vm423, %v1956, 0
      %1989 = vmatpush.bf16.msra.mxu0 0
      %1990 = vmatpush.bf16.msra.mxu0 0
      %1991 = vmatpush.bf16.msra.mxu0 0
      %1992 = vmatpush.bf16.msra.mxu0 0
      %1993 = vmatpush.bf16.msra.mxu0 0
      %1994 = vmatpush.bf16.msra.mxu0 0
      %1995 = vmatpush.bf16.msra.mxu0 %v1974
      %1996 = vmatpush.bf16.msra.mxu0 %v1973
      %1997 = vmatmul.bf16.gmra.mxu0 %v1978
      %v1998 = vpop.f32.mrf.mxu0
      %v1999 = vadd.f32 %v1963, %v1998
      %v2000 = vpop.f32.mrf.mxu0
      %v2001 = vadd.f32 %v1963, %v2000
      %2002 = vmatmul.bf16.gmra.mxu0 %v1981
      %v2003 = vpop.f32.mrf.mxu0
      %v2004 = vadd.f32 %v1963, %v2003
      %v2005 = vpop.f32.mrf.mxu0
      %v2006 = vadd.f32 %v1963, %v2005
      %2007 = vmatmul.bf16.gmra.mxu0 %v1984
      %v2008 = vpop.f32.mrf.mxu0
      %v2009 = vadd.f32 %v1963, %v2008
      %v2010 = vpop.f32.mrf.mxu0
      %v2011 = vadd.f32 %v1963, %v2010
      %2012 = vmatmul.bf16.gmra.mxu0 %v1987
      %v2013 = vpop.f32.mrf.mxu0
      %v2014 = vadd.f32 %v1963, %v2013
      %v2015 = vpop.f32.mrf.mxu0
      %v2016 = vadd.f32 %v1963, %v2015
      %2017 = vdwg.mxu0
      %v2018 = vmul.f32 %v1999, 0.5
      %v2019 = vmul.f32 %v2001, 0.5
      %v2020 = vmul.f32 %v2004, 0.5
      %v2021 = vmul.f32 %v2006, 0.5
      %v2022 = vmul.f32 %v2009, 0.5
      %v2023 = vmul.f32 %v2011, 0.5
      %v2024 = vmul.f32 %v2014, 0.5
      %v2025 = vmul.f32 %v2016, 0.5
      %v2026 = vmul.f32 %v1999, 0.70710677
      %v2027 = vmul.f32 %v2001, 0.70710677
      %v2028 = vmul.f32 %v2004, 0.70710677
      %v2029 = vmul.f32 %v2006, 0.70710677
      %v2030 = vmul.f32 %v2009, 0.70710677
      %v2031 = vmul.f32 %v2011, 0.70710677
      %v2032 = vmul.f32 %v2014, 0.70710677
      %v2033 = vmul.f32 %v2016, 0.70710677
      %vm2034 = vcmp.ge.f32.partialorder %v2026, 0.0
      %vm2035 = vcmp.ge.f32.partialorder %v2027, 0.0
      %vm2036 = vcmp.ge.f32.partialorder %v2028, 0.0
      %vm2037 = vcmp.ge.f32.partialorder %v2029, 0.0
      %vm2038 = vcmp.ge.f32.partialorder %v2030, 0.0
      %vm2039 = vcmp.ge.f32.partialorder %v2031, 0.0
      %vm2040 = vcmp.ge.f32.partialorder %v2032, 0.0
      %vm2041 = vcmp.ge.f32.partialorder %v2033, 0.0
      %v2042 = vsel %vm2034, 1.0, -1.0
      %v2043 = vsel %vm2035, 1.0, -1.0
      %v2044 = vsel %vm2036, 1.0, -1.0
      %v2045 = vsel %vm2037, 1.0, -1.0
      %v2046 = vsel %vm2038, 1.0, -1.0
      %v2047 = vsel %vm2039, 1.0, -1.0
      %v2048 = vsel %vm2040, 1.0, -1.0
      %v2049 = vsel %vm2041, 1.0, -1.0
      %v2050 = vand.u32 2147483647, %v2026
      %v2051 = vand.u32 2147483647, %v2027
      %v2052 = vand.u32 2147483647, %v2028
      %v2053 = vand.u32 2147483647, %v2029
      %v2054 = vand.u32 2147483647, %v2030
      %v2055 = vand.u32 2147483647, %v2031
      %v2056 = vand.u32 2147483647, %v2032
      %v2057 = vand.u32 2147483647, %v2033
      %v2058 = vmul.f32 %v2050, 0.3275911
      %v2059 = vmul.f32 %v2051, 0.3275911
      %v2060 = vmul.f32 %v2052, 0.3275911
      %v2061 = vmul.f32 %v2053, 0.3275911
      %v2062 = vmul.f32 %v2054, 0.3275911
      %v2063 = vmul.f32 %v2055, 0.3275911
      %v2064 = vmul.f32 %v2056, 0.3275911
      %v2065 = vmul.f32 %v2057, 0.3275911
      %v2066 = vadd.f32 %v2058, 1.0
      %v2067 = vadd.f32 %v2059, 1.0
      %v2068 = vadd.f32 %v2060, 1.0
      %v2069 = vadd.f32 %v2061, 1.0
      %v2070 = vadd.f32 %v2062, 1.0
      %v2071 = vadd.f32 %v2063, 1.0
      %v2072 = vadd.f32 %v2064, 1.0
      %v2073 = vadd.f32 %v2065, 1.0
      %v2074 = vrcp.pop %v2066
      %v2075 = vmul.f32 %v2066, %v2074
      %v2076 = vsub.f32 1.0, %v2075
      %v2077 = vmul.f32 %v2074, %v2076
      %v2078 = vadd.f32 %v2074, %v2077
      %vm2079 = vweird.f32 %v2066
      %vm2080 = vweird.f32 %v2074
      %vm2081 = vmor %vm2079, %vm2080
      %v2082 = vsel %vm2081, %v2074, %v2078
      %v2083 = vand.u32 2147483647, %v2066
      %vm2084 = vcmp.eq.f32.partialorder %v2083, 8.507059e+37
      %v2085 = vand.u32 %v2066, 2147483648
      %v2086 = vor.u32 1.1754944e-38, %v2085
      %v2087 = vsel %vm2084, %v2086, %v2082
      %v2088 = vmul.f32 1.0, %v2087
      %v2089 = vrcp.pop %v2067
      %v2090 = vmul.f32 %v2067, %v2089
      %v2091 = vsub.f32 1.0, %v2090
      %v2092 = vmul.f32 %v2089, %v2091
      %v2093 = vadd.f32 %v2089, %v2092
      %vm2094 = vweird.f32 %v2067
      %vm2095 = vweird.f32 %v2089
      %vm2096 = vmor %vm2094, %vm2095
      %v2097 = vsel %vm2096, %v2089, %v2093
      %v2098 = vand.u32 2147483647, %v2067
      %vm2099 = vcmp.eq.f32.partialorder %v2098, 8.507059e+37
      %v2100 = vand.u32 %v2067, 2147483648
      %v2101 = vor.u32 1.1754944e-38, %v2100
      %v2102 = vsel %vm2099, %v2101, %v2097
      %v2103 = vmul.f32 1.0, %v2102
      %v2104 = vrcp.pop %v2068
      %v2105 = vmul.f32 %v2068, %v2104
      %v2106 = vsub.f32 1.0, %v2105
      %v2107 = vmul.f32 %v2104, %v2106
      %v2108 = vadd.f32 %v2104, %v2107
      %vm2109 = vweird.f32 %v2068
      %vm2110 = vweird.f32 %v2104
      %vm2111 = vmor %vm2109, %vm2110
      %v2112 = vsel %vm2111, %v2104, %v2108
      %v2113 = vand.u32 2147483647, %v2068
      %vm2114 = vcmp.eq.f32.partialorder %v2113, 8.507059e+37
      %v2115 = vand.u32 %v2068, 2147483648
      %v2116 = vor.u32 1.1754944e-38, %v2115
      %v2117 = vsel %vm2114, %v2116, %v2112
      %v2118 = vmul.f32 1.0, %v2117
      %v2119 = vrcp.pop %v2069
      %v2120 = vmul.f32 %v2069, %v2119
      %v2121 = vsub.f32 1.0, %v2120
      %v2122 = vmul.f32 %v2119, %v2121
      %v2123 = vadd.f32 %v2119, %v2122
      %vm2124 = vweird.f32 %v2069
      %vm2125 = vweird.f32 %v2119
      %vm2126 = vmor %vm2124, %vm2125
      %v2127 = vsel %vm2126, %v2119, %v2123
      %v2128 = vand.u32 2147483647, %v2069
      %vm2129 = vcmp.eq.f32.partialorder %v2128, 8.507059e+37
      %v2130 = vand.u32 %v2069, 2147483648
      %v2131 = vor.u32 1.1754944e-38, %v2130
      %v2132 = vsel %vm2129, %v2131, %v2127
      %v2133 = vmul.f32 1.0, %v2132
      %v2134 = vrcp.pop %v2070
      %v2135 = vmul.f32 %v2070, %v2134
      %v2136 = vsub.f32 1.0, %v2135
      %v2137 = vmul.f32 %v2134, %v2136
      %v2138 = vadd.f32 %v2134, %v2137
      %vm2139 = vweird.f32 %v2070
      %vm2140 = vweird.f32 %v2134
      %vm2141 = vmor %vm2139, %vm2140
      %v2142 = vsel %vm2141, %v2134, %v2138
      %v2143 = vand.u32 2147483647, %v2070
      %vm2144 = vcmp.eq.f32.partialorder %v2143, 8.507059e+37
      %v2145 = vand.u32 %v2070, 2147483648
      %v2146 = vor.u32 1.1754944e-38, %v2145
      %v2147 = vsel %vm2144, %v2146, %v2142
      %v2148 = vmul.f32 1.0, %v2147
      %v2149 = vrcp.pop %v2071
      %v2150 = vmul.f32 %v2071, %v2149
      %v2151 = vsub.f32 1.0, %v2150
      %v2152 = vmul.f32 %v2149, %v2151
      %v2153 = vadd.f32 %v2149, %v2152
      %vm2154 = vweird.f32 %v2071
      %vm2155 = vweird.f32 %v2149
      %vm2156 = vmor %vm2154, %vm2155
      %v2157 = vsel %vm2156, %v2149, %v2153
      %v2158 = vand.u32 2147483647, %v2071
      %vm2159 = vcmp.eq.f32.partialorder %v2158, 8.507059e+37
      %v2160 = vand.u32 %v2071, 2147483648
      %v2161 = vor.u32 1.1754944e-38, %v2160
      %v2162 = vsel %vm2159, %v2161, %v2157
      %v2163 = vmul.f32 1.0, %v2162
      %v2164 = vrcp.pop %v2072
      %v2165 = vmul.f32 %v2072, %v2164
      %v2166 = vsub.f32 1.0, %v2165
      %v2167 = vmul.f32 %v2164, %v2166
      %v2168 = vadd.f32 %v2164, %v2167
      %vm2169 = vweird.f32 %v2072
      %vm2170 = vweird.f32 %v2164
      %vm2171 = vmor %vm2169, %vm2170
      %v2172 = vsel %vm2171, %v2164, %v2168
      %v2173 = vand.u32 2147483647, %v2072
      %vm2174 = vcmp.eq.f32.partialorder %v2173, 8.507059e+37
      %v2175 = vand.u32 %v2072, 2147483648
      %v2176 = vor.u32 1.1754944e-38, %v2175
      %v2177 = vsel %vm2174, %v2176, %v2172
      %v2178 = vmul.f32 1.0, %v2177
      %v2179 = vrcp.pop %v2073
      %v2180 = vmul.f32 %v2073, %v2179
      %v2181 = vsub.f32 1.0, %v2180
      %v2182 = vmul.f32 %v2179, %v2181
      %v2183 = vadd.f32 %v2179, %v2182
      %vm2184 = vweird.f32 %v2073
      %vm2185 = vweird.f32 %v2179
      %vm2186 = vmor %vm2184, %vm2185
      %v2187 = vsel %vm2186, %v2179, %v2183
      %v2188 = vand.u32 2147483647, %v2073
      %vm2189 = vcmp.eq.f32.partialorder %v2188, 8.507059e+37
      %v2190 = vand.u32 %v2073, 2147483648
      %v2191 = vor.u32 1.1754944e-38, %v2190
      %v2192 = vsel %vm2189, %v2191, %v2187
      %v2193 = vmul.f32 1.0, %v2192
      %v2194 = vmul.f32 %v2088, 1.0614054
      %v2195 = vmul.f32 %v2103, 1.0614054
      %v2196 = vmul.f32 %v2118, 1.0614054
      %v2197 = vmul.f32 %v2133, 1.0614054
      %v2198 = vmul.f32 %v2148, 1.0614054
      %v2199 = vmul.f32 %v2163, 1.0614054
      %v2200 = vmul.f32 %v2178, 1.0614054
      %v2201 = vmul.f32 %v2193, 1.0614054
      %v2202 = vadd.f32 %v2194, -1.4531521
      %v2203 = vadd.f32 %v2195, -1.4531521
      %v2204 = vadd.f32 %v2196, -1.4531521
      %v2205 = vadd.f32 %v2197, -1.4531521
      %v2206 = vadd.f32 %v2198, -1.4531521
      %v2207 = vadd.f32 %v2199, -1.4531521
      %v2208 = vadd.f32 %v2200, -1.4531521
      %v2209 = vadd.f32 %v2201, -1.4531521
      %v2210 = vmul.f32 %v2202, %v2088
      %v2211 = vmul.f32 %v2203, %v2103
      %v2212 = vmul.f32 %v2204, %v2118
      %v2213 = vmul.f32 %v2205, %v2133
      %v2214 = vmul.f32 %v2206, %v2148
      %v2215 = vmul.f32 %v2207, %v2163
      %v2216 = vmul.f32 %v2208, %v2178
      %v2217 = vmul.f32 %v2209, %v2193
      %v2218 = vadd.f32 %v2210, 1.4214138
      %v2219 = vadd.f32 %v2211, 1.4214138
      %v2220 = vadd.f32 %v2212, 1.4214138
      %v2221 = vadd.f32 %v2213, 1.4214138
      %v2222 = vadd.f32 %v2214, 1.4214138
      %v2223 = vadd.f32 %v2215, 1.4214138
      %v2224 = vadd.f32 %v2216, 1.4214138
      %v2225 = vadd.f32 %v2217, 1.4214138
      %v2226 = vmul.f32 %v2218, %v2088
      %v2227 = vmul.f32 %v2219, %v2103
      %v2228 = vmul.f32 %v2220, %v2118
      %v2229 = vmul.f32 %v2221, %v2133
      %v2230 = vmul.f32 %v2222, %v2148
      %v2231 = vmul.f32 %v2223, %v2163
      %v2232 = vmul.f32 %v2224, %v2178
      %v2233 = vmul.f32 %v2225, %v2193
      %v2234 = vadd.f32 %v2226, -0.28449672
      %v2235 = vadd.f32 %v2227, -0.28449672
      %v2236 = vadd.f32 %v2228, -0.28449672
      %v2237 = vadd.f32 %v2229, -0.28449672
      %v2238 = vadd.f32 %v2230, -0.28449672
      %v2239 = vadd.f32 %v2231, -0.28449672
      %v2240 = vadd.f32 %v2232, -0.28449672
      %v2241 = vadd.f32 %v2233, -0.28449672
      %v2242 = vmul.f32 %v2234, %v2088
      %v2243 = vmul.f32 %v2235, %v2103
      %v2244 = vmul.f32 %v2236, %v2118
      %v2245 = vmul.f32 %v2237, %v2133
      %v2246 = vmul.f32 %v2238, %v2148
      %v2247 = vmul.f32 %v2239, %v2163
      %v2248 = vmul.f32 %v2240, %v2178
      %v2249 = vmul.f32 %v2241, %v2193
      %v2250 = vadd.f32 %v2242, 0.2548296
      %v2251 = vadd.f32 %v2243, 0.2548296
      %v2252 = vadd.f32 %v2244, 0.2548296
      %v2253 = vadd.f32 %v2245, 0.2548296
      %v2254 = vadd.f32 %v2246, 0.2548296
      %v2255 = vadd.f32 %v2247, 0.2548296
      %v2256 = vadd.f32 %v2248, 0.2548296
      %v2257 = vadd.f32 %v2249, 0.2548296
      %v2258 = vmul.f32 %v2250, %v2088
      %v2259 = vmul.f32 %v2251, %v2103
      %v2260 = vmul.f32 %v2252, %v2118
      %v2261 = vmul.f32 %v2253, %v2133
      %v2262 = vmul.f32 %v2254, %v2148
      %v2263 = vmul.f32 %v2255, %v2163
      %v2264 = vmul.f32 %v2256, %v2178
      %v2265 = vmul.f32 %v2257, %v2193
      %v2266 = vsub.f32 0.0, %v2050
      %v2267 = vsub.f32 0.0, %v2051
      %v2268 = vsub.f32 0.0, %v2052
      %v2269 = vsub.f32 0.0, %v2053
      %v2270 = vsub.f32 0.0, %v2054
      %v2271 = vsub.f32 0.0, %v2055
      %v2272 = vsub.f32 0.0, %v2056
      %v2273 = vsub.f32 0.0, %v2057
      %v2274 = vmul.f32 %v2266, %v2050
      %v2275 = vmul.f32 %v2267, %v2051
      %v2276 = vmul.f32 %v2268, %v2052
      %v2277 = vmul.f32 %v2269, %v2053
      %v2278 = vmul.f32 %v2270, %v2054
      %v2279 = vmul.f32 %v2271, %v2055
      %v2280 = vmul.f32 %v2272, %v2056
      %v2281 = vmul.f32 %v2273, %v2057
      %v2282 = vmul.f32 %v2274, 1.442695
      %v2283 = vpow.pop %v2282
      %v2284 = vmul.f32 %v2275, 1.442695
      %v2285 = vpow.pop %v2284
      %v2286 = vmul.f32 %v2276, 1.442695
      %v2287 = vpow.pop %v2286
      %v2288 = vmul.f32 %v2277, 1.442695
      %v2289 = vpow.pop %v2288
      %v2290 = vmul.f32 %v2278, 1.442695
      %v2291 = vpow.pop %v2290
      %v2292 = vmul.f32 %v2279, 1.442695
      %v2293 = vpow.pop %v2292
      %v2294 = vmul.f32 %v2280, 1.442695
      %v2295 = vpow.pop %v2294
      %v2296 = vmul.f32 %v2281, 1.442695
      %v2297 = vpow.pop %v2296
      %v2298 = vmul.f32 %v2258, %v2283
      %v2299 = vmul.f32 %v2259, %v2285
      %v2300 = vmul.f32 %v2260, %v2287
      %v2301 = vmul.f32 %v2261, %v2289
      %v2302 = vmul.f32 %v2262, %v2291
      %v2303 = vmul.f32 %v2263, %v2293
      %v2304 = vmul.f32 %v2264, %v2295
      %v2305 = vmul.f32 %v2265, %v2297
      %v2306 = vsub.f32 1.0, %v2298
      %v2307 = vsub.f32 1.0, %v2299
      %v2308 = vsub.f32 1.0, %v2300
      %v2309 = vsub.f32 1.0, %v2301
      %v2310 = vsub.f32 1.0, %v2302
      %v2311 = vsub.f32 1.0, %v2303
      %v2312 = vsub.f32 1.0, %v2304
      %v2313 = vsub.f32 1.0, %v2305
      %v2314 = vmul.f32 %v2042, %v2306
      %v2315 = vmul.f32 %v2043, %v2307
      %v2316 = vmul.f32 %v2044, %v2308
      %v2317 = vmul.f32 %v2045, %v2309
      %v2318 = vmul.f32 %v2046, %v2310
      %v2319 = vmul.f32 %v2047, %v2311
      %v2320 = vmul.f32 %v2048, %v2312
      %v2321 = vmul.f32 %v2049, %v2313
      %v2322 = vadd.f32 %v2314, 1.0
      %v2323 = vadd.f32 %v2315, 1.0
      %v2324 = vadd.f32 %v2316, 1.0
      %v2325 = vadd.f32 %v2317, 1.0
      %v2326 = vadd.f32 %v2318, 1.0
      %v2327 = vadd.f32 %v2319, 1.0
      %v2328 = vadd.f32 %v2320, 1.0
      %v2329 = vadd.f32 %v2321, 1.0
      %v2330 = vmul.f32 %v2018, %v2322
      %v2331 = vmul.f32 %v2019, %v2323
      %v2332 = vmul.f32 %v2020, %v2324
      %v2333 = vmul.f32 %v2021, %v2325
      %v2334 = vmul.f32 %v2022, %v2326
      %v2335 = vmul.f32 %v2023, %v2327
      %v2336 = vmul.f32 %v2024, %v2328
      %v2337 = vmul.f32 %v2025, %v2329
      %v2338 = vpack.c.bf16 %v2331, %v2330
      %v2339 = vpack.c.bf16 %v2333, %v2332
      %v2340 = vpack.c.bf16 %v2335, %v2334
      %v2341 = vpack.c.bf16 %v2337, %v2336
      %v2342 = vld [vmem:[%s10] sm:$0xf]
      %v2343 = vld [vmem:[%s10 + $0x4] sm:$0xf]
      %v2344 = vld [vmem:[%s10 + $0x8] sm:$0xf]
      %v2345 = vld [vmem:[%s10 + $0xc] sm:$0xf]
      %v2346 = vld [vmem:[%s10 + $0x10] sm:$0xf]
      %v2347 = vld [vmem:[%s10 + $0x14] sm:$0xf]
      %v2348 = vld [vmem:[%s10 + $0x18] sm:$0xf]
      %v2349 = vld [vmem:[%s10 + $0x1c] sm:$0xf]
      %v2350 = vld [vmem:[%s10 + $0x20] sm:$0xf]
      %v2351 = vld [vmem:[%s10 + $0x24] sm:$0xf]
      %v2352 = vld [vmem:[%s10 + $0x28] sm:$0xf]
      %v2353 = vld [vmem:[%s10 + $0x2c] sm:$0xf]
      %v2354 = vld [vmem:[%s10 + $0x30] sm:$0xf]
      %v2355 = vld [vmem:[%s10 + $0x34] sm:$0xf]
      %v2356 = vld [vmem:[%s10 + $0x38] sm:$0xf]
      %v2357 = vld [vmem:[%s10 + $0x3c] sm:$0xf]
      %v2374 = vunpack.c.l.b16 %v2342
      %v2375 = vunpack.c.l.b16 %v2343
      %v2376 = vunpack.c.l.b16 %v2344
      %v2377 = vunpack.c.l.b16 %v2345
      %v2378 = vunpack.c.l.b16 %v2346
      %v2379 = vunpack.c.l.b16 %v2347
      %v2380 = vunpack.c.l.b16 %v2348
      %v2381 = vunpack.c.l.b16 %v2349
      %v2382 = vunpack.c.l.b16 %v2350
      %v2383 = vunpack.c.l.b16 %v2351
      %v2384 = vunpack.c.l.b16 %v2352
      %v2385 = vunpack.c.l.b16 %v2353
      %v2386 = vunpack.c.l.b16 %v2354
      %v2387 = vunpack.c.l.b16 %v2355
      %v2388 = vunpack.c.l.b16 %v2356
      %v2389 = vunpack.c.l.b16 %v2357
      %v2390 = vpack.c.b16 %v2375, %v2374
      %v2391 = vpack.c.b16 %v2377, %v2376
      %v2392 = vpack.c.b16 %v2379, %v2378
      %v2393 = vpack.c.b16 %v2381, %v2380
      %v2394 = vpack.c.b16 %v2383, %v2382
      %v2395 = vpack.c.b16 %v2385, %v2384
      %v2396 = vpack.c.b16 %v2387, %v2386
      %v2397 = vpack.c.b16 %v2389, %v2388
      %2406 = vmatpush.bf16.msra.mxu0 %v2397
      %2407 = vmatpush.bf16.msra.mxu0 %v2396
      %2408 = vmatpush.bf16.msra.mxu0 %v2395
      %2409 = vmatpush.bf16.msra.mxu0 %v2394
      %2410 = vmatpush.bf16.msra.mxu0 %v2393
      %2411 = vmatpush.bf16.msra.mxu0 %v2392
      %2412 = vmatpush.bf16.msra.mxu0 %v2391
      %2413 = vmatpush.bf16.msra.mxu0 %v2390
      %2414 = vmatmul.bf16.gmra.mxu0 %v2338
      %v2415 = vpop.f32.mrf.mxu0
      %v2416 = vadd.f32 0.0, %v2415
      %v2417 = vpop.f32.mrf.mxu0
      %v2418 = vadd.f32 0.0, %v2417
      %2419 = vmatmul.bf16.gmra.mxu0 %v2339
      %v2420 = vpop.f32.mrf.mxu0
      %v2421 = vadd.f32 0.0, %v2420
      %v2422 = vpop.f32.mrf.mxu0
      %v2423 = vadd.f32 0.0, %v2422
      %2424 = vmatmul.bf16.gmra.mxu0 %v2340
      %v2425 = vpop.f32.mrf.mxu0
      %v2426 = vadd.f32 0.0, %v2425
      %v2427 = vpop.f32.mrf.mxu0
      %v2428 = vadd.f32 0.0, %v2427
      %2429 = vmatmul.bf16.gmra.mxu0 %v2341
      %v2430 = vpop.f32.mrf.mxu0
      %v2431 = vadd.f32 0.0, %v2430
      %v2432 = vpop.f32.mrf.mxu0
      %v2433 = vadd.f32 0.0, %v2432
      %2434 = vdwg.mxu0
      %v2435 = vadd.f32 %v1745, %v2416
      %v2436 = vadd.f32 %v1746, %v2418
      %v2437 = vadd.f32 %v1747, %v2421
      %v2438 = vadd.f32 %v1748, %v2423
      %v2439 = vadd.f32 %v1749, %v2426
      %v2440 = vadd.f32 %v1750, %v2428
      %v2441 = vadd.f32 %v1751, %v2431
      %v2442 = vadd.f32 %v1752, %v2433
      %v2443 = vld [vmem:[%s11] sm:$0x1]
      %v2445 = vperm.slane %v2443, 0
      %v2447 = vadd.f32 %v2435, %v2445
      %v2448 = vadd.f32 %v2436, %v2445
      %v2449 = vadd.f32 %v2437, %v2445
      %v2450 = vadd.f32 %v2438, %v2445
      %v2451 = vadd.f32 %v2439, %v2445
      %v2452 = vadd.f32 %v2440, %v2445
      %v2453 = vadd.f32 %v2441, %v2445
      %v2454 = vadd.f32 %v2442, %v2445
      %2455 = vst.msk [vmem:[%s413] sm:$0xff] %vm423, %v2447
      %2456 = vst.msk [vmem:[%s413 + $0x8] sm:$0xff] %vm423, %v2448
      %2457 = vst.msk [vmem:[%s413 + $0x10] sm:$0xff] %vm423, %v2449
      %2458 = vst.msk [vmem:[%s413 + $0x18] sm:$0xff] %vm423, %v2450
      %2459 = vst.msk [vmem:[%s413 + $0x20] sm:$0xff] %vm423, %v2451
      %2460 = vst.msk [vmem:[%s413 + $0x28] sm:$0xff] %vm423, %v2452
      %2461 = vst.msk [vmem:[%s413 + $0x30] sm:$0xff] %vm423, %v2453
      %2462 = vst.msk [vmem:[%s413 + $0x38] sm:$0xff] %vm423, %v2454
      %p2463 = scmp.lt.s32.totalorder %s23, 1
      %s2464 = scalar_select %p2463, %s23, 1
      %s2465 = smul.addr %s2464, 8
      %s2466 = smul.addr %s2465, 8
      %s2467 = scalar_lea.vmem %s12, %s2466
      // Predicated region
      $region69: #{_lambda_.13} parent=67 // pred_check
        %p2468 = pneg %p298
      $region70: #{_lambda_.13} parent=67 // pred_check_branch
        %2470 = sbr.rel (%p2468) target = $region72
      $region71: #{_lambda_.13} parent=67 // pred_region
        _
      $region72: #{_lambda_.13} parent=67 // pred_fallthru
        _
    $region68: #{_lambda_.13} parent=5 // pred_fallthru
      _
    %p2471 = scmp.le.s32.totalorder 2, %s18
    // Predicated region
    $region73: #{_lambda_.13} parent=5 // pred_check
      %p2472 = pneg %p2471
    $region74: #{_lambda_.13} parent=5 // pred_check_branch
      %2474 = sbr.rel (%p2472) target = $region76
    $region75: #{_lambda_.13} parent=5 // pred_region
      %s2475 = ssub.s32 %s18, 2
      // Predicated region
      $region77: #{_lambda_.13} parent=75 // pred_check
        %p2476 = pneg %p304
      $region78: #{_lambda_.13} parent=75 // pred_check_branch
        %2478 = sbr.rel (%p2476) target = $region80
      $region79: #{_lambda_.13} parent=75 // pred_region
        %p2479 = scmp.lt.s32.totalorder %s24, 1
        %s2480 = scalar_select %p2479, %s24, 1
        %s2481 = smul.addr %s2480, 8
        %s2482 = smul.addr %s2481, 8
        %s2483 = scalar_lea.vmem %s12, %s2482
      $region80: #{_lambda_.13} parent=75 // pred_fallthru
        _
    $region76: #{_lambda_.13} parent=5 // pred_fallthru
      _
  $region6: #{_lambda_.13} parent=0 // loop_footer
    %s22 = sadd.s32 1, %s18
  $region7: #{_lambda_.13} parent=0 // loop_footer_branch
    %17 = sbr.rel target = $region3
  $region8: #{_lambda_.13} parent=0 // loop_exit
    _

// kernel: _lambda_.17
$region0: #{_lambda_.17}
  #allocation0 [shape = 'u32[]', space=smem, size = 0x4, offset = 0x4, fixed_abs, tag = 'smem constant byte address 0x4 - core index']
  #allocation1 [shape = 'u32[72,128]{1,0:T(1,128)}', space=vmem, size = 0x9000, scoped, tag = 'internal scratch']
  #allocation2 [shape = 'f32[1,1]{1,0:T(1,128)S(1)}', space=vmem, size = 0x200, scoped, tag = 'scoped memory for _lambda_.17']
  %s0 = inlined_call_operand.vmem [shape: f32[512,64], index: 0, kind: input, shape index: {}]
  %s1 = inlined_call_operand.vmem [shape: f32[1,64], index: 1, kind: input, shape index: {}]
  %s2 = inlined_call_operand.vmem [shape: f32[1,64], index: 2, kind: input, shape index: {}]
  %s3 = inlined_call_operand.vmem [shape: bf16[64,1], index: 3, kind: input, shape index: {}]
  %s4 = inlined_call_operand.<no memory space> [shape: f32[1,1], index: 4, kind: input, shape index: {}]
  %s5 = inlined_call_operand.vmem [shape: f32[512,1], index: 5, kind: output, shape index: {}]
  %s6 = sld [smem:[#allocation0]]
  $region30: #{_lambda_.17} parent=0
    _
  %s8 = ssub.s32 1, %s6
  %s9 = scalar_select 0, %s8, %s6
  %v10 = vstv %s4
  %11 = vst [vmem:[#allocation2] sm:$0x1] %v10
  // Predicated region
  $region2: #{_lambda_.17} parent=0 // pred_check
    _
  $region3: #{_lambda_.17} parent=0 // pred_check_branch
    %13 = sbr.rel (0) target = $region5
  $region4: #{_lambda_.17} parent=0 // pred_region
    _
  $region5: #{_lambda_.17} parent=0 // pred_fallthru
    _
  // Predicated region
  $region6: #{_lambda_.17} parent=0 // pred_check
    _
  $region7: #{_lambda_.17} parent=0 // pred_check_branch
    %15 = sbr.rel (0) target = $region9
  $region8: #{_lambda_.17} parent=0 // pred_region
    _
  $region9: #{_lambda_.17} parent=0 // pred_fallthru
    _
  // Predicated region
  $region10: #{_lambda_.17} parent=0 // pred_check
    _
  $region11: #{_lambda_.17} parent=0 // pred_check_branch
    %17 = sbr.rel (0) target = $region13
  $region12: #{_lambda_.17} parent=0 // pred_region
    _
  $region13: #{_lambda_.17} parent=0 // pred_fallthru
    _
  // Predicated region
  $region14: #{_lambda_.17} parent=0 // pred_check
    _
  $region15: #{_lambda_.17} parent=0 // pred_check_branch
    %19 = sbr.rel (0) target = $region17
  $region16: #{_lambda_.17} parent=0 // pred_region
    _
  $region17: #{_lambda_.17} parent=0 // pred_fallthru
    _
  // Predicated region
  $region18: #{_lambda_.17} parent=0 // pred_check
    _
  $region19: #{_lambda_.17} parent=0 // pred_check_branch
    %21 = sbr.rel (0) target = $region21
  $region20: #{_lambda_.17} parent=0 // pred_region
    _
  $region21: #{_lambda_.17} parent=0 // pred_fallthru
    _
  %v23 = vld [vmem:[%s0] sm:$0xff]
  %v24 = vld [vmem:[%s0 + $0x8] sm:$0xff]
  %v25 = vld [vmem:[%s0 + $0x10] sm:$0xff]
  %v26 = vld [vmem:[%s0 + $0x18] sm:$0xff]
  %v27 = vld [vmem:[%s0 + $0x20] sm:$0xff]
  %v28 = vld [vmem:[%s0 + $0x28] sm:$0xff]
  %v29 = vld [vmem:[%s0 + $0x30] sm:$0xff]
  %v30 = vld [vmem:[%s0 + $0x38] sm:$0xff]
  %v31 = vld [vmem:[%s0 + $0x40] sm:$0xff]
  %v32 = vld [vmem:[%s0 + $0x48] sm:$0xff]
  %v33 = vld [vmem:[%s0 + $0x50] sm:$0xff]
  %v34 = vld [vmem:[%s0 + $0x58] sm:$0xff]
  %v35 = vld [vmem:[%s0 + $0x60] sm:$0xff]
  %v36 = vld [vmem:[%s0 + $0x68] sm:$0xff]
  %v37 = vld [vmem:[%s0 + $0x70] sm:$0xff]
  %v38 = vld [vmem:[%s0 + $0x78] sm:$0xff]
  %v39 = vld [vmem:[%s0 + $0x80] sm:$0xff]
  %v40 = vld [vmem:[%s0 + $0x88] sm:$0xff]
  %v41 = vld [vmem:[%s0 + $0x90] sm:$0xff]
  %v42 = vld [vmem:[%s0 + $0x98] sm:$0xff]
  %v43 = vld [vmem:[%s0 + $0xa0] sm:$0xff]
  %v44 = vld [vmem:[%s0 + $0xa8] sm:$0xff]
  %v45 = vld [vmem:[%s0 + $0xb0] sm:$0xff]
  %v46 = vld [vmem:[%s0 + $0xb8] sm:$0xff]
  %v47 = vld [vmem:[%s0 + $0xc0] sm:$0xff]
  %v48 = vld [vmem:[%s0 + $0xc8] sm:$0xff]
  %v49 = vld [vmem:[%s0 + $0xd0] sm:$0xff]
  %v50 = vld [vmem:[%s0 + $0xd8] sm:$0xff]
  %v51 = vld [vmem:[%s0 + $0xe0] sm:$0xff]
  %v52 = vld [vmem:[%s0 + $0xe8] sm:$0xff]
  %v53 = vld [vmem:[%s0 + $0xf0] sm:$0xff]
  %v54 = vld [vmem:[%s0 + $0xf8] sm:$0xff]
  %v55 = vld [vmem:[%s0 + $0x100] sm:$0xff]
  %v56 = vld [vmem:[%s0 + $0x108] sm:$0xff]
  %v57 = vld [vmem:[%s0 + $0x110] sm:$0xff]
  %v58 = vld [vmem:[%s0 + $0x118] sm:$0xff]
  %v59 = vld [vmem:[%s0 + $0x120] sm:$0xff]
  %v60 = vld [vmem:[%s0 + $0x128] sm:$0xff]
  %v61 = vld [vmem:[%s0 + $0x130] sm:$0xff]
  %v62 = vld [vmem:[%s0 + $0x138] sm:$0xff]
  %v63 = vld [vmem:[%s0 + $0x140] sm:$0xff]
  %v64 = vld [vmem:[%s0 + $0x148] sm:$0xff]
  %v65 = vld [vmem:[%s0 + $0x150] sm:$0xff]
  %v66 = vld [vmem:[%s0 + $0x158] sm:$0xff]
  %v67 = vld [vmem:[%s0 + $0x160] sm:$0xff]
  %v68 = vld [vmem:[%s0 + $0x168] sm:$0xff]
  %v69 = vld [vmem:[%s0 + $0x170] sm:$0xff]
  %v70 = vld [vmem:[%s0 + $0x178] sm:$0xff]
  %v71 = vld [vmem:[%s0 + $0x180] sm:$0xff]
  %v72 = vld [vmem:[%s0 + $0x188] sm:$0xff]
  %v73 = vld [vmem:[%s0 + $0x190] sm:$0xff]
  %v74 = vld [vmem:[%s0 + $0x198] sm:$0xff]
  %v75 = vld [vmem:[%s0 + $0x1a0] sm:$0xff]
  %v76 = vld [vmem:[%s0 + $0x1a8] sm:$0xff]
  %v77 = vld [vmem:[%s0 + $0x1b0] sm:$0xff]
  %v78 = vld [vmem:[%s0 + $0x1b8] sm:$0xff]
  %v79 = vld [vmem:[%s0 + $0x1c0] sm:$0xff]
  %v80 = vld [vmem:[%s0 + $0x1c8] sm:$0xff]
  %v81 = vld [vmem:[%s0 + $0x1d0] sm:$0xff]
  %v82 = vld [vmem:[%s0 + $0x1d8] sm:$0xff]
  %v83 = vld [vmem:[%s0 + $0x1e0] sm:$0xff]
  %v84 = vld [vmem:[%s0 + $0x1e8] sm:$0xff]
  %v85 = vld [vmem:[%s0 + $0x1f0] sm:$0xff]
  %v86 = vld [vmem:[%s0 + $0x1f8] sm:$0xff]
  %v87 = vld [vmem:[%s1] sm:$0x1]
  %v89 = vperm.slane %v87, 0
  %v91 = vmul.f32 %v23, %v89
  %v92 = vmul.f32 %v24, %v89
  %v93 = vmul.f32 %v25, %v89
  %v94 = vmul.f32 %v26, %v89
  %v95 = vmul.f32 %v27, %v89
  %v96 = vmul.f32 %v28, %v89
  %v97 = vmul.f32 %v29, %v89
  %v98 = vmul.f32 %v30, %v89
  %v99 = vmul.f32 %v31, %v89
  %v100 = vmul.f32 %v32, %v89
  %v101 = vmul.f32 %v33, %v89
  %v102 = vmul.f32 %v34, %v89
  %v103 = vmul.f32 %v35, %v89
  %v104 = vmul.f32 %v36, %v89
  %v105 = vmul.f32 %v37, %v89
  %v106 = vmul.f32 %v38, %v89
  %v107 = vmul.f32 %v39, %v89
  %v108 = vmul.f32 %v40, %v89
  %v109 = vmul.f32 %v41, %v89
  %v110 = vmul.f32 %v42, %v89
  %v111 = vmul.f32 %v43, %v89
  %v112 = vmul.f32 %v44, %v89
  %v113 = vmul.f32 %v45, %v89
  %v114 = vmul.f32 %v46, %v89
  %v115 = vmul.f32 %v47, %v89
  %v116 = vmul.f32 %v48, %v89
  %v117 = vmul.f32 %v49, %v89
  %v118 = vmul.f32 %v50, %v89
  %v119 = vmul.f32 %v51, %v89
  %v120 = vmul.f32 %v52, %v89
  %v121 = vmul.f32 %v53, %v89
  %v122 = vmul.f32 %v54, %v89
  %v123 = vmul.f32 %v55, %v89
  %v124 = vmul.f32 %v56, %v89
  %v125 = vmul.f32 %v57, %v89
  %v126 = vmul.f32 %v58, %v89
  %v127 = vmul.f32 %v59, %v89
  %v128 = vmul.f32 %v60, %v89
  %v129 = vmul.f32 %v61, %v89
  %v130 = vmul.f32 %v62, %v89
  %v131 = vmul.f32 %v63, %v89
  %v132 = vmul.f32 %v64, %v89
  %v133 = vmul.f32 %v65, %v89
  %v134 = vmul.f32 %v66, %v89
  %v135 = vmul.f32 %v67, %v89
  %v136 = vmul.f32 %v68, %v89
  %v137 = vmul.f32 %v69, %v89
  %v138 = vmul.f32 %v70, %v89
  %v139 = vmul.f32 %v71, %v89
  %v140 = vmul.f32 %v72, %v89
  %v141 = vmul.f32 %v73, %v89
  %v142 = vmul.f32 %v74, %v89
  %v143 = vmul.f32 %v75, %v89
  %v144 = vmul.f32 %v76, %v89
  %v145 = vmul.f32 %v77, %v89
  %v146 = vmul.f32 %v78, %v89
  %v147 = vmul.f32 %v79, %v89
  %v148 = vmul.f32 %v80, %v89
  %v149 = vmul.f32 %v81, %v89
  %v150 = vmul.f32 %v82, %v89
  %v151 = vmul.f32 %v83, %v89
  %v152 = vmul.f32 %v84, %v89
  %v153 = vmul.f32 %v85, %v89
  %v154 = vmul.f32 %v86, %v89
  %v155 = vld [vmem:[%s2] sm:$0x1]
  %v157 = vperm.slane %v155, 0
  %v159 = vadd.f32 %v91, %v157
  %v160 = vadd.f32 %v92, %v157
  %v161 = vadd.f32 %v93, %v157
  %v162 = vadd.f32 %v94, %v157
  %v163 = vadd.f32 %v95, %v157
  %v164 = vadd.f32 %v96, %v157
  %v165 = vadd.f32 %v97, %v157
  %v166 = vadd.f32 %v98, %v157
  %v167 = vadd.f32 %v99, %v157
  %v168 = vadd.f32 %v100, %v157
  %v169 = vadd.f32 %v101, %v157
  %v170 = vadd.f32 %v102, %v157
  %v171 = vadd.f32 %v103, %v157
  %v172 = vadd.f32 %v104, %v157
  %v173 = vadd.f32 %v105, %v157
  %v174 = vadd.f32 %v106, %v157
  %v175 = vadd.f32 %v107, %v157
  %v176 = vadd.f32 %v108, %v157
  %v177 = vadd.f32 %v109, %v157
  %v178 = vadd.f32 %v110, %v157
  %v179 = vadd.f32 %v111, %v157
  %v180 = vadd.f32 %v112, %v157
  %v181 = vadd.f32 %v113, %v157
  %v182 = vadd.f32 %v114, %v157
  %v183 = vadd.f32 %v115, %v157
  %v184 = vadd.f32 %v116, %v157
  %v185 = vadd.f32 %v117, %v157
  %v186 = vadd.f32 %v118, %v157
  %v187 = vadd.f32 %v119, %v157
  %v188 = vadd.f32 %v120, %v157
  %v189 = vadd.f32 %v121, %v157
  %v190 = vadd.f32 %v122, %v157
  %v191 = vadd.f32 %v123, %v157
  %v192 = vadd.f32 %v124, %v157
  %v193 = vadd.f32 %v125, %v157
  %v194 = vadd.f32 %v126, %v157
  %v195 = vadd.f32 %v127, %v157
  %v196 = vadd.f32 %v128, %v157
  %v197 = vadd.f32 %v129, %v157
  %v198 = vadd.f32 %v130, %v157
  %v199 = vadd.f32 %v131, %v157
  %v200 = vadd.f32 %v132, %v157
  %v201 = vadd.f32 %v133, %v157
  %v202 = vadd.f32 %v134, %v157
  %v203 = vadd.f32 %v135, %v157
  %v204 = vadd.f32 %v136, %v157
  %v205 = vadd.f32 %v137, %v157
  %v206 = vadd.f32 %v138, %v157
  %v207 = vadd.f32 %v139, %v157
  %v208 = vadd.f32 %v140, %v157
  %v209 = vadd.f32 %v141, %v157
  %v210 = vadd.f32 %v142, %v157
  %v211 = vadd.f32 %v143, %v157
  %v212 = vadd.f32 %v144, %v157
  %v213 = vadd.f32 %v145, %v157
  %v214 = vadd.f32 %v146, %v157
  %v215 = vadd.f32 %v147, %v157
  %v216 = vadd.f32 %v148, %v157
  %v217 = vadd.f32 %v149, %v157
  %v218 = vadd.f32 %v150, %v157
  %v219 = vadd.f32 %v151, %v157
  %v220 = vadd.f32 %v152, %v157
  %v221 = vadd.f32 %v153, %v157
  %v222 = vadd.f32 %v154, %v157
  %v223 = vmax.f32 %v159, 0.0
  %v224 = vmax.f32 %v160, 0.0
  %v225 = vmax.f32 %v161, 0.0
  %v226 = vmax.f32 %v162, 0.0
  %v227 = vmax.f32 %v163, 0.0
  %v228 = vmax.f32 %v164, 0.0
  %v229 = vmax.f32 %v165, 0.0
  %v230 = vmax.f32 %v166, 0.0
  %v231 = vmax.f32 %v167, 0.0
  %v232 = vmax.f32 %v168, 0.0
  %v233 = vmax.f32 %v169, 0.0
  %v234 = vmax.f32 %v170, 0.0
  %v235 = vmax.f32 %v171, 0.0
  %v236 = vmax.f32 %v172, 0.0
  %v237 = vmax.f32 %v173, 0.0
  %v238 = vmax.f32 %v174, 0.0
  %v239 = vmax.f32 %v175, 0.0
  %v240 = vmax.f32 %v176, 0.0
  %v241 = vmax.f32 %v177, 0.0
  %v242 = vmax.f32 %v178, 0.0
  %v243 = vmax.f32 %v179, 0.0
  %v244 = vmax.f32 %v180, 0.0
  %v245 = vmax.f32 %v181, 0.0
  %v246 = vmax.f32 %v182, 0.0
  %v247 = vmax.f32 %v183, 0.0
  %v248 = vmax.f32 %v184, 0.0
  %v249 = vmax.f32 %v185, 0.0
  %v250 = vmax.f32 %v186, 0.0
  %v251 = vmax.f32 %v187, 0.0
  %v252 = vmax.f32 %v188, 0.0
  %v253 = vmax.f32 %v189, 0.0
  %v254 = vmax.f32 %v190, 0.0
  %v255 = vmax.f32 %v191, 0.0
  %v256 = vmax.f32 %v192, 0.0
  %v257 = vmax.f32 %v193, 0.0
  %v258 = vmax.f32 %v194, 0.0
  %v259 = vmax.f32 %v195, 0.0
  %v260 = vmax.f32 %v196, 0.0
  %v261 = vmax.f32 %v197, 0.0
  %v262 = vmax.f32 %v198, 0.0
  %v263 = vmax.f32 %v199, 0.0
  %v264 = vmax.f32 %v200, 0.0
  %v265 = vmax.f32 %v201, 0.0
  %v266 = vmax.f32 %v202, 0.0
  %v267 = vmax.f32 %v203, 0.0
  %v268 = vmax.f32 %v204, 0.0
  %v269 = vmax.f32 %v205, 0.0
  %v270 = vmax.f32 %v206, 0.0
  %v271 = vmax.f32 %v207, 0.0
  %v272 = vmax.f32 %v208, 0.0
  %v273 = vmax.f32 %v209, 0.0
  %v274 = vmax.f32 %v210, 0.0
  %v275 = vmax.f32 %v211, 0.0
  %v276 = vmax.f32 %v212, 0.0
  %v277 = vmax.f32 %v213, 0.0
  %v278 = vmax.f32 %v214, 0.0
  %v279 = vmax.f32 %v215, 0.0
  %v280 = vmax.f32 %v216, 0.0
  %v281 = vmax.f32 %v217, 0.0
  %v282 = vmax.f32 %v218, 0.0
  %v283 = vmax.f32 %v219, 0.0
  %v284 = vmax.f32 %v220, 0.0
  %v285 = vmax.f32 %v221, 0.0
  %v286 = vmax.f32 %v222, 0.0
  %v287 = vpack.c.bf16 %v224, %v223
  %v288 = vpack.c.bf16 %v226, %v225
  %v289 = vpack.c.bf16 %v228, %v227
  %v290 = vpack.c.bf16 %v230, %v229
  %v291 = vpack.c.bf16 %v232, %v231
  %v292 = vpack.c.bf16 %v234, %v233
  %v293 = vpack.c.bf16 %v236, %v235
  %v294 = vpack.c.bf16 %v238, %v237
  %v295 = vpack.c.bf16 %v240, %v239
  %v296 = vpack.c.bf16 %v242, %v241
  %v297 = vpack.c.bf16 %v244, %v243
  %v298 = vpack.c.bf16 %v246, %v245
  %v299 = vpack.c.bf16 %v248, %v247
  %v300 = vpack.c.bf16 %v250, %v249
  %v301 = vpack.c.bf16 %v252, %v251
  %v302 = vpack.c.bf16 %v254, %v253
  %v303 = vpack.c.bf16 %v256, %v255
  %v304 = vpack.c.bf16 %v258, %v257
  %v305 = vpack.c.bf16 %v260, %v259
  %v306 = vpack.c.bf16 %v262, %v261
  %v307 = vpack.c.bf16 %v264, %v263
  %v308 = vpack.c.bf16 %v266, %v265
  %v309 = vpack.c.bf16 %v268, %v267
  %v310 = vpack.c.bf16 %v270, %v269
  %v311 = vpack.c.bf16 %v272, %v271
  %v312 = vpack.c.bf16 %v274, %v273
  %v313 = vpack.c.bf16 %v276, %v275
  %v314 = vpack.c.bf16 %v278, %v277
  %v315 = vpack.c.bf16 %v280, %v279
  %v316 = vpack.c.bf16 %v282, %v281
  %v317 = vpack.c.bf16 %v284, %v283
  %v318 = vpack.c.bf16 %v286, %v285
  %v319 = vld [vmem:[%s3] sm:$0xf]
  %v320 = vld [vmem:[%s3 + $0x4] sm:$0xf]
  %v321 = vld [vmem:[%s3 + $0x8] sm:$0xf]
  %v322 = vld [vmem:[%s3 + $0xc] sm:$0xf]
  %v323 = vld [vmem:[%s3 + $0x10] sm:$0xf]
  %v324 = vld [vmem:[%s3 + $0x14] sm:$0xf]
  %v325 = vld [vmem:[%s3 + $0x18] sm:$0xf]
  %v326 = vld [vmem:[%s3 + $0x1c] sm:$0xf]
  %v327 = vld [vmem:[#allocation2] sm:$0x1]
  %v329 = vperm.slane %v327, 0
  %v339 = vunpack.c.l.b16 %v319
  %v340 = vunpack.c.l.b16 %v320
  %v341 = vunpack.c.l.b16 %v321
  %v342 = vunpack.c.l.b16 %v322
  %v343 = vunpack.c.l.b16 %v323
  %v344 = vunpack.c.l.b16 %v324
  %v345 = vunpack.c.l.b16 %v325
  %v346 = vunpack.c.l.b16 %v326
  %v347 = vpack.c.b16 %v340, %v339
  %v348 = vpack.c.b16 %v342, %v341
  %v349 = vpack.c.b16 %v344, %v343
  %v350 = vpack.c.b16 %v346, %v345
  %vm355 = vcmask 523264
  %v357 = vsel %vm355, %v287, 0
  %v360 = vsel %vm355, %v288, 0
  %v363 = vsel %vm355, %v289, 0
  %v366 = vsel %vm355, %v290, 0
  %v369 = vsel %vm355, %v291, 0
  %v372 = vsel %vm355, %v292, 0
  %v375 = vsel %vm355, %v293, 0
  %v378 = vsel %vm355, %v294, 0
  %v381 = vsel %vm355, %v295, 0
  %v384 = vsel %vm355, %v296, 0
  %v387 = vsel %vm355, %v297, 0
  %v390 = vsel %vm355, %v298, 0
  %v393 = vsel %vm355, %v299, 0
  %v396 = vsel %vm355, %v300, 0
  %v399 = vsel %vm355, %v301, 0
  %v402 = vsel %vm355, %v302, 0
  %v405 = vsel %vm355, %v303, 0
  %v408 = vsel %vm355, %v304, 0
  %v411 = vsel %vm355, %v305, 0
  %v414 = vsel %vm355, %v306, 0
  %v417 = vsel %vm355, %v307, 0
  %v420 = vsel %vm355, %v308, 0
  %v423 = vsel %vm355, %v309, 0
  %v426 = vsel %vm355, %v310, 0
  %v429 = vsel %vm355, %v311, 0
  %v432 = vsel %vm355, %v312, 0
  %v435 = vsel %vm355, %v313, 0
  %v438 = vsel %vm355, %v314, 0
  %v441 = vsel %vm355, %v315, 0
  %v444 = vsel %vm355, %v316, 0
  %v447 = vsel %vm355, %v317, 0
  %v450 = vsel %vm355, %v318, 0
  %452 = vmatpush.bf16.msra.mxu0 0
  %453 = vmatpush.bf16.msra.mxu0 0
  %454 = vmatpush.bf16.msra.mxu0 0
  %455 = vmatpush.bf16.msra.mxu0 0
  %456 = vmatpush.bf16.msra.mxu0 %v350
  %457 = vmatpush.bf16.msra.mxu0 %v349
  %458 = vmatpush.bf16.msra.mxu0 %v348
  %459 = vmatpush.bf16.msra.mxu0 %v347
  %460 = vmatmul.bf16.gmra.mxu0 %v357
  %v461 = vpop.f32.mrf.mxu0
  %v462 = vadd.f32 %v329, %v461
  %v463 = vpop.f32.mrf.mxu0
  %v464 = vadd.f32 %v329, %v463
  %465 = vmatmul.bf16.gmra.mxu0 %v360
  %v466 = vpop.f32.mrf.mxu0
  %v467 = vadd.f32 %v329, %v466
  %v468 = vpop.f32.mrf.mxu0
  %v469 = vadd.f32 %v329, %v468
  %470 = vmatmul.bf16.gmra.mxu0 %v363
  %v471 = vpop.f32.mrf.mxu0
  %v472 = vadd.f32 %v329, %v471
  %v473 = vpop.f32.mrf.mxu0
  %v474 = vadd.f32 %v329, %v473
  %475 = vmatmul.bf16.gmra.mxu0 %v366
  %v476 = vpop.f32.mrf.mxu0
  %v477 = vadd.f32 %v329, %v476
  %v478 = vpop.f32.mrf.mxu0
  %v479 = vadd.f32 %v329, %v478
  %480 = vmatmul.bf16.gmra.mxu0 %v369
  %v481 = vpop.f32.mrf.mxu0
  %v482 = vadd.f32 %v329, %v481
  %v483 = vpop.f32.mrf.mxu0
  %v484 = vadd.f32 %v329, %v483
  %485 = vmatmul.bf16.gmra.mxu0 %v372
  %v486 = vpop.f32.mrf.mxu0
  %v487 = vadd.f32 %v329, %v486
  %v488 = vpop.f32.mrf.mxu0
  %v489 = vadd.f32 %v329, %v488
  %490 = vmatmul.bf16.gmra.mxu0 %v375
  %v491 = vpop.f32.mrf.mxu0
  %v492 = vadd.f32 %v329, %v491
  %v493 = vpop.f32.mrf.mxu0
  %v494 = vadd.f32 %v329, %v493
  %495 = vmatmul.bf16.gmra.mxu0 %v378
  %v496 = vpop.f32.mrf.mxu0
  %v497 = vadd.f32 %v329, %v496
  %v498 = vpop.f32.mrf.mxu0
  %v499 = vadd.f32 %v329, %v498
  %500 = vmatmul.bf16.gmra.mxu0 %v381
  %v501 = vpop.f32.mrf.mxu0
  %v502 = vadd.f32 %v329, %v501
  %v503 = vpop.f32.mrf.mxu0
  %v504 = vadd.f32 %v329, %v503
  %505 = vmatmul.bf16.gmra.mxu0 %v384
  %v506 = vpop.f32.mrf.mxu0
  %v507 = vadd.f32 %v329, %v506
  %v508 = vpop.f32.mrf.mxu0
  %v509 = vadd.f32 %v329, %v508
  %510 = vmatmul.bf16.gmra.mxu0 %v387
  %v511 = vpop.f32.mrf.mxu0
  %v512 = vadd.f32 %v329, %v511
  %v513 = vpop.f32.mrf.mxu0
  %v514 = vadd.f32 %v329, %v513
  %515 = vmatmul.bf16.gmra.mxu0 %v390
  %v516 = vpop.f32.mrf.mxu0
  %v517 = vadd.f32 %v329, %v516
  %v518 = vpop.f32.mrf.mxu0
  %v519 = vadd.f32 %v329, %v518
  %520 = vmatmul.bf16.gmra.mxu0 %v393
  %v521 = vpop.f32.mrf.mxu0
  %v522 = vadd.f32 %v329, %v521
  %v523 = vpop.f32.mrf.mxu0
  %v524 = vadd.f32 %v329, %v523
  %525 = vmatmul.bf16.gmra.mxu0 %v396
  %v526 = vpop.f32.mrf.mxu0
  %v527 = vadd.f32 %v329, %v526
  %v528 = vpop.f32.mrf.mxu0
  %v529 = vadd.f32 %v329, %v528
  %530 = vmatmul.bf16.gmra.mxu0 %v399
  %v531 = vpop.f32.mrf.mxu0
  %v532 = vadd.f32 %v329, %v531
  %v533 = vpop.f32.mrf.mxu0
  %v534 = vadd.f32 %v329, %v533
  %535 = vmatmul.bf16.gmra.mxu0 %v402
  %v536 = vpop.f32.mrf.mxu0
  %v537 = vadd.f32 %v329, %v536
  %v538 = vpop.f32.mrf.mxu0
  %v539 = vadd.f32 %v329, %v538
  %540 = vmatmul.bf16.gmra.mxu0 %v405
  %v541 = vpop.f32.mrf.mxu0
  %v542 = vadd.f32 %v329, %v541
  %v543 = vpop.f32.mrf.mxu0
  %v544 = vadd.f32 %v329, %v543
  %545 = vmatmul.bf16.gmra.mxu0 %v408
  %v546 = vpop.f32.mrf.mxu0
  %v547 = vadd.f32 %v329, %v546
  %v548 = vpop.f32.mrf.mxu0
  %v549 = vadd.f32 %v329, %v548
  %550 = vmatmul.bf16.gmra.mxu0 %v411
  %v551 = vpop.f32.mrf.mxu0
  %v552 = vadd.f32 %v329, %v551
  %v553 = vpop.f32.mrf.mxu0
  %v554 = vadd.f32 %v329, %v553
  %555 = vmatmul.bf16.gmra.mxu0 %v414
  %v556 = vpop.f32.mrf.mxu0
  %v557 = vadd.f32 %v329, %v556
  %v558 = vpop.f32.mrf.mxu0
  %v559 = vadd.f32 %v329, %v558
  %560 = vmatmul.bf16.gmra.mxu0 %v417
  %v561 = vpop.f32.mrf.mxu0
  %v562 = vadd.f32 %v329, %v561
  %v563 = vpop.f32.mrf.mxu0
  %v564 = vadd.f32 %v329, %v563
  %565 = vmatmul.bf16.gmra.mxu0 %v420
  %v566 = vpop.f32.mrf.mxu0
  %v567 = vadd.f32 %v329, %v566
  %v568 = vpop.f32.mrf.mxu0
  %v569 = vadd.f32 %v329, %v568
  %570 = vmatmul.bf16.gmra.mxu0 %v423
  %v571 = vpop.f32.mrf.mxu0
  %v572 = vadd.f32 %v329, %v571
  %v573 = vpop.f32.mrf.mxu0
  %v574 = vadd.f32 %v329, %v573
  %575 = vmatmul.bf16.gmra.mxu0 %v426
  %v576 = vpop.f32.mrf.mxu0
  %v577 = vadd.f32 %v329, %v576
  %v578 = vpop.f32.mrf.mxu0
  %v579 = vadd.f32 %v329, %v578
  %580 = vmatmul.bf16.gmra.mxu0 %v429
  %v581 = vpop.f32.mrf.mxu0
  %v582 = vadd.f32 %v329, %v581
  %v583 = vpop.f32.mrf.mxu0
  %v584 = vadd.f32 %v329, %v583
  %585 = vmatmul.bf16.gmra.mxu0 %v432
  %v586 = vpop.f32.mrf.mxu0
  %v587 = vadd.f32 %v329, %v586
  %v588 = vpop.f32.mrf.mxu0
  %v589 = vadd.f32 %v329, %v588
  %590 = vmatmul.bf16.gmra.mxu0 %v435
  %v591 = vpop.f32.mrf.mxu0
  %v592 = vadd.f32 %v329, %v591
  %v593 = vpop.f32.mrf.mxu0
  %v594 = vadd.f32 %v329, %v593
  %595 = vmatmul.bf16.gmra.mxu0 %v438
  %v596 = vpop.f32.mrf.mxu0
  %v597 = vadd.f32 %v329, %v596
  %v598 = vpop.f32.mrf.mxu0
  %v599 = vadd.f32 %v329, %v598
  %600 = vmatmul.bf16.gmra.mxu0 %v441
  %v601 = vpop.f32.mrf.mxu0
  %v602 = vadd.f32 %v329, %v601
  %v603 = vpop.f32.mrf.mxu0
  %v604 = vadd.f32 %v329, %v603
  %605 = vmatmul.bf16.gmra.mxu0 %v444
  %v606 = vpop.f32.mrf.mxu0
  %v607 = vadd.f32 %v329, %v606
  %v608 = vpop.f32.mrf.mxu0
  %v609 = vadd.f32 %v329, %v608
  %610 = vmatmul.bf16.gmra.mxu0 %v447
  %v611 = vpop.f32.mrf.mxu0
  %v612 = vadd.f32 %v329, %v611
  %v613 = vpop.f32.mrf.mxu0
  %v614 = vadd.f32 %v329, %v613
  %615 = vmatmul.bf16.gmra.mxu0 %v450
  %v616 = vpop.f32.mrf.mxu0
  %v617 = vadd.f32 %v329, %v616
  %v618 = vpop.f32.mrf.mxu0
  %v619 = vadd.f32 %v329, %v618
  %620 = vdwg.mxu0
  %vm621 = vcmask 7168
  %622 = vst.msk [vmem:[%s5] sm:$0xff] %vm621, %v462
  %623 = vst.msk [vmem:[%s5 + $0x8] sm:$0xff] %vm621, %v464
  %624 = vst.msk [vmem:[%s5 + $0x10] sm:$0xff] %vm621, %v467
  %625 = vst.msk [vmem:[%s5 + $0x18] sm:$0xff] %vm621, %v469
  %626 = vst.msk [vmem:[%s5 + $0x20] sm:$0xff] %vm621, %v472
  %627 = vst.msk [vmem:[%s5 + $0x28] sm:$0xff] %vm621, %v474
  %628 = vst.msk [vmem:[%s5 + $0x30] sm:$0xff] %vm621, %v477
  %629 = vst.msk [vmem:[%s5 + $0x38] sm:$0xff] %vm621, %v479
  %630 = vst.msk [vmem:[%s5 + $0x40] sm:$0xff] %vm621, %v482
  %631 = vst.msk [vmem:[%s5 + $0x48] sm:$0xff] %vm621, %v484
  %632 = vst.msk [vmem:[%s5 + $0x50] sm:$0xff] %vm621, %v487
  %633 = vst.msk [vmem:[%s5 + $0x58] sm:$0xff] %vm621, %v489
  %634 = vst.msk [vmem:[%s5 + $0x60] sm:$0xff] %vm621, %v492
  %635 = vst.msk [vmem:[%s5 + $0x68] sm:$0xff] %vm621, %v494
  %636 = vst.msk [vmem:[%s5 + $0x70] sm:$0xff] %vm621, %v497
  %637 = vst.msk [vmem:[%s5 + $0x78] sm:$0xff] %vm621, %v499
  %638 = vst.msk [vmem:[%s5 + $0x80] sm:$0xff] %vm621, %v502
  %639 = vst.msk [vmem:[%s5 + $0x88] sm:$0xff] %vm621, %v504
  %640 = vst.msk [vmem:[%s5 + $0x90] sm:$0xff] %vm621, %v507
  %641 = vst.msk [vmem:[%s5 + $0x98] sm:$0xff] %vm621, %v509
  %642 = vst.msk [vmem:[%s5 + $0xa0] sm:$0xff] %vm621, %v512
  %643 = vst.msk [vmem:[%s5 + $0xa8] sm:$0xff] %vm621, %v514
  %644 = vst.msk [vmem:[%s5 + $0xb0] sm:$0xff] %vm621, %v517
  %645 = vst.msk [vmem:[%s5 + $0xb8] sm:$0xff] %vm621, %v519
  %646 = vst.msk [vmem:[%s5 + $0xc0] sm:$0xff] %vm621, %v522
  %647 = vst.msk [vmem:[%s5 + $0xc8] sm:$0xff] %vm621, %v524
  %648 = vst.msk [vmem:[%s5 + $0xd0] sm:$0xff] %vm621, %v527
  %649 = vst.msk [vmem:[%s5 + $0xd8] sm:$0xff] %vm621, %v529
  %650 = vst.msk [vmem:[%s5 + $0xe0] sm:$0xff] %vm621, %v532
  %651 = vst.msk [vmem:[%s5 + $0xe8] sm:$0xff] %vm621, %v534
  %652 = vst.msk [vmem:[%s5 + $0xf0] sm:$0xff] %vm621, %v537
  %653 = vst.msk [vmem:[%s5 + $0xf8] sm:$0xff] %vm621, %v539
  %654 = vst.msk [vmem:[%s5 + $0x100] sm:$0xff] %vm621, %v542
  %655 = vst.msk [vmem:[%s5 + $0x108] sm:$0xff] %vm621, %v544
  %656 = vst.msk [vmem:[%s5 + $0x110] sm:$0xff] %vm621, %v547
  %657 = vst.msk [vmem:[%s5 + $0x118] sm:$0xff] %vm621, %v549
  %658 = vst.msk [vmem:[%s5 + $0x120] sm:$0xff] %vm621, %v552
  %659 = vst.msk [vmem:[%s5 + $0x128] sm:$0xff] %vm621, %v554
  %660 = vst.msk [vmem:[%s5 + $0x130] sm:$0xff] %vm621, %v557
  %661 = vst.msk [vmem:[%s5 + $0x138] sm:$0xff] %vm621, %v559
  %662 = vst.msk [vmem:[%s5 + $0x140] sm:$0xff] %vm621, %v562
  %663 = vst.msk [vmem:[%s5 + $0x148] sm:$0xff] %vm621, %v564
  %664 = vst.msk [vmem:[%s5 + $0x150] sm:$0xff] %vm621, %v567
  %665 = vst.msk [vmem:[%s5 + $0x158] sm:$0xff] %vm621, %v569
  %666 = vst.msk [vmem:[%s5 + $0x160] sm:$0xff] %vm621, %v572
  %667 = vst.msk [vmem:[%s5 + $0x168] sm:$0xff] %vm621, %v574
  %668 = vst.msk [vmem:[%s5 + $0x170] sm:$0xff] %vm621, %v577
  %669 = vst.msk [vmem:[%s5 + $0x178] sm:$0xff] %vm621, %v579
  %670 = vst.msk [vmem:[%s5 + $0x180] sm:$0xff] %vm621, %v582
  %671 = vst.msk [vmem:[%s5 + $0x188] sm:$0xff] %vm621, %v584
  %672 = vst.msk [vmem:[%s5 + $0x190] sm:$0xff] %vm621, %v587
  %673 = vst.msk [vmem:[%s5 + $0x198] sm:$0xff] %vm621, %v589
  %674 = vst.msk [vmem:[%s5 + $0x1a0] sm:$0xff] %vm621, %v592
  %675 = vst.msk [vmem:[%s5 + $0x1a8] sm:$0xff] %vm621, %v594
  %676 = vst.msk [vmem:[%s5 + $0x1b0] sm:$0xff] %vm621, %v597
  %677 = vst.msk [vmem:[%s5 + $0x1b8] sm:$0xff] %vm621, %v599
  %678 = vst.msk [vmem:[%s5 + $0x1c0] sm:$0xff] %vm621, %v602
  %679 = vst.msk [vmem:[%s5 + $0x1c8] sm:$0xff] %vm621, %v604
  %680 = vst.msk [vmem:[%s5 + $0x1d0] sm:$0xff] %vm621, %v607
  %681 = vst.msk [vmem:[%s5 + $0x1d8] sm:$0xff] %vm621, %v609
  %682 = vst.msk [vmem:[%s5 + $0x1e0] sm:$0xff] %vm621, %v612
  %683 = vst.msk [vmem:[%s5 + $0x1e8] sm:$0xff] %vm621, %v614
  %684 = vst.msk [vmem:[%s5 + $0x1f0] sm:$0xff] %vm621, %v617
  %685 = vst.msk [vmem:[%s5 + $0x1f8] sm:$0xff] %vm621, %v619
  // Predicated region
  $region22: #{_lambda_.17} parent=0 // pred_check
    _
  $region23: #{_lambda_.17} parent=0 // pred_check_branch
    %687 = sbr.rel (0) target = $region25
  $region24: #{_lambda_.17} parent=0 // pred_region
    _
  $region25: #{_lambda_.17} parent=0 // pred_fallthru
    _
  // Predicated region
  $region26: #{_lambda_.17} parent=0 // pred_check
    _
  $region27: #{_lambda_.17} parent=0 // pred_check_branch
    %689 = sbr.rel (0) target = $region29
  $region28: #{_lambda_.17} parent=0 // pred_region
    _
  $region29: #{_lambda_.17} parent=0 // pred_fallthru
    _

</llo_original>
